<compile_context>
chip_gen: v6e
topology: v6e:2x2x1
jax: 0.10.0
libtpu: 0.0.40
codegen_flags: <defaults>
</compile_context>

<pallas_src>
import functools

import jax
import jax.numpy as jnp
from jax import lax
from jax.experimental import pallas as pl
from jax.experimental.pallas import tpu as pltpu

LANE = 128  # TPU lane width; channels are padded up to a multiple of this.


def _round_up(n, m):
    return (n + m - 1) // m * m


def basic_block_kernel(H, W, xp_ref, w1_ref, b1_ref, w2_ref, b2_ref, mask_ref,
                       o_ref, h1pad_ref):
    # xp_ref:   (1, (H+5)*(W+4), Cp) bf16 flat slab, 2-px halo all around plus
    #           one slack bottom row so every tap slice stays in bounds.
    # w*_ref:   (9, Cp, Cp) bf16 folded conv+BN weights (tap-major).
    # b*_ref:   (1, Cp) f32 folded BN biases.
    # mask_ref: (M1, 1) f32, 1.0 on the true h1 interior, 0.0 on the zero ring
    #           and on the flat-wrap columns.
    # h1pad_ref:((H+3)*(W+4), Cp) bf16 scratch = conv2's zero-padded input.
    Wp = W + 4                       # padded row width shared by all flat views
    M1 = (H + 2) * Wp                # conv1 extended-output length (incl. ring)
    M2 = H * Wp                      # conv2 / final-output length
    Cp = xp_ref.shape[-1]

    # ---- conv1 + folded bn1 + relu1: 9 accumulating MXU matmuls ------------
    acc1 = None
    for t in range(9):
        dy, dx = divmod(t, 3)
        a = xp_ref[0, pl.ds(dy * Wp + dx, M1), :]                 # bf16, contiguous
        d = jnp.dot(a, w1_ref[t], preferred_element_type=jnp.float32)
        acc1 = d if acc1 is None else acc1 + d
    # Bias + ReLU in f32; the mask zeroes the 1-px ring (and wrap columns), so
    # the scratch becomes conv2's zero-padded input directly.
    h1 = jnp.maximum(acc1 + b1_ref[...], 0.0) * mask_ref[...]

    # Aligned, full-width, lane-dense store at offset 0 (no misaligned interior
    # write); zero the one slack row read by the last tap slices.
    h1pad_ref[0:M1, :] = h1.astype(h1pad_ref.dtype)
    h1pad_ref[M1:M1 + Wp, :] = jnp.zeros((Wp, Cp), h1pad_ref.dtype)

    # ---- conv2 + folded bn2: same 9-tap accumulation from the scratch -------
    acc2 = None
    for t in range(9):
        dy, dx = divmod(t, 3)
        a = h1pad_ref[pl.ds(dy * Wp + dx, M2), :]                 # bf16, contiguous
        d = jnp.dot(a, w2_ref[t], preferred_element_type=jnp.float32)
        acc2 = d if acc2 is None else acc2 + d

    # ---- identity residual (contiguous center slice of the input slab) ------
    res = xp_ref[0, pl.ds(2 * Wp + 2, M2), :].astype(jnp.float32)
    out = jnp.maximum(acc2 + b2_ref[...] + res, 0.0)
    o_ref[0] = out.astype(o_ref.dtype)                            # (M2, Cp), dense


def fold_and_pad_params(w1_hwio, bn1, w2_hwio, bn2, eps=1e-5):
    """Fold inference BN into the convs and pad channels to a lane multiple.

    Returns (w1, b1, w2, b2): w* are (9, Cp, Cp) bf16 (tap-major, in-channel
    rows, out-channel cols), b* are (1, Cp) f32. Zero channel padding is exact.
    """
    def fold(w_hwio, gamma, beta, mean, var):
        kh, kw, cin, cout = w_hwio.shape
        cin_p, cout_p = _round_up(cin, LANE), _round_up(cout, LANE)
        scale = gamma / jnp.sqrt(var + eps)
        w = w_hwio * scale                                         # fold BN scale
        w = jnp.pad(w, ((0, 0), (0, 0), (0, cin_p - cin), (0, cout_p - cout)))
        b = jnp.pad(beta - mean * scale, ((0, cout_p - cout),))
        return (w.reshape(kh * kw, cin_p, cout_p).astype(jnp.bfloat16),
                b.reshape(1, cout_p).astype(jnp.float32))

    w1m, b1 = fold(w1_hwio, *bn1)
    w2m, b2 = fold(w2_hwio, *bn2)
    return w1m, b1, w2m, b2


def basic_block_forward(x_nchw, params):
    w1, b1, w2, b2 = params
    N, C0, H, W = x_nchw.shape
    Cp = w1.shape[-1]
    assert w1.shape == (9, Cp, Cp) and w2.shape == (9, Cp, Cp), \
        "identity residual path requires inplanes == planes"

    Wp = W + 4                      # 2-px left/right halo
    Hxp = H + 5                     # 2-px top + 2-px bottom halo + 1 slack row
    M1 = (H + 2) * Wp
    M2 = H * Wp

    # NCHW -> NHWC, bf16 activations, lane-padded channels, 2-px spatial halo,
    # flattened to a (rows*cols, C) slab so conv taps are contiguous slices.
    x = jnp.transpose(x_nchw, (0, 2, 3, 1)).astype(jnp.bfloat16)
    xp = jnp.pad(x, ((0, 0), (2, 3), (2, 2), (0, Cp - C0)))
    xp_flat = xp.reshape(N, Hxp * Wp, Cp)

    # Interior mask for conv2's padded input: 1 inside the true h1 footprint,
    # 0 on the zero-padding ring and on the flat-wrap columns.
    rows = jnp.arange(H + 2)[:, None]
    cols = jnp.arange(Wp)[None, :]
    mask = ((rows >= 1) & (rows <= H) & (cols >= 1) & (cols <= W))
    mask = mask.astype(jnp.float32).reshape(M1, 1)

    kernel = functools.partial(basic_block_kernel, H, W)

    flops = 2 * 2 * 9 * N * M1 * Cp * Cp           # both convs (slight overcount)
    bytes_accessed = int(xp_flat.size * 2 + N * M2 * Cp * 4
                         + (w1.size + w2.size) * 2
                         + (b1.size + b2.size + mask.size) * 4)

    # Explicit VMEM budget: double-buffered in/out blocks + single-buffered
    # invariants + pad scratch, with headroom for compiler temporaries.
    vmem_bytes = (2 * (Hxp * Wp * Cp * 2 + M2 * Cp * 4)
                  + (H + 3) * Wp * Cp * 2
                  + (w1.size + w2.size) * 2 + (b1.size + b2.size) * 4
                  + _round_up(M1, 8) * LANE * 4)
    vmem_limit = min(100 * 1024 * 1024, max(32 * 1024 * 1024, int(vmem_bytes * 2)))

    # Grid-invariant operands: whole-array VMEM residents (no per-step DMA,
    # no second pipeline buffer).
    invariant = pl.BlockSpec(memory_space=pltpu.MemorySpace.VMEM)

    out_flat = pl.pallas_call(
        kernel,
        out_shape=jax.ShapeDtypeStruct((N, M2, Cp), x_nchw.dtype),
        grid_spec=pltpu.PrefetchScalarGridSpec(
            num_scalar_prefetch=0,
            grid=(N,),
            in_specs=[
                pl.BlockSpec((1, Hxp * Wp, Cp), lambda n: (n, 0, 0)),
                invariant, invariant, invariant, invariant, invariant,
            ],
            out_specs=pl.BlockSpec((1, M2, Cp), lambda n: (n, 0, 0)),
            scratch_shapes=[pltpu.VMEM(((H + 3) * Wp, Cp), jnp.bfloat16)],
        ),
        compiler_params=pltpu.CompilerParams(
            dimension_semantics=("parallel",),          # batch items independent
            vmem_limit_bytes=vmem_limit),
        cost_estimate=pl.CostEstimate(flops=flops, transcendentals=0,
                                      bytes_accessed=bytes_accessed),
    )(xp_flat, w1, b1, w2, b2, mask)

    # Drop the wrap columns and channel padding; back to NCHW.
    out = out_flat.reshape(N, H, Wp, Cp)[:, :, :W, :C0]
    return jnp.transpose(out, (0, 3, 1, 2))


def ref_forward(x_nchw, params):
    """Plain-JAX reference with the same folded-BN / bf16-operand,
    f32-accumulate precision (and bf16 residual) as the kernel."""
    w1, b1, w2, b2 = params
    Cp = w1.shape[-1]
    N, C0, H, W = x_nchw.shape
    x = jnp.transpose(x_nchw, (0, 2, 3, 1))
    x = jnp.pad(x, ((0, 0), (0, 0), (0, 0), (0, Cp - C0))).astype(jnp.bfloat16)
    dn = ('NHWC', 'HWIO', 'NHWC')
    h = lax.conv_general_dilated(x, w1.reshape(3, 3, Cp, Cp), (1, 1), 'SAME',
                                 dimension_numbers=dn,
                                 preferred_element_type=jnp.float32)
    h = jnp.maximum(h + b1[0], 0.0)
    h = lax.conv_general_dilated(h.astype(jnp.bfloat16), w2.reshape(3, 3, Cp, Cp),
                                 (1, 1), 'SAME', dimension_numbers=dn,
                                 preferred_element_type=jnp.float32)
    h = h + b2[0] + x.astype(jnp.float32)
    out = jnp.maximum(h, 0.0)[..., :C0]
    return jnp.transpose(out, (0, 3, 1, 2))


if __name__ == "__main__":
    key = jax.random.PRNGKey(0)
    N, planes, H, W = 2, 8, 16, 16        # inplanes == planes -> identity residual
    ks = jax.random.split(key, 11)

    def make_bn(kg, kb, km, kv, c):
        gamma = jax.random.normal(kg, (c,), jnp.float32) * 0.1 + 1.0
        beta = jax.random.normal(kb, (c,), jnp.float32) * 0.1
        mean = jax.random.normal(km, (c,), jnp.float32) * 0.1
        var = jax.random.uniform(kv, (c,), jnp.float32, minval=0.5, maxval=1.5)
        return gamma, beta, mean, var

    w1_hwio = jax.random.normal(ks[0], (3, 3, planes, planes), jnp.float32) * 0.1
    bn1 = make_bn(ks[1], ks[2], ks[3], ks[4], planes)
    w2_hwio = jax.random.normal(ks[5], (3, 3, planes, planes), jnp.float32) * 0.1
    bn2 = make_bn(ks[6], ks[7], ks[8], ks[9], planes)
    x = jax.random.normal(ks[10], (N, planes, H, W), jnp.float32)

    params = fold_and_pad_params(w1_hwio, bn1, w2_hwio, bn2)

    out = jax.block_until_ready(basic_block_forward(x, params))
    ref = ref_forward(x, params)

    assert out.shape == (N, planes, H, W)
    max_err = float(jnp.max(jnp.abs(out - ref)))
    assert jnp.allclose(out, ref, rtol=2e-2, atol=2e-2), max_err
    print("KERNEL_OK")
</pallas_src>

<mosaic_0001>
module attributes {stable_mosaic.version = 11 : i64} {
  func.func @basic_block_kernel(%arg0: i32, %arg1: memref<1x420x128xbf16, #tpu.memory_space<vmem>>, %arg2: memref<9x128x128xbf16, #tpu.memory_space<vmem>>, %arg3: memref<1x128xf32, #tpu.memory_space<vmem>>, %arg4: memref<9x128x128xbf16, #tpu.memory_space<vmem>>, %arg5: memref<1x128xf32, #tpu.memory_space<vmem>>, %arg6: memref<360x1xf32, #tpu.memory_space<vmem>>, %arg7: memref<1x320x128xf32, #tpu.memory_space<vmem>>, %arg8: memref<380x128xbf16, #tpu.memory_space<vmem>>) attributes {dimension_semantics = [#tpu.dimension_semantics<parallel>], iteration_bounds = array<i64: 2>, scalar_prefetch = 0 : i64, scratch_operands = 1 : i64, tpu.core_type = #tpu.core_type<tc>, window_params = [{transform_indices = @transform_0, window_bounds = array<i64: 1, 420, 128>}, {pipeline_mode = #tpu.pipeline_mode<synchronous>, transform_indices = @transform_1, window_bounds = array<i64: 9, 128, 128>}, {pipeline_mode = #tpu.pipeline_mode<synchronous>, transform_indices = @transform_2, window_bounds = array<i64: 1, 128>}, {pipeline_mode = #tpu.pipeline_mode<synchronous>, transform_indices = @transform_3, window_bounds = array<i64: 9, 128, 128>}, {pipeline_mode = #tpu.pipeline_mode<synchronous>, transform_indices = @transform_4, window_bounds = array<i64: 1, 128>}, {pipeline_mode = #tpu.pipeline_mode<synchronous>, transform_indices = @transform_5, window_bounds = array<i64: 360, 1>}, {transform_indices = @transform_6, window_bounds = array<i64: 1, 320, 128>}]} {
    %c0 = arith.constant 0 : index
    %c0_0 = arith.constant 0 : index
    %c0_1 = arith.constant 0 : index
    %0 = vector.load %arg1[%c0, %c0_0, %c0_1] : memref<1x420x128xbf16, #tpu.memory_space<vmem>>, vector<1x360x128xbf16>
    %1 = vector.shape_cast %0 : vector<1x360x128xbf16> to vector<360x128xbf16>
    %c0_2 = arith.constant 0 : index
    %c0_3 = arith.constant 0 : index
    %c0_4 = arith.constant 0 : index
    %2 = vector.load %arg2[%c0_2, %c0_3, %c0_4] : memref<9x128x128xbf16, #tpu.memory_space<vmem>>, vector<1x128x128xbf16>
    %3 = vector.shape_cast %2 : vector<1x128x128xbf16> to vector<128x128xbf16>
    %cst = arith.constant dense<0.000000e+00> : vector<360x128xf32>
    %4 = tpu.matmul %1, %3, %cst {dimension_numbers = #tpu.dot_dimension_numbers<[1], [0], [0], [1], [0, 0, 1, 1], [], []>} : vector<360x128xbf16>, vector<128x128xbf16>, vector<360x128xf32> -> vector<360x128xf32>
    %c0_5 = arith.constant 0 : index
    %c1 = arith.constant 1 : index
    %c0_6 = arith.constant 0 : index
    %5 = vector.load %arg1[%c0_5, %c1, %c0_6] : memref<1x420x128xbf16, #tpu.memory_space<vmem>>, vector<1x360x128xbf16>
    %6 = vector.shape_cast %5 : vector<1x360x128xbf16> to vector<360x128xbf16>
    %c1_7 = arith.constant 1 : index
    %c0_8 = arith.constant 0 : index
    %c0_9 = arith.constant 0 : index
    %7 = vector.load %arg2[%c1_7, %c0_8, %c0_9] : memref<9x128x128xbf16, #tpu.memory_space<vmem>>, vector<1x128x128xbf16>
    %8 = vector.shape_cast %7 : vector<1x128x128xbf16> to vector<128x128xbf16>
    %cst_10 = arith.constant dense<0.000000e+00> : vector<360x128xf32>
    %9 = tpu.matmul %6, %8, %cst_10 {dimension_numbers = #tpu.dot_dimension_numbers<[1], [0], [0], [1], [0, 0, 1, 1], [], []>} : vector<360x128xbf16>, vector<128x128xbf16>, vector<360x128xf32> -> vector<360x128xf32>
    %10 = arith.addf %4, %9 : vector<360x128xf32>
    %c0_11 = arith.constant 0 : index
    %c2 = arith.constant 2 : index
    %c0_12 = arith.constant 0 : index
    %11 = vector.load %arg1[%c0_11, %c2, %c0_12] : memref<1x420x128xbf16, #tpu.memory_space<vmem>>, vector<1x360x128xbf16>
    %12 = vector.shape_cast %11 : vector<1x360x128xbf16> to vector<360x128xbf16>
    %c2_13 = arith.constant 2 : index
    %c0_14 = arith.constant 0 : index
    %c0_15 = arith.constant 0 : index
    %13 = vector.load %arg2[%c2_13, %c0_14, %c0_15] : memref<9x128x128xbf16, #tpu.memory_space<vmem>>, vector<1x128x128xbf16>
    %14 = vector.shape_cast %13 : vector<1x128x128xbf16> to vector<128x128xbf16>
    %cst_16 = arith.constant dense<0.000000e+00> : vector<360x128xf32>
    %15 = tpu.matmul %12, %14, %cst_16 {dimension_numbers = #tpu.dot_dimension_numbers<[1], [0], [0], [1], [0, 0, 1, 1], [], []>} : vector<360x128xbf16>, vector<128x128xbf16>, vector<360x128xf32> -> vector<360x128xf32>
    %16 = arith.addf %10, %15 : vector<360x128xf32>
    %c0_17 = arith.constant 0 : index
    %c20 = arith.constant 20 : index
    %c0_18 = arith.constant 0 : index
    %17 = vector.load %arg1[%c0_17, %c20, %c0_18] : memref<1x420x128xbf16, #tpu.memory_space<vmem>>, vector<1x360x128xbf16>
    %18 = vector.shape_cast %17 : vector<1x360x128xbf16> to vector<360x128xbf16>
    %c3 = arith.constant 3 : index
    %c0_19 = arith.constant 0 : index
    %c0_20 = arith.constant 0 : index
    %19 = vector.load %arg2[%c3, %c0_19, %c0_20] : memref<9x128x128xbf16, #tpu.memory_space<vmem>>, vector<1x128x128xbf16>
    %20 = vector.shape_cast %19 : vector<1x128x128xbf16> to vector<128x128xbf16>
    %cst_21 = arith.constant dense<0.000000e+00> : vector<360x128xf32>
    %21 = tpu.matmul %18, %20, %cst_21 {dimension_numbers = #tpu.dot_dimension_numbers<[1], [0], [0], [1], [0, 0, 1, 1], [], []>} : vector<360x128xbf16>, vector<128x128xbf16>, vector<360x128xf32> -> vector<360x128xf32>
    %22 = arith.addf %16, %21 : vector<360x128xf32>
    %c0_22 = arith.constant 0 : index
    %c21 = arith.constant 21 : index
    %c0_23 = arith.constant 0 : index
    %23 = vector.load %arg1[%c0_22, %c21, %c0_23] : memref<1x420x128xbf16, #tpu.memory_space<vmem>>, vector<1x360x128xbf16>
    %24 = vector.shape_cast %23 : vector<1x360x128xbf16> to vector<360x128xbf16>
    %c4 = arith.constant 4 : index
    %c0_24 = arith.constant 0 : index
    %c0_25 = arith.constant 0 : index
    %25 = vector.load %arg2[%c4, %c0_24, %c0_25] : memref<9x128x128xbf16, #tpu.memory_space<vmem>>, vector<1x128x128xbf16>
    %26 = vector.shape_cast %25 : vector<1x128x128xbf16> to vector<128x128xbf16>
    %cst_26 = arith.constant dense<0.000000e+00> : vector<360x128xf32>
    %27 = tpu.matmul %24, %26, %cst_26 {dimension_numbers = #tpu.dot_dimension_numbers<[1], [0], [0], [1], [0, 0, 1, 1], [], []>} : vector<360x128xbf16>, vector<128x128xbf16>, vector<360x128xf32> -> vector<360x128xf32>
    %28 = arith.addf %22, %27 : vector<360x128xf32>
    %c0_27 = arith.constant 0 : index
    %c22 = arith.constant 22 : index
    %c0_28 = arith.constant 0 : index
    %29 = vector.load %arg1[%c0_27, %c22, %c0_28] : memref<1x420x128xbf16, #tpu.memory_space<vmem>>, vector<1x360x128xbf16>
    %30 = vector.shape_cast %29 : vector<1x360x128xbf16> to vector<360x128xbf16>
    %c5 = arith.constant 5 : index
    %c0_29 = arith.constant 0 : index
    %c0_30 = arith.constant 0 : index
    %31 = vector.load %arg2[%c5, %c0_29, %c0_30] : memref<9x128x128xbf16, #tpu.memory_space<vmem>>, vector<1x128x128xbf16>
    %32 = vector.shape_cast %31 : vector<1x128x128xbf16> to vector<128x128xbf16>
    %cst_31 = arith.constant dense<0.000000e+00> : vector<360x128xf32>
    %33 = tpu.matmul %30, %32, %cst_31 {dimension_numbers = #tpu.dot_dimension_numbers<[1], [0], [0], [1], [0, 0, 1, 1], [], []>} : vector<360x128xbf16>, vector<128x128xbf16>, vector<360x128xf32> -> vector<360x128xf32>
    %34 = arith.addf %28, %33 : vector<360x128xf32>
    %c0_32 = arith.constant 0 : index
    %c40 = arith.constant 40 : index
    %c0_33 = arith.constant 0 : index
    %35 = vector.load %arg1[%c0_32, %c40, %c0_33] : memref<1x420x128xbf16, #tpu.memory_space<vmem>>, vector<1x360x128xbf16>
    %36 = vector.shape_cast %35 : vector<1x360x128xbf16> to vector<360x128xbf16>
    %c6 = arith.constant 6 : index
    %c0_34 = arith.constant 0 : index
    %c0_35 = arith.constant 0 : index
    %37 = vector.load %arg2[%c6, %c0_34, %c0_35] : memref<9x128x128xbf16, #tpu.memory_space<vmem>>, vector<1x128x128xbf16>
    %38 = vector.shape_cast %37 : vector<1x128x128xbf16> to vector<128x128xbf16>
    %cst_36 = arith.constant dense<0.000000e+00> : vector<360x128xf32>
    %39 = tpu.matmul %36, %38, %cst_36 {dimension_numbers = #tpu.dot_dimension_numbers<[1], [0], [0], [1], [0, 0, 1, 1], [], []>} : vector<360x128xbf16>, vector<128x128xbf16>, vector<360x128xf32> -> vector<360x128xf32>
    %40 = arith.addf %34, %39 : vector<360x128xf32>
    %c0_37 = arith.constant 0 : index
    %c41 = arith.constant 41 : index
    %c0_38 = arith.constant 0 : index
    %41 = vector.load %arg1[%c0_37, %c41, %c0_38] : memref<1x420x128xbf16, #tpu.memory_space<vmem>>, vector<1x360x128xbf16>
    %42 = vector.shape_cast %41 : vector<1x360x128xbf16> to vector<360x128xbf16>
    %c7 = arith.constant 7 : index
    %c0_39 = arith.constant 0 : index
    %c0_40 = arith.constant 0 : index
    %43 = vector.load %arg2[%c7, %c0_39, %c0_40] : memref<9x128x128xbf16, #tpu.memory_space<vmem>>, vector<1x128x128xbf16>
    %44 = vector.shape_cast %43 : vector<1x128x128xbf16> to vector<128x128xbf16>
    %cst_41 = arith.constant dense<0.000000e+00> : vector<360x128xf32>
    %45 = tpu.matmul %42, %44, %cst_41 {dimension_numbers = #tpu.dot_dimension_numbers<[1], [0], [0], [1], [0, 0, 1, 1], [], []>} : vector<360x128xbf16>, vector<128x128xbf16>, vector<360x128xf32> -> vector<360x128xf32>
    %46 = arith.addf %40, %45 : vector<360x128xf32>
    %c0_42 = arith.constant 0 : index
    %c42 = arith.constant 42 : index
    %c0_43 = arith.constant 0 : index
    %47 = vector.load %arg1[%c0_42, %c42, %c0_43] : memref<1x420x128xbf16, #tpu.memory_space<vmem>>, vector<1x360x128xbf16>
    %48 = vector.shape_cast %47 : vector<1x360x128xbf16> to vector<360x128xbf16>
    %c8 = arith.constant 8 : index
    %c0_44 = arith.constant 0 : index
    %c0_45 = arith.constant 0 : index
    %49 = vector.load %arg2[%c8, %c0_44, %c0_45] : memref<9x128x128xbf16, #tpu.memory_space<vmem>>, vector<1x128x128xbf16>
    %50 = vector.shape_cast %49 : vector<1x128x128xbf16> to vector<128x128xbf16>
    %cst_46 = arith.constant dense<0.000000e+00> : vector<360x128xf32>
    %51 = tpu.matmul %48, %50, %cst_46 {dimension_numbers = #tpu.dot_dimension_numbers<[1], [0], [0], [1], [0, 0, 1, 1], [], []>} : vector<360x128xbf16>, vector<128x128xbf16>, vector<360x128xf32> -> vector<360x128xf32>
    %52 = arith.addf %46, %51 : vector<360x128xf32>
    %c0_47 = arith.constant 0 : index
    %c0_48 = arith.constant 0 : index
    %53 = vector.load %arg3[%c0_47, %c0_48] : memref<1x128xf32, #tpu.memory_space<vmem>>, vector<1x128xf32>
    %54 = vector.broadcast %53 : vector<1x128xf32> to vector<360x128xf32>
    %55 = arith.addf %52, %54 : vector<360x128xf32>
    %cst_49 = arith.constant 0.000000e+00 : f32
    %56 = vector.broadcast %cst_49 : f32 to vector<360x128xf32>
    %57 = arith.maximumf %55, %56 : vector<360x128xf32>
    %c0_50 = arith.constant 0 : index
    %c0_51 = arith.constant 0 : index
    %58 = vector.load %arg6[%c0_50, %c0_51] : memref<360x1xf32, #tpu.memory_space<vmem>>, vector<360x1xf32>
    %59 = vector.broadcast %58 : vector<360x1xf32> to vector<360x128xf32>
    %60 = arith.mulf %57, %59 : vector<360x128xf32>
    %61 = arith.truncf %60 : vector<360x128xf32> to vector<360x128xbf16>
    %c0_52 = arith.constant 0 : index
    %c0_53 = arith.constant 0 : index
    %62 = vector.load %arg8[%c0_52, %c0_53] : memref<380x128xbf16, #tpu.memory_space<vmem>>, vector<360x128xbf16>
    tpu.vector_store %arg8[%c0_52, %c0_53], %61 {strides = array<i32>} : memref<380x128xbf16, #tpu.memory_space<vmem>>, vector<360x128xbf16>,
    %cst_54 = arith.constant 0.000000e+00 : bf16
    %63 = vector.broadcast %cst_54 : bf16 to vector<20x128xbf16>
    %c360 = arith.constant 360 : index
    %c0_55 = arith.constant 0 : index
    %64 = vector.load %arg8[%c360, %c0_55] : memref<380x128xbf16, #tpu.memory_space<vmem>>, vector<20x128xbf16>
    tpu.vector_store %arg8[%c360, %c0_55], %63 {strides = array<i32>} : memref<380x128xbf16, #tpu.memory_space<vmem>>, vector<20x128xbf16>,
    %c0_56 = arith.constant 0 : index
    %c0_57 = arith.constant 0 : index
    %65 = vector.load %arg8[%c0_56, %c0_57] : memref<380x128xbf16, #tpu.memory_space<vmem>>, vector<320x128xbf16>
    %c0_58 = arith.constant 0 : index
    %c0_59 = arith.constant 0 : index
    %c0_60 = arith.constant 0 : index
    %66 = vector.load %arg4[%c0_58, %c0_59, %c0_60] : memref<9x128x128xbf16, #tpu.memory_space<vmem>>, vector<1x128x128xbf16>
    %67 = vector.shape_cast %66 : vector<1x128x128xbf16> to vector<128x128xbf16>
    %cst_61 = arith.constant dense<0.000000e+00> : vector<320x128xf32>
    %68 = tpu.matmul %65, %67, %cst_61 {dimension_numbers = #tpu.dot_dimension_numbers<[1], [0], [0], [1], [0, 0, 1, 1], [], []>} : vector<320x128xbf16>, vector<128x128xbf16>, vector<320x128xf32> -> vector<320x128xf32>
    %c1_62 = arith.constant 1 : index
    %c0_63 = arith.constant 0 : index
    %69 = vector.load %arg8[%c1_62, %c0_63] : memref<380x128xbf16, #tpu.memory_space<vmem>>, vector<320x128xbf16>
    %c1_64 = arith.constant 1 : index
    %c0_65 = arith.constant 0 : index
    %c0_66 = arith.constant 0 : index
    %70 = vector.load %arg4[%c1_64, %c0_65, %c0_66] : memref<9x128x128xbf16, #tpu.memory_space<vmem>>, vector<1x128x128xbf16>
    %71 = vector.shape_cast %70 : vector<1x128x128xbf16> to vector<128x128xbf16>
    %cst_67 = arith.constant dense<0.000000e+00> : vector<320x128xf32>
    %72 = tpu.matmul %69, %71, %cst_67 {dimension_numbers = #tpu.dot_dimension_numbers<[1], [0], [0], [1], [0, 0, 1, 1], [], []>} : vector<320x128xbf16>, vector<128x128xbf16>, vector<320x128xf32> -> vector<320x128xf32>
    %73 = arith.addf %68, %72 : vector<320x128xf32>
    %c2_68 = arith.constant 2 : index
    %c0_69 = arith.constant 0 : index
    %74 = vector.load %arg8[%c2_68, %c0_69] : memref<380x128xbf16, #tpu.memory_space<vmem>>, vector<320x128xbf16>
    %c2_70 = arith.constant 2 : index
    %c0_71 = arith.constant 0 : index
    %c0_72 = arith.constant 0 : index
    %75 = vector.load %arg4[%c2_70, %c0_71, %c0_72] : memref<9x128x128xbf16, #tpu.memory_space<vmem>>, vector<1x128x128xbf16>
    %76 = vector.shape_cast %75 : vector<1x128x128xbf16> to vector<128x128xbf16>
    %cst_73 = arith.constant dense<0.000000e+00> : vector<320x128xf32>
    %77 = tpu.matmul %74, %76, %cst_73 {dimension_numbers = #tpu.dot_dimension_numbers<[1], [0], [0], [1], [0, 0, 1, 1], [], []>} : vector<320x128xbf16>, vector<128x128xbf16>, vector<320x128xf32> -> vector<320x128xf32>
    %78 = arith.addf %73, %77 : vector<320x128xf32>
    %c20_74 = arith.constant 20 : index
    %c0_75 = arith.constant 0 : index
    %79 = vector.load %arg8[%c20_74, %c0_75] : memref<380x128xbf16, #tpu.memory_space<vmem>>, vector<320x128xbf16>
    %c3_76 = arith.constant 3 : index
    %c0_77 = arith.constant 0 : index
    %c0_78 = arith.constant 0 : index
    %80 = vector.load %arg4[%c3_76, %c0_77, %c0_78] : memref<9x128x128xbf16, #tpu.memory_space<vmem>>, vector<1x128x128xbf16>
    %81 = vector.shape_cast %80 : vector<1x128x128xbf16> to vector<128x128xbf16>
    %cst_79 = arith.constant dense<0.000000e+00> : vector<320x128xf32>
    %82 = tpu.matmul %79, %81, %cst_79 {dimension_numbers = #tpu.dot_dimension_numbers<[1], [0], [0], [1], [0, 0, 1, 1], [], []>} : vector<320x128xbf16>, vector<128x128xbf16>, vector<320x128xf32> -> vector<320x128xf32>
    %83 = arith.addf %78, %82 : vector<320x128xf32>
    %c21_80 = arith.constant 21 : index
    %c0_81 = arith.constant 0 : index
    %84 = vector.load %arg8[%c21_80, %c0_81] : memref<380x128xbf16, #tpu.memory_space<vmem>>, vector<320x128xbf16>
    %c4_82 = arith.constant 4 : index
    %c0_83 = arith.constant 0 : index
    %c0_84 = arith.constant 0 : index
    %85 = vector.load %arg4[%c4_82, %c0_83, %c0_84] : memref<9x128x128xbf16, #tpu.memory_space<vmem>>, vector<1x128x128xbf16>
    %86 = vector.shape_cast %85 : vector<1x128x128xbf16> to vector<128x128xbf16>
    %cst_85 = arith.constant dense<0.000000e+00> : vector<320x128xf32>
    %87 = tpu.matmul %84, %86, %cst_85 {dimension_numbers = #tpu.dot_dimension_numbers<[1], [0], [0], [1], [0, 0, 1, 1], [], []>} : vector<320x128xbf16>, vector<128x128xbf16>, vector<320x128xf32> -> vector<320x128xf32>
    %88 = arith.addf %83, %87 : vector<320x128xf32>
    %c22_86 = arith.constant 22 : index
    %c0_87 = arith.constant 0 : index
    %89 = vector.load %arg8[%c22_86, %c0_87] : memref<380x128xbf16, #tpu.memory_space<vmem>>, vector<320x128xbf16>
    %c5_88 = arith.constant 5 : index
    %c0_89 = arith.constant 0 : index
    %c0_90 = arith.constant 0 : index
    %90 = vector.load %arg4[%c5_88, %c0_89, %c0_90] : memref<9x128x128xbf16, #tpu.memory_space<vmem>>, vector<1x128x128xbf16>
    %91 = vector.shape_cast %90 : vector<1x128x128xbf16> to vector<128x128xbf16>
    %cst_91 = arith.constant dense<0.000000e+00> : vector<320x128xf32>
    %92 = tpu.matmul %89, %91, %cst_91 {dimension_numbers = #tpu.dot_dimension_numbers<[1], [0], [0], [1], [0, 0, 1, 1], [], []>} : vector<320x128xbf16>, vector<128x128xbf16>, vector<320x128xf32> -> vector<320x128xf32>
    %93 = arith.addf %88, %92 : vector<320x128xf32>
    %c40_92 = arith.constant 40 : index
    %c0_93 = arith.constant 0 : index
    %94 = vector.load %arg8[%c40_92, %c0_93] : memref<380x128xbf16, #tpu.memory_space<vmem>>, vector<320x128xbf16>
    %c6_94 = arith.constant 6 : index
    %c0_95 = arith.constant 0 : index
    %c0_96 = arith.constant 0 : index
    %95 = vector.load %arg4[%c6_94, %c0_95, %c0_96] : memref<9x128x128xbf16, #tpu.memory_space<vmem>>, vector<1x128x128xbf16>
    %96 = vector.shape_cast %95 : vector<1x128x128xbf16> to vector<128x128xbf16>
    %cst_97 = arith.constant dense<0.000000e+00> : vector<320x128xf32>
    %97 = tpu.matmul %94, %96, %cst_97 {dimension_numbers = #tpu.dot_dimension_numbers<[1], [0], [0], [1], [0, 0, 1, 1], [], []>} : vector<320x128xbf16>, vector<128x128xbf16>, vector<320x128xf32> -> vector<320x128xf32>
    %98 = arith.addf %93, %97 : vector<320x128xf32>
    %c41_98 = arith.constant 41 : index
    %c0_99 = arith.constant 0 : index
    %99 = vector.load %arg8[%c41_98, %c0_99] : memref<380x128xbf16, #tpu.memory_space<vmem>>, vector<320x128xbf16>
    %c7_100 = arith.constant 7 : index
    %c0_101 = arith.constant 0 : index
    %c0_102 = arith.constant 0 : index
    %100 = vector.load %arg4[%c7_100, %c0_101, %c0_102] : memref<9x128x128xbf16, #tpu.memory_space<vmem>>, vector<1x128x128xbf16>
    %101 = vector.shape_cast %100 : vector<1x128x128xbf16> to vector<128x128xbf16>
    %cst_103 = arith.constant dense<0.000000e+00> : vector<320x128xf32>
    %102 = tpu.matmul %99, %101, %cst_103 {dimension_numbers = #tpu.dot_dimension_numbers<[1], [0], [0], [1], [0, 0, 1, 1], [], []>} : vector<320x128xbf16>, vector<128x128xbf16>, vector<320x128xf32> -> vector<320x128xf32>
    %103 = arith.addf %98, %102 : vector<320x128xf32>
    %c42_104 = arith.constant 42 : index
    %c0_105 = arith.constant 0 : index
    %104 = vector.load %arg8[%c42_104, %c0_105] : memref<380x128xbf16, #tpu.memory_space<vmem>>, vector<320x128xbf16>
    %c8_106 = arith.constant 8 : index
    %c0_107 = arith.constant 0 : index
    %c0_108 = arith.constant 0 : index
    %105 = vector.load %arg4[%c8_106, %c0_107, %c0_108] : memref<9x128x128xbf16, #tpu.memory_space<vmem>>, vector<1x128x128xbf16>
    %106 = vector.shape_cast %105 : vector<1x128x128xbf16> to vector<128x128xbf16>
    %cst_109 = arith.constant dense<0.000000e+00> : vector<320x128xf32>
    %107 = tpu.matmul %104, %106, %cst_109 {dimension_numbers = #tpu.dot_dimension_numbers<[1], [0], [0], [1], [0, 0, 1, 1], [], []>} : vector<320x128xbf16>, vector<128x128xbf16>, vector<320x128xf32> -> vector<320x128xf32>
    %108 = arith.addf %103, %107 : vector<320x128xf32>
    %c0_110 = arith.constant 0 : index
    %c42_111 = arith.constant 42 : index
    %c0_112 = arith.constant 0 : index
    %109 = vector.load %arg1[%c0_110, %c42_111, %c0_112] : memref<1x420x128xbf16, #tpu.memory_space<vmem>>, vector<1x320x128xbf16>
    %110 = vector.shape_cast %109 : vector<1x320x128xbf16> to vector<320x128xbf16>
    %111 = arith.extf %110 : vector<320x128xbf16> to vector<320x128xf32>
    %c0_113 = arith.constant 0 : index
    %c0_114 = arith.constant 0 : index
    %112 = vector.load %arg5[%c0_113, %c0_114] : memref<1x128xf32, #tpu.memory_space<vmem>>, vector<1x128xf32>
    %113 = vector.broadcast %112 : vector<1x128xf32> to vector<320x128xf32>
    %114 = arith.addf %108, %113 : vector<320x128xf32>
    %115 = arith.addf %114, %111 : vector<320x128xf32>
    %cst_115 = arith.constant 0.000000e+00 : f32
    %116 = vector.broadcast %cst_115 : f32 to vector<320x128xf32>
    %117 = arith.maximumf %115, %116 : vector<320x128xf32>
    %c0_116 = arith.constant 0 : index
    %c0_117 = arith.constant 0 : index
    %c0_118 = arith.constant 0 : index
    %118 = vector.load %arg7[%c0_116, %c0_117, %c0_118] : memref<1x320x128xf32, #tpu.memory_space<vmem>>, vector<1x320x128xf32>
    %119 = vector.shape_cast %118 : vector<1x320x128xf32> to vector<320x128xf32>
    %120 = vector.shape_cast %117 : vector<320x128xf32> to vector<1x320x128xf32>
    tpu.vector_store %arg7[%c0_116, %c0_117, %c0_118], %120 {strides = array<i32>} : memref<1x320x128xf32, #tpu.memory_space<vmem>>, vector<1x320x128xf32>,
    return
  }
  func.func @transform_0(%arg0: i32) -> (i32, i32, i32) {
    %c0_i32 = arith.constant 0 : i32
    %c0_i32_0 = arith.constant 0 : i32
    %c0_i32_1 = arith.constant 0 : i32
    return %arg0, %c0_i32, %c0_i32_0 : i32, i32, i32
  }
  func.func @transform_1(%arg0: i32) -> (i32, i32, i32) {
    %c0_i32 = arith.constant 0 : i32
    %c0_i32_0 = arith.constant 0 : i32
    %c0_i32_1 = arith.constant 0 : i32
    %c0_i32_2 = arith.constant 0 : i32
    return %c0_i32, %c0_i32_0, %c0_i32_1 : i32, i32, i32
  }
  func.func @transform_2(%arg0: i32) -> (i32, i32) {
    %c0_i32 = arith.constant 0 : i32
    %c0_i32_0 = arith.constant 0 : i32
    %c0_i32_1 = arith.constant 0 : i32
    return %c0_i32, %c0_i32_0 : i32, i32
  }
  func.func @transform_3(%arg0: i32) -> (i32, i32, i32) {
    %c0_i32 = arith.constant 0 : i32
    %c0_i32_0 = arith.constant 0 : i32
    %c0_i32_1 = arith.constant 0 : i32
    %c0_i32_2 = arith.constant 0 : i32
    return %c0_i32, %c0_i32_0, %c0_i32_1 : i32, i32, i32
  }
  func.func @transform_4(%arg0: i32) -> (i32, i32) {
    %c0_i32 = arith.constant 0 : i32
    %c0_i32_0 = arith.constant 0 : i32
    %c0_i32_1 = arith.constant 0 : i32
    return %c0_i32, %c0_i32_0 : i32, i32
  }
  func.func @transform_5(%arg0: i32) -> (i32, i32) {
    %c0_i32 = arith.constant 0 : i32
    %c0_i32_0 = arith.constant 0 : i32
    %c0_i32_1 = arith.constant 0 : i32
    return %c0_i32, %c0_i32_0 : i32, i32
  }
  func.func @transform_6(%arg0: i32) -> (i32, i32, i32) {
    %c0_i32 = arith.constant 0 : i32
    %c0_i32_0 = arith.constant 0 : i32
    %c0_i32_1 = arith.constant 0 : i32
    return %arg0, %c0_i32, %c0_i32_0 : i32, i32, i32
  }
}

</mosaic_0001>

<llo_original>
// kernel: tpu_custom_call.1
$region0: #{tpu_custom_call.1}
  #allocation0 [shape = 'u32[]', space=smem, size = 0x4, offset = 0x4, fixed_abs, tag = 'smem constant byte address 0x4 - core index']
  #allocation1 [shape = 'u32[144,128]{1,0:T(1,128)}', space=vmem, size = 0x12000, scoped, tag = 'internal scratch']
  #allocation2 [shape = 'bf16[380,128]{1,0:T(8,128)(2,1)}', space=vmem, size = 0x18000, scoped, tag = 'scratch operand']
  %s0 = inlined_call_operand.vmem [shape: bf16[2,420,128], index: 0, kind: input, shape index: {}]
  %s1 = inlined_call_operand.vmem [shape: bf16[9,128,128], index: 1, kind: input, shape index: {}]
  %s2 = inlined_call_operand.vmem [shape: f32[1,128], index: 2, kind: input, shape index: {}]
  %s3 = inlined_call_operand.vmem [shape: bf16[9,128,128], index: 3, kind: input, shape index: {}]
  %s4 = inlined_call_operand.vmem [shape: f32[1,128], index: 4, kind: input, shape index: {}]
  %s5 = inlined_call_operand.vmem [shape: f32[360,1], index: 5, kind: input, shape index: {}]
  %s6 = inlined_call_operand.hbm [shape: f32[2,320,128], index: 6, kind: output, shape index: {}]
  %s7 = sld [smem:[#allocation0]]
  $region57: #{tpu_custom_call.1} parent=0
    _
  %s9 = ssub.s32 1, %s7
  %s10 = scalar_select 0, %s9, %s7
  $region1: #{tpu_custom_call.1} parent=0
    #allocation3 [shape = 'u8[327680]{0}', space=vmem, size = 0x50000, scoped, tag = 'output window, operand 0']
    #allocation4 [shape = 's32[2]{0}', space=sflag, size = 0x8, scoped, tag = 'scoped memory for tpu_custom_call.1']
    %11 = vsyncpa [#allocation4], 0
    %s12 = scalar_lea.sflag [#allocation4], 1
    %13 = vsyncpa %s12, 0
    loop: start=0, step=1, limit=4
    $region2: #{tpu_custom_call.1} parent=1 // loop_pre_header
      _
    $region3: #{tpu_custom_call.1} parent=1 // loop_header
      %s15 = sphi 0, %s19
      %p16 = scmp.ge.s32.totalorder %s15, 4
      %s25 = sphi 0, %s27
      %s28 = sphi 0, %s25
      %s29 = sphi 0, %s28
      %s45 = sphi 0, %s29
      %s49 = sphi 0, %s49
      %s51 = sphi 0, %s49
      %s52 = sphi 0, %s51
      %s66 = sphi 0, %s52
      %s70 = sphi 0, %s70
      %s72 = sphi 0, %s70
      %s73 = sphi 0, %s72
      %s87 = sphi 0, %s73
      %s91 = sphi 0, %s91
      %s93 = sphi 0, %s91
      %s94 = sphi 0, %s93
      %s108 = sphi 0, %s94
      %s112 = sphi 0, %s112
      %s114 = sphi 0, %s112
      %s115 = sphi 0, %s114
      %s129 = sphi 0, %s115
      %s133 = sphi 0, %s133
      %s135 = sphi 0, %s133
      %s136 = sphi 0, %s135
      %s150 = sphi 0, %s136
      %s156 = sphi 0, %s158
      %s159 = sphi 0, %s156
      %s160 = sphi 0, %s159
      %s176 = sphi 0, %s160
    $region4: #{tpu_custom_call.1} parent=1 // loop_header_branch
      %18 = sbr.rel (%p16) target = $region8
    $region5: #{tpu_custom_call.1} parent=1 // loop_body
      %s20 = ssub.s32 %s15, 1
      %s21 = ssub.s32 %s15, 2
      %s22 = sadd.s32 %s15, 1
      %s23 = ssub.s32 %s15, %s22
      %p24 = scmp.eq.s32.totalorder %s23, 0
      %s26 = sadd.s32 %s25, 1
      %s27 = scalar_select %p24, %s25, %s26
      %p30 = pneg %p24
      %p31 = scmp.eq.s32.totalorder %s15, 1
      %p32 = por %p30, %p31
      %p33 = scmp.ne.s32.totalorder %s25, %s28
      %p34 = scmp.eq.s32.totalorder %s15, 0
      %p35 = por %p33, %p34
      %p36 = scmp.ne.s32.totalorder %s25, %s28
      %p37 = scmp.eq.s32.totalorder %s20, 1
      %p38 = por %p36, %p37
      %p39 = scmp.ne.s32.totalorder %s28, %s29
      %p40 = scmp.eq.s32.totalorder %s20, 0
      %p41 = por %p39, %p40
      %p42 = scmp.ne.s32.totalorder %s28, %s29
      %p43 = scmp.eq.s32.totalorder %s21, 1
      %p44 = por %p42, %p43
      %p46 = scmp.ne.s32.totalorder %s29, %s45
      %p47 = scmp.eq.s32.totalorder %s21, 0
      %p48 = por %p46, %p47
      %s50 = sadd.s32 %s49, 1
      %p53 = scmp.eq.s32.totalorder %s15, 1
      %p54 = scmp.ne.s32.totalorder %s49, %s51
      %p55 = scmp.eq.s32.totalorder %s15, 0
      %p56 = por %p54, %p55
      %p57 = scmp.ne.s32.totalorder %s49, %s51
      %p58 = scmp.eq.s32.totalorder %s20, 1
      %p59 = por %p57, %p58
      %p60 = scmp.ne.s32.totalorder %s51, %s52
      %p61 = scmp.eq.s32.totalorder %s20, 0
      %p62 = por %p60, %p61
      %p63 = scmp.ne.s32.totalorder %s51, %s52
      %p64 = scmp.eq.s32.totalorder %s21, 1
      %p65 = por %p63, %p64
      %p67 = scmp.ne.s32.totalorder %s52, %s66
      %p68 = scmp.eq.s32.totalorder %s21, 0
      %p69 = por %p67, %p68
      %s71 = sadd.s32 %s70, 1
      %p74 = scmp.eq.s32.totalorder %s15, 1
      %p75 = scmp.ne.s32.totalorder %s70, %s72
      %p76 = scmp.eq.s32.totalorder %s15, 0
      %p77 = por %p75, %p76
      %p78 = scmp.ne.s32.totalorder %s70, %s72
      %p79 = scmp.eq.s32.totalorder %s20, 1
      %p80 = por %p78, %p79
      %p81 = scmp.ne.s32.totalorder %s72, %s73
      %p82 = scmp.eq.s32.totalorder %s20, 0
      %p83 = por %p81, %p82
      %p84 = scmp.ne.s32.totalorder %s72, %s73
      %p85 = scmp.eq.s32.totalorder %s21, 1
      %p86 = por %p84, %p85
      %p88 = scmp.ne.s32.totalorder %s73, %s87
      %p89 = scmp.eq.s32.totalorder %s21, 0
      %p90 = por %p88, %p89
      %s92 = sadd.s32 %s91, 1
      %p95 = scmp.eq.s32.totalorder %s15, 1
      %p96 = scmp.ne.s32.totalorder %s91, %s93
      %p97 = scmp.eq.s32.totalorder %s15, 0
      %p98 = por %p96, %p97
      %p99 = scmp.ne.s32.totalorder %s91, %s93
      %p100 = scmp.eq.s32.totalorder %s20, 1
      %p101 = por %p99, %p100
      %p102 = scmp.ne.s32.totalorder %s93, %s94
      %p103 = scmp.eq.s32.totalorder %s20, 0
      %p104 = por %p102, %p103
      %p105 = scmp.ne.s32.totalorder %s93, %s94
      %p106 = scmp.eq.s32.totalorder %s21, 1
      %p107 = por %p105, %p106
      %p109 = scmp.ne.s32.totalorder %s94, %s108
      %p110 = scmp.eq.s32.totalorder %s21, 0
      %p111 = por %p109, %p110
      %s113 = sadd.s32 %s112, 1
      %p116 = scmp.eq.s32.totalorder %s15, 1
      %p117 = scmp.ne.s32.totalorder %s112, %s114
      %p118 = scmp.eq.s32.totalorder %s15, 0
      %p119 = por %p117, %p118
      %p120 = scmp.ne.s32.totalorder %s112, %s114
      %p121 = scmp.eq.s32.totalorder %s20, 1
      %p122 = por %p120, %p121
      %p123 = scmp.ne.s32.totalorder %s114, %s115
      %p124 = scmp.eq.s32.totalorder %s20, 0
      %p125 = por %p123, %p124
      %p126 = scmp.ne.s32.totalorder %s114, %s115
      %p127 = scmp.eq.s32.totalorder %s21, 1
      %p128 = por %p126, %p127
      %p130 = scmp.ne.s32.totalorder %s115, %s129
      %p131 = scmp.eq.s32.totalorder %s21, 0
      %p132 = por %p130, %p131
      %s134 = sadd.s32 %s133, 1
      %p137 = scmp.eq.s32.totalorder %s15, 1
      %p138 = scmp.ne.s32.totalorder %s133, %s135
      %p139 = scmp.eq.s32.totalorder %s15, 0
      %p140 = por %p138, %p139
      %p141 = scmp.ne.s32.totalorder %s133, %s135
      %p142 = scmp.eq.s32.totalorder %s20, 1
      %p143 = por %p141, %p142
      %p144 = scmp.ne.s32.totalorder %s135, %s136
      %p145 = scmp.eq.s32.totalorder %s20, 0
      %p146 = por %p144, %p145
      %p147 = scmp.ne.s32.totalorder %s135, %s136
      %p148 = scmp.eq.s32.totalorder %s21, 1
      %p149 = por %p147, %p148
      %p151 = scmp.ne.s32.totalorder %s136, %s150
      %p152 = scmp.eq.s32.totalorder %s21, 0
      %p153 = por %p151, %p152
      %s154 = ssub.s32 %s15, %s22
      %p155 = scmp.eq.s32.totalorder %s154, 0
      %s157 = sadd.s32 %s156, 1
      %s158 = scalar_select %p155, %s156, %s157
      %p161 = pneg %p155
      %p162 = scmp.eq.s32.totalorder %s15, 1
      %p163 = por %p161, %p162
      %p164 = scmp.ne.s32.totalorder %s156, %s159
      %p165 = scmp.eq.s32.totalorder %s15, 0
      %p166 = por %p164, %p165
      %p167 = scmp.ne.s32.totalorder %s156, %s159
      %p168 = scmp.eq.s32.totalorder %s20, 1
      %p169 = por %p167, %p168
      %p170 = scmp.ne.s32.totalorder %s159, %s160
      %p171 = scmp.eq.s32.totalorder %s20, 0
      %p172 = por %p170, %p171
      %p173 = scmp.ne.s32.totalorder %s159, %s160
      %p174 = scmp.eq.s32.totalorder %s21, 1
      %p175 = por %p173, %p174
      %p177 = scmp.ne.s32.totalorder %s160, %s176
      %p178 = scmp.eq.s32.totalorder %s21, 0
      %p179 = por %p177, %p178
      %p180 = scmp.le.s32.totalorder 1, %s15
      %p181 = scmp.lt.s32.totalorder %s15, 3
      %p182 = pnand %p180, %p181
      %p183 = pneg %p182
      // Predicated region
      $region9: #{tpu_custom_call.1} parent=5 // pred_check
        _
      $region10: #{tpu_custom_call.1} parent=5 // pred_check_branch
        %185 = sbr.rel (%p182) target = $region12
      $region11: #{tpu_custom_call.1} parent=5 // pred_region
        %s186 = ssub.s32 %s15, 1
        // Predicated region
        $region13: #{tpu_custom_call.1} parent=11 // pred_check
          %p187 = pneg %p62
        $region14: #{tpu_custom_call.1} parent=11 // pred_check_branch
          %189 = sbr.rel (%p187) target = $region16
        $region15: #{tpu_custom_call.1} parent=11 // pred_region
          _
        $region16: #{tpu_custom_call.1} parent=11 // pred_fallthru
          _
        // Predicated region
        $region17: #{tpu_custom_call.1} parent=11 // pred_check
          %p190 = pneg %p83
        $region18: #{tpu_custom_call.1} parent=11 // pred_check_branch
          %192 = sbr.rel (%p190) target = $region20
        $region19: #{tpu_custom_call.1} parent=11 // pred_region
          _
        $region20: #{tpu_custom_call.1} parent=11 // pred_fallthru
          _
        // Predicated region
        $region21: #{tpu_custom_call.1} parent=11 // pred_check
          %p193 = pneg %p104
        $region22: #{tpu_custom_call.1} parent=11 // pred_check_branch
          %195 = sbr.rel (%p193) target = $region24
        $region23: #{tpu_custom_call.1} parent=11 // pred_region
          _
        $region24: #{tpu_custom_call.1} parent=11 // pred_fallthru
          _
        // Predicated region
        $region25: #{tpu_custom_call.1} parent=11 // pred_check
          %p196 = pneg %p125
        $region26: #{tpu_custom_call.1} parent=11 // pred_check_branch
          %198 = sbr.rel (%p196) target = $region28
        $region27: #{tpu_custom_call.1} parent=11 // pred_region
          _
        $region28: #{tpu_custom_call.1} parent=11 // pred_fallthru
          _
        // Predicated region
        $region29: #{tpu_custom_call.1} parent=11 // pred_check
          %p199 = pneg %p146
        $region30: #{tpu_custom_call.1} parent=11 // pred_check_branch
          %201 = sbr.rel (%p199) target = $region32
        $region31: #{tpu_custom_call.1} parent=11 // pred_region
          _
        $region32: #{tpu_custom_call.1} parent=11 // pred_fallthru
          _
      $region12: #{tpu_custom_call.1} parent=5 // pred_fallthru
        _
      %p202 = scmp.lt.s32.totalorder %s15, 2
      // Predicated region
      $region33: #{tpu_custom_call.1} parent=5 // pred_check
        %p203 = pneg %p202
      $region34: #{tpu_custom_call.1} parent=5 // pred_check_branch
        %205 = sbr.rel (%p203) target = $region36
      $region35: #{tpu_custom_call.1} parent=5 // pred_region
        // Predicated region
        $region37: #{tpu_custom_call.1} parent=35 // pred_check
          %p206 = pneg %p35
        $region38: #{tpu_custom_call.1} parent=35 // pred_check_branch
          %208 = sbr.rel (%p206) target = $region40
        $region39: #{tpu_custom_call.1} parent=35 // pred_region
          %p209 = scmp.lt.s32.totalorder %s15, 1
          %s210 = scalar_select %p209, %s15, 1
          %s211 = smul.addr %s210, 53
          %s212 = smul.addr %s211, 4
          %s213 = scalar_lea.vmem %s0, %s212
        $region40: #{tpu_custom_call.1} parent=35 // pred_fallthru
          _
      $region36: #{tpu_custom_call.1} parent=5 // pred_fallthru
        _
      %p214 = scmp.le.s32.totalorder 1, %s15
      %p215 = scmp.lt.s32.totalorder %s15, 3
      %p216 = pnand %p214, %p215
      %p217 = pneg %p216
      // Predicated region
      $region41: #{tpu_custom_call.1} parent=5 // pred_check
        _
      $region42: #{tpu_custom_call.1} parent=5 // pred_check_branch
        %219 = sbr.rel (%p216) target = $region44
      $region43: #{tpu_custom_call.1} parent=5 // pred_region
        %s220 = ssub.s32 %s15, 1
        %p221 = scmp.lt.s32.totalorder %s20, 1
        %s222 = scalar_select %p221, %s20, 1
        %s223 = smul.addr %s222, 53
        %s224 = smul.addr %s223, 4
        %s225 = scalar_lea.vmem %s0, %s224
        %p226 = pneg %p41
        %p227 = pneg %p38
        %p228 = pneg %p62
        %p229 = pneg %p59
        %p230 = pneg %p83
        %p231 = pneg %p80
        %p232 = pneg %p104
        %p233 = pneg %p101
        %p234 = pneg %p125
        %p235 = pneg %p122
        %p236 = pneg %p146
        %p237 = pneg %p143
        %p238 = pneg %p172
        %p239 = pneg %p169
        %s240 = sand.u32 %s159, 1
        %s241 = scalar_lea.sflag [#allocation4], %s240
        %s242 = sand.u32 %s159, 1
        %s243 = smul.addr %s242, 320
        %s244 = scalar_lea.vmem [#allocation3], %s243
        %p245 = scmp.lt.s32.totalorder %s20, 1
        %s246 = scalar_select %p245, %s20, 1
        %s247 = smul.addr %s246, 53
        %s248 = smul.addr %s247, 4
        %s249 = scalar_lea.vmem %s0, %s248
        %v251 = vld [vmem:[%s249] sm:$0xf]
        %v252 = vld [vmem:[%s249 + $0x4] sm:$0xf]
        %v253 = vld [vmem:[%s249 + $0x8] sm:$0xf]
        %v254 = vld [vmem:[%s249 + $0xc] sm:$0xf]
        %v255 = vld [vmem:[%s249 + $0x10] sm:$0xf]
        %v256 = vld [vmem:[%s249 + $0x14] sm:$0xf]
        %v257 = vld [vmem:[%s249 + $0x18] sm:$0xf]
        %v258 = vld [vmem:[%s249 + $0x1c] sm:$0xf]
        %v259 = vld [vmem:[%s249 + $0x20] sm:$0xf]
        %v260 = vld [vmem:[%s249 + $0x24] sm:$0xf]
        %v261 = vld [vmem:[%s249 + $0x28] sm:$0xf]
        %v262 = vld [vmem:[%s249 + $0x2c] sm:$0xf]
        %v263 = vld [vmem:[%s249 + $0x30] sm:$0xf]
        %v264 = vld [vmem:[%s249 + $0x34] sm:$0xf]
        %v265 = vld [vmem:[%s249 + $0x38] sm:$0xf]
        %v266 = vld [vmem:[%s249 + $0x3c] sm:$0xf]
        %v267 = vld [vmem:[%s249 + $0x40] sm:$0xf]
        %v268 = vld [vmem:[%s249 + $0x44] sm:$0xf]
        %v269 = vld [vmem:[%s249 + $0x48] sm:$0xf]
        %v270 = vld [vmem:[%s249 + $0x4c] sm:$0xf]
        %v271 = vld [vmem:[%s249 + $0x50] sm:$0xf]
        %v272 = vld [vmem:[%s249 + $0x54] sm:$0xf]
        %v273 = vld [vmem:[%s249 + $0x58] sm:$0xf]
        %v274 = vld [vmem:[%s249 + $0x5c] sm:$0xf]
        %v275 = vld [vmem:[%s249 + $0x60] sm:$0xf]
        %v276 = vld [vmem:[%s249 + $0x64] sm:$0xf]
        %v277 = vld [vmem:[%s249 + $0x68] sm:$0xf]
        %v278 = vld [vmem:[%s249 + $0x6c] sm:$0xf]
        %v279 = vld [vmem:[%s249 + $0x70] sm:$0xf]
        %v280 = vld [vmem:[%s249 + $0x74] sm:$0xf]
        %v281 = vld [vmem:[%s249 + $0x78] sm:$0xf]
        %v282 = vld [vmem:[%s249 + $0x7c] sm:$0xf]
        %v283 = vld [vmem:[%s249 + $0x80] sm:$0xf]
        %v284 = vld [vmem:[%s249 + $0x84] sm:$0xf]
        %v285 = vld [vmem:[%s249 + $0x88] sm:$0xf]
        %v286 = vld [vmem:[%s249 + $0x8c] sm:$0xf]
        %v287 = vld [vmem:[%s249 + $0x90] sm:$0xf]
        %v288 = vld [vmem:[%s249 + $0x94] sm:$0xf]
        %v289 = vld [vmem:[%s249 + $0x98] sm:$0xf]
        %v290 = vld [vmem:[%s249 + $0x9c] sm:$0xf]
        %v291 = vld [vmem:[%s249 + $0xa0] sm:$0xf]
        %v292 = vld [vmem:[%s249 + $0xa4] sm:$0xf]
        %v293 = vld [vmem:[%s249 + $0xa8] sm:$0xf]
        %v294 = vld [vmem:[%s249 + $0xac] sm:$0xf]
        %v295 = vld [vmem:[%s249 + $0xb0] sm:$0xf]
        %v296 = vld [vmem:[%s1] sm:$0xf]
        %v297 = vld [vmem:[%s1 + $0x4] sm:$0xf]
        %v298 = vld [vmem:[%s1 + $0x8] sm:$0xf]
        %v299 = vld [vmem:[%s1 + $0xc] sm:$0xf]
        %v300 = vld [vmem:[%s1 + $0x10] sm:$0xf]
        %v301 = vld [vmem:[%s1 + $0x14] sm:$0xf]
        %v302 = vld [vmem:[%s1 + $0x18] sm:$0xf]
        %v303 = vld [vmem:[%s1 + $0x1c] sm:$0xf]
        %v304 = vld [vmem:[%s1 + $0x20] sm:$0xf]
        %v305 = vld [vmem:[%s1 + $0x24] sm:$0xf]
        %v306 = vld [vmem:[%s1 + $0x28] sm:$0xf]
        %v307 = vld [vmem:[%s1 + $0x2c] sm:$0xf]
        %v308 = vld [vmem:[%s1 + $0x30] sm:$0xf]
        %v309 = vld [vmem:[%s1 + $0x34] sm:$0xf]
        %v310 = vld [vmem:[%s1 + $0x38] sm:$0xf]
        %v311 = vld [vmem:[%s1 + $0x3c] sm:$0xf]
        %v312 = vld [vmem:[%s249 + $0xb4] sm:$0x1]
        %s313 = scalar_lea.vmem %s1, 64
        %v314 = vld [vmem:[%s313] sm:$0xf]
        %v315 = vld [vmem:[%s313 + $0x4] sm:$0xf]
        %v316 = vld [vmem:[%s313 + $0x8] sm:$0xf]
        %v317 = vld [vmem:[%s313 + $0xc] sm:$0xf]
        %v318 = vld [vmem:[%s313 + $0x10] sm:$0xf]
        %v319 = vld [vmem:[%s313 + $0x14] sm:$0xf]
        %v320 = vld [vmem:[%s313 + $0x18] sm:$0xf]
        %v321 = vld [vmem:[%s313 + $0x1c] sm:$0xf]
        %v322 = vld [vmem:[%s313 + $0x20] sm:$0xf]
        %v323 = vld [vmem:[%s313 + $0x24] sm:$0xf]
        %v324 = vld [vmem:[%s313 + $0x28] sm:$0xf]
        %v325 = vld [vmem:[%s313 + $0x2c] sm:$0xf]
        %v326 = vld [vmem:[%s313 + $0x30] sm:$0xf]
        %v327 = vld [vmem:[%s313 + $0x34] sm:$0xf]
        %v328 = vld [vmem:[%s313 + $0x38] sm:$0xf]
        %v329 = vld [vmem:[%s313 + $0x3c] sm:$0xf]
        %v376 = vunpack.c.l.b16 %v251
        %v377 = vunpack.c.l.b16 %v252
        %v378 = vunpack.c.l.b16 %v253
        %v379 = vunpack.c.l.b16 %v254
        %v380 = vunpack.c.l.b16 %v255
        %v381 = vunpack.c.l.b16 %v256
        %v382 = vunpack.c.l.b16 %v257
        %v383 = vunpack.c.l.b16 %v258
        %v384 = vunpack.c.l.b16 %v259
        %v385 = vunpack.c.l.b16 %v260
        %v386 = vunpack.c.l.b16 %v261
        %v387 = vunpack.c.l.b16 %v262
        %v388 = vunpack.c.l.b16 %v263
        %v389 = vunpack.c.l.b16 %v264
        %v390 = vunpack.c.l.b16 %v265
        %v391 = vunpack.c.l.b16 %v266
        %v392 = vunpack.c.l.b16 %v267
        %v393 = vunpack.c.l.b16 %v268
        %v394 = vunpack.c.l.b16 %v269
        %v395 = vunpack.c.l.b16 %v270
        %v396 = vunpack.c.l.b16 %v271
        %v397 = vunpack.c.l.b16 %v272
        %v398 = vunpack.c.l.b16 %v273
        %v399 = vunpack.c.l.b16 %v274
        %v400 = vunpack.c.l.b16 %v275
        %v401 = vunpack.c.l.b16 %v276
        %v402 = vunpack.c.l.b16 %v277
        %v403 = vunpack.c.l.b16 %v278
        %v404 = vunpack.c.l.b16 %v279
        %v405 = vunpack.c.l.b16 %v280
        %v406 = vunpack.c.l.b16 %v281
        %v407 = vunpack.c.l.b16 %v282
        %v408 = vunpack.c.l.b16 %v283
        %v409 = vunpack.c.l.b16 %v284
        %v410 = vunpack.c.l.b16 %v285
        %v411 = vunpack.c.l.b16 %v286
        %v412 = vunpack.c.l.b16 %v287
        %v413 = vunpack.c.l.b16 %v288
        %v414 = vunpack.c.l.b16 %v289
        %v415 = vunpack.c.l.b16 %v290
        %v416 = vunpack.c.l.b16 %v291
        %v417 = vunpack.c.l.b16 %v292
        %v418 = vunpack.c.l.b16 %v293
        %v419 = vunpack.c.l.b16 %v294
        %v420 = vunpack.c.l.b16 %v295
        %v421 = vunpack.c.l.b16 %v312
        %v422 = vpack.c.b16 %v377, %v376
        %v423 = vpack.c.b16 %v379, %v378
        %v424 = vpack.c.b16 %v381, %v380
        %v425 = vpack.c.b16 %v383, %v382
        %v426 = vpack.c.b16 %v385, %v384
        %v427 = vpack.c.b16 %v387, %v386
        %v428 = vpack.c.b16 %v389, %v388
        %v429 = vpack.c.b16 %v391, %v390
        %v430 = vpack.c.b16 %v393, %v392
        %v431 = vpack.c.b16 %v395, %v394
        %v432 = vpack.c.b16 %v397, %v396
        %v433 = vpack.c.b16 %v399, %v398
        %v434 = vpack.c.b16 %v401, %v400
        %v435 = vpack.c.b16 %v403, %v402
        %v436 = vpack.c.b16 %v405, %v404
        %v437 = vpack.c.b16 %v407, %v406
        %v438 = vpack.c.b16 %v409, %v408
        %v439 = vpack.c.b16 %v411, %v410
        %v440 = vpack.c.b16 %v413, %v412
        %v441 = vpack.c.b16 %v415, %v414
        %v442 = vpack.c.b16 %v417, %v416
        %v443 = vpack.c.b16 %v419, %v418
        %v444 = vpack.c.b16 %v421, %v420
        %vm445 = vsmask.f32 7424
        %v447 = vshrl.u32 %v422, 16
        %v449 = vshll.u32 %v422, 16
        %v451 = vrot.slane %v449, 1
        %v452 = vor.u32 %v447, %v451
        %v454 = vshll.u32 %v423, 16
        %v456 = vrot.slane %v454, 1
        %v457 = vsel %vm445, %v452, %v456
        %v458 = vshrl.u32 %v423, 16
        %v460 = vor.u32 %v458, %v456
        %v462 = vshll.u32 %v424, 16
        %v464 = vrot.slane %v462, 1
        %v465 = vsel %vm445, %v460, %v464
        %v466 = vshrl.u32 %v424, 16
        %v468 = vor.u32 %v466, %v464
        %v470 = vshll.u32 %v425, 16
        %v472 = vrot.slane %v470, 1
        %v473 = vsel %vm445, %v468, %v472
        %v474 = vshrl.u32 %v425, 16
        %v476 = vor.u32 %v474, %v472
        %v478 = vshll.u32 %v426, 16
        %v480 = vrot.slane %v478, 1
        %v481 = vsel %vm445, %v476, %v480
        %v482 = vshrl.u32 %v426, 16
        %v484 = vor.u32 %v482, %v480
        %v486 = vshll.u32 %v427, 16
        %v488 = vrot.slane %v486, 1
        %v489 = vsel %vm445, %v484, %v488
        %v490 = vshrl.u32 %v427, 16
        %v492 = vor.u32 %v490, %v488
        %v494 = vshll.u32 %v428, 16
        %v496 = vrot.slane %v494, 1
        %v497 = vsel %vm445, %v492, %v496
        %v498 = vshrl.u32 %v428, 16
        %v500 = vor.u32 %v498, %v496
        %v502 = vshll.u32 %v429, 16
        %v504 = vrot.slane %v502, 1
        %v505 = vsel %vm445, %v500, %v504
        %v506 = vshrl.u32 %v429, 16
        %v508 = vor.u32 %v506, %v504
        %v510 = vshll.u32 %v430, 16
        %v512 = vrot.slane %v510, 1
        %v513 = vsel %vm445, %v508, %v512
        %v514 = vshrl.u32 %v430, 16
        %v516 = vor.u32 %v514, %v512
        %v518 = vshll.u32 %v431, 16
        %v520 = vrot.slane %v518, 1
        %v521 = vsel %vm445, %v516, %v520
        %v522 = vshrl.u32 %v431, 16
        %v524 = vor.u32 %v522, %v520
        %v526 = vshll.u32 %v432, 16
        %v528 = vrot.slane %v526, 1
        %v529 = vsel %vm445, %v524, %v528
        %v530 = vshrl.u32 %v432, 16
        %v532 = vor.u32 %v530, %v528
        %v534 = vshll.u32 %v433, 16
        %v536 = vrot.slane %v534, 1
        %v537 = vsel %vm445, %v532, %v536
        %v538 = vshrl.u32 %v433, 16
        %v540 = vor.u32 %v538, %v536
        %v542 = vshll.u32 %v434, 16
        %v544 = vrot.slane %v542, 1
        %v545 = vsel %vm445, %v540, %v544
        %v546 = vshrl.u32 %v434, 16
        %v548 = vor.u32 %v546, %v544
        %v550 = vshll.u32 %v435, 16
        %v552 = vrot.slane %v550, 1
        %v553 = vsel %vm445, %v548, %v552
        %v554 = vshrl.u32 %v435, 16
        %v556 = vor.u32 %v554, %v552
        %v558 = vshll.u32 %v436, 16
        %v560 = vrot.slane %v558, 1
        %v561 = vsel %vm445, %v556, %v560
        %v562 = vshrl.u32 %v436, 16
        %v564 = vor.u32 %v562, %v560
        %v566 = vshll.u32 %v437, 16
        %v568 = vrot.slane %v566, 1
        %v569 = vsel %vm445, %v564, %v568
        %v570 = vshrl.u32 %v437, 16
        %v572 = vor.u32 %v570, %v568
        %v574 = vshll.u32 %v438, 16
        %v576 = vrot.slane %v574, 1
        %v577 = vsel %vm445, %v572, %v576
        %v578 = vshrl.u32 %v438, 16
        %v580 = vor.u32 %v578, %v576
        %v582 = vshll.u32 %v439, 16
        %v584 = vrot.slane %v582, 1
        %v585 = vsel %vm445, %v580, %v584
        %v586 = vshrl.u32 %v439, 16
        %v588 = vor.u32 %v586, %v584
        %v590 = vshll.u32 %v440, 16
        %v592 = vrot.slane %v590, 1
        %v593 = vsel %vm445, %v588, %v592
        %v594 = vshrl.u32 %v440, 16
        %v596 = vor.u32 %v594, %v592
        %v598 = vshll.u32 %v441, 16
        %v600 = vrot.slane %v598, 1
        %v601 = vsel %vm445, %v596, %v600
        %v602 = vshrl.u32 %v441, 16
        %v604 = vor.u32 %v602, %v600
        %v606 = vshll.u32 %v442, 16
        %v608 = vrot.slane %v606, 1
        %v609 = vsel %vm445, %v604, %v608
        %v610 = vshrl.u32 %v442, 16
        %v612 = vor.u32 %v610, %v608
        %v614 = vshll.u32 %v443, 16
        %v616 = vrot.slane %v614, 1
        %v617 = vsel %vm445, %v612, %v616
        %v618 = vshrl.u32 %v443, 16
        %v620 = vor.u32 %v618, %v616
        %v622 = vshll.u32 %v444, 16
        %v624 = vrot.slane %v622, 1
        %v625 = vsel %vm445, %v620, %v624
        %v626 = vshrl.u32 %v444, 16
        %v628 = vor.u32 %v626, %v624
        %v668 = vunpack.c.l.b16 %v314
        %v669 = vunpack.c.l.b16 %v315
        %v670 = vunpack.c.l.b16 %v316
        %v671 = vunpack.c.l.b16 %v317
        %v672 = vunpack.c.l.b16 %v318
        %v673 = vunpack.c.l.b16 %v319
        %v674 = vunpack.c.l.b16 %v320
        %v675 = vunpack.c.l.b16 %v321
        %v676 = vunpack.c.l.b16 %v322
        %v677 = vunpack.c.l.b16 %v323
        %v678 = vunpack.c.l.b16 %v324
        %v679 = vunpack.c.l.b16 %v325
        %v680 = vunpack.c.l.b16 %v326
        %v681 = vunpack.c.l.b16 %v327
        %v682 = vunpack.c.l.b16 %v328
        %v683 = vunpack.c.l.b16 %v329
        %v684 = vpack.c.b16 %v669, %v668
        %v685 = vpack.c.b16 %v671, %v670
        %v686 = vpack.c.b16 %v673, %v672
        %v687 = vpack.c.b16 %v675, %v674
        %v688 = vpack.c.b16 %v677, %v676
        %v689 = vpack.c.b16 %v679, %v678
        %v690 = vpack.c.b16 %v681, %v680
        %v691 = vpack.c.b16 %v683, %v682
        %700 = vmatprep.subr.bf16.mxu0 0
        %701 = vmatpush1.bf16.msra.mxu0 %v691
        %702 = vmatprep.subr.bf16.mxu0 0
        %703 = vmatpush1.bf16.msra.mxu0 %v690
        %704 = vmatprep.subr.bf16.mxu0 0
        %705 = vmatpush1.bf16.msra.mxu0 %v689
        %706 = vmatprep.subr.bf16.mxu0 0
        %707 = vmatpush1.bf16.msra.mxu0 %v688
        %708 = vmatprep.subr.bf16.mxu0 0
        %709 = vmatpush1.bf16.msra.mxu0 %v687
        %710 = vmatprep.subr.bf16.mxu0 0
        %711 = vmatpush1.bf16.msra.mxu0 %v686
        %712 = vmatprep.subr.bf16.mxu0 0
        %713 = vmatpush1.bf16.msra.mxu0 %v685
        %714 = vmatprep.subr.bf16.mxu0 0
        %715 = vmatpush1.bf16.msra.mxu0 %v684
        %716 = vmatprep.subr.bf16.mxu0 0
        %717 = vmatpush2.bf16.msra.mxu0 0
        %718 = vmatprep.subr.bf16.mxu0 0
        %719 = vmatpush2.bf16.msra.mxu0 0
        %720 = vmatprep.subr.bf16.mxu0 0
        %721 = vmatpush2.bf16.msra.mxu0 0
        %722 = vmatprep.subr.bf16.mxu0 0
        %723 = vmatpush2.bf16.msra.mxu0 0
        %724 = vmatprep.subr.bf16.mxu0 0
        %725 = vmatpush2.bf16.msra.mxu0 0
        %726 = vmatprep.subr.bf16.mxu0 0
        %727 = vmatpush2.bf16.msra.mxu0 0
        %728 = vmatprep.subr.bf16.mxu0 0
        %729 = vmatpush2.bf16.msra.mxu0 0
        %730 = vmatprep.subr.bf16.mxu0 0
        %731 = vmatpush2.bf16.msra.mxu0 0
        %732 = vmatprep.mubr.bf16.mxu0 0
        %733 = vmatmul.mubr.bf16.gmra.mxu0 %v457
        %v734 = vpop.f32.mrf.mxu0
        %v735 = vadd.f32 0.0, %v734
        %v736 = vpop.f32.mrf.mxu0
        %v737 = vpop.f32.mrf.mxu0
        %v738 = vadd.f32 0.0, %v737
        %v739 = vpop.f32.mrf.mxu0
        %740 = vmatprep.mubr.bf16.mxu0 0
        %741 = vmatmul.mubr.bf16.gmra.mxu0 %v465
        %v742 = vpop.f32.mrf.mxu0
        %v743 = vadd.f32 0.0, %v742
        %v744 = vpop.f32.mrf.mxu0
        %v745 = vpop.f32.mrf.mxu0
        %v746 = vadd.f32 0.0, %v745
        %v747 = vpop.f32.mrf.mxu0
        %748 = vmatprep.mubr.bf16.mxu0 0
        %749 = vmatmul.mubr.bf16.gmra.mxu0 %v473
        %v750 = vpop.f32.mrf.mxu0
        %v751 = vadd.f32 0.0, %v750
        %v752 = vpop.f32.mrf.mxu0
        %v753 = vpop.f32.mrf.mxu0
        %v754 = vadd.f32 0.0, %v753
        %v755 = vpop.f32.mrf.mxu0
        %756 = vmatprep.mubr.bf16.mxu0 0
        %757 = vmatmul.mubr.bf16.gmra.mxu0 %v481
        %v758 = vpop.f32.mrf.mxu0
        %v759 = vadd.f32 0.0, %v758
        %v760 = vpop.f32.mrf.mxu0
        %v761 = vpop.f32.mrf.mxu0
        %v762 = vadd.f32 0.0, %v761
        %v763 = vpop.f32.mrf.mxu0
        %764 = vmatprep.mubr.bf16.mxu0 0
        %765 = vmatmul.mubr.bf16.gmra.mxu0 %v489
        %v766 = vpop.f32.mrf.mxu0
        %v767 = vadd.f32 0.0, %v766
        %v768 = vpop.f32.mrf.mxu0
        %v769 = vpop.f32.mrf.mxu0
        %v770 = vadd.f32 0.0, %v769
        %v771 = vpop.f32.mrf.mxu0
        %772 = vmatprep.mubr.bf16.mxu0 0
        %773 = vmatmul.mubr.bf16.gmra.mxu0 %v497
        %v774 = vpop.f32.mrf.mxu0
        %v775 = vadd.f32 0.0, %v774
        %v776 = vpop.f32.mrf.mxu0
        %v777 = vpop.f32.mrf.mxu0
        %v778 = vadd.f32 0.0, %v777
        %v779 = vpop.f32.mrf.mxu0
        %780 = vmatprep.mubr.bf16.mxu0 0
        %781 = vmatmul.mubr.bf16.gmra.mxu0 %v505
        %v782 = vpop.f32.mrf.mxu0
        %v783 = vadd.f32 0.0, %v782
        %v784 = vpop.f32.mrf.mxu0
        %v785 = vpop.f32.mrf.mxu0
        %v786 = vadd.f32 0.0, %v785
        %v787 = vpop.f32.mrf.mxu0
        %788 = vmatprep.mubr.bf16.mxu0 0
        %789 = vmatmul.mubr.bf16.gmra.mxu0 %v513
        %v790 = vpop.f32.mrf.mxu0
        %v791 = vadd.f32 0.0, %v790
        %v792 = vpop.f32.mrf.mxu0
        %v793 = vpop.f32.mrf.mxu0
        %v794 = vadd.f32 0.0, %v793
        %v795 = vpop.f32.mrf.mxu0
        %796 = vmatprep.mubr.bf16.mxu0 0
        %797 = vmatmul.mubr.bf16.gmra.mxu0 %v521
        %v798 = vpop.f32.mrf.mxu0
        %v799 = vadd.f32 0.0, %v798
        %v800 = vpop.f32.mrf.mxu0
        %v801 = vpop.f32.mrf.mxu0
        %v802 = vadd.f32 0.0, %v801
        %v803 = vpop.f32.mrf.mxu0
        %804 = vmatprep.mubr.bf16.mxu0 0
        %805 = vmatmul.mubr.bf16.gmra.mxu0 %v529
        %v806 = vpop.f32.mrf.mxu0
        %v807 = vadd.f32 0.0, %v806
        %v808 = vpop.f32.mrf.mxu0
        %v809 = vpop.f32.mrf.mxu0
        %v810 = vadd.f32 0.0, %v809
        %v811 = vpop.f32.mrf.mxu0
        %812 = vmatprep.mubr.bf16.mxu0 0
        %813 = vmatmul.mubr.bf16.gmra.mxu0 %v537
        %v814 = vpop.f32.mrf.mxu0
        %v815 = vadd.f32 0.0, %v814
        %v816 = vpop.f32.mrf.mxu0
        %v817 = vpop.f32.mrf.mxu0
        %v818 = vadd.f32 0.0, %v817
        %v819 = vpop.f32.mrf.mxu0
        %820 = vmatprep.mubr.bf16.mxu0 0
        %821 = vmatmul.mubr.bf16.gmra.mxu0 %v545
        %v822 = vpop.f32.mrf.mxu0
        %v823 = vadd.f32 0.0, %v822
        %v824 = vpop.f32.mrf.mxu0
        %v825 = vpop.f32.mrf.mxu0
        %v826 = vadd.f32 0.0, %v825
        %v827 = vpop.f32.mrf.mxu0
        %828 = vmatprep.mubr.bf16.mxu0 0
        %829 = vmatmul.mubr.bf16.gmra.mxu0 %v553
        %v830 = vpop.f32.mrf.mxu0
        %v831 = vadd.f32 0.0, %v830
        %v832 = vpop.f32.mrf.mxu0
        %v833 = vpop.f32.mrf.mxu0
        %v834 = vadd.f32 0.0, %v833
        %v835 = vpop.f32.mrf.mxu0
        %836 = vmatprep.mubr.bf16.mxu0 0
        %837 = vmatmul.mubr.bf16.gmra.mxu0 %v561
        %v838 = vpop.f32.mrf.mxu0
        %v839 = vadd.f32 0.0, %v838
        %v840 = vpop.f32.mrf.mxu0
        %v841 = vpop.f32.mrf.mxu0
        %v842 = vadd.f32 0.0, %v841
        %v843 = vpop.f32.mrf.mxu0
        %844 = vmatprep.mubr.bf16.mxu0 0
        %845 = vmatmul.mubr.bf16.gmra.mxu0 %v569
        %v846 = vpop.f32.mrf.mxu0
        %v847 = vadd.f32 0.0, %v846
        %v848 = vpop.f32.mrf.mxu0
        %v849 = vpop.f32.mrf.mxu0
        %v850 = vadd.f32 0.0, %v849
        %v851 = vpop.f32.mrf.mxu0
        %852 = vmatprep.mubr.bf16.mxu0 0
        %853 = vmatmul.mubr.bf16.gmra.mxu0 %v577
        %v854 = vpop.f32.mrf.mxu0
        %v855 = vadd.f32 0.0, %v854
        %v856 = vpop.f32.mrf.mxu0
        %v857 = vpop.f32.mrf.mxu0
        %v858 = vadd.f32 0.0, %v857
        %v859 = vpop.f32.mrf.mxu0
        %860 = vmatprep.mubr.bf16.mxu0 0
        %861 = vmatmul.mubr.bf16.gmra.mxu0 %v585
        %v862 = vpop.f32.mrf.mxu0
        %v863 = vadd.f32 0.0, %v862
        %v864 = vpop.f32.mrf.mxu0
        %v865 = vpop.f32.mrf.mxu0
        %v866 = vadd.f32 0.0, %v865
        %v867 = vpop.f32.mrf.mxu0
        %868 = vmatprep.mubr.bf16.mxu0 0
        %869 = vmatmul.mubr.bf16.gmra.mxu0 %v593
        %v870 = vpop.f32.mrf.mxu0
        %v871 = vadd.f32 0.0, %v870
        %v872 = vpop.f32.mrf.mxu0
        %v873 = vpop.f32.mrf.mxu0
        %v874 = vadd.f32 0.0, %v873
        %v875 = vpop.f32.mrf.mxu0
        %876 = vmatprep.mubr.bf16.mxu0 0
        %877 = vmatmul.mubr.bf16.gmra.mxu0 %v601
        %v878 = vpop.f32.mrf.mxu0
        %v879 = vadd.f32 0.0, %v878
        %v880 = vpop.f32.mrf.mxu0
        %v881 = vpop.f32.mrf.mxu0
        %v882 = vadd.f32 0.0, %v881
        %v883 = vpop.f32.mrf.mxu0
        %884 = vmatprep.mubr.bf16.mxu0 0
        %885 = vmatmul.mubr.bf16.gmra.mxu0 %v609
        %v886 = vpop.f32.mrf.mxu0
        %v887 = vadd.f32 0.0, %v886
        %v888 = vpop.f32.mrf.mxu0
        %v889 = vpop.f32.mrf.mxu0
        %v890 = vadd.f32 0.0, %v889
        %v891 = vpop.f32.mrf.mxu0
        %892 = vmatprep.mubr.bf16.mxu0 0
        %893 = vmatmul.mubr.bf16.gmra.mxu0 %v617
        %v894 = vpop.f32.mrf.mxu0
        %v895 = vadd.f32 0.0, %v894
        %v896 = vpop.f32.mrf.mxu0
        %v897 = vpop.f32.mrf.mxu0
        %v898 = vadd.f32 0.0, %v897
        %v899 = vpop.f32.mrf.mxu0
        %900 = vmatprep.mubr.bf16.mxu0 0
        %901 = vmatmul.mubr.bf16.gmra.mxu0 %v625
        %v902 = vpop.f32.mrf.mxu0
        %v903 = vadd.f32 0.0, %v902
        %v904 = vpop.f32.mrf.mxu0
        %v905 = vpop.f32.mrf.mxu0
        %v906 = vadd.f32 0.0, %v905
        %v907 = vpop.f32.mrf.mxu0
        %908 = vmatprep.mubr.bf16.mxu0 0
        %909 = vmatmul.mubr.bf16.gmra.mxu0 %v628
        %v910 = vpop.f32.mrf.mxu0
        %v911 = vadd.f32 0.0, %v910
        %v912 = vpop.f32.mrf.mxu0
        %v913 = vpop.f32.mrf.mxu0
        %v914 = vpop.f32.mrf.mxu0
        %915 = vdwg.mxu0
        %v916 = vpack.c.b16 %v420, %v420
        %v956 = vunpack.c.l.b16 %v296
        %v957 = vunpack.c.l.b16 %v297
        %v958 = vunpack.c.l.b16 %v298
        %v959 = vunpack.c.l.b16 %v299
        %v960 = vunpack.c.l.b16 %v300
        %v961 = vunpack.c.l.b16 %v301
        %v962 = vunpack.c.l.b16 %v302
        %v963 = vunpack.c.l.b16 %v303
        %v964 = vunpack.c.l.b16 %v304
        %v965 = vunpack.c.l.b16 %v305
        %v966 = vunpack.c.l.b16 %v306
        %v967 = vunpack.c.l.b16 %v307
        %v968 = vunpack.c.l.b16 %v308
        %v969 = vunpack.c.l.b16 %v309
        %v970 = vunpack.c.l.b16 %v310
        %v971 = vunpack.c.l.b16 %v311
        %v972 = vpack.c.b16 %v957, %v956
        %v973 = vpack.c.b16 %v959, %v958
        %v974 = vpack.c.b16 %v961, %v960
        %v975 = vpack.c.b16 %v963, %v962
        %v976 = vpack.c.b16 %v965, %v964
        %v977 = vpack.c.b16 %v967, %v966
        %v978 = vpack.c.b16 %v969, %v968
        %v979 = vpack.c.b16 %v971, %v970
        %988 = vmatprep.subr.bf16.mxu0 0
        %989 = vmatpush1.bf16.msra.mxu0 %v979
        %990 = vmatprep.subr.bf16.mxu0 0
        %991 = vmatpush1.bf16.msra.mxu0 %v978
        %992 = vmatprep.subr.bf16.mxu0 0
        %993 = vmatpush1.bf16.msra.mxu0 %v977
        %994 = vmatprep.subr.bf16.mxu0 0
        %995 = vmatpush1.bf16.msra.mxu0 %v976
        %996 = vmatprep.subr.bf16.mxu0 0
        %997 = vmatpush1.bf16.msra.mxu0 %v975
        %998 = vmatprep.subr.bf16.mxu0 0
        %999 = vmatpush1.bf16.msra.mxu0 %v974
        %1000 = vmatprep.subr.bf16.mxu0 0
        %1001 = vmatpush1.bf16.msra.mxu0 %v973
        %1002 = vmatprep.subr.bf16.mxu0 0
        %1003 = vmatpush1.bf16.msra.mxu0 %v972
        %1004 = vmatprep.subr.bf16.mxu0 0
        %1005 = vmatpush2.bf16.msra.mxu0 0
        %1006 = vmatprep.subr.bf16.mxu0 0
        %1007 = vmatpush2.bf16.msra.mxu0 0
        %1008 = vmatprep.subr.bf16.mxu0 0
        %1009 = vmatpush2.bf16.msra.mxu0 0
        %1010 = vmatprep.subr.bf16.mxu0 0
        %1011 = vmatpush2.bf16.msra.mxu0 0
        %1012 = vmatprep.subr.bf16.mxu0 0
        %1013 = vmatpush2.bf16.msra.mxu0 0
        %1014 = vmatprep.subr.bf16.mxu0 0
        %1015 = vmatpush2.bf16.msra.mxu0 0
        %1016 = vmatprep.subr.bf16.mxu0 0
        %1017 = vmatpush2.bf16.msra.mxu0 0
        %1018 = vmatprep.subr.bf16.mxu0 0
        %1019 = vmatpush2.bf16.msra.mxu0 0
        %1020 = vmatprep.mubr.bf16.mxu0 0
        %1021 = vmatmul.mubr.bf16.gmra.mxu0 %v422
        %v1022 = vpop.f32.mrf.mxu0
        %v1023 = vadd.f32 %v735, %v1022
        %v1024 = vpop.f32.mrf.mxu0
        %v1025 = vpop.f32.mrf.mxu0
        %v1026 = vadd.f32 %v738, %v1025
        %v1027 = vpop.f32.mrf.mxu0
        %1028 = vmatprep.mubr.bf16.mxu0 0
        %1029 = vmatmul.mubr.bf16.gmra.mxu0 %v423
        %v1030 = vpop.f32.mrf.mxu0
        %v1031 = vadd.f32 %v743, %v1030
        %v1032 = vpop.f32.mrf.mxu0
        %v1033 = vpop.f32.mrf.mxu0
        %v1034 = vadd.f32 %v746, %v1033
        %v1035 = vpop.f32.mrf.mxu0
        %1036 = vmatprep.mubr.bf16.mxu0 0
        %1037 = vmatmul.mubr.bf16.gmra.mxu0 %v424
        %v1038 = vpop.f32.mrf.mxu0
        %v1039 = vadd.f32 %v751, %v1038
        %v1040 = vpop.f32.mrf.mxu0
        %v1041 = vpop.f32.mrf.mxu0
        %v1042 = vadd.f32 %v754, %v1041
        %v1043 = vpop.f32.mrf.mxu0
        %1044 = vmatprep.mubr.bf16.mxu0 0
        %1045 = vmatmul.mubr.bf16.gmra.mxu0 %v425
        %v1046 = vpop.f32.mrf.mxu0
        %v1047 = vadd.f32 %v759, %v1046
        %v1048 = vpop.f32.mrf.mxu0
        %v1049 = vpop.f32.mrf.mxu0
        %v1050 = vadd.f32 %v762, %v1049
        %v1051 = vpop.f32.mrf.mxu0
        %1052 = vmatprep.mubr.bf16.mxu0 0
        %1053 = vmatmul.mubr.bf16.gmra.mxu0 %v426
        %v1054 = vpop.f32.mrf.mxu0
        %v1055 = vadd.f32 %v767, %v1054
        %v1056 = vpop.f32.mrf.mxu0
        %v1057 = vpop.f32.mrf.mxu0
        %v1058 = vadd.f32 %v770, %v1057
        %v1059 = vpop.f32.mrf.mxu0
        %1060 = vmatprep.mubr.bf16.mxu0 0
        %1061 = vmatmul.mubr.bf16.gmra.mxu0 %v427
        %v1062 = vpop.f32.mrf.mxu0
        %v1063 = vadd.f32 %v775, %v1062
        %v1064 = vpop.f32.mrf.mxu0
        %v1065 = vpop.f32.mrf.mxu0
        %v1066 = vadd.f32 %v778, %v1065
        %v1067 = vpop.f32.mrf.mxu0
        %1068 = vmatprep.mubr.bf16.mxu0 0
        %1069 = vmatmul.mubr.bf16.gmra.mxu0 %v428
        %v1070 = vpop.f32.mrf.mxu0
        %v1071 = vadd.f32 %v783, %v1070
        %v1072 = vpop.f32.mrf.mxu0
        %v1073 = vpop.f32.mrf.mxu0
        %v1074 = vadd.f32 %v786, %v1073
        %v1075 = vpop.f32.mrf.mxu0
        %1076 = vmatprep.mubr.bf16.mxu0 0
        %1077 = vmatmul.mubr.bf16.gmra.mxu0 %v429
        %v1078 = vpop.f32.mrf.mxu0
        %v1079 = vadd.f32 %v791, %v1078
        %v1080 = vpop.f32.mrf.mxu0
        %v1081 = vpop.f32.mrf.mxu0
        %v1082 = vadd.f32 %v794, %v1081
        %v1083 = vpop.f32.mrf.mxu0
        %1084 = vmatprep.mubr.bf16.mxu0 0
        %1085 = vmatmul.mubr.bf16.gmra.mxu0 %v430
        %v1086 = vpop.f32.mrf.mxu0
        %v1087 = vadd.f32 %v799, %v1086
        %v1088 = vpop.f32.mrf.mxu0
        %v1089 = vpop.f32.mrf.mxu0
        %v1090 = vadd.f32 %v802, %v1089
        %v1091 = vpop.f32.mrf.mxu0
        %1092 = vmatprep.mubr.bf16.mxu0 0
        %1093 = vmatmul.mubr.bf16.gmra.mxu0 %v431
        %v1094 = vpop.f32.mrf.mxu0
        %v1095 = vadd.f32 %v807, %v1094
        %v1096 = vpop.f32.mrf.mxu0
        %v1097 = vpop.f32.mrf.mxu0
        %v1098 = vadd.f32 %v810, %v1097
        %v1099 = vpop.f32.mrf.mxu0
        %1100 = vmatprep.mubr.bf16.mxu0 0
        %1101 = vmatmul.mubr.bf16.gmra.mxu0 %v432
        %v1102 = vpop.f32.mrf.mxu0
        %v1103 = vadd.f32 %v815, %v1102
        %v1104 = vpop.f32.mrf.mxu0
        %v1105 = vpop.f32.mrf.mxu0
        %v1106 = vadd.f32 %v818, %v1105
        %v1107 = vpop.f32.mrf.mxu0
        %1108 = vmatprep.mubr.bf16.mxu0 0
        %1109 = vmatmul.mubr.bf16.gmra.mxu0 %v433
        %v1110 = vpop.f32.mrf.mxu0
        %v1111 = vadd.f32 %v823, %v1110
        %v1112 = vpop.f32.mrf.mxu0
        %v1113 = vpop.f32.mrf.mxu0
        %v1114 = vadd.f32 %v826, %v1113
        %v1115 = vpop.f32.mrf.mxu0
        %1116 = vmatprep.mubr.bf16.mxu0 0
        %1117 = vmatmul.mubr.bf16.gmra.mxu0 %v434
        %v1118 = vpop.f32.mrf.mxu0
        %v1119 = vadd.f32 %v831, %v1118
        %v1120 = vpop.f32.mrf.mxu0
        %v1121 = vpop.f32.mrf.mxu0
        %v1122 = vadd.f32 %v834, %v1121
        %v1123 = vpop.f32.mrf.mxu0
        %1124 = vmatprep.mubr.bf16.mxu0 0
        %1125 = vmatmul.mubr.bf16.gmra.mxu0 %v435
        %v1126 = vpop.f32.mrf.mxu0
        %v1127 = vadd.f32 %v839, %v1126
        %v1128 = vpop.f32.mrf.mxu0
        %v1129 = vpop.f32.mrf.mxu0
        %v1130 = vadd.f32 %v842, %v1129
        %v1131 = vpop.f32.mrf.mxu0
        %1132 = vmatprep.mubr.bf16.mxu0 0
        %1133 = vmatmul.mubr.bf16.gmra.mxu0 %v436
        %v1134 = vpop.f32.mrf.mxu0
        %v1135 = vadd.f32 %v847, %v1134
        %v1136 = vpop.f32.mrf.mxu0
        %v1137 = vpop.f32.mrf.mxu0
        %v1138 = vadd.f32 %v850, %v1137
        %v1139 = vpop.f32.mrf.mxu0
        %1140 = vmatprep.mubr.bf16.mxu0 0
        %1141 = vmatmul.mubr.bf16.gmra.mxu0 %v437
        %v1142 = vpop.f32.mrf.mxu0
        %v1143 = vadd.f32 %v855, %v1142
        %v1144 = vpop.f32.mrf.mxu0
        %v1145 = vpop.f32.mrf.mxu0
        %v1146 = vadd.f32 %v858, %v1145
        %v1147 = vpop.f32.mrf.mxu0
        %1148 = vmatprep.mubr.bf16.mxu0 0
        %1149 = vmatmul.mubr.bf16.gmra.mxu0 %v438
        %v1150 = vpop.f32.mrf.mxu0
        %v1151 = vadd.f32 %v863, %v1150
        %v1152 = vpop.f32.mrf.mxu0
        %v1153 = vpop.f32.mrf.mxu0
        %v1154 = vadd.f32 %v866, %v1153
        %v1155 = vpop.f32.mrf.mxu0
        %1156 = vmatprep.mubr.bf16.mxu0 0
        %1157 = vmatmul.mubr.bf16.gmra.mxu0 %v439
        %v1158 = vpop.f32.mrf.mxu0
        %v1159 = vadd.f32 %v871, %v1158
        %v1160 = vpop.f32.mrf.mxu0
        %v1161 = vpop.f32.mrf.mxu0
        %v1162 = vadd.f32 %v874, %v1161
        %v1163 = vpop.f32.mrf.mxu0
        %1164 = vmatprep.mubr.bf16.mxu0 0
        %1165 = vmatmul.mubr.bf16.gmra.mxu0 %v440
        %v1166 = vpop.f32.mrf.mxu0
        %v1167 = vadd.f32 %v879, %v1166
        %v1168 = vpop.f32.mrf.mxu0
        %v1169 = vpop.f32.mrf.mxu0
        %v1170 = vadd.f32 %v882, %v1169
        %v1171 = vpop.f32.mrf.mxu0
        %1172 = vmatprep.mubr.bf16.mxu0 0
        %1173 = vmatmul.mubr.bf16.gmra.mxu0 %v441
        %v1174 = vpop.f32.mrf.mxu0
        %v1175 = vadd.f32 %v887, %v1174
        %v1176 = vpop.f32.mrf.mxu0
        %v1177 = vpop.f32.mrf.mxu0
        %v1178 = vadd.f32 %v890, %v1177
        %v1179 = vpop.f32.mrf.mxu0
        %1180 = vmatprep.mubr.bf16.mxu0 0
        %1181 = vmatmul.mubr.bf16.gmra.mxu0 %v442
        %v1182 = vpop.f32.mrf.mxu0
        %v1183 = vadd.f32 %v895, %v1182
        %v1184 = vpop.f32.mrf.mxu0
        %v1185 = vpop.f32.mrf.mxu0
        %v1186 = vadd.f32 %v898, %v1185
        %v1187 = vpop.f32.mrf.mxu0
        %1188 = vmatprep.mubr.bf16.mxu0 0
        %1189 = vmatmul.mubr.bf16.gmra.mxu0 %v443
        %v1190 = vpop.f32.mrf.mxu0
        %v1191 = vadd.f32 %v903, %v1190
        %v1192 = vpop.f32.mrf.mxu0
        %v1193 = vpop.f32.mrf.mxu0
        %v1194 = vadd.f32 %v906, %v1193
        %v1195 = vpop.f32.mrf.mxu0
        %1196 = vmatprep.mubr.bf16.mxu0 0
        %1197 = vmatmul.mubr.bf16.gmra.mxu0 %v916
        %v1198 = vpop.f32.mrf.mxu0
        %v1199 = vadd.f32 %v911, %v1198
        %v1200 = vpop.f32.mrf.mxu0
        %v1201 = vpop.f32.mrf.mxu0
        %v1202 = vpop.f32.mrf.mxu0
        %1203 = vdwg.mxu0
        %v1204 = vld [vmem:[%s249] sm:$0xe]
        %s1205 = scalar_lea.vmem %s1, 128
        %v1206 = vld [vmem:[%s1205] sm:$0xf]
        %v1207 = vld [vmem:[%s1205 + $0x4] sm:$0xf]
        %v1208 = vld [vmem:[%s1205 + $0x8] sm:$0xf]
        %v1209 = vld [vmem:[%s1205 + $0xc] sm:$0xf]
        %v1210 = vld [vmem:[%s1205 + $0x10] sm:$0xf]
        %v1211 = vld [vmem:[%s1205 + $0x14] sm:$0xf]
        %v1212 = vld [vmem:[%s1205 + $0x18] sm:$0xf]
        %v1213 = vld [vmem:[%s1205 + $0x1c] sm:$0xf]
        %v1214 = vld [vmem:[%s1205 + $0x20] sm:$0xf]
        %v1215 = vld [vmem:[%s1205 + $0x24] sm:$0xf]
        %v1216 = vld [vmem:[%s1205 + $0x28] sm:$0xf]
        %v1217 = vld [vmem:[%s1205 + $0x2c] sm:$0xf]
        %v1218 = vld [vmem:[%s1205 + $0x30] sm:$0xf]
        %v1219 = vld [vmem:[%s1205 + $0x34] sm:$0xf]
        %v1220 = vld [vmem:[%s1205 + $0x38] sm:$0xf]
        %v1221 = vld [vmem:[%s1205 + $0x3c] sm:$0xf]
        %v1223 = vunpack.c.l.b16 %v1204
        %v1224 = vpack.c.b16 %v377, %v1223
        %vm1225 = vcmask 1046528
        %v1226 = vrot.slane %v1224, 1
        %v1227 = vrot.slane %v423, 1
        %v1228 = vsel %vm1225, %v1226, %v1227
        %v1229 = vrot.slane %v424, 1
        %v1230 = vsel %vm1225, %v1227, %v1229
        %v1231 = vrot.slane %v425, 1
        %v1232 = vsel %vm1225, %v1229, %v1231
        %v1233 = vrot.slane %v426, 1
        %v1234 = vsel %vm1225, %v1231, %v1233
        %v1235 = vrot.slane %v427, 1
        %v1236 = vsel %vm1225, %v1233, %v1235
        %v1237 = vrot.slane %v428, 1
        %v1238 = vsel %vm1225, %v1235, %v1237
        %v1239 = vrot.slane %v429, 1
        %v1240 = vsel %vm1225, %v1237, %v1239
        %v1241 = vrot.slane %v430, 1
        %v1242 = vsel %vm1225, %v1239, %v1241
        %v1243 = vrot.slane %v431, 1
        %v1244 = vsel %vm1225, %v1241, %v1243
        %v1245 = vrot.slane %v432, 1
        %v1246 = vsel %vm1225, %v1243, %v1245
        %v1247 = vrot.slane %v433, 1
        %v1248 = vsel %vm1225, %v1245, %v1247
        %v1249 = vrot.slane %v434, 1
        %v1250 = vsel %vm1225, %v1247, %v1249
        %v1251 = vrot.slane %v435, 1
        %v1252 = vsel %vm1225, %v1249, %v1251
        %v1253 = vrot.slane %v436, 1
        %v1254 = vsel %vm1225, %v1251, %v1253
        %v1255 = vrot.slane %v437, 1
        %v1256 = vsel %vm1225, %v1253, %v1255
        %v1257 = vrot.slane %v438, 1
        %v1258 = vsel %vm1225, %v1255, %v1257
        %v1259 = vrot.slane %v439, 1
        %v1260 = vsel %vm1225, %v1257, %v1259
        %v1261 = vrot.slane %v440, 1
        %v1262 = vsel %vm1225, %v1259, %v1261
        %v1263 = vrot.slane %v441, 1
        %v1264 = vsel %vm1225, %v1261, %v1263
        %v1265 = vrot.slane %v442, 1
        %v1266 = vsel %vm1225, %v1263, %v1265
        %v1267 = vrot.slane %v443, 1
        %v1268 = vsel %vm1225, %v1265, %v1267
        %v1269 = vrot.slane %v444, 1
        %v1270 = vsel %vm1225, %v1267, %v1269
        %v1310 = vunpack.c.l.b16 %v1206
        %v1311 = vunpack.c.l.b16 %v1207
        %v1312 = vunpack.c.l.b16 %v1208
        %v1313 = vunpack.c.l.b16 %v1209
        %v1314 = vunpack.c.l.b16 %v1210
        %v1315 = vunpack.c.l.b16 %v1211
        %v1316 = vunpack.c.l.b16 %v1212
        %v1317 = vunpack.c.l.b16 %v1213
        %v1318 = vunpack.c.l.b16 %v1214
        %v1319 = vunpack.c.l.b16 %v1215
        %v1320 = vunpack.c.l.b16 %v1216
        %v1321 = vunpack.c.l.b16 %v1217
        %v1322 = vunpack.c.l.b16 %v1218
        %v1323 = vunpack.c.l.b16 %v1219
        %v1324 = vunpack.c.l.b16 %v1220
        %v1325 = vunpack.c.l.b16 %v1221
        %v1326 = vpack.c.b16 %v1311, %v1310
        %v1327 = vpack.c.b16 %v1313, %v1312
        %v1328 = vpack.c.b16 %v1315, %v1314
        %v1329 = vpack.c.b16 %v1317, %v1316
        %v1330 = vpack.c.b16 %v1319, %v1318
        %v1331 = vpack.c.b16 %v1321, %v1320
        %v1332 = vpack.c.b16 %v1323, %v1322
        %v1333 = vpack.c.b16 %v1325, %v1324
        %1342 = vmatprep.subr.bf16.mxu0 0
        %1343 = vmatpush1.bf16.msra.mxu0 %v1333
        %1344 = vmatprep.subr.bf16.mxu0 0
        %1345 = vmatpush1.bf16.msra.mxu0 %v1332
        %1346 = vmatprep.subr.bf16.mxu0 0
        %1347 = vmatpush1.bf16.msra.mxu0 %v1331
        %1348 = vmatprep.subr.bf16.mxu0 0
        %1349 = vmatpush1.bf16.msra.mxu0 %v1330
        %1350 = vmatprep.subr.bf16.mxu0 0
        %1351 = vmatpush1.bf16.msra.mxu0 %v1329
        %1352 = vmatprep.subr.bf16.mxu0 0
        %1353 = vmatpush1.bf16.msra.mxu0 %v1328
        %1354 = vmatprep.subr.bf16.mxu0 0
        %1355 = vmatpush1.bf16.msra.mxu0 %v1327
        %1356 = vmatprep.subr.bf16.mxu0 0
        %1357 = vmatpush1.bf16.msra.mxu0 %v1326
        %1358 = vmatprep.subr.bf16.mxu0 0
        %1359 = vmatpush2.bf16.msra.mxu0 0
        %1360 = vmatprep.subr.bf16.mxu0 0
        %1361 = vmatpush2.bf16.msra.mxu0 0
        %1362 = vmatprep.subr.bf16.mxu0 0
        %1363 = vmatpush2.bf16.msra.mxu0 0
        %1364 = vmatprep.subr.bf16.mxu0 0
        %1365 = vmatpush2.bf16.msra.mxu0 0
        %1366 = vmatprep.subr.bf16.mxu0 0
        %1367 = vmatpush2.bf16.msra.mxu0 0
        %1368 = vmatprep.subr.bf16.mxu0 0
        %1369 = vmatpush2.bf16.msra.mxu0 0
        %1370 = vmatprep.subr.bf16.mxu0 0
        %1371 = vmatpush2.bf16.msra.mxu0 0
        %1372 = vmatprep.subr.bf16.mxu0 0
        %1373 = vmatpush2.bf16.msra.mxu0 0
        %1374 = vmatprep.mubr.bf16.mxu0 0
        %1375 = vmatmul.mubr.bf16.gmra.mxu0 %v1228
        %v1376 = vpop.f32.mrf.mxu0
        %v1377 = vadd.f32 0.0, %v1376
        %v1378 = vpop.f32.mrf.mxu0
        %v1379 = vpop.f32.mrf.mxu0
        %v1380 = vadd.f32 0.0, %v1379
        %v1381 = vpop.f32.mrf.mxu0
        %1382 = vmatprep.mubr.bf16.mxu0 0
        %1383 = vmatmul.mubr.bf16.gmra.mxu0 %v1230
        %v1384 = vpop.f32.mrf.mxu0
        %v1385 = vadd.f32 0.0, %v1384
        %v1386 = vpop.f32.mrf.mxu0
        %v1387 = vpop.f32.mrf.mxu0
        %v1388 = vadd.f32 0.0, %v1387
        %v1389 = vpop.f32.mrf.mxu0
        %1390 = vmatprep.mubr.bf16.mxu0 0
        %1391 = vmatmul.mubr.bf16.gmra.mxu0 %v1232
        %v1392 = vpop.f32.mrf.mxu0
        %v1393 = vadd.f32 0.0, %v1392
        %v1394 = vpop.f32.mrf.mxu0
        %v1395 = vpop.f32.mrf.mxu0
        %v1396 = vadd.f32 0.0, %v1395
        %v1397 = vpop.f32.mrf.mxu0
        %1398 = vmatprep.mubr.bf16.mxu0 0
        %1399 = vmatmul.mubr.bf16.gmra.mxu0 %v1234
        %v1400 = vpop.f32.mrf.mxu0
        %v1401 = vadd.f32 0.0, %v1400
        %v1402 = vpop.f32.mrf.mxu0
        %v1403 = vpop.f32.mrf.mxu0
        %v1404 = vadd.f32 0.0, %v1403
        %v1405 = vpop.f32.mrf.mxu0
        %1406 = vmatprep.mubr.bf16.mxu0 0
        %1407 = vmatmul.mubr.bf16.gmra.mxu0 %v1236
        %v1408 = vpop.f32.mrf.mxu0
        %v1409 = vadd.f32 0.0, %v1408
        %v1410 = vpop.f32.mrf.mxu0
        %v1411 = vpop.f32.mrf.mxu0
        %v1412 = vadd.f32 0.0, %v1411
        %v1413 = vpop.f32.mrf.mxu0
        %1414 = vmatprep.mubr.bf16.mxu0 0
        %1415 = vmatmul.mubr.bf16.gmra.mxu0 %v1238
        %v1416 = vpop.f32.mrf.mxu0
        %v1417 = vadd.f32 0.0, %v1416
        %v1418 = vpop.f32.mrf.mxu0
        %v1419 = vpop.f32.mrf.mxu0
        %v1420 = vadd.f32 0.0, %v1419
        %v1421 = vpop.f32.mrf.mxu0
        %1422 = vmatprep.mubr.bf16.mxu0 0
        %1423 = vmatmul.mubr.bf16.gmra.mxu0 %v1240
        %v1424 = vpop.f32.mrf.mxu0
        %v1425 = vadd.f32 0.0, %v1424
        %v1426 = vpop.f32.mrf.mxu0
        %v1427 = vpop.f32.mrf.mxu0
        %v1428 = vadd.f32 0.0, %v1427
        %v1429 = vpop.f32.mrf.mxu0
        %1430 = vmatprep.mubr.bf16.mxu0 0
        %1431 = vmatmul.mubr.bf16.gmra.mxu0 %v1242
        %v1432 = vpop.f32.mrf.mxu0
        %v1433 = vadd.f32 0.0, %v1432
        %v1434 = vpop.f32.mrf.mxu0
        %v1435 = vpop.f32.mrf.mxu0
        %v1436 = vadd.f32 0.0, %v1435
        %v1437 = vpop.f32.mrf.mxu0
        %1438 = vmatprep.mubr.bf16.mxu0 0
        %1439 = vmatmul.mubr.bf16.gmra.mxu0 %v1244
        %v1440 = vpop.f32.mrf.mxu0
        %v1441 = vadd.f32 0.0, %v1440
        %v1442 = vpop.f32.mrf.mxu0
        %v1443 = vpop.f32.mrf.mxu0
        %v1444 = vadd.f32 0.0, %v1443
        %v1445 = vpop.f32.mrf.mxu0
        %1446 = vmatprep.mubr.bf16.mxu0 0
        %1447 = vmatmul.mubr.bf16.gmra.mxu0 %v1246
        %v1448 = vpop.f32.mrf.mxu0
        %v1449 = vadd.f32 0.0, %v1448
        %v1450 = vpop.f32.mrf.mxu0
        %v1451 = vpop.f32.mrf.mxu0
        %v1452 = vadd.f32 0.0, %v1451
        %v1453 = vpop.f32.mrf.mxu0
        %1454 = vmatprep.mubr.bf16.mxu0 0
        %1455 = vmatmul.mubr.bf16.gmra.mxu0 %v1248
        %v1456 = vpop.f32.mrf.mxu0
        %v1457 = vadd.f32 0.0, %v1456
        %v1458 = vpop.f32.mrf.mxu0
        %v1459 = vpop.f32.mrf.mxu0
        %v1460 = vadd.f32 0.0, %v1459
        %v1461 = vpop.f32.mrf.mxu0
        %1462 = vmatprep.mubr.bf16.mxu0 0
        %1463 = vmatmul.mubr.bf16.gmra.mxu0 %v1250
        %v1464 = vpop.f32.mrf.mxu0
        %v1465 = vadd.f32 0.0, %v1464
        %v1466 = vpop.f32.mrf.mxu0
        %v1467 = vpop.f32.mrf.mxu0
        %v1468 = vadd.f32 0.0, %v1467
        %v1469 = vpop.f32.mrf.mxu0
        %1470 = vmatprep.mubr.bf16.mxu0 0
        %1471 = vmatmul.mubr.bf16.gmra.mxu0 %v1252
        %v1472 = vpop.f32.mrf.mxu0
        %v1473 = vadd.f32 0.0, %v1472
        %v1474 = vpop.f32.mrf.mxu0
        %v1475 = vpop.f32.mrf.mxu0
        %v1476 = vadd.f32 0.0, %v1475
        %v1477 = vpop.f32.mrf.mxu0
        %1478 = vmatprep.mubr.bf16.mxu0 0
        %1479 = vmatmul.mubr.bf16.gmra.mxu0 %v1254
        %v1480 = vpop.f32.mrf.mxu0
        %v1481 = vadd.f32 0.0, %v1480
        %v1482 = vpop.f32.mrf.mxu0
        %v1483 = vpop.f32.mrf.mxu0
        %v1484 = vadd.f32 0.0, %v1483
        %v1485 = vpop.f32.mrf.mxu0
        %1486 = vmatprep.mubr.bf16.mxu0 0
        %1487 = vmatmul.mubr.bf16.gmra.mxu0 %v1256
        %v1488 = vpop.f32.mrf.mxu0
        %v1489 = vadd.f32 0.0, %v1488
        %v1490 = vpop.f32.mrf.mxu0
        %v1491 = vpop.f32.mrf.mxu0
        %v1492 = vadd.f32 0.0, %v1491
        %v1493 = vpop.f32.mrf.mxu0
        %1494 = vmatprep.mubr.bf16.mxu0 0
        %1495 = vmatmul.mubr.bf16.gmra.mxu0 %v1258
        %v1496 = vpop.f32.mrf.mxu0
        %v1497 = vadd.f32 0.0, %v1496
        %v1498 = vpop.f32.mrf.mxu0
        %v1499 = vpop.f32.mrf.mxu0
        %v1500 = vadd.f32 0.0, %v1499
        %v1501 = vpop.f32.mrf.mxu0
        %1502 = vmatprep.mubr.bf16.mxu0 0
        %1503 = vmatmul.mubr.bf16.gmra.mxu0 %v1260
        %v1504 = vpop.f32.mrf.mxu0
        %v1505 = vadd.f32 0.0, %v1504
        %v1506 = vpop.f32.mrf.mxu0
        %v1507 = vpop.f32.mrf.mxu0
        %v1508 = vadd.f32 0.0, %v1507
        %v1509 = vpop.f32.mrf.mxu0
        %1510 = vmatprep.mubr.bf16.mxu0 0
        %1511 = vmatmul.mubr.bf16.gmra.mxu0 %v1262
        %v1512 = vpop.f32.mrf.mxu0
        %v1513 = vadd.f32 0.0, %v1512
        %v1514 = vpop.f32.mrf.mxu0
        %v1515 = vpop.f32.mrf.mxu0
        %v1516 = vadd.f32 0.0, %v1515
        %v1517 = vpop.f32.mrf.mxu0
        %1518 = vmatprep.mubr.bf16.mxu0 0
        %1519 = vmatmul.mubr.bf16.gmra.mxu0 %v1264
        %v1520 = vpop.f32.mrf.mxu0
        %v1521 = vadd.f32 0.0, %v1520
        %v1522 = vpop.f32.mrf.mxu0
        %v1523 = vpop.f32.mrf.mxu0
        %v1524 = vadd.f32 0.0, %v1523
        %v1525 = vpop.f32.mrf.mxu0
        %1526 = vmatprep.mubr.bf16.mxu0 0
        %1527 = vmatmul.mubr.bf16.gmra.mxu0 %v1266
        %v1528 = vpop.f32.mrf.mxu0
        %v1529 = vadd.f32 0.0, %v1528
        %v1530 = vpop.f32.mrf.mxu0
        %v1531 = vpop.f32.mrf.mxu0
        %v1532 = vadd.f32 0.0, %v1531
        %v1533 = vpop.f32.mrf.mxu0
        %1534 = vmatprep.mubr.bf16.mxu0 0
        %1535 = vmatmul.mubr.bf16.gmra.mxu0 %v1268
        %v1536 = vpop.f32.mrf.mxu0
        %v1537 = vadd.f32 0.0, %v1536
        %v1538 = vpop.f32.mrf.mxu0
        %v1539 = vpop.f32.mrf.mxu0
        %v1540 = vadd.f32 0.0, %v1539
        %v1541 = vpop.f32.mrf.mxu0
        %1542 = vmatprep.mubr.bf16.mxu0 0
        %1543 = vmatmul.mubr.bf16.gmra.mxu0 %v1270
        %v1544 = vpop.f32.mrf.mxu0
        %v1545 = vadd.f32 0.0, %v1544
        %v1546 = vpop.f32.mrf.mxu0
        %v1547 = vpop.f32.mrf.mxu0
        %v1548 = vadd.f32 0.0, %v1547
        %v1549 = vpop.f32.mrf.mxu0
        %1550 = vmatprep.mubr.bf16.mxu0 0
        %1551 = vmatmul.mubr.bf16.gmra.mxu0 %v1269
        %v1552 = vpop.f32.mrf.mxu0
        %v1553 = vadd.f32 0.0, %v1552
        %v1554 = vpop.f32.mrf.mxu0
        %v1555 = vpop.f32.mrf.mxu0
        %v1556 = vpop.f32.mrf.mxu0
        %1557 = vdwg.mxu0
        %v1558 = vadd.f32 %v1023, %v1377
        %v1559 = vadd.f32 %v1026, %v1380
        %v1560 = vadd.f32 %v1031, %v1385
        %v1561 = vadd.f32 %v1034, %v1388
        %v1562 = vadd.f32 %v1039, %v1393
        %v1563 = vadd.f32 %v1042, %v1396
        %v1564 = vadd.f32 %v1047, %v1401
        %v1565 = vadd.f32 %v1050, %v1404
        %v1566 = vadd.f32 %v1055, %v1409
        %v1567 = vadd.f32 %v1058, %v1412
        %v1568 = vadd.f32 %v1063, %v1417
        %v1569 = vadd.f32 %v1066, %v1420
        %v1570 = vadd.f32 %v1071, %v1425
        %v1571 = vadd.f32 %v1074, %v1428
        %v1572 = vadd.f32 %v1079, %v1433
        %v1573 = vadd.f32 %v1082, %v1436
        %v1574 = vadd.f32 %v1087, %v1441
        %v1575 = vadd.f32 %v1090, %v1444
        %v1576 = vadd.f32 %v1095, %v1449
        %v1577 = vadd.f32 %v1098, %v1452
        %v1578 = vadd.f32 %v1103, %v1457
        %v1579 = vadd.f32 %v1106, %v1460
        %v1580 = vadd.f32 %v1111, %v1465
        %v1581 = vadd.f32 %v1114, %v1468
        %v1582 = vadd.f32 %v1119, %v1473
        %v1583 = vadd.f32 %v1122, %v1476
        %v1584 = vadd.f32 %v1127, %v1481
        %v1585 = vadd.f32 %v1130, %v1484
        %v1586 = vadd.f32 %v1135, %v1489
        %v1587 = vadd.f32 %v1138, %v1492
        %v1588 = vadd.f32 %v1143, %v1497
        %v1589 = vadd.f32 %v1146, %v1500
        %v1590 = vadd.f32 %v1151, %v1505
        %v1591 = vadd.f32 %v1154, %v1508
        %v1592 = vadd.f32 %v1159, %v1513
        %v1593 = vadd.f32 %v1162, %v1516
        %v1594 = vadd.f32 %v1167, %v1521
        %v1595 = vadd.f32 %v1170, %v1524
        %v1596 = vadd.f32 %v1175, %v1529
        %v1597 = vadd.f32 %v1178, %v1532
        %v1598 = vadd.f32 %v1183, %v1537
        %v1599 = vadd.f32 %v1186, %v1540
        %v1600 = vadd.f32 %v1191, %v1545
        %v1601 = vadd.f32 %v1194, %v1548
        %v1602 = vadd.f32 %v1199, %v1553
        %v1603 = vld [vmem:[%s249 + $0x8] sm:$0xc]
        %v1604 = vld [vmem:[%s249 + $0xc] sm:$0xf]
        %v1605 = vld [vmem:[%s249 + $0x10] sm:$0xf]
        %v1606 = vld [vmem:[%s249 + $0x14] sm:$0xf]
        %v1607 = vld [vmem:[%s249 + $0x18] sm:$0xf]
        %v1608 = vld [vmem:[%s249 + $0x1c] sm:$0xf]
        %v1609 = vld [vmem:[%s249 + $0x20] sm:$0xf]
        %v1610 = vld [vmem:[%s249 + $0x24] sm:$0xf]
        %v1611 = vld [vmem:[%s249 + $0x28] sm:$0xf]
        %v1612 = vld [vmem:[%s249 + $0x2c] sm:$0xf]
        %v1613 = vld [vmem:[%s249 + $0x30] sm:$0xf]
        %v1614 = vld [vmem:[%s249 + $0x34] sm:$0xf]
        %v1615 = vld [vmem:[%s249 + $0x38] sm:$0xf]
        %v1616 = vld [vmem:[%s249 + $0x3c] sm:$0xf]
        %v1617 = vld [vmem:[%s249 + $0x40] sm:$0xf]
        %v1618 = vld [vmem:[%s249 + $0x44] sm:$0xf]
        %v1619 = vld [vmem:[%s249 + $0x48] sm:$0xf]
        %v1620 = vld [vmem:[%s249 + $0x4c] sm:$0xf]
        %v1621 = vld [vmem:[%s249 + $0x50] sm:$0xf]
        %v1622 = vld [vmem:[%s249 + $0x54] sm:$0xf]
        %v1623 = vld [vmem:[%s249 + $0x58] sm:$0xf]
        %v1624 = vld [vmem:[%s249 + $0x5c] sm:$0xf]
        %v1625 = vld [vmem:[%s249 + $0x60] sm:$0xf]
        %v1626 = vld [vmem:[%s249 + $0x64] sm:$0xf]
        %v1627 = vld [vmem:[%s249 + $0x68] sm:$0xf]
        %v1628 = vld [vmem:[%s249 + $0x6c] sm:$0xf]
        %v1629 = vld [vmem:[%s249 + $0x70] sm:$0xf]
        %v1630 = vld [vmem:[%s249 + $0x74] sm:$0xf]
        %v1631 = vld [vmem:[%s249 + $0x78] sm:$0xf]
        %v1632 = vld [vmem:[%s249 + $0x7c] sm:$0xf]
        %v1633 = vld [vmem:[%s249 + $0x80] sm:$0xf]
        %v1634 = vld [vmem:[%s249 + $0x84] sm:$0xf]
        %v1635 = vld [vmem:[%s249 + $0x88] sm:$0xf]
        %v1636 = vld [vmem:[%s249 + $0x8c] sm:$0xf]
        %v1637 = vld [vmem:[%s249 + $0x90] sm:$0xf]
        %v1638 = vld [vmem:[%s249 + $0x94] sm:$0xf]
        %v1639 = vld [vmem:[%s249 + $0x98] sm:$0xf]
        %v1640 = vld [vmem:[%s249 + $0x9c] sm:$0xf]
        %v1641 = vld [vmem:[%s249 + $0xa0] sm:$0xf]
        %v1642 = vld [vmem:[%s249 + $0xa4] sm:$0xf]
        %v1643 = vld [vmem:[%s249 + $0xa8] sm:$0xf]
        %v1644 = vld [vmem:[%s249 + $0xac] sm:$0xf]
        %v1645 = vld [vmem:[%s249 + $0xb0] sm:$0xf]
        %v1646 = vld [vmem:[%s249 + $0xb4] sm:$0xf]
        %v1647 = vld [vmem:[%s249 + $0xb8] sm:$0xf]
        %v1648 = vld [vmem:[%s249 + $0xbc] sm:$0x3]
        %s1649 = scalar_lea.vmem %s1, 192
        %v1650 = vld [vmem:[%s1649] sm:$0xf]
        %v1651 = vld [vmem:[%s1649 + $0x4] sm:$0xf]
        %v1652 = vld [vmem:[%s1649 + $0x8] sm:$0xf]
        %v1653 = vld [vmem:[%s1649 + $0xc] sm:$0xf]
        %v1654 = vld [vmem:[%s1649 + $0x10] sm:$0xf]
        %v1655 = vld [vmem:[%s1649 + $0x14] sm:$0xf]
        %v1656 = vld [vmem:[%s1649 + $0x18] sm:$0xf]
        %v1657 = vld [vmem:[%s1649 + $0x1c] sm:$0xf]
        %v1658 = vld [vmem:[%s1649 + $0x20] sm:$0xf]
        %v1659 = vld [vmem:[%s1649 + $0x24] sm:$0xf]
        %v1660 = vld [vmem:[%s1649 + $0x28] sm:$0xf]
        %v1661 = vld [vmem:[%s1649 + $0x2c] sm:$0xf]
        %v1662 = vld [vmem:[%s1649 + $0x30] sm:$0xf]
        %v1663 = vld [vmem:[%s1649 + $0x34] sm:$0xf]
        %v1664 = vld [vmem:[%s1649 + $0x38] sm:$0xf]
        %v1665 = vld [vmem:[%s1649 + $0x3c] sm:$0xf]
        %v1712 = vunpack.c.l.b16 %v1603
        %v1713 = vunpack.c.l.b16 %v1604
        %v1714 = vunpack.c.l.b16 %v1605
        %v1715 = vunpack.c.l.b16 %v1606
        %v1716 = vunpack.c.l.b16 %v1607
        %v1717 = vunpack.c.l.b16 %v1608
        %v1718 = vunpack.c.l.b16 %v1609
        %v1719 = vunpack.c.l.b16 %v1610
        %v1720 = vunpack.c.l.b16 %v1611
        %v1721 = vunpack.c.l.b16 %v1612
        %v1722 = vunpack.c.l.b16 %v1613
        %v1723 = vunpack.c.l.b16 %v1614
        %v1724 = vunpack.c.l.b16 %v1615
        %v1725 = vunpack.c.l.b16 %v1616
        %v1726 = vunpack.c.l.b16 %v1617
        %v1727 = vunpack.c.l.b16 %v1618
        %v1728 = vunpack.c.l.b16 %v1619
        %v1729 = vunpack.c.l.b16 %v1620
        %v1730 = vunpack.c.l.b16 %v1621
        %v1731 = vunpack.c.l.b16 %v1622
        %v1732 = vunpack.c.l.b16 %v1623
        %v1733 = vunpack.c.l.b16 %v1624
        %v1734 = vunpack.c.l.b16 %v1625
        %v1735 = vunpack.c.l.b16 %v1626
        %v1736 = vunpack.c.l.b16 %v1627
        %v1737 = vunpack.c.l.b16 %v1628
        %v1738 = vunpack.c.l.b16 %v1629
        %v1739 = vunpack.c.l.b16 %v1630
        %v1740 = vunpack.c.l.b16 %v1631
        %v1741 = vunpack.c.l.b16 %v1632
        %v1742 = vunpack.c.l.b16 %v1633
        %v1743 = vunpack.c.l.b16 %v1634
        %v1744 = vunpack.c.l.b16 %v1635
        %v1745 = vunpack.c.l.b16 %v1636
        %v1746 = vunpack.c.l.b16 %v1637
        %v1747 = vunpack.c.l.b16 %v1638
        %v1748 = vunpack.c.l.b16 %v1639
        %v1749 = vunpack.c.l.b16 %v1640
        %v1750 = vunpack.c.l.b16 %v1641
        %v1751 = vunpack.c.l.b16 %v1642
        %v1752 = vunpack.c.l.b16 %v1643
        %v1753 = vunpack.c.l.b16 %v1644
        %v1754 = vunpack.c.l.b16 %v1645
        %v1755 = vunpack.c.l.b16 %v1646
        %v1756 = vunpack.c.l.b16 %v1647
        %v1757 = vunpack.c.l.b16 %v1648
        %v1758 = vpack.c.b16 %v1713, %v1712
        %v1759 = vpack.c.b16 %v1715, %v1714
        %v1760 = vpack.c.b16 %v1717, %v1716
        %v1761 = vpack.c.b16 %v1719, %v1718
        %v1762 = vpack.c.b16 %v1721, %v1720
        %v1763 = vpack.c.b16 %v1723, %v1722
        %v1764 = vpack.c.b16 %v1725, %v1724
        %v1765 = vpack.c.b16 %v1727, %v1726
        %v1766 = vpack.c.b16 %v1729, %v1728
        %v1767 = vpack.c.b16 %v1731, %v1730
        %v1768 = vpack.c.b16 %v1733, %v1732
        %v1769 = vpack.c.b16 %v1735, %v1734
        %v1770 = vpack.c.b16 %v1737, %v1736
        %v1771 = vpack.c.b16 %v1739, %v1738
        %v1772 = vpack.c.b16 %v1741, %v1740
        %v1773 = vpack.c.b16 %v1743, %v1742
        %v1774 = vpack.c.b16 %v1745, %v1744
        %v1775 = vpack.c.b16 %v1747, %v1746
        %v1776 = vpack.c.b16 %v1749, %v1748
        %v1777 = vpack.c.b16 %v1751, %v1750
        %v1778 = vpack.c.b16 %v1753, %v1752
        %v1779 = vpack.c.b16 %v1755, %v1754
        %v1780 = vpack.c.b16 %v1757, %v1756
        %vm1781 = vcmask 1045504
        %v1782 = vrot.slane %v1758, 2
        %v1783 = vrot.slane %v1759, 2
        %v1784 = vsel %vm1781, %v1782, %v1783
        %v1785 = vrot.slane %v1760, 2
        %v1786 = vsel %vm1781, %v1783, %v1785
        %v1787 = vrot.slane %v1761, 2
        %v1788 = vsel %vm1781, %v1785, %v1787
        %v1789 = vrot.slane %v1762, 2
        %v1790 = vsel %vm1781, %v1787, %v1789
        %v1791 = vrot.slane %v1763, 2
        %v1792 = vsel %vm1781, %v1789, %v1791
        %v1793 = vrot.slane %v1764, 2
        %v1794 = vsel %vm1781, %v1791, %v1793
        %v1795 = vrot.slane %v1765, 2
        %v1796 = vsel %vm1781, %v1793, %v1795
        %v1797 = vrot.slane %v1766, 2
        %v1798 = vsel %vm1781, %v1795, %v1797
        %v1799 = vrot.slane %v1767, 2
        %v1800 = vsel %vm1781, %v1797, %v1799
        %v1801 = vrot.slane %v1768, 2
        %v1802 = vsel %vm1781, %v1799, %v1801
        %v1803 = vrot.slane %v1769, 2
        %v1804 = vsel %vm1781, %v1801, %v1803
        %v1805 = vrot.slane %v1770, 2
        %v1806 = vsel %vm1781, %v1803, %v1805
        %v1807 = vrot.slane %v1771, 2
        %v1808 = vsel %vm1781, %v1805, %v1807
        %v1809 = vrot.slane %v1772, 2
        %v1810 = vsel %vm1781, %v1807, %v1809
        %v1811 = vrot.slane %v1773, 2
        %v1812 = vsel %vm1781, %v1809, %v1811
        %v1813 = vrot.slane %v1774, 2
        %v1814 = vsel %vm1781, %v1811, %v1813
        %v1815 = vrot.slane %v1775, 2
        %v1816 = vsel %vm1781, %v1813, %v1815
        %v1817 = vrot.slane %v1776, 2
        %v1818 = vsel %vm1781, %v1815, %v1817
        %v1819 = vrot.slane %v1777, 2
        %v1820 = vsel %vm1781, %v1817, %v1819
        %v1821 = vrot.slane %v1778, 2
        %v1822 = vsel %vm1781, %v1819, %v1821
        %v1823 = vrot.slane %v1779, 2
        %v1824 = vsel %vm1781, %v1821, %v1823
        %v1825 = vrot.slane %v1780, 2
        %v1826 = vsel %vm1781, %v1823, %v1825
        %v1866 = vunpack.c.l.b16 %v1650
        %v1867 = vunpack.c.l.b16 %v1651
        %v1868 = vunpack.c.l.b16 %v1652
        %v1869 = vunpack.c.l.b16 %v1653
        %v1870 = vunpack.c.l.b16 %v1654
        %v1871 = vunpack.c.l.b16 %v1655
        %v1872 = vunpack.c.l.b16 %v1656
        %v1873 = vunpack.c.l.b16 %v1657
        %v1874 = vunpack.c.l.b16 %v1658
        %v1875 = vunpack.c.l.b16 %v1659
        %v1876 = vunpack.c.l.b16 %v1660
        %v1877 = vunpack.c.l.b16 %v1661
        %v1878 = vunpack.c.l.b16 %v1662
        %v1879 = vunpack.c.l.b16 %v1663
        %v1880 = vunpack.c.l.b16 %v1664
        %v1881 = vunpack.c.l.b16 %v1665
        %v1882 = vpack.c.b16 %v1867, %v1866
        %v1883 = vpack.c.b16 %v1869, %v1868
        %v1884 = vpack.c.b16 %v1871, %v1870
        %v1885 = vpack.c.b16 %v1873, %v1872
        %v1886 = vpack.c.b16 %v1875, %v1874
        %v1887 = vpack.c.b16 %v1877, %v1876
        %v1888 = vpack.c.b16 %v1879, %v1878
        %v1889 = vpack.c.b16 %v1881, %v1880
        %1898 = vmatprep.subr.bf16.mxu0 0
        %1899 = vmatpush1.bf16.msra.mxu0 %v1889
        %1900 = vmatprep.subr.bf16.mxu0 0
        %1901 = vmatpush1.bf16.msra.mxu0 %v1888
        %1902 = vmatprep.subr.bf16.mxu0 0
        %1903 = vmatpush1.bf16.msra.mxu0 %v1887
        %1904 = vmatprep.subr.bf16.mxu0 0
        %1905 = vmatpush1.bf16.msra.mxu0 %v1886
        %1906 = vmatprep.subr.bf16.mxu0 0
        %1907 = vmatpush1.bf16.msra.mxu0 %v1885
        %1908 = vmatprep.subr.bf16.mxu0 0
        %1909 = vmatpush1.bf16.msra.mxu0 %v1884
        %1910 = vmatprep.subr.bf16.mxu0 0
        %1911 = vmatpush1.bf16.msra.mxu0 %v1883
        %1912 = vmatprep.subr.bf16.mxu0 0
        %1913 = vmatpush1.bf16.msra.mxu0 %v1882
        %1914 = vmatprep.subr.bf16.mxu0 0
        %1915 = vmatpush2.bf16.msra.mxu0 0
        %1916 = vmatprep.subr.bf16.mxu0 0
        %1917 = vmatpush2.bf16.msra.mxu0 0
        %1918 = vmatprep.subr.bf16.mxu0 0
        %1919 = vmatpush2.bf16.msra.mxu0 0
        %1920 = vmatprep.subr.bf16.mxu0 0
        %1921 = vmatpush2.bf16.msra.mxu0 0
        %1922 = vmatprep.subr.bf16.mxu0 0
        %1923 = vmatpush2.bf16.msra.mxu0 0
        %1924 = vmatprep.subr.bf16.mxu0 0
        %1925 = vmatpush2.bf16.msra.mxu0 0
        %1926 = vmatprep.subr.bf16.mxu0 0
        %1927 = vmatpush2.bf16.msra.mxu0 0
        %1928 = vmatprep.subr.bf16.mxu0 0
        %1929 = vmatpush2.bf16.msra.mxu0 0
        %1930 = vmatprep.mubr.bf16.mxu0 0
        %1931 = vmatmul.mubr.bf16.gmra.mxu0 %v1784
        %v1932 = vpop.f32.mrf.mxu0
        %v1933 = vadd.f32 0.0, %v1932
        %v1934 = vpop.f32.mrf.mxu0
        %v1935 = vpop.f32.mrf.mxu0
        %v1936 = vadd.f32 0.0, %v1935
        %v1937 = vpop.f32.mrf.mxu0
        %1938 = vmatprep.mubr.bf16.mxu0 0
        %1939 = vmatmul.mubr.bf16.gmra.mxu0 %v1786
        %v1940 = vpop.f32.mrf.mxu0
        %v1941 = vadd.f32 0.0, %v1940
        %v1942 = vpop.f32.mrf.mxu0
        %v1943 = vpop.f32.mrf.mxu0
        %v1944 = vadd.f32 0.0, %v1943
        %v1945 = vpop.f32.mrf.mxu0
        %1946 = vmatprep.mubr.bf16.mxu0 0
        %1947 = vmatmul.mubr.bf16.gmra.mxu0 %v1788
        %v1948 = vpop.f32.mrf.mxu0
        %v1949 = vadd.f32 0.0, %v1948
        %v1950 = vpop.f32.mrf.mxu0
        %v1951 = vpop.f32.mrf.mxu0
        %v1952 = vadd.f32 0.0, %v1951
        %v1953 = vpop.f32.mrf.mxu0
        %1954 = vmatprep.mubr.bf16.mxu0 0
        %1955 = vmatmul.mubr.bf16.gmra.mxu0 %v1790
        %v1956 = vpop.f32.mrf.mxu0
        %v1957 = vadd.f32 0.0, %v1956
        %v1958 = vpop.f32.mrf.mxu0
        %v1959 = vpop.f32.mrf.mxu0
        %v1960 = vadd.f32 0.0, %v1959
        %v1961 = vpop.f32.mrf.mxu0
        %1962 = vmatprep.mubr.bf16.mxu0 0
        %1963 = vmatmul.mubr.bf16.gmra.mxu0 %v1792
        %v1964 = vpop.f32.mrf.mxu0
        %v1965 = vadd.f32 0.0, %v1964
        %v1966 = vpop.f32.mrf.mxu0
        %v1967 = vpop.f32.mrf.mxu0
        %v1968 = vadd.f32 0.0, %v1967
        %v1969 = vpop.f32.mrf.mxu0
        %1970 = vmatprep.mubr.bf16.mxu0 0
        %1971 = vmatmul.mubr.bf16.gmra.mxu0 %v1794
        %v1972 = vpop.f32.mrf.mxu0
        %v1973 = vadd.f32 0.0, %v1972
        %v1974 = vpop.f32.mrf.mxu0
        %v1975 = vpop.f32.mrf.mxu0
        %v1976 = vadd.f32 0.0, %v1975
        %v1977 = vpop.f32.mrf.mxu0
        %1978 = vmatprep.mubr.bf16.mxu0 0
        %1979 = vmatmul.mubr.bf16.gmra.mxu0 %v1796
        %v1980 = vpop.f32.mrf.mxu0
        %v1981 = vadd.f32 0.0, %v1980
        %v1982 = vpop.f32.mrf.mxu0
        %v1983 = vpop.f32.mrf.mxu0
        %v1984 = vadd.f32 0.0, %v1983
        %v1985 = vpop.f32.mrf.mxu0
        %1986 = vmatprep.mubr.bf16.mxu0 0
        %1987 = vmatmul.mubr.bf16.gmra.mxu0 %v1798
        %v1988 = vpop.f32.mrf.mxu0
        %v1989 = vadd.f32 0.0, %v1988
        %v1990 = vpop.f32.mrf.mxu0
        %v1991 = vpop.f32.mrf.mxu0
        %v1992 = vadd.f32 0.0, %v1991
        %v1993 = vpop.f32.mrf.mxu0
        %1994 = vmatprep.mubr.bf16.mxu0 0
        %1995 = vmatmul.mubr.bf16.gmra.mxu0 %v1800
        %v1996 = vpop.f32.mrf.mxu0
        %v1997 = vadd.f32 0.0, %v1996
        %v1998 = vpop.f32.mrf.mxu0
        %v1999 = vpop.f32.mrf.mxu0
        %v2000 = vadd.f32 0.0, %v1999
        %v2001 = vpop.f32.mrf.mxu0
        %2002 = vmatprep.mubr.bf16.mxu0 0
        %2003 = vmatmul.mubr.bf16.gmra.mxu0 %v1802
        %v2004 = vpop.f32.mrf.mxu0
        %v2005 = vadd.f32 0.0, %v2004
        %v2006 = vpop.f32.mrf.mxu0
        %v2007 = vpop.f32.mrf.mxu0
        %v2008 = vadd.f32 0.0, %v2007
        %v2009 = vpop.f32.mrf.mxu0
        %2010 = vmatprep.mubr.bf16.mxu0 0
        %2011 = vmatmul.mubr.bf16.gmra.mxu0 %v1804
        %v2012 = vpop.f32.mrf.mxu0
        %v2013 = vadd.f32 0.0, %v2012
        %v2014 = vpop.f32.mrf.mxu0
        %v2015 = vpop.f32.mrf.mxu0
        %v2016 = vadd.f32 0.0, %v2015
        %v2017 = vpop.f32.mrf.mxu0
        %2018 = vmatprep.mubr.bf16.mxu0 0
        %2019 = vmatmul.mubr.bf16.gmra.mxu0 %v1806
        %v2020 = vpop.f32.mrf.mxu0
        %v2021 = vadd.f32 0.0, %v2020
        %v2022 = vpop.f32.mrf.mxu0
        %v2023 = vpop.f32.mrf.mxu0
        %v2024 = vadd.f32 0.0, %v2023
        %v2025 = vpop.f32.mrf.mxu0
        %2026 = vmatprep.mubr.bf16.mxu0 0
        %2027 = vmatmul.mubr.bf16.gmra.mxu0 %v1808
        %v2028 = vpop.f32.mrf.mxu0
        %v2029 = vadd.f32 0.0, %v2028
        %v2030 = vpop.f32.mrf.mxu0
        %v2031 = vpop.f32.mrf.mxu0
        %v2032 = vadd.f32 0.0, %v2031
        %v2033 = vpop.f32.mrf.mxu0
        %2034 = vmatprep.mubr.bf16.mxu0 0
        %2035 = vmatmul.mubr.bf16.gmra.mxu0 %v1810
        %v2036 = vpop.f32.mrf.mxu0
        %v2037 = vadd.f32 0.0, %v2036
        %v2038 = vpop.f32.mrf.mxu0
        %v2039 = vpop.f32.mrf.mxu0
        %v2040 = vadd.f32 0.0, %v2039
        %v2041 = vpop.f32.mrf.mxu0
        %2042 = vmatprep.mubr.bf16.mxu0 0
        %2043 = vmatmul.mubr.bf16.gmra.mxu0 %v1812
        %v2044 = vpop.f32.mrf.mxu0
        %v2045 = vadd.f32 0.0, %v2044
        %v2046 = vpop.f32.mrf.mxu0
        %v2047 = vpop.f32.mrf.mxu0
        %v2048 = vadd.f32 0.0, %v2047
        %v2049 = vpop.f32.mrf.mxu0
        %2050 = vmatprep.mubr.bf16.mxu0 0
        %2051 = vmatmul.mubr.bf16.gmra.mxu0 %v1814
        %v2052 = vpop.f32.mrf.mxu0
        %v2053 = vadd.f32 0.0, %v2052
        %v2054 = vpop.f32.mrf.mxu0
        %v2055 = vpop.f32.mrf.mxu0
        %v2056 = vadd.f32 0.0, %v2055
        %v2057 = vpop.f32.mrf.mxu0
        %2058 = vmatprep.mubr.bf16.mxu0 0
        %2059 = vmatmul.mubr.bf16.gmra.mxu0 %v1816
        %v2060 = vpop.f32.mrf.mxu0
        %v2061 = vadd.f32 0.0, %v2060
        %v2062 = vpop.f32.mrf.mxu0
        %v2063 = vpop.f32.mrf.mxu0
        %v2064 = vadd.f32 0.0, %v2063
        %v2065 = vpop.f32.mrf.mxu0
        %2066 = vmatprep.mubr.bf16.mxu0 0
        %2067 = vmatmul.mubr.bf16.gmra.mxu0 %v1818
        %v2068 = vpop.f32.mrf.mxu0
        %v2069 = vadd.f32 0.0, %v2068
        %v2070 = vpop.f32.mrf.mxu0
        %v2071 = vpop.f32.mrf.mxu0
        %v2072 = vadd.f32 0.0, %v2071
        %v2073 = vpop.f32.mrf.mxu0
        %2074 = vmatprep.mubr.bf16.mxu0 0
        %2075 = vmatmul.mubr.bf16.gmra.mxu0 %v1820
        %v2076 = vpop.f32.mrf.mxu0
        %v2077 = vadd.f32 0.0, %v2076
        %v2078 = vpop.f32.mrf.mxu0
        %v2079 = vpop.f32.mrf.mxu0
        %v2080 = vadd.f32 0.0, %v2079
        %v2081 = vpop.f32.mrf.mxu0
        %2082 = vmatprep.mubr.bf16.mxu0 0
        %2083 = vmatmul.mubr.bf16.gmra.mxu0 %v1822
        %v2084 = vpop.f32.mrf.mxu0
        %v2085 = vadd.f32 0.0, %v2084
        %v2086 = vpop.f32.mrf.mxu0
        %v2087 = vpop.f32.mrf.mxu0
        %v2088 = vadd.f32 0.0, %v2087
        %v2089 = vpop.f32.mrf.mxu0
        %2090 = vmatprep.mubr.bf16.mxu0 0
        %2091 = vmatmul.mubr.bf16.gmra.mxu0 %v1824
        %v2092 = vpop.f32.mrf.mxu0
        %v2093 = vadd.f32 0.0, %v2092
        %v2094 = vpop.f32.mrf.mxu0
        %v2095 = vpop.f32.mrf.mxu0
        %v2096 = vadd.f32 0.0, %v2095
        %v2097 = vpop.f32.mrf.mxu0
        %2098 = vmatprep.mubr.bf16.mxu0 0
        %2099 = vmatmul.mubr.bf16.gmra.mxu0 %v1826
        %v2100 = vpop.f32.mrf.mxu0
        %v2101 = vadd.f32 0.0, %v2100
        %v2102 = vpop.f32.mrf.mxu0
        %v2103 = vpop.f32.mrf.mxu0
        %v2104 = vadd.f32 0.0, %v2103
        %v2105 = vpop.f32.mrf.mxu0
        %2106 = vmatprep.mubr.bf16.mxu0 0
        %2107 = vmatmul.mubr.bf16.gmra.mxu0 %v1825
        %v2108 = vpop.f32.mrf.mxu0
        %v2109 = vadd.f32 0.0, %v2108
        %v2110 = vpop.f32.mrf.mxu0
        %v2111 = vpop.f32.mrf.mxu0
        %v2112 = vpop.f32.mrf.mxu0
        %2113 = vdwg.mxu0
        %v2114 = vadd.f32 %v1558, %v1933
        %v2115 = vadd.f32 %v1559, %v1936
        %v2116 = vadd.f32 %v1560, %v1941
        %v2117 = vadd.f32 %v1561, %v1944
        %v2118 = vadd.f32 %v1562, %v1949
        %v2119 = vadd.f32 %v1563, %v1952
        %v2120 = vadd.f32 %v1564, %v1957
        %v2121 = vadd.f32 %v1565, %v1960
        %v2122 = vadd.f32 %v1566, %v1965
        %v2123 = vadd.f32 %v1567, %v1968
        %v2124 = vadd.f32 %v1568, %v1973
        %v2125 = vadd.f32 %v1569, %v1976
        %v2126 = vadd.f32 %v1570, %v1981
        %v2127 = vadd.f32 %v1571, %v1984
        %v2128 = vadd.f32 %v1572, %v1989
        %v2129 = vadd.f32 %v1573, %v1992
        %v2130 = vadd.f32 %v1574, %v1997
        %v2131 = vadd.f32 %v1575, %v2000
        %v2132 = vadd.f32 %v1576, %v2005
        %v2133 = vadd.f32 %v1577, %v2008
        %v2134 = vadd.f32 %v1578, %v2013
        %v2135 = vadd.f32 %v1579, %v2016
        %v2136 = vadd.f32 %v1580, %v2021
        %v2137 = vadd.f32 %v1581, %v2024
        %v2138 = vadd.f32 %v1582, %v2029
        %v2139 = vadd.f32 %v1583, %v2032
        %v2140 = vadd.f32 %v1584, %v2037
        %v2141 = vadd.f32 %v1585, %v2040
        %v2142 = vadd.f32 %v1586, %v2045
        %v2143 = vadd.f32 %v1587, %v2048
        %v2144 = vadd.f32 %v1588, %v2053
        %v2145 = vadd.f32 %v1589, %v2056
        %v2146 = vadd.f32 %v1590, %v2061
        %v2147 = vadd.f32 %v1591, %v2064
        %v2148 = vadd.f32 %v1592, %v2069
        %v2149 = vadd.f32 %v1593, %v2072
        %v2150 = vadd.f32 %v1594, %v2077
        %v2151 = vadd.f32 %v1595, %v2080
        %v2152 = vadd.f32 %v1596, %v2085
        %v2153 = vadd.f32 %v1597, %v2088
        %v2154 = vadd.f32 %v1598, %v2093
        %v2155 = vadd.f32 %v1599, %v2096
        %v2156 = vadd.f32 %v1600, %v2101
        %v2157 = vadd.f32 %v1601, %v2104
        %v2158 = vadd.f32 %v1602, %v2109
        %v2159 = vld [vmem:[%s249 + $0xbc] sm:$0x7]
        %s2160 = scalar_lea.vmem %s1, 256
        %v2161 = vld [vmem:[%s2160] sm:$0xf]
        %v2162 = vld [vmem:[%s2160 + $0x4] sm:$0xf]
        %v2163 = vld [vmem:[%s2160 + $0x8] sm:$0xf]
        %v2164 = vld [vmem:[%s2160 + $0xc] sm:$0xf]
        %v2165 = vld [vmem:[%s2160 + $0x10] sm:$0xf]
        %v2166 = vld [vmem:[%s2160 + $0x14] sm:$0xf]
        %v2167 = vld [vmem:[%s2160 + $0x18] sm:$0xf]
        %v2168 = vld [vmem:[%s2160 + $0x1c] sm:$0xf]
        %v2169 = vld [vmem:[%s2160 + $0x20] sm:$0xf]
        %v2170 = vld [vmem:[%s2160 + $0x24] sm:$0xf]
        %v2171 = vld [vmem:[%s2160 + $0x28] sm:$0xf]
        %v2172 = vld [vmem:[%s2160 + $0x2c] sm:$0xf]
        %v2173 = vld [vmem:[%s2160 + $0x30] sm:$0xf]
        %v2174 = vld [vmem:[%s2160 + $0x34] sm:$0xf]
        %v2175 = vld [vmem:[%s2160 + $0x38] sm:$0xf]
        %v2176 = vld [vmem:[%s2160 + $0x3c] sm:$0xf]
        %v2178 = vunpack.c.l.b16 %v2159
        %v2179 = vpack.c.b16 %v2178, %v1756
        %vm2180 = vsmask.f32 5376
        %v2182 = vshrl.u32 %v1758, 16
        %v2184 = vrot.slane %v2182, 2
        %v2185 = vshll.u32 %v1758, 16
        %v2187 = vrot.slane %v2185, 3
        %v2188 = vor.u32 %v2184, %v2187
        %v2190 = vshrl.u32 %v1759, 16
        %v2192 = vrot.slane %v2190, 2
        %v2193 = vshll.u32 %v1759, 16
        %v2195 = vrot.slane %v2193, 3
        %v2196 = vor.u32 %v2192, %v2195
        %v2197 = vsel %vm2180, %v2188, %v2196
        %v2199 = vshrl.u32 %v1760, 16
        %v2201 = vrot.slane %v2199, 2
        %v2202 = vshll.u32 %v1760, 16
        %v2204 = vrot.slane %v2202, 3
        %v2205 = vor.u32 %v2201, %v2204
        %v2206 = vsel %vm2180, %v2196, %v2205
        %v2208 = vshrl.u32 %v1761, 16
        %v2210 = vrot.slane %v2208, 2
        %v2211 = vshll.u32 %v1761, 16
        %v2213 = vrot.slane %v2211, 3
        %v2214 = vor.u32 %v2210, %v2213
        %v2215 = vsel %vm2180, %v2205, %v2214
        %v2217 = vshrl.u32 %v1762, 16
        %v2219 = vrot.slane %v2217, 2
        %v2220 = vshll.u32 %v1762, 16
        %v2222 = vrot.slane %v2220, 3
        %v2223 = vor.u32 %v2219, %v2222
        %v2224 = vsel %vm2180, %v2214, %v2223
        %v2226 = vshrl.u32 %v1763, 16
        %v2228 = vrot.slane %v2226, 2
        %v2229 = vshll.u32 %v1763, 16
        %v2231 = vrot.slane %v2229, 3
        %v2232 = vor.u32 %v2228, %v2231
        %v2233 = vsel %vm2180, %v2223, %v2232
        %v2235 = vshrl.u32 %v1764, 16
        %v2237 = vrot.slane %v2235, 2
        %v2238 = vshll.u32 %v1764, 16
        %v2240 = vrot.slane %v2238, 3
        %v2241 = vor.u32 %v2237, %v2240
        %v2242 = vsel %vm2180, %v2232, %v2241
        %v2244 = vshrl.u32 %v1765, 16
        %v2246 = vrot.slane %v2244, 2
        %v2247 = vshll.u32 %v1765, 16
        %v2249 = vrot.slane %v2247, 3
        %v2250 = vor.u32 %v2246, %v2249
        %v2251 = vsel %vm2180, %v2241, %v2250
        %v2253 = vshrl.u32 %v1766, 16
        %v2255 = vrot.slane %v2253, 2
        %v2256 = vshll.u32 %v1766, 16
        %v2258 = vrot.slane %v2256, 3
        %v2259 = vor.u32 %v2255, %v2258
        %v2260 = vsel %vm2180, %v2250, %v2259
        %v2262 = vshrl.u32 %v1767, 16
        %v2264 = vrot.slane %v2262, 2
        %v2265 = vshll.u32 %v1767, 16
        %v2267 = vrot.slane %v2265, 3
        %v2268 = vor.u32 %v2264, %v2267
        %v2269 = vsel %vm2180, %v2259, %v2268
        %v2271 = vshrl.u32 %v1768, 16
        %v2273 = vrot.slane %v2271, 2
        %v2274 = vshll.u32 %v1768, 16
        %v2276 = vrot.slane %v2274, 3
        %v2277 = vor.u32 %v2273, %v2276
        %v2278 = vsel %vm2180, %v2268, %v2277
        %v2280 = vshrl.u32 %v1769, 16
        %v2282 = vrot.slane %v2280, 2
        %v2283 = vshll.u32 %v1769, 16
        %v2285 = vrot.slane %v2283, 3
        %v2286 = vor.u32 %v2282, %v2285
        %v2287 = vsel %vm2180, %v2277, %v2286
        %v2289 = vshrl.u32 %v1770, 16
        %v2291 = vrot.slane %v2289, 2
        %v2292 = vshll.u32 %v1770, 16
        %v2294 = vrot.slane %v2292, 3
        %v2295 = vor.u32 %v2291, %v2294
        %v2296 = vsel %vm2180, %v2286, %v2295
        %v2298 = vshrl.u32 %v1771, 16
        %v2300 = vrot.slane %v2298, 2
        %v2301 = vshll.u32 %v1771, 16
        %v2303 = vrot.slane %v2301, 3
        %v2304 = vor.u32 %v2300, %v2303
        %v2305 = vsel %vm2180, %v2295, %v2304
        %v2307 = vshrl.u32 %v1772, 16
        %v2309 = vrot.slane %v2307, 2
        %v2310 = vshll.u32 %v1772, 16
        %v2312 = vrot.slane %v2310, 3
        %v2313 = vor.u32 %v2309, %v2312
        %v2314 = vsel %vm2180, %v2304, %v2313
        %v2316 = vshrl.u32 %v1773, 16
        %v2318 = vrot.slane %v2316, 2
        %v2319 = vshll.u32 %v1773, 16
        %v2321 = vrot.slane %v2319, 3
        %v2322 = vor.u32 %v2318, %v2321
        %v2323 = vsel %vm2180, %v2313, %v2322
        %v2325 = vshrl.u32 %v1774, 16
        %v2327 = vrot.slane %v2325, 2
        %v2328 = vshll.u32 %v1774, 16
        %v2330 = vrot.slane %v2328, 3
        %v2331 = vor.u32 %v2327, %v2330
        %v2332 = vsel %vm2180, %v2322, %v2331
        %v2334 = vshrl.u32 %v1775, 16
        %v2336 = vrot.slane %v2334, 2
        %v2337 = vshll.u32 %v1775, 16
        %v2339 = vrot.slane %v2337, 3
        %v2340 = vor.u32 %v2336, %v2339
        %v2341 = vsel %vm2180, %v2331, %v2340
        %v2343 = vshrl.u32 %v1776, 16
        %v2345 = vrot.slane %v2343, 2
        %v2346 = vshll.u32 %v1776, 16
        %v2348 = vrot.slane %v2346, 3
        %v2349 = vor.u32 %v2345, %v2348
        %v2350 = vsel %vm2180, %v2340, %v2349
        %v2352 = vshrl.u32 %v1777, 16
        %v2354 = vrot.slane %v2352, 2
        %v2355 = vshll.u32 %v1777, 16
        %v2357 = vrot.slane %v2355, 3
        %v2358 = vor.u32 %v2354, %v2357
        %v2359 = vsel %vm2180, %v2349, %v2358
        %v2361 = vshrl.u32 %v1778, 16
        %v2363 = vrot.slane %v2361, 2
        %v2364 = vshll.u32 %v1778, 16
        %v2366 = vrot.slane %v2364, 3
        %v2367 = vor.u32 %v2363, %v2366
        %v2368 = vsel %vm2180, %v2358, %v2367
        %v2370 = vshrl.u32 %v1779, 16
        %v2372 = vrot.slane %v2370, 2
        %v2373 = vshll.u32 %v1779, 16
        %v2375 = vrot.slane %v2373, 3
        %v2376 = vor.u32 %v2372, %v2375
        %v2377 = vsel %vm2180, %v2367, %v2376
        %v2379 = vshrl.u32 %v2179, 16
        %v2381 = vrot.slane %v2379, 2
        %v2382 = vshll.u32 %v2179, 16
        %v2384 = vrot.slane %v2382, 3
        %v2385 = vor.u32 %v2381, %v2384
        %v2386 = vsel %vm2180, %v2376, %v2385
        %v2426 = vunpack.c.l.b16 %v2161
        %v2427 = vunpack.c.l.b16 %v2162
        %v2428 = vunpack.c.l.b16 %v2163
        %v2429 = vunpack.c.l.b16 %v2164
        %v2430 = vunpack.c.l.b16 %v2165
        %v2431 = vunpack.c.l.b16 %v2166
        %v2432 = vunpack.c.l.b16 %v2167
        %v2433 = vunpack.c.l.b16 %v2168
        %v2434 = vunpack.c.l.b16 %v2169
        %v2435 = vunpack.c.l.b16 %v2170
        %v2436 = vunpack.c.l.b16 %v2171
        %v2437 = vunpack.c.l.b16 %v2172
        %v2438 = vunpack.c.l.b16 %v2173
        %v2439 = vunpack.c.l.b16 %v2174
        %v2440 = vunpack.c.l.b16 %v2175
        %v2441 = vunpack.c.l.b16 %v2176
        %v2442 = vpack.c.b16 %v2427, %v2426
        %v2443 = vpack.c.b16 %v2429, %v2428
        %v2444 = vpack.c.b16 %v2431, %v2430
        %v2445 = vpack.c.b16 %v2433, %v2432
        %v2446 = vpack.c.b16 %v2435, %v2434
        %v2447 = vpack.c.b16 %v2437, %v2436
        %v2448 = vpack.c.b16 %v2439, %v2438
        %v2449 = vpack.c.b16 %v2441, %v2440
        %2458 = vmatprep.subr.bf16.mxu0 0
        %2459 = vmatpush1.bf16.msra.mxu0 %v2449
        %2460 = vmatprep.subr.bf16.mxu0 0
        %2461 = vmatpush1.bf16.msra.mxu0 %v2448
        %2462 = vmatprep.subr.bf16.mxu0 0
        %2463 = vmatpush1.bf16.msra.mxu0 %v2447
        %2464 = vmatprep.subr.bf16.mxu0 0
        %2465 = vmatpush1.bf16.msra.mxu0 %v2446
        %2466 = vmatprep.subr.bf16.mxu0 0
        %2467 = vmatpush1.bf16.msra.mxu0 %v2445
        %2468 = vmatprep.subr.bf16.mxu0 0
        %2469 = vmatpush1.bf16.msra.mxu0 %v2444
        %2470 = vmatprep.subr.bf16.mxu0 0
        %2471 = vmatpush1.bf16.msra.mxu0 %v2443
        %2472 = vmatprep.subr.bf16.mxu0 0
        %2473 = vmatpush1.bf16.msra.mxu0 %v2442
        %2474 = vmatprep.subr.bf16.mxu0 0
        %2475 = vmatpush2.bf16.msra.mxu0 0
        %2476 = vmatprep.subr.bf16.mxu0 0
        %2477 = vmatpush2.bf16.msra.mxu0 0
        %2478 = vmatprep.subr.bf16.mxu0 0
        %2479 = vmatpush2.bf16.msra.mxu0 0
        %2480 = vmatprep.subr.bf16.mxu0 0
        %2481 = vmatpush2.bf16.msra.mxu0 0
        %2482 = vmatprep.subr.bf16.mxu0 0
        %2483 = vmatpush2.bf16.msra.mxu0 0
        %2484 = vmatprep.subr.bf16.mxu0 0
        %2485 = vmatpush2.bf16.msra.mxu0 0
        %2486 = vmatprep.subr.bf16.mxu0 0
        %2487 = vmatpush2.bf16.msra.mxu0 0
        %2488 = vmatprep.subr.bf16.mxu0 0
        %2489 = vmatpush2.bf16.msra.mxu0 0
        %2490 = vmatprep.mubr.bf16.mxu0 0
        %2491 = vmatmul.mubr.bf16.gmra.mxu0 %v2197
        %v2492 = vpop.f32.mrf.mxu0
        %v2493 = vadd.f32 0.0, %v2492
        %v2494 = vpop.f32.mrf.mxu0
        %v2495 = vpop.f32.mrf.mxu0
        %v2496 = vadd.f32 0.0, %v2495
        %v2497 = vpop.f32.mrf.mxu0
        %2498 = vmatprep.mubr.bf16.mxu0 0
        %2499 = vmatmul.mubr.bf16.gmra.mxu0 %v2206
        %v2500 = vpop.f32.mrf.mxu0
        %v2501 = vadd.f32 0.0, %v2500
        %v2502 = vpop.f32.mrf.mxu0
        %v2503 = vpop.f32.mrf.mxu0
        %v2504 = vadd.f32 0.0, %v2503
        %v2505 = vpop.f32.mrf.mxu0
        %2506 = vmatprep.mubr.bf16.mxu0 0
        %2507 = vmatmul.mubr.bf16.gmra.mxu0 %v2215
        %v2508 = vpop.f32.mrf.mxu0
        %v2509 = vadd.f32 0.0, %v2508
        %v2510 = vpop.f32.mrf.mxu0
        %v2511 = vpop.f32.mrf.mxu0
        %v2512 = vadd.f32 0.0, %v2511
        %v2513 = vpop.f32.mrf.mxu0
        %2514 = vmatprep.mubr.bf16.mxu0 0
        %2515 = vmatmul.mubr.bf16.gmra.mxu0 %v2224
        %v2516 = vpop.f32.mrf.mxu0
        %v2517 = vadd.f32 0.0, %v2516
        %v2518 = vpop.f32.mrf.mxu0
        %v2519 = vpop.f32.mrf.mxu0
        %v2520 = vadd.f32 0.0, %v2519
        %v2521 = vpop.f32.mrf.mxu0
        %2522 = vmatprep.mubr.bf16.mxu0 0
        %2523 = vmatmul.mubr.bf16.gmra.mxu0 %v2233
        %v2524 = vpop.f32.mrf.mxu0
        %v2525 = vadd.f32 0.0, %v2524
        %v2526 = vpop.f32.mrf.mxu0
        %v2527 = vpop.f32.mrf.mxu0
        %v2528 = vadd.f32 0.0, %v2527
        %v2529 = vpop.f32.mrf.mxu0
        %2530 = vmatprep.mubr.bf16.mxu0 0
        %2531 = vmatmul.mubr.bf16.gmra.mxu0 %v2242
        %v2532 = vpop.f32.mrf.mxu0
        %v2533 = vadd.f32 0.0, %v2532
        %v2534 = vpop.f32.mrf.mxu0
        %v2535 = vpop.f32.mrf.mxu0
        %v2536 = vadd.f32 0.0, %v2535
        %v2537 = vpop.f32.mrf.mxu0
        %2538 = vmatprep.mubr.bf16.mxu0 0
        %2539 = vmatmul.mubr.bf16.gmra.mxu0 %v2251
        %v2540 = vpop.f32.mrf.mxu0
        %v2541 = vadd.f32 0.0, %v2540
        %v2542 = vpop.f32.mrf.mxu0
        %v2543 = vpop.f32.mrf.mxu0
        %v2544 = vadd.f32 0.0, %v2543
        %v2545 = vpop.f32.mrf.mxu0
        %2546 = vmatprep.mubr.bf16.mxu0 0
        %2547 = vmatmul.mubr.bf16.gmra.mxu0 %v2260
        %v2548 = vpop.f32.mrf.mxu0
        %v2549 = vadd.f32 0.0, %v2548
        %v2550 = vpop.f32.mrf.mxu0
        %v2551 = vpop.f32.mrf.mxu0
        %v2552 = vadd.f32 0.0, %v2551
        %v2553 = vpop.f32.mrf.mxu0
        %2554 = vmatprep.mubr.bf16.mxu0 0
        %2555 = vmatmul.mubr.bf16.gmra.mxu0 %v2269
        %v2556 = vpop.f32.mrf.mxu0
        %v2557 = vadd.f32 0.0, %v2556
        %v2558 = vpop.f32.mrf.mxu0
        %v2559 = vpop.f32.mrf.mxu0
        %v2560 = vadd.f32 0.0, %v2559
        %v2561 = vpop.f32.mrf.mxu0
        %2562 = vmatprep.mubr.bf16.mxu0 0
        %2563 = vmatmul.mubr.bf16.gmra.mxu0 %v2278
        %v2564 = vpop.f32.mrf.mxu0
        %v2565 = vadd.f32 0.0, %v2564
        %v2566 = vpop.f32.mrf.mxu0
        %v2567 = vpop.f32.mrf.mxu0
        %v2568 = vadd.f32 0.0, %v2567
        %v2569 = vpop.f32.mrf.mxu0
        %2570 = vmatprep.mubr.bf16.mxu0 0
        %2571 = vmatmul.mubr.bf16.gmra.mxu0 %v2287
        %v2572 = vpop.f32.mrf.mxu0
        %v2573 = vadd.f32 0.0, %v2572
        %v2574 = vpop.f32.mrf.mxu0
        %v2575 = vpop.f32.mrf.mxu0
        %v2576 = vadd.f32 0.0, %v2575
        %v2577 = vpop.f32.mrf.mxu0
        %2578 = vmatprep.mubr.bf16.mxu0 0
        %2579 = vmatmul.mubr.bf16.gmra.mxu0 %v2296
        %v2580 = vpop.f32.mrf.mxu0
        %v2581 = vadd.f32 0.0, %v2580
        %v2582 = vpop.f32.mrf.mxu0
        %v2583 = vpop.f32.mrf.mxu0
        %v2584 = vadd.f32 0.0, %v2583
        %v2585 = vpop.f32.mrf.mxu0
        %2586 = vmatprep.mubr.bf16.mxu0 0
        %2587 = vmatmul.mubr.bf16.gmra.mxu0 %v2305
        %v2588 = vpop.f32.mrf.mxu0
        %v2589 = vadd.f32 0.0, %v2588
        %v2590 = vpop.f32.mrf.mxu0
        %v2591 = vpop.f32.mrf.mxu0
        %v2592 = vadd.f32 0.0, %v2591
        %v2593 = vpop.f32.mrf.mxu0
        %2594 = vmatprep.mubr.bf16.mxu0 0
        %2595 = vmatmul.mubr.bf16.gmra.mxu0 %v2314
        %v2596 = vpop.f32.mrf.mxu0
        %v2597 = vadd.f32 0.0, %v2596
        %v2598 = vpop.f32.mrf.mxu0
        %v2599 = vpop.f32.mrf.mxu0
        %v2600 = vadd.f32 0.0, %v2599
        %v2601 = vpop.f32.mrf.mxu0
        %2602 = vmatprep.mubr.bf16.mxu0 0
        %2603 = vmatmul.mubr.bf16.gmra.mxu0 %v2323
        %v2604 = vpop.f32.mrf.mxu0
        %v2605 = vadd.f32 0.0, %v2604
        %v2606 = vpop.f32.mrf.mxu0
        %v2607 = vpop.f32.mrf.mxu0
        %v2608 = vadd.f32 0.0, %v2607
        %v2609 = vpop.f32.mrf.mxu0
        %2610 = vmatprep.mubr.bf16.mxu0 0
        %2611 = vmatmul.mubr.bf16.gmra.mxu0 %v2332
        %v2612 = vpop.f32.mrf.mxu0
        %v2613 = vadd.f32 0.0, %v2612
        %v2614 = vpop.f32.mrf.mxu0
        %v2615 = vpop.f32.mrf.mxu0
        %v2616 = vadd.f32 0.0, %v2615
        %v2617 = vpop.f32.mrf.mxu0
        %2618 = vmatprep.mubr.bf16.mxu0 0
        %2619 = vmatmul.mubr.bf16.gmra.mxu0 %v2341
        %v2620 = vpop.f32.mrf.mxu0
        %v2621 = vadd.f32 0.0, %v2620
        %v2622 = vpop.f32.mrf.mxu0
        %v2623 = vpop.f32.mrf.mxu0
        %v2624 = vadd.f32 0.0, %v2623
        %v2625 = vpop.f32.mrf.mxu0
        %2626 = vmatprep.mubr.bf16.mxu0 0
        %2627 = vmatmul.mubr.bf16.gmra.mxu0 %v2350
        %v2628 = vpop.f32.mrf.mxu0
        %v2629 = vadd.f32 0.0, %v2628
        %v2630 = vpop.f32.mrf.mxu0
        %v2631 = vpop.f32.mrf.mxu0
        %v2632 = vadd.f32 0.0, %v2631
        %v2633 = vpop.f32.mrf.mxu0
        %2634 = vmatprep.mubr.bf16.mxu0 0
        %2635 = vmatmul.mubr.bf16.gmra.mxu0 %v2359
        %v2636 = vpop.f32.mrf.mxu0
        %v2637 = vadd.f32 0.0, %v2636
        %v2638 = vpop.f32.mrf.mxu0
        %v2639 = vpop.f32.mrf.mxu0
        %v2640 = vadd.f32 0.0, %v2639
        %v2641 = vpop.f32.mrf.mxu0
        %2642 = vmatprep.mubr.bf16.mxu0 0
        %2643 = vmatmul.mubr.bf16.gmra.mxu0 %v2368
        %v2644 = vpop.f32.mrf.mxu0
        %v2645 = vadd.f32 0.0, %v2644
        %v2646 = vpop.f32.mrf.mxu0
        %v2647 = vpop.f32.mrf.mxu0
        %v2648 = vadd.f32 0.0, %v2647
        %v2649 = vpop.f32.mrf.mxu0
        %2650 = vmatprep.mubr.bf16.mxu0 0
        %2651 = vmatmul.mubr.bf16.gmra.mxu0 %v2377
        %v2652 = vpop.f32.mrf.mxu0
        %v2653 = vadd.f32 0.0, %v2652
        %v2654 = vpop.f32.mrf.mxu0
        %v2655 = vpop.f32.mrf.mxu0
        %v2656 = vadd.f32 0.0, %v2655
        %v2657 = vpop.f32.mrf.mxu0
        %2658 = vmatprep.mubr.bf16.mxu0 0
        %2659 = vmatmul.mubr.bf16.gmra.mxu0 %v2386
        %v2660 = vpop.f32.mrf.mxu0
        %v2661 = vadd.f32 0.0, %v2660
        %v2662 = vpop.f32.mrf.mxu0
        %v2663 = vpop.f32.mrf.mxu0
        %v2664 = vadd.f32 0.0, %v2663
        %v2665 = vpop.f32.mrf.mxu0
        %2666 = vmatprep.mubr.bf16.mxu0 0
        %2667 = vmatmul.mubr.bf16.gmra.mxu0 %v2385
        %v2668 = vpop.f32.mrf.mxu0
        %v2669 = vadd.f32 0.0, %v2668
        %v2670 = vpop.f32.mrf.mxu0
        %v2671 = vpop.f32.mrf.mxu0
        %v2672 = vpop.f32.mrf.mxu0
        %2673 = vdwg.mxu0
        %v2674 = vadd.f32 %v2114, %v2493
        %v2675 = vadd.f32 %v2115, %v2496
        %v2676 = vadd.f32 %v2116, %v2501
        %v2677 = vadd.f32 %v2117, %v2504
        %v2678 = vadd.f32 %v2118, %v2509
        %v2679 = vadd.f32 %v2119, %v2512
        %v2680 = vadd.f32 %v2120, %v2517
        %v2681 = vadd.f32 %v2121, %v2520
        %v2682 = vadd.f32 %v2122, %v2525
        %v2683 = vadd.f32 %v2123, %v2528
        %v2684 = vadd.f32 %v2124, %v2533
        %v2685 = vadd.f32 %v2125, %v2536
        %v2686 = vadd.f32 %v2126, %v2541
        %v2687 = vadd.f32 %v2127, %v2544
        %v2688 = vadd.f32 %v2128, %v2549
        %v2689 = vadd.f32 %v2129, %v2552
        %v2690 = vadd.f32 %v2130, %v2557
        %v2691 = vadd.f32 %v2131, %v2560
        %v2692 = vadd.f32 %v2132, %v2565
        %v2693 = vadd.f32 %v2133, %v2568
        %v2694 = vadd.f32 %v2134, %v2573
        %v2695 = vadd.f32 %v2135, %v2576
        %v2696 = vadd.f32 %v2136, %v2581
        %v2697 = vadd.f32 %v2137, %v2584
        %v2698 = vadd.f32 %v2138, %v2589
        %v2699 = vadd.f32 %v2139, %v2592
        %v2700 = vadd.f32 %v2140, %v2597
        %v2701 = vadd.f32 %v2141, %v2600
        %v2702 = vadd.f32 %v2142, %v2605
        %v2703 = vadd.f32 %v2143, %v2608
        %v2704 = vadd.f32 %v2144, %v2613
        %v2705 = vadd.f32 %v2145, %v2616
        %v2706 = vadd.f32 %v2146, %v2621
        %v2707 = vadd.f32 %v2147, %v2624
        %v2708 = vadd.f32 %v2148, %v2629
        %v2709 = vadd.f32 %v2149, %v2632
        %v2710 = vadd.f32 %v2150, %v2637
        %v2711 = vadd.f32 %v2151, %v2640
        %v2712 = vadd.f32 %v2152, %v2645
        %v2713 = vadd.f32 %v2153, %v2648
        %v2714 = vadd.f32 %v2154, %v2653
        %v2715 = vadd.f32 %v2155, %v2656
        %v2716 = vadd.f32 %v2156, %v2661
        %v2717 = vadd.f32 %v2157, %v2664
        %v2718 = vadd.f32 %v2158, %v2669
        %v2719 = vld [vmem:[%s249 + $0x8] sm:$0x8]
        %s2720 = scalar_lea.vmem %s1, 320
        %v2721 = vld [vmem:[%s2720] sm:$0xf]
        %v2722 = vld [vmem:[%s2720 + $0x4] sm:$0xf]
        %v2723 = vld [vmem:[%s2720 + $0x8] sm:$0xf]
        %v2724 = vld [vmem:[%s2720 + $0xc] sm:$0xf]
        %v2725 = vld [vmem:[%s2720 + $0x10] sm:$0xf]
        %v2726 = vld [vmem:[%s2720 + $0x14] sm:$0xf]
        %v2727 = vld [vmem:[%s2720 + $0x18] sm:$0xf]
        %v2728 = vld [vmem:[%s2720 + $0x1c] sm:$0xf]
        %v2729 = vld [vmem:[%s2720 + $0x20] sm:$0xf]
        %v2730 = vld [vmem:[%s2720 + $0x24] sm:$0xf]
        %v2731 = vld [vmem:[%s2720 + $0x28] sm:$0xf]
        %v2732 = vld [vmem:[%s2720 + $0x2c] sm:$0xf]
        %v2733 = vld [vmem:[%s2720 + $0x30] sm:$0xf]
        %v2734 = vld [vmem:[%s2720 + $0x34] sm:$0xf]
        %v2735 = vld [vmem:[%s2720 + $0x38] sm:$0xf]
        %v2736 = vld [vmem:[%s2720 + $0x3c] sm:$0xf]
        %v2738 = vunpack.c.l.b16 %v2719
        %v2739 = vpack.c.b16 %v1713, %v2738
        %vm2740 = vcmask 1044480
        %v2741 = vrot.slane %v2739, 3
        %v2742 = vrot.slane %v1759, 3
        %v2743 = vsel %vm2740, %v2741, %v2742
        %v2744 = vrot.slane %v1760, 3
        %v2745 = vsel %vm2740, %v2742, %v2744
        %v2746 = vrot.slane %v1761, 3
        %v2747 = vsel %vm2740, %v2744, %v2746
        %v2748 = vrot.slane %v1762, 3
        %v2749 = vsel %vm2740, %v2746, %v2748
        %v2750 = vrot.slane %v1763, 3
        %v2751 = vsel %vm2740, %v2748, %v2750
        %v2752 = vrot.slane %v1764, 3
        %v2753 = vsel %vm2740, %v2750, %v2752
        %v2754 = vrot.slane %v1765, 3
        %v2755 = vsel %vm2740, %v2752, %v2754
        %v2756 = vrot.slane %v1766, 3
        %v2757 = vsel %vm2740, %v2754, %v2756
        %v2758 = vrot.slane %v1767, 3
        %v2759 = vsel %vm2740, %v2756, %v2758
        %v2760 = vrot.slane %v1768, 3
        %v2761 = vsel %vm2740, %v2758, %v2760
        %v2762 = vrot.slane %v1769, 3
        %v2763 = vsel %vm2740, %v2760, %v2762
        %v2764 = vrot.slane %v1770, 3
        %v2765 = vsel %vm2740, %v2762, %v2764
        %v2766 = vrot.slane %v1771, 3
        %v2767 = vsel %vm2740, %v2764, %v2766
        %v2768 = vrot.slane %v1772, 3
        %v2769 = vsel %vm2740, %v2766, %v2768
        %v2770 = vrot.slane %v1773, 3
        %v2771 = vsel %vm2740, %v2768, %v2770
        %v2772 = vrot.slane %v1774, 3
        %v2773 = vsel %vm2740, %v2770, %v2772
        %v2774 = vrot.slane %v1775, 3
        %v2775 = vsel %vm2740, %v2772, %v2774
        %v2776 = vrot.slane %v1776, 3
        %v2777 = vsel %vm2740, %v2774, %v2776
        %v2778 = vrot.slane %v1777, 3
        %v2779 = vsel %vm2740, %v2776, %v2778
        %v2780 = vrot.slane %v1778, 3
        %v2781 = vsel %vm2740, %v2778, %v2780
        %v2782 = vrot.slane %v1779, 3
        %v2783 = vsel %vm2740, %v2780, %v2782
        %v2784 = vrot.slane %v2179, 3
        %v2785 = vsel %vm2740, %v2782, %v2784
        %v2825 = vunpack.c.l.b16 %v2721
        %v2826 = vunpack.c.l.b16 %v2722
        %v2827 = vunpack.c.l.b16 %v2723
        %v2828 = vunpack.c.l.b16 %v2724
        %v2829 = vunpack.c.l.b16 %v2725
        %v2830 = vunpack.c.l.b16 %v2726
        %v2831 = vunpack.c.l.b16 %v2727
        %v2832 = vunpack.c.l.b16 %v2728
        %v2833 = vunpack.c.l.b16 %v2729
        %v2834 = vunpack.c.l.b16 %v2730
        %v2835 = vunpack.c.l.b16 %v2731
        %v2836 = vunpack.c.l.b16 %v2732
        %v2837 = vunpack.c.l.b16 %v2733
        %v2838 = vunpack.c.l.b16 %v2734
        %v2839 = vunpack.c.l.b16 %v2735
        %v2840 = vunpack.c.l.b16 %v2736
        %v2841 = vpack.c.b16 %v2826, %v2825
        %v2842 = vpack.c.b16 %v2828, %v2827
        %v2843 = vpack.c.b16 %v2830, %v2829
        %v2844 = vpack.c.b16 %v2832, %v2831
        %v2845 = vpack.c.b16 %v2834, %v2833
        %v2846 = vpack.c.b16 %v2836, %v2835
        %v2847 = vpack.c.b16 %v2838, %v2837
        %v2848 = vpack.c.b16 %v2840, %v2839
        %2857 = vmatprep.subr.bf16.mxu0 0
        %2858 = vmatpush1.bf16.msra.mxu0 %v2848
        %2859 = vmatprep.subr.bf16.mxu0 0
        %2860 = vmatpush1.bf16.msra.mxu0 %v2847
        %2861 = vmatprep.subr.bf16.mxu0 0
        %2862 = vmatpush1.bf16.msra.mxu0 %v2846
        %2863 = vmatprep.subr.bf16.mxu0 0
        %2864 = vmatpush1.bf16.msra.mxu0 %v2845
        %2865 = vmatprep.subr.bf16.mxu0 0
        %2866 = vmatpush1.bf16.msra.mxu0 %v2844
        %2867 = vmatprep.subr.bf16.mxu0 0
        %2868 = vmatpush1.bf16.msra.mxu0 %v2843
        %2869 = vmatprep.subr.bf16.mxu0 0
        %2870 = vmatpush1.bf16.msra.mxu0 %v2842
        %2871 = vmatprep.subr.bf16.mxu0 0
        %2872 = vmatpush1.bf16.msra.mxu0 %v2841
        %2873 = vmatprep.subr.bf16.mxu0 0
        %2874 = vmatpush2.bf16.msra.mxu0 0
        %2875 = vmatprep.subr.bf16.mxu0 0
        %2876 = vmatpush2.bf16.msra.mxu0 0
        %2877 = vmatprep.subr.bf16.mxu0 0
        %2878 = vmatpush2.bf16.msra.mxu0 0
        %2879 = vmatprep.subr.bf16.mxu0 0
        %2880 = vmatpush2.bf16.msra.mxu0 0
        %2881 = vmatprep.subr.bf16.mxu0 0
        %2882 = vmatpush2.bf16.msra.mxu0 0
        %2883 = vmatprep.subr.bf16.mxu0 0
        %2884 = vmatpush2.bf16.msra.mxu0 0
        %2885 = vmatprep.subr.bf16.mxu0 0
        %2886 = vmatpush2.bf16.msra.mxu0 0
        %2887 = vmatprep.subr.bf16.mxu0 0
        %2888 = vmatpush2.bf16.msra.mxu0 0
        %2889 = vmatprep.mubr.bf16.mxu0 0
        %2890 = vmatmul.mubr.bf16.gmra.mxu0 %v2743
        %v2891 = vpop.f32.mrf.mxu0
        %v2892 = vadd.f32 0.0, %v2891
        %v2893 = vpop.f32.mrf.mxu0
        %v2894 = vpop.f32.mrf.mxu0
        %v2895 = vadd.f32 0.0, %v2894
        %v2896 = vpop.f32.mrf.mxu0
        %2897 = vmatprep.mubr.bf16.mxu0 0
        %2898 = vmatmul.mubr.bf16.gmra.mxu0 %v2745
        %v2899 = vpop.f32.mrf.mxu0
        %v2900 = vadd.f32 0.0, %v2899
        %v2901 = vpop.f32.mrf.mxu0
        %v2902 = vpop.f32.mrf.mxu0
        %v2903 = vadd.f32 0.0, %v2902
        %v2904 = vpop.f32.mrf.mxu0
        %2905 = vmatprep.mubr.bf16.mxu0 0
        %2906 = vmatmul.mubr.bf16.gmra.mxu0 %v2747
        %v2907 = vpop.f32.mrf.mxu0
        %v2908 = vadd.f32 0.0, %v2907
        %v2909 = vpop.f32.mrf.mxu0
        %v2910 = vpop.f32.mrf.mxu0
        %v2911 = vadd.f32 0.0, %v2910
        %v2912 = vpop.f32.mrf.mxu0
        %2913 = vmatprep.mubr.bf16.mxu0 0
        %2914 = vmatmul.mubr.bf16.gmra.mxu0 %v2749
        %v2915 = vpop.f32.mrf.mxu0
        %v2916 = vadd.f32 0.0, %v2915
        %v2917 = vpop.f32.mrf.mxu0
        %v2918 = vpop.f32.mrf.mxu0
        %v2919 = vadd.f32 0.0, %v2918
        %v2920 = vpop.f32.mrf.mxu0
        %2921 = vmatprep.mubr.bf16.mxu0 0
        %2922 = vmatmul.mubr.bf16.gmra.mxu0 %v2751
        %v2923 = vpop.f32.mrf.mxu0
        %v2924 = vadd.f32 0.0, %v2923
        %v2925 = vpop.f32.mrf.mxu0
        %v2926 = vpop.f32.mrf.mxu0
        %v2927 = vadd.f32 0.0, %v2926
        %v2928 = vpop.f32.mrf.mxu0
        %2929 = vmatprep.mubr.bf16.mxu0 0
        %2930 = vmatmul.mubr.bf16.gmra.mxu0 %v2753
        %v2931 = vpop.f32.mrf.mxu0
        %v2932 = vadd.f32 0.0, %v2931
        %v2933 = vpop.f32.mrf.mxu0
        %v2934 = vpop.f32.mrf.mxu0
        %v2935 = vadd.f32 0.0, %v2934
        %v2936 = vpop.f32.mrf.mxu0
        %2937 = vmatprep.mubr.bf16.mxu0 0
        %2938 = vmatmul.mubr.bf16.gmra.mxu0 %v2755
        %v2939 = vpop.f32.mrf.mxu0
        %v2940 = vadd.f32 0.0, %v2939
        %v2941 = vpop.f32.mrf.mxu0
        %v2942 = vpop.f32.mrf.mxu0
        %v2943 = vadd.f32 0.0, %v2942
        %v2944 = vpop.f32.mrf.mxu0
        %2945 = vmatprep.mubr.bf16.mxu0 0
        %2946 = vmatmul.mubr.bf16.gmra.mxu0 %v2757
        %v2947 = vpop.f32.mrf.mxu0
        %v2948 = vadd.f32 0.0, %v2947
        %v2949 = vpop.f32.mrf.mxu0
        %v2950 = vpop.f32.mrf.mxu0
        %v2951 = vadd.f32 0.0, %v2950
        %v2952 = vpop.f32.mrf.mxu0
        %2953 = vmatprep.mubr.bf16.mxu0 0
        %2954 = vmatmul.mubr.bf16.gmra.mxu0 %v2759
        %v2955 = vpop.f32.mrf.mxu0
        %v2956 = vadd.f32 0.0, %v2955
        %v2957 = vpop.f32.mrf.mxu0
        %v2958 = vpop.f32.mrf.mxu0
        %v2959 = vadd.f32 0.0, %v2958
        %v2960 = vpop.f32.mrf.mxu0
        %2961 = vmatprep.mubr.bf16.mxu0 0
        %2962 = vmatmul.mubr.bf16.gmra.mxu0 %v2761
        %v2963 = vpop.f32.mrf.mxu0
        %v2964 = vadd.f32 0.0, %v2963
        %v2965 = vpop.f32.mrf.mxu0
        %v2966 = vpop.f32.mrf.mxu0
        %v2967 = vadd.f32 0.0, %v2966
        %v2968 = vpop.f32.mrf.mxu0
        %2969 = vmatprep.mubr.bf16.mxu0 0
        %2970 = vmatmul.mubr.bf16.gmra.mxu0 %v2763
        %v2971 = vpop.f32.mrf.mxu0
        %v2972 = vadd.f32 0.0, %v2971
        %v2973 = vpop.f32.mrf.mxu0
        %v2974 = vpop.f32.mrf.mxu0
        %v2975 = vadd.f32 0.0, %v2974
        %v2976 = vpop.f32.mrf.mxu0
        %2977 = vmatprep.mubr.bf16.mxu0 0
        %2978 = vmatmul.mubr.bf16.gmra.mxu0 %v2765
        %v2979 = vpop.f32.mrf.mxu0
        %v2980 = vadd.f32 0.0, %v2979
        %v2981 = vpop.f32.mrf.mxu0
        %v2982 = vpop.f32.mrf.mxu0
        %v2983 = vadd.f32 0.0, %v2982
        %v2984 = vpop.f32.mrf.mxu0
        %2985 = vmatprep.mubr.bf16.mxu0 0
        %2986 = vmatmul.mubr.bf16.gmra.mxu0 %v2767
        %v2987 = vpop.f32.mrf.mxu0
        %v2988 = vadd.f32 0.0, %v2987
        %v2989 = vpop.f32.mrf.mxu0
        %v2990 = vpop.f32.mrf.mxu0
        %v2991 = vadd.f32 0.0, %v2990
        %v2992 = vpop.f32.mrf.mxu0
        %2993 = vmatprep.mubr.bf16.mxu0 0
        %2994 = vmatmul.mubr.bf16.gmra.mxu0 %v2769
        %v2995 = vpop.f32.mrf.mxu0
        %v2996 = vadd.f32 0.0, %v2995
        %v2997 = vpop.f32.mrf.mxu0
        %v2998 = vpop.f32.mrf.mxu0
        %v2999 = vadd.f32 0.0, %v2998
        %v3000 = vpop.f32.mrf.mxu0
        %3001 = vmatprep.mubr.bf16.mxu0 0
        %3002 = vmatmul.mubr.bf16.gmra.mxu0 %v2771
        %v3003 = vpop.f32.mrf.mxu0
        %v3004 = vadd.f32 0.0, %v3003
        %v3005 = vpop.f32.mrf.mxu0
        %v3006 = vpop.f32.mrf.mxu0
        %v3007 = vadd.f32 0.0, %v3006
        %v3008 = vpop.f32.mrf.mxu0
        %3009 = vmatprep.mubr.bf16.mxu0 0
        %3010 = vmatmul.mubr.bf16.gmra.mxu0 %v2773
        %v3011 = vpop.f32.mrf.mxu0
        %v3012 = vadd.f32 0.0, %v3011
        %v3013 = vpop.f32.mrf.mxu0
        %v3014 = vpop.f32.mrf.mxu0
        %v3015 = vadd.f32 0.0, %v3014
        %v3016 = vpop.f32.mrf.mxu0
        %3017 = vmatprep.mubr.bf16.mxu0 0
        %3018 = vmatmul.mubr.bf16.gmra.mxu0 %v2775
        %v3019 = vpop.f32.mrf.mxu0
        %v3020 = vadd.f32 0.0, %v3019
        %v3021 = vpop.f32.mrf.mxu0
        %v3022 = vpop.f32.mrf.mxu0
        %v3023 = vadd.f32 0.0, %v3022
        %v3024 = vpop.f32.mrf.mxu0
        %3025 = vmatprep.mubr.bf16.mxu0 0
        %3026 = vmatmul.mubr.bf16.gmra.mxu0 %v2777
        %v3027 = vpop.f32.mrf.mxu0
        %v3028 = vadd.f32 0.0, %v3027
        %v3029 = vpop.f32.mrf.mxu0
        %v3030 = vpop.f32.mrf.mxu0
        %v3031 = vadd.f32 0.0, %v3030
        %v3032 = vpop.f32.mrf.mxu0
        %3033 = vmatprep.mubr.bf16.mxu0 0
        %3034 = vmatmul.mubr.bf16.gmra.mxu0 %v2779
        %v3035 = vpop.f32.mrf.mxu0
        %v3036 = vadd.f32 0.0, %v3035
        %v3037 = vpop.f32.mrf.mxu0
        %v3038 = vpop.f32.mrf.mxu0
        %v3039 = vadd.f32 0.0, %v3038
        %v3040 = vpop.f32.mrf.mxu0
        %3041 = vmatprep.mubr.bf16.mxu0 0
        %3042 = vmatmul.mubr.bf16.gmra.mxu0 %v2781
        %v3043 = vpop.f32.mrf.mxu0
        %v3044 = vadd.f32 0.0, %v3043
        %v3045 = vpop.f32.mrf.mxu0
        %v3046 = vpop.f32.mrf.mxu0
        %v3047 = vadd.f32 0.0, %v3046
        %v3048 = vpop.f32.mrf.mxu0
        %3049 = vmatprep.mubr.bf16.mxu0 0
        %3050 = vmatmul.mubr.bf16.gmra.mxu0 %v2783
        %v3051 = vpop.f32.mrf.mxu0
        %v3052 = vadd.f32 0.0, %v3051
        %v3053 = vpop.f32.mrf.mxu0
        %v3054 = vpop.f32.mrf.mxu0
        %v3055 = vadd.f32 0.0, %v3054
        %v3056 = vpop.f32.mrf.mxu0
        %3057 = vmatprep.mubr.bf16.mxu0 0
        %3058 = vmatmul.mubr.bf16.gmra.mxu0 %v2785
        %v3059 = vpop.f32.mrf.mxu0
        %v3060 = vadd.f32 0.0, %v3059
        %v3061 = vpop.f32.mrf.mxu0
        %v3062 = vpop.f32.mrf.mxu0
        %v3063 = vadd.f32 0.0, %v3062
        %v3064 = vpop.f32.mrf.mxu0
        %3065 = vmatprep.mubr.bf16.mxu0 0
        %3066 = vmatmul.mubr.bf16.gmra.mxu0 %v2784
        %v3067 = vpop.f32.mrf.mxu0
        %v3068 = vadd.f32 0.0, %v3067
        %v3069 = vpop.f32.mrf.mxu0
        %v3070 = vpop.f32.mrf.mxu0
        %v3071 = vpop.f32.mrf.mxu0
        %3072 = vdwg.mxu0
        %v3073 = vadd.f32 %v2674, %v2892
        %v3074 = vadd.f32 %v2675, %v2895
        %v3075 = vadd.f32 %v2676, %v2900
        %v3076 = vadd.f32 %v2677, %v2903
        %v3077 = vadd.f32 %v2678, %v2908
        %v3078 = vadd.f32 %v2679, %v2911
        %v3079 = vadd.f32 %v2680, %v2916
        %v3080 = vadd.f32 %v2681, %v2919
        %v3081 = vadd.f32 %v2682, %v2924
        %v3082 = vadd.f32 %v2683, %v2927
        %v3083 = vadd.f32 %v2684, %v2932
        %v3084 = vadd.f32 %v2685, %v2935
        %v3085 = vadd.f32 %v2686, %v2940
        %v3086 = vadd.f32 %v2687, %v2943
        %v3087 = vadd.f32 %v2688, %v2948
        %v3088 = vadd.f32 %v2689, %v2951
        %v3089 = vadd.f32 %v2690, %v2956
        %v3090 = vadd.f32 %v2691, %v2959
        %v3091 = vadd.f32 %v2692, %v2964
        %v3092 = vadd.f32 %v2693, %v2967
        %v3093 = vadd.f32 %v2694, %v2972
        %v3094 = vadd.f32 %v2695, %v2975
        %v3095 = vadd.f32 %v2696, %v2980
        %v3096 = vadd.f32 %v2697, %v2983
        %v3097 = vadd.f32 %v2698, %v2988
        %v3098 = vadd.f32 %v2699, %v2991
        %v3099 = vadd.f32 %v2700, %v2996
        %v3100 = vadd.f32 %v2701, %v2999
        %v3101 = vadd.f32 %v2702, %v3004
        %v3102 = vadd.f32 %v2703, %v3007
        %v3103 = vadd.f32 %v2704, %v3012
        %v3104 = vadd.f32 %v2705, %v3015
        %v3105 = vadd.f32 %v2706, %v3020
        %v3106 = vadd.f32 %v2707, %v3023
        %v3107 = vadd.f32 %v2708, %v3028
        %v3108 = vadd.f32 %v2709, %v3031
        %v3109 = vadd.f32 %v2710, %v3036
        %v3110 = vadd.f32 %v2711, %v3039
        %v3111 = vadd.f32 %v2712, %v3044
        %v3112 = vadd.f32 %v2713, %v3047
        %v3113 = vadd.f32 %v2714, %v3052
        %v3114 = vadd.f32 %v2715, %v3055
        %v3115 = vadd.f32 %v2716, %v3060
        %v3116 = vadd.f32 %v2717, %v3063
        %v3117 = vadd.f32 %v2718, %v3068
        %v3118 = vld [vmem:[%s249 + $0x14] sm:$0xf]
        %v3119 = vld [vmem:[%s249 + $0x18] sm:$0xf]
        %v3120 = vld [vmem:[%s249 + $0x1c] sm:$0xf]
        %v3121 = vld [vmem:[%s249 + $0x20] sm:$0xf]
        %v3122 = vld [vmem:[%s249 + $0x24] sm:$0xf]
        %v3123 = vld [vmem:[%s249 + $0x28] sm:$0xf]
        %v3124 = vld [vmem:[%s249 + $0x2c] sm:$0xf]
        %v3125 = vld [vmem:[%s249 + $0x30] sm:$0xf]
        %v3126 = vld [vmem:[%s249 + $0x34] sm:$0xf]
        %v3127 = vld [vmem:[%s249 + $0x38] sm:$0xf]
        %v3128 = vld [vmem:[%s249 + $0x3c] sm:$0xf]
        %v3129 = vld [vmem:[%s249 + $0x40] sm:$0xf]
        %v3130 = vld [vmem:[%s249 + $0x44] sm:$0xf]
        %v3131 = vld [vmem:[%s249 + $0x48] sm:$0xf]
        %v3132 = vld [vmem:[%s249 + $0x4c] sm:$0xf]
        %v3133 = vld [vmem:[%s249 + $0x50] sm:$0xf]
        %v3134 = vld [vmem:[%s249 + $0x54] sm:$0xf]
        %v3135 = vld [vmem:[%s249 + $0x58] sm:$0xf]
        %v3136 = vld [vmem:[%s249 + $0x5c] sm:$0xf]
        %v3137 = vld [vmem:[%s249 + $0x60] sm:$0xf]
        %v3138 = vld [vmem:[%s249 + $0x64] sm:$0xf]
        %v3139 = vld [vmem:[%s249 + $0x68] sm:$0xf]
        %v3140 = vld [vmem:[%s249 + $0x6c] sm:$0xf]
        %v3141 = vld [vmem:[%s249 + $0x70] sm:$0xf]
        %v3142 = vld [vmem:[%s249 + $0x74] sm:$0xf]
        %v3143 = vld [vmem:[%s249 + $0x78] sm:$0xf]
        %v3144 = vld [vmem:[%s249 + $0x7c] sm:$0xf]
        %v3145 = vld [vmem:[%s249 + $0x80] sm:$0xf]
        %v3146 = vld [vmem:[%s249 + $0x84] sm:$0xf]
        %v3147 = vld [vmem:[%s249 + $0x88] sm:$0xf]
        %v3148 = vld [vmem:[%s249 + $0x8c] sm:$0xf]
        %v3149 = vld [vmem:[%s249 + $0x90] sm:$0xf]
        %v3150 = vld [vmem:[%s249 + $0x94] sm:$0xf]
        %v3151 = vld [vmem:[%s249 + $0x98] sm:$0xf]
        %v3152 = vld [vmem:[%s249 + $0x9c] sm:$0xf]
        %v3153 = vld [vmem:[%s249 + $0xa0] sm:$0xf]
        %v3154 = vld [vmem:[%s249 + $0xa4] sm:$0xf]
        %v3155 = vld [vmem:[%s249 + $0xa8] sm:$0xf]
        %v3156 = vld [vmem:[%s249 + $0xac] sm:$0xf]
        %v3157 = vld [vmem:[%s249 + $0xb0] sm:$0xf]
        %v3158 = vld [vmem:[%s249 + $0xb4] sm:$0xf]
        %v3159 = vld [vmem:[%s249 + $0xb8] sm:$0xf]
        %v3160 = vld [vmem:[%s249 + $0xbc] sm:$0xf]
        %v3161 = vld [vmem:[%s249 + $0xc0] sm:$0xf]
        %v3162 = vld [vmem:[%s249 + $0xc4] sm:$0xf]
        %s3163 = scalar_lea.vmem %s1, 384
        %v3164 = vld [vmem:[%s3163] sm:$0xf]
        %v3165 = vld [vmem:[%s3163 + $0x4] sm:$0xf]
        %v3166 = vld [vmem:[%s3163 + $0x8] sm:$0xf]
        %v3167 = vld [vmem:[%s3163 + $0xc] sm:$0xf]
        %v3168 = vld [vmem:[%s3163 + $0x10] sm:$0xf]
        %v3169 = vld [vmem:[%s3163 + $0x14] sm:$0xf]
        %v3170 = vld [vmem:[%s3163 + $0x18] sm:$0xf]
        %v3171 = vld [vmem:[%s3163 + $0x1c] sm:$0xf]
        %v3172 = vld [vmem:[%s3163 + $0x20] sm:$0xf]
        %v3173 = vld [vmem:[%s3163 + $0x24] sm:$0xf]
        %v3174 = vld [vmem:[%s3163 + $0x28] sm:$0xf]
        %v3175 = vld [vmem:[%s3163 + $0x2c] sm:$0xf]
        %v3176 = vld [vmem:[%s3163 + $0x30] sm:$0xf]
        %v3177 = vld [vmem:[%s3163 + $0x34] sm:$0xf]
        %v3178 = vld [vmem:[%s3163 + $0x38] sm:$0xf]
        %v3179 = vld [vmem:[%s3163 + $0x3c] sm:$0xf]
        %v3225 = vunpack.c.l.b16 %v3118
        %v3226 = vunpack.c.l.b16 %v3119
        %v3227 = vunpack.c.l.b16 %v3120
        %v3228 = vunpack.c.l.b16 %v3121
        %v3229 = vunpack.c.l.b16 %v3122
        %v3230 = vunpack.c.l.b16 %v3123
        %v3231 = vunpack.c.l.b16 %v3124
        %v3232 = vunpack.c.l.b16 %v3125
        %v3233 = vunpack.c.l.b16 %v3126
        %v3234 = vunpack.c.l.b16 %v3127
        %v3235 = vunpack.c.l.b16 %v3128
        %v3236 = vunpack.c.l.b16 %v3129
        %v3237 = vunpack.c.l.b16 %v3130
        %v3238 = vunpack.c.l.b16 %v3131
        %v3239 = vunpack.c.l.b16 %v3132
        %v3240 = vunpack.c.l.b16 %v3133
        %v3241 = vunpack.c.l.b16 %v3134
        %v3242 = vunpack.c.l.b16 %v3135
        %v3243 = vunpack.c.l.b16 %v3136
        %v3244 = vunpack.c.l.b16 %v3137
        %v3245 = vunpack.c.l.b16 %v3138
        %v3246 = vunpack.c.l.b16 %v3139
        %v3247 = vunpack.c.l.b16 %v3140
        %v3248 = vunpack.c.l.b16 %v3141
        %v3249 = vunpack.c.l.b16 %v3142
        %v3250 = vunpack.c.l.b16 %v3143
        %v3251 = vunpack.c.l.b16 %v3144
        %v3252 = vunpack.c.l.b16 %v3145
        %v3253 = vunpack.c.l.b16 %v3146
        %v3254 = vunpack.c.l.b16 %v3147
        %v3255 = vunpack.c.l.b16 %v3148
        %v3256 = vunpack.c.l.b16 %v3149
        %v3257 = vunpack.c.l.b16 %v3150
        %v3258 = vunpack.c.l.b16 %v3151
        %v3259 = vunpack.c.l.b16 %v3152
        %v3260 = vunpack.c.l.b16 %v3153
        %v3261 = vunpack.c.l.b16 %v3154
        %v3262 = vunpack.c.l.b16 %v3155
        %v3263 = vunpack.c.l.b16 %v3156
        %v3264 = vunpack.c.l.b16 %v3157
        %v3265 = vunpack.c.l.b16 %v3158
        %v3266 = vunpack.c.l.b16 %v3159
        %v3267 = vunpack.c.l.b16 %v3160
        %v3268 = vunpack.c.l.b16 %v3161
        %v3269 = vunpack.c.l.b16 %v3162
        %v3270 = vpack.c.b16 %v3226, %v3225
        %v3271 = vpack.c.b16 %v3228, %v3227
        %v3272 = vpack.c.b16 %v3230, %v3229
        %v3273 = vpack.c.b16 %v3232, %v3231
        %v3274 = vpack.c.b16 %v3234, %v3233
        %v3275 = vpack.c.b16 %v3236, %v3235
        %v3276 = vpack.c.b16 %v3238, %v3237
        %v3277 = vpack.c.b16 %v3240, %v3239
        %v3278 = vpack.c.b16 %v3242, %v3241
        %v3279 = vpack.c.b16 %v3244, %v3243
        %v3280 = vpack.c.b16 %v3246, %v3245
        %v3281 = vpack.c.b16 %v3248, %v3247
        %v3282 = vpack.c.b16 %v3250, %v3249
        %v3283 = vpack.c.b16 %v3252, %v3251
        %v3284 = vpack.c.b16 %v3254, %v3253
        %v3285 = vpack.c.b16 %v3256, %v3255
        %v3286 = vpack.c.b16 %v3258, %v3257
        %v3287 = vpack.c.b16 %v3260, %v3259
        %v3288 = vpack.c.b16 %v3262, %v3261
        %v3289 = vpack.c.b16 %v3264, %v3263
        %v3290 = vpack.c.b16 %v3266, %v3265
        %v3291 = vpack.c.b16 %v3268, %v3267
        %v3292 = vpack.c.b16 %v3269, %v3269
        %v3332 = vunpack.c.l.b16 %v3164
        %v3333 = vunpack.c.l.b16 %v3165
        %v3334 = vunpack.c.l.b16 %v3166
        %v3335 = vunpack.c.l.b16 %v3167
        %v3336 = vunpack.c.l.b16 %v3168
        %v3337 = vunpack.c.l.b16 %v3169
        %v3338 = vunpack.c.l.b16 %v3170
        %v3339 = vunpack.c.l.b16 %v3171
        %v3340 = vunpack.c.l.b16 %v3172
        %v3341 = vunpack.c.l.b16 %v3173
        %v3342 = vunpack.c.l.b16 %v3174
        %v3343 = vunpack.c.l.b16 %v3175
        %v3344 = vunpack.c.l.b16 %v3176
        %v3345 = vunpack.c.l.b16 %v3177
        %v3346 = vunpack.c.l.b16 %v3178
        %v3347 = vunpack.c.l.b16 %v3179
        %v3348 = vpack.c.b16 %v3333, %v3332
        %v3349 = vpack.c.b16 %v3335, %v3334
        %v3350 = vpack.c.b16 %v3337, %v3336
        %v3351 = vpack.c.b16 %v3339, %v3338
        %v3352 = vpack.c.b16 %v3341, %v3340
        %v3353 = vpack.c.b16 %v3343, %v3342
        %v3354 = vpack.c.b16 %v3345, %v3344
        %v3355 = vpack.c.b16 %v3347, %v3346
        %3364 = vmatprep.subr.bf16.mxu0 0
        %3365 = vmatpush1.bf16.msra.mxu0 %v3355
        %3366 = vmatprep.subr.bf16.mxu0 0
        %3367 = vmatpush1.bf16.msra.mxu0 %v3354
        %3368 = vmatprep.subr.bf16.mxu0 0
        %3369 = vmatpush1.bf16.msra.mxu0 %v3353
        %3370 = vmatprep.subr.bf16.mxu0 0
        %3371 = vmatpush1.bf16.msra.mxu0 %v3352
        %3372 = vmatprep.subr.bf16.mxu0 0
        %3373 = vmatpush1.bf16.msra.mxu0 %v3351
        %3374 = vmatprep.subr.bf16.mxu0 0
        %3375 = vmatpush1.bf16.msra.mxu0 %v3350
        %3376 = vmatprep.subr.bf16.mxu0 0
        %3377 = vmatpush1.bf16.msra.mxu0 %v3349
        %3378 = vmatprep.subr.bf16.mxu0 0
        %3379 = vmatpush1.bf16.msra.mxu0 %v3348
        %3380 = vmatprep.subr.bf16.mxu0 0
        %3381 = vmatpush2.bf16.msra.mxu0 0
        %3382 = vmatprep.subr.bf16.mxu0 0
        %3383 = vmatpush2.bf16.msra.mxu0 0
        %3384 = vmatprep.subr.bf16.mxu0 0
        %3385 = vmatpush2.bf16.msra.mxu0 0
        %3386 = vmatprep.subr.bf16.mxu0 0
        %3387 = vmatpush2.bf16.msra.mxu0 0
        %3388 = vmatprep.subr.bf16.mxu0 0
        %3389 = vmatpush2.bf16.msra.mxu0 0
        %3390 = vmatprep.subr.bf16.mxu0 0
        %3391 = vmatpush2.bf16.msra.mxu0 0
        %3392 = vmatprep.subr.bf16.mxu0 0
        %3393 = vmatpush2.bf16.msra.mxu0 0
        %3394 = vmatprep.subr.bf16.mxu0 0
        %3395 = vmatpush2.bf16.msra.mxu0 0
        %3396 = vmatprep.mubr.bf16.mxu0 0
        %3397 = vmatmul.mubr.bf16.gmra.mxu0 %v3270
        %v3398 = vpop.f32.mrf.mxu0
        %v3399 = vadd.f32 0.0, %v3398
        %v3400 = vpop.f32.mrf.mxu0
        %v3401 = vpop.f32.mrf.mxu0
        %v3402 = vadd.f32 0.0, %v3401
        %v3403 = vpop.f32.mrf.mxu0
        %3404 = vmatprep.mubr.bf16.mxu0 0
        %3405 = vmatmul.mubr.bf16.gmra.mxu0 %v3271
        %v3406 = vpop.f32.mrf.mxu0
        %v3407 = vadd.f32 0.0, %v3406
        %v3408 = vpop.f32.mrf.mxu0
        %v3409 = vpop.f32.mrf.mxu0
        %v3410 = vadd.f32 0.0, %v3409
        %v3411 = vpop.f32.mrf.mxu0
        %3412 = vmatprep.mubr.bf16.mxu0 0
        %3413 = vmatmul.mubr.bf16.gmra.mxu0 %v3272
        %v3414 = vpop.f32.mrf.mxu0
        %v3415 = vadd.f32 0.0, %v3414
        %v3416 = vpop.f32.mrf.mxu0
        %v3417 = vpop.f32.mrf.mxu0
        %v3418 = vadd.f32 0.0, %v3417
        %v3419 = vpop.f32.mrf.mxu0
        %3420 = vmatprep.mubr.bf16.mxu0 0
        %3421 = vmatmul.mubr.bf16.gmra.mxu0 %v3273
        %v3422 = vpop.f32.mrf.mxu0
        %v3423 = vadd.f32 0.0, %v3422
        %v3424 = vpop.f32.mrf.mxu0
        %v3425 = vpop.f32.mrf.mxu0
        %v3426 = vadd.f32 0.0, %v3425
        %v3427 = vpop.f32.mrf.mxu0
        %3428 = vmatprep.mubr.bf16.mxu0 0
        %3429 = vmatmul.mubr.bf16.gmra.mxu0 %v3274
        %v3430 = vpop.f32.mrf.mxu0
        %v3431 = vadd.f32 0.0, %v3430
        %v3432 = vpop.f32.mrf.mxu0
        %v3433 = vpop.f32.mrf.mxu0
        %v3434 = vadd.f32 0.0, %v3433
        %v3435 = vpop.f32.mrf.mxu0
        %3436 = vmatprep.mubr.bf16.mxu0 0
        %3437 = vmatmul.mubr.bf16.gmra.mxu0 %v3275
        %v3438 = vpop.f32.mrf.mxu0
        %v3439 = vadd.f32 0.0, %v3438
        %v3440 = vpop.f32.mrf.mxu0
        %v3441 = vpop.f32.mrf.mxu0
        %v3442 = vadd.f32 0.0, %v3441
        %v3443 = vpop.f32.mrf.mxu0
        %3444 = vmatprep.mubr.bf16.mxu0 0
        %3445 = vmatmul.mubr.bf16.gmra.mxu0 %v3276
        %v3446 = vpop.f32.mrf.mxu0
        %v3447 = vadd.f32 0.0, %v3446
        %v3448 = vpop.f32.mrf.mxu0
        %v3449 = vpop.f32.mrf.mxu0
        %v3450 = vadd.f32 0.0, %v3449
        %v3451 = vpop.f32.mrf.mxu0
        %3452 = vmatprep.mubr.bf16.mxu0 0
        %3453 = vmatmul.mubr.bf16.gmra.mxu0 %v3277
        %v3454 = vpop.f32.mrf.mxu0
        %v3455 = vadd.f32 0.0, %v3454
        %v3456 = vpop.f32.mrf.mxu0
        %v3457 = vpop.f32.mrf.mxu0
        %v3458 = vadd.f32 0.0, %v3457
        %v3459 = vpop.f32.mrf.mxu0
        %3460 = vmatprep.mubr.bf16.mxu0 0
        %3461 = vmatmul.mubr.bf16.gmra.mxu0 %v3278
        %v3462 = vpop.f32.mrf.mxu0
        %v3463 = vadd.f32 0.0, %v3462
        %v3464 = vpop.f32.mrf.mxu0
        %v3465 = vpop.f32.mrf.mxu0
        %v3466 = vadd.f32 0.0, %v3465
        %v3467 = vpop.f32.mrf.mxu0
        %3468 = vmatprep.mubr.bf16.mxu0 0
        %3469 = vmatmul.mubr.bf16.gmra.mxu0 %v3279
        %v3470 = vpop.f32.mrf.mxu0
        %v3471 = vadd.f32 0.0, %v3470
        %v3472 = vpop.f32.mrf.mxu0
        %v3473 = vpop.f32.mrf.mxu0
        %v3474 = vadd.f32 0.0, %v3473
        %v3475 = vpop.f32.mrf.mxu0
        %3476 = vmatprep.mubr.bf16.mxu0 0
        %3477 = vmatmul.mubr.bf16.gmra.mxu0 %v3280
        %v3478 = vpop.f32.mrf.mxu0
        %v3479 = vadd.f32 0.0, %v3478
        %v3480 = vpop.f32.mrf.mxu0
        %v3481 = vpop.f32.mrf.mxu0
        %v3482 = vadd.f32 0.0, %v3481
        %v3483 = vpop.f32.mrf.mxu0
        %3484 = vmatprep.mubr.bf16.mxu0 0
        %3485 = vmatmul.mubr.bf16.gmra.mxu0 %v3281
        %v3486 = vpop.f32.mrf.mxu0
        %v3487 = vadd.f32 0.0, %v3486
        %v3488 = vpop.f32.mrf.mxu0
        %v3489 = vpop.f32.mrf.mxu0
        %v3490 = vadd.f32 0.0, %v3489
        %v3491 = vpop.f32.mrf.mxu0
        %3492 = vmatprep.mubr.bf16.mxu0 0
        %3493 = vmatmul.mubr.bf16.gmra.mxu0 %v3282
        %v3494 = vpop.f32.mrf.mxu0
        %v3495 = vadd.f32 0.0, %v3494
        %v3496 = vpop.f32.mrf.mxu0
        %v3497 = vpop.f32.mrf.mxu0
        %v3498 = vadd.f32 0.0, %v3497
        %v3499 = vpop.f32.mrf.mxu0
        %3500 = vmatprep.mubr.bf16.mxu0 0
        %3501 = vmatmul.mubr.bf16.gmra.mxu0 %v3283
        %v3502 = vpop.f32.mrf.mxu0
        %v3503 = vadd.f32 0.0, %v3502
        %v3504 = vpop.f32.mrf.mxu0
        %v3505 = vpop.f32.mrf.mxu0
        %v3506 = vadd.f32 0.0, %v3505
        %v3507 = vpop.f32.mrf.mxu0
        %3508 = vmatprep.mubr.bf16.mxu0 0
        %3509 = vmatmul.mubr.bf16.gmra.mxu0 %v3284
        %v3510 = vpop.f32.mrf.mxu0
        %v3511 = vadd.f32 0.0, %v3510
        %v3512 = vpop.f32.mrf.mxu0
        %v3513 = vpop.f32.mrf.mxu0
        %v3514 = vadd.f32 0.0, %v3513
        %v3515 = vpop.f32.mrf.mxu0
        %3516 = vmatprep.mubr.bf16.mxu0 0
        %3517 = vmatmul.mubr.bf16.gmra.mxu0 %v3285
        %v3518 = vpop.f32.mrf.mxu0
        %v3519 = vadd.f32 0.0, %v3518
        %v3520 = vpop.f32.mrf.mxu0
        %v3521 = vpop.f32.mrf.mxu0
        %v3522 = vadd.f32 0.0, %v3521
        %v3523 = vpop.f32.mrf.mxu0
        %3524 = vmatprep.mubr.bf16.mxu0 0
        %3525 = vmatmul.mubr.bf16.gmra.mxu0 %v3286
        %v3526 = vpop.f32.mrf.mxu0
        %v3527 = vadd.f32 0.0, %v3526
        %v3528 = vpop.f32.mrf.mxu0
        %v3529 = vpop.f32.mrf.mxu0
        %v3530 = vadd.f32 0.0, %v3529
        %v3531 = vpop.f32.mrf.mxu0
        %3532 = vmatprep.mubr.bf16.mxu0 0
        %3533 = vmatmul.mubr.bf16.gmra.mxu0 %v3287
        %v3534 = vpop.f32.mrf.mxu0
        %v3535 = vadd.f32 0.0, %v3534
        %v3536 = vpop.f32.mrf.mxu0
        %v3537 = vpop.f32.mrf.mxu0
        %v3538 = vadd.f32 0.0, %v3537
        %v3539 = vpop.f32.mrf.mxu0
        %3540 = vmatprep.mubr.bf16.mxu0 0
        %3541 = vmatmul.mubr.bf16.gmra.mxu0 %v3288
        %v3542 = vpop.f32.mrf.mxu0
        %v3543 = vadd.f32 0.0, %v3542
        %v3544 = vpop.f32.mrf.mxu0
        %v3545 = vpop.f32.mrf.mxu0
        %v3546 = vadd.f32 0.0, %v3545
        %v3547 = vpop.f32.mrf.mxu0
        %3548 = vmatprep.mubr.bf16.mxu0 0
        %3549 = vmatmul.mubr.bf16.gmra.mxu0 %v3289
        %v3550 = vpop.f32.mrf.mxu0
        %v3551 = vadd.f32 0.0, %v3550
        %v3552 = vpop.f32.mrf.mxu0
        %v3553 = vpop.f32.mrf.mxu0
        %v3554 = vadd.f32 0.0, %v3553
        %v3555 = vpop.f32.mrf.mxu0
        %3556 = vmatprep.mubr.bf16.mxu0 0
        %3557 = vmatmul.mubr.bf16.gmra.mxu0 %v3290
        %v3558 = vpop.f32.mrf.mxu0
        %v3559 = vadd.f32 0.0, %v3558
        %v3560 = vpop.f32.mrf.mxu0
        %v3561 = vpop.f32.mrf.mxu0
        %v3562 = vadd.f32 0.0, %v3561
        %v3563 = vpop.f32.mrf.mxu0
        %3564 = vmatprep.mubr.bf16.mxu0 0
        %3565 = vmatmul.mubr.bf16.gmra.mxu0 %v3291
        %v3566 = vpop.f32.mrf.mxu0
        %v3567 = vadd.f32 0.0, %v3566
        %v3568 = vpop.f32.mrf.mxu0
        %v3569 = vpop.f32.mrf.mxu0
        %v3570 = vadd.f32 0.0, %v3569
        %v3571 = vpop.f32.mrf.mxu0
        %3572 = vmatprep.mubr.bf16.mxu0 0
        %3573 = vmatmul.mubr.bf16.gmra.mxu0 %v3292
        %v3574 = vpop.f32.mrf.mxu0
        %v3575 = vadd.f32 0.0, %v3574
        %v3576 = vpop.f32.mrf.mxu0
        %v3577 = vpop.f32.mrf.mxu0
        %v3578 = vpop.f32.mrf.mxu0
        %3579 = vdwg.mxu0
        %v3580 = vadd.f32 %v3073, %v3399
        %v3581 = vadd.f32 %v3074, %v3402
        %v3582 = vadd.f32 %v3075, %v3407
        %v3583 = vadd.f32 %v3076, %v3410
        %v3584 = vadd.f32 %v3077, %v3415
        %v3585 = vadd.f32 %v3078, %v3418
        %v3586 = vadd.f32 %v3079, %v3423
        %v3587 = vadd.f32 %v3080, %v3426
        %v3588 = vadd.f32 %v3081, %v3431
        %v3589 = vadd.f32 %v3082, %v3434
        %v3590 = vadd.f32 %v3083, %v3439
        %v3591 = vadd.f32 %v3084, %v3442
        %v3592 = vadd.f32 %v3085, %v3447
        %v3593 = vadd.f32 %v3086, %v3450
        %v3594 = vadd.f32 %v3087, %v3455
        %v3595 = vadd.f32 %v3088, %v3458
        %v3596 = vadd.f32 %v3089, %v3463
        %v3597 = vadd.f32 %v3090, %v3466
        %v3598 = vadd.f32 %v3091, %v3471
        %v3599 = vadd.f32 %v3092, %v3474
        %v3600 = vadd.f32 %v3093, %v3479
        %v3601 = vadd.f32 %v3094, %v3482
        %v3602 = vadd.f32 %v3095, %v3487
        %v3603 = vadd.f32 %v3096, %v3490
        %v3604 = vadd.f32 %v3097, %v3495
        %v3605 = vadd.f32 %v3098, %v3498
        %v3606 = vadd.f32 %v3099, %v3503
        %v3607 = vadd.f32 %v3100, %v3506
        %v3608 = vadd.f32 %v3101, %v3511
        %v3609 = vadd.f32 %v3102, %v3514
        %v3610 = vadd.f32 %v3103, %v3519
        %v3611 = vadd.f32 %v3104, %v3522
        %v3612 = vadd.f32 %v3105, %v3527
        %v3613 = vadd.f32 %v3106, %v3530
        %v3614 = vadd.f32 %v3107, %v3535
        %v3615 = vadd.f32 %v3108, %v3538
        %v3616 = vadd.f32 %v3109, %v3543
        %v3617 = vadd.f32 %v3110, %v3546
        %v3618 = vadd.f32 %v3111, %v3551
        %v3619 = vadd.f32 %v3112, %v3554
        %v3620 = vadd.f32 %v3113, %v3559
        %v3621 = vadd.f32 %v3114, %v3562
        %v3622 = vadd.f32 %v3115, %v3567
        %v3623 = vadd.f32 %v3116, %v3570
        %v3624 = vadd.f32 %v3117, %v3575
        %v3625 = vld [vmem:[%s249 + $0x14] sm:$0xf]
        %v3626 = vld [vmem:[%s249 + $0x18] sm:$0xf]
        %v3627 = vld [vmem:[%s249 + $0x1c] sm:$0xf]
        %v3628 = vld [vmem:[%s249 + $0x20] sm:$0xf]
        %v3629 = vld [vmem:[%s249 + $0x24] sm:$0xf]
        %v3630 = vld [vmem:[%s249 + $0x28] sm:$0xf]
        %v3631 = vld [vmem:[%s249 + $0x2c] sm:$0xf]
        %v3632 = vld [vmem:[%s249 + $0x30] sm:$0xf]
        %v3633 = vld [vmem:[%s249 + $0x34] sm:$0xf]
        %v3634 = vld [vmem:[%s249 + $0x38] sm:$0xf]
        %v3635 = vld [vmem:[%s249 + $0x3c] sm:$0xf]
        %v3636 = vld [vmem:[%s249 + $0x40] sm:$0xf]
        %v3637 = vld [vmem:[%s249 + $0x44] sm:$0xf]
        %v3638 = vld [vmem:[%s249 + $0x48] sm:$0xf]
        %v3639 = vld [vmem:[%s249 + $0x4c] sm:$0xf]
        %v3640 = vld [vmem:[%s249 + $0x50] sm:$0xf]
        %v3641 = vld [vmem:[%s249 + $0x54] sm:$0xf]
        %v3642 = vld [vmem:[%s249 + $0x58] sm:$0xf]
        %v3643 = vld [vmem:[%s249 + $0x5c] sm:$0xf]
        %v3644 = vld [vmem:[%s249 + $0x60] sm:$0xf]
        %v3645 = vld [vmem:[%s249 + $0x64] sm:$0xf]
        %v3646 = vld [vmem:[%s249 + $0x68] sm:$0xf]
        %v3647 = vld [vmem:[%s249 + $0x6c] sm:$0xf]
        %v3648 = vld [vmem:[%s249 + $0x70] sm:$0xf]
        %v3649 = vld [vmem:[%s249 + $0x74] sm:$0xf]
        %v3650 = vld [vmem:[%s249 + $0x78] sm:$0xf]
        %v3651 = vld [vmem:[%s249 + $0x7c] sm:$0xf]
        %v3652 = vld [vmem:[%s249 + $0x80] sm:$0xf]
        %v3653 = vld [vmem:[%s249 + $0x84] sm:$0xf]
        %v3654 = vld [vmem:[%s249 + $0x88] sm:$0xf]
        %v3655 = vld [vmem:[%s249 + $0x8c] sm:$0xf]
        %v3656 = vld [vmem:[%s249 + $0x90] sm:$0xf]
        %v3657 = vld [vmem:[%s249 + $0x94] sm:$0xf]
        %v3658 = vld [vmem:[%s249 + $0x98] sm:$0xf]
        %v3659 = vld [vmem:[%s249 + $0x9c] sm:$0xf]
        %v3660 = vld [vmem:[%s249 + $0xa0] sm:$0xf]
        %v3661 = vld [vmem:[%s249 + $0xa4] sm:$0xf]
        %v3662 = vld [vmem:[%s249 + $0xa8] sm:$0xf]
        %v3663 = vld [vmem:[%s249 + $0xac] sm:$0xf]
        %v3664 = vld [vmem:[%s249 + $0xb0] sm:$0xf]
        %v3665 = vld [vmem:[%s249 + $0xb4] sm:$0xf]
        %v3666 = vld [vmem:[%s249 + $0xb8] sm:$0xf]
        %v3667 = vld [vmem:[%s249 + $0xbc] sm:$0xf]
        %v3668 = vld [vmem:[%s249 + $0xc0] sm:$0xf]
        %v3669 = vld [vmem:[%s249 + $0xc4] sm:$0xf]
        %v3670 = vld [vmem:[%s249 + $0xc8] sm:$0x1]
        %s3671 = scalar_lea.vmem %s1, 448
        %v3672 = vld [vmem:[%s3671] sm:$0xf]
        %v3673 = vld [vmem:[%s3671 + $0x4] sm:$0xf]
        %v3674 = vld [vmem:[%s3671 + $0x8] sm:$0xf]
        %v3675 = vld [vmem:[%s3671 + $0xc] sm:$0xf]
        %v3676 = vld [vmem:[%s3671 + $0x10] sm:$0xf]
        %v3677 = vld [vmem:[%s3671 + $0x14] sm:$0xf]
        %v3678 = vld [vmem:[%s3671 + $0x18] sm:$0xf]
        %v3679 = vld [vmem:[%s3671 + $0x1c] sm:$0xf]
        %v3680 = vld [vmem:[%s3671 + $0x20] sm:$0xf]
        %v3681 = vld [vmem:[%s3671 + $0x24] sm:$0xf]
        %v3682 = vld [vmem:[%s3671 + $0x28] sm:$0xf]
        %v3683 = vld [vmem:[%s3671 + $0x2c] sm:$0xf]
        %v3684 = vld [vmem:[%s3671 + $0x30] sm:$0xf]
        %v3685 = vld [vmem:[%s3671 + $0x34] sm:$0xf]
        %v3686 = vld [vmem:[%s3671 + $0x38] sm:$0xf]
        %v3687 = vld [vmem:[%s3671 + $0x3c] sm:$0xf]
        %v3734 = vunpack.c.l.b16 %v3625
        %v3735 = vunpack.c.l.b16 %v3626
        %v3736 = vunpack.c.l.b16 %v3627
        %v3737 = vunpack.c.l.b16 %v3628
        %v3738 = vunpack.c.l.b16 %v3629
        %v3739 = vunpack.c.l.b16 %v3630
        %v3740 = vunpack.c.l.b16 %v3631
        %v3741 = vunpack.c.l.b16 %v3632
        %v3742 = vunpack.c.l.b16 %v3633
        %v3743 = vunpack.c.l.b16 %v3634
        %v3744 = vunpack.c.l.b16 %v3635
        %v3745 = vunpack.c.l.b16 %v3636
        %v3746 = vunpack.c.l.b16 %v3637
        %v3747 = vunpack.c.l.b16 %v3638
        %v3748 = vunpack.c.l.b16 %v3639
        %v3749 = vunpack.c.l.b16 %v3640
        %v3750 = vunpack.c.l.b16 %v3641
        %v3751 = vunpack.c.l.b16 %v3642
        %v3752 = vunpack.c.l.b16 %v3643
        %v3753 = vunpack.c.l.b16 %v3644
        %v3754 = vunpack.c.l.b16 %v3645
        %v3755 = vunpack.c.l.b16 %v3646
        %v3756 = vunpack.c.l.b16 %v3647
        %v3757 = vunpack.c.l.b16 %v3648
        %v3758 = vunpack.c.l.b16 %v3649
        %v3759 = vunpack.c.l.b16 %v3650
        %v3760 = vunpack.c.l.b16 %v3651
        %v3761 = vunpack.c.l.b16 %v3652
        %v3762 = vunpack.c.l.b16 %v3653
        %v3763 = vunpack.c.l.b16 %v3654
        %v3764 = vunpack.c.l.b16 %v3655
        %v3765 = vunpack.c.l.b16 %v3656
        %v3766 = vunpack.c.l.b16 %v3657
        %v3767 = vunpack.c.l.b16 %v3658
        %v3768 = vunpack.c.l.b16 %v3659
        %v3769 = vunpack.c.l.b16 %v3660
        %v3770 = vunpack.c.l.b16 %v3661
        %v3771 = vunpack.c.l.b16 %v3662
        %v3772 = vunpack.c.l.b16 %v3663
        %v3773 = vunpack.c.l.b16 %v3664
        %v3774 = vunpack.c.l.b16 %v3665
        %v3775 = vunpack.c.l.b16 %v3666
        %v3776 = vunpack.c.l.b16 %v3667
        %v3777 = vunpack.c.l.b16 %v3668
        %v3778 = vunpack.c.l.b16 %v3669
        %v3779 = vunpack.c.l.b16 %v3670
        %v3780 = vpack.c.b16 %v3735, %v3734
        %v3781 = vpack.c.b16 %v3737, %v3736
        %v3782 = vpack.c.b16 %v3739, %v3738
        %v3783 = vpack.c.b16 %v3741, %v3740
        %v3784 = vpack.c.b16 %v3743, %v3742
        %v3785 = vpack.c.b16 %v3745, %v3744
        %v3786 = vpack.c.b16 %v3747, %v3746
        %v3787 = vpack.c.b16 %v3749, %v3748
        %v3788 = vpack.c.b16 %v3751, %v3750
        %v3789 = vpack.c.b16 %v3753, %v3752
        %v3790 = vpack.c.b16 %v3755, %v3754
        %v3791 = vpack.c.b16 %v3757, %v3756
        %v3792 = vpack.c.b16 %v3759, %v3758
        %v3793 = vpack.c.b16 %v3761, %v3760
        %v3794 = vpack.c.b16 %v3763, %v3762
        %v3795 = vpack.c.b16 %v3765, %v3764
        %v3796 = vpack.c.b16 %v3767, %v3766
        %v3797 = vpack.c.b16 %v3769, %v3768
        %v3798 = vpack.c.b16 %v3771, %v3770
        %v3799 = vpack.c.b16 %v3773, %v3772
        %v3800 = vpack.c.b16 %v3775, %v3774
        %v3801 = vpack.c.b16 %v3777, %v3776
        %v3802 = vpack.c.b16 %v3779, %v3778
        %v3804 = vshrl.u32 %v3780, 16
        %v3806 = vshll.u32 %v3780, 16
        %v3808 = vrot.slane %v3806, 1
        %v3809 = vor.u32 %v3804, %v3808
        %v3811 = vshll.u32 %v3781, 16
        %v3813 = vrot.slane %v3811, 1
        %v3814 = vsel %vm445, %v3809, %v3813
        %v3815 = vshrl.u32 %v3781, 16
        %v3817 = vor.u32 %v3815, %v3813
        %v3819 = vshll.u32 %v3782, 16
        %v3821 = vrot.slane %v3819, 1
        %v3822 = vsel %vm445, %v3817, %v3821
        %v3823 = vshrl.u32 %v3782, 16
        %v3825 = vor.u32 %v3823, %v3821
        %v3827 = vshll.u32 %v3783, 16
        %v3829 = vrot.slane %v3827, 1
        %v3830 = vsel %vm445, %v3825, %v3829
        %v3831 = vshrl.u32 %v3783, 16
        %v3833 = vor.u32 %v3831, %v3829
        %v3835 = vshll.u32 %v3784, 16
        %v3837 = vrot.slane %v3835, 1
        %v3838 = vsel %vm445, %v3833, %v3837
        %v3839 = vshrl.u32 %v3784, 16
        %v3841 = vor.u32 %v3839, %v3837
        %v3843 = vshll.u32 %v3785, 16
        %v3845 = vrot.slane %v3843, 1
        %v3846 = vsel %vm445, %v3841, %v3845
        %v3847 = vshrl.u32 %v3785, 16
        %v3849 = vor.u32 %v3847, %v3845
        %v3851 = vshll.u32 %v3786, 16
        %v3853 = vrot.slane %v3851, 1
        %v3854 = vsel %vm445, %v3849, %v3853
        %v3855 = vshrl.u32 %v3786, 16
        %v3857 = vor.u32 %v3855, %v3853
        %v3859 = vshll.u32 %v3787, 16
        %v3861 = vrot.slane %v3859, 1
        %v3862 = vsel %vm445, %v3857, %v3861
        %v3863 = vshrl.u32 %v3787, 16
        %v3865 = vor.u32 %v3863, %v3861
        %v3867 = vshll.u32 %v3788, 16
        %v3869 = vrot.slane %v3867, 1
        %v3870 = vsel %vm445, %v3865, %v3869
        %v3871 = vshrl.u32 %v3788, 16
        %v3873 = vor.u32 %v3871, %v3869
        %v3875 = vshll.u32 %v3789, 16
        %v3877 = vrot.slane %v3875, 1
        %v3878 = vsel %vm445, %v3873, %v3877
        %v3879 = vshrl.u32 %v3789, 16
        %v3881 = vor.u32 %v3879, %v3877
        %v3883 = vshll.u32 %v3790, 16
        %v3885 = vrot.slane %v3883, 1
        %v3886 = vsel %vm445, %v3881, %v3885
        %v3887 = vshrl.u32 %v3790, 16
        %v3889 = vor.u32 %v3887, %v3885
        %v3891 = vshll.u32 %v3791, 16
        %v3893 = vrot.slane %v3891, 1
        %v3894 = vsel %vm445, %v3889, %v3893
        %v3895 = vshrl.u32 %v3791, 16
        %v3897 = vor.u32 %v3895, %v3893
        %v3899 = vshll.u32 %v3792, 16
        %v3901 = vrot.slane %v3899, 1
        %v3902 = vsel %vm445, %v3897, %v3901
        %v3903 = vshrl.u32 %v3792, 16
        %v3905 = vor.u32 %v3903, %v3901
        %v3907 = vshll.u32 %v3793, 16
        %v3909 = vrot.slane %v3907, 1
        %v3910 = vsel %vm445, %v3905, %v3909
        %v3911 = vshrl.u32 %v3793, 16
        %v3913 = vor.u32 %v3911, %v3909
        %v3915 = vshll.u32 %v3794, 16
        %v3917 = vrot.slane %v3915, 1
        %v3918 = vsel %vm445, %v3913, %v3917
        %v3919 = vshrl.u32 %v3794, 16
        %v3921 = vor.u32 %v3919, %v3917
        %v3923 = vshll.u32 %v3795, 16
        %v3925 = vrot.slane %v3923, 1
        %v3926 = vsel %vm445, %v3921, %v3925
        %v3927 = vshrl.u32 %v3795, 16
        %v3929 = vor.u32 %v3927, %v3925
        %v3931 = vshll.u32 %v3796, 16
        %v3933 = vrot.slane %v3931, 1
        %v3934 = vsel %vm445, %v3929, %v3933
        %v3935 = vshrl.u32 %v3796, 16
        %v3937 = vor.u32 %v3935, %v3933
        %v3939 = vshll.u32 %v3797, 16
        %v3941 = vrot.slane %v3939, 1
        %v3942 = vsel %vm445, %v3937, %v3941
        %v3943 = vshrl.u32 %v3797, 16
        %v3945 = vor.u32 %v3943, %v3941
        %v3947 = vshll.u32 %v3798, 16
        %v3949 = vrot.slane %v3947, 1
        %v3950 = vsel %vm445, %v3945, %v3949
        %v3951 = vshrl.u32 %v3798, 16
        %v3953 = vor.u32 %v3951, %v3949
        %v3955 = vshll.u32 %v3799, 16
        %v3957 = vrot.slane %v3955, 1
        %v3958 = vsel %vm445, %v3953, %v3957
        %v3959 = vshrl.u32 %v3799, 16
        %v3961 = vor.u32 %v3959, %v3957
        %v3963 = vshll.u32 %v3800, 16
        %v3965 = vrot.slane %v3963, 1
        %v3966 = vsel %vm445, %v3961, %v3965
        %v3967 = vshrl.u32 %v3800, 16
        %v3969 = vor.u32 %v3967, %v3965
        %v3971 = vshll.u32 %v3801, 16
        %v3973 = vrot.slane %v3971, 1
        %v3974 = vsel %vm445, %v3969, %v3973
        %v3975 = vshrl.u32 %v3801, 16
        %v3977 = vor.u32 %v3975, %v3973
        %v3979 = vshll.u32 %v3802, 16
        %v3981 = vrot.slane %v3979, 1
        %v3982 = vsel %vm445, %v3977, %v3981
        %v3983 = vshrl.u32 %v3802, 16
        %v3985 = vor.u32 %v3983, %v3981
        %v4025 = vunpack.c.l.b16 %v3672
        %v4026 = vunpack.c.l.b16 %v3673
        %v4027 = vunpack.c.l.b16 %v3674
        %v4028 = vunpack.c.l.b16 %v3675
        %v4029 = vunpack.c.l.b16 %v3676
        %v4030 = vunpack.c.l.b16 %v3677
        %v4031 = vunpack.c.l.b16 %v3678
        %v4032 = vunpack.c.l.b16 %v3679
        %v4033 = vunpack.c.l.b16 %v3680
        %v4034 = vunpack.c.l.b16 %v3681
        %v4035 = vunpack.c.l.b16 %v3682
        %v4036 = vunpack.c.l.b16 %v3683
        %v4037 = vunpack.c.l.b16 %v3684
        %v4038 = vunpack.c.l.b16 %v3685
        %v4039 = vunpack.c.l.b16 %v3686
        %v4040 = vunpack.c.l.b16 %v3687
        %v4041 = vpack.c.b16 %v4026, %v4025
        %v4042 = vpack.c.b16 %v4028, %v4027
        %v4043 = vpack.c.b16 %v4030, %v4029
        %v4044 = vpack.c.b16 %v4032, %v4031
        %v4045 = vpack.c.b16 %v4034, %v4033
        %v4046 = vpack.c.b16 %v4036, %v4035
        %v4047 = vpack.c.b16 %v4038, %v4037
        %v4048 = vpack.c.b16 %v4040, %v4039
        %4057 = vmatprep.subr.bf16.mxu0 0
        %4058 = vmatpush1.bf16.msra.mxu0 %v4048
        %4059 = vmatprep.subr.bf16.mxu0 0
        %4060 = vmatpush1.bf16.msra.mxu0 %v4047
        %4061 = vmatprep.subr.bf16.mxu0 0
        %4062 = vmatpush1.bf16.msra.mxu0 %v4046
        %4063 = vmatprep.subr.bf16.mxu0 0
        %4064 = vmatpush1.bf16.msra.mxu0 %v4045
        %4065 = vmatprep.subr.bf16.mxu0 0
        %4066 = vmatpush1.bf16.msra.mxu0 %v4044
        %4067 = vmatprep.subr.bf16.mxu0 0
        %4068 = vmatpush1.bf16.msra.mxu0 %v4043
        %4069 = vmatprep.subr.bf16.mxu0 0
        %4070 = vmatpush1.bf16.msra.mxu0 %v4042
        %4071 = vmatprep.subr.bf16.mxu0 0
        %4072 = vmatpush1.bf16.msra.mxu0 %v4041
        %4073 = vmatprep.subr.bf16.mxu0 0
        %4074 = vmatpush2.bf16.msra.mxu0 0
        %4075 = vmatprep.subr.bf16.mxu0 0
        %4076 = vmatpush2.bf16.msra.mxu0 0
        %4077 = vmatprep.subr.bf16.mxu0 0
        %4078 = vmatpush2.bf16.msra.mxu0 0
        %4079 = vmatprep.subr.bf16.mxu0 0
        %4080 = vmatpush2.bf16.msra.mxu0 0
        %4081 = vmatprep.subr.bf16.mxu0 0
        %4082 = vmatpush2.bf16.msra.mxu0 0
        %4083 = vmatprep.subr.bf16.mxu0 0
        %4084 = vmatpush2.bf16.msra.mxu0 0
        %4085 = vmatprep.subr.bf16.mxu0 0
        %4086 = vmatpush2.bf16.msra.mxu0 0
        %4087 = vmatprep.subr.bf16.mxu0 0
        %4088 = vmatpush2.bf16.msra.mxu0 0
        %4089 = vmatprep.mubr.bf16.mxu0 0
        %4090 = vmatmul.mubr.bf16.gmra.mxu0 %v3814
        %v4091 = vpop.f32.mrf.mxu0
        %v4092 = vadd.f32 0.0, %v4091
        %v4093 = vpop.f32.mrf.mxu0
        %v4094 = vpop.f32.mrf.mxu0
        %v4095 = vadd.f32 0.0, %v4094
        %v4096 = vpop.f32.mrf.mxu0
        %4097 = vmatprep.mubr.bf16.mxu0 0
        %4098 = vmatmul.mubr.bf16.gmra.mxu0 %v3822
        %v4099 = vpop.f32.mrf.mxu0
        %v4100 = vadd.f32 0.0, %v4099
        %v4101 = vpop.f32.mrf.mxu0
        %v4102 = vpop.f32.mrf.mxu0
        %v4103 = vadd.f32 0.0, %v4102
        %v4104 = vpop.f32.mrf.mxu0
        %4105 = vmatprep.mubr.bf16.mxu0 0
        %4106 = vmatmul.mubr.bf16.gmra.mxu0 %v3830
        %v4107 = vpop.f32.mrf.mxu0
        %v4108 = vadd.f32 0.0, %v4107
        %v4109 = vpop.f32.mrf.mxu0
        %v4110 = vpop.f32.mrf.mxu0
        %v4111 = vadd.f32 0.0, %v4110
        %v4112 = vpop.f32.mrf.mxu0
        %4113 = vmatprep.mubr.bf16.mxu0 0
        %4114 = vmatmul.mubr.bf16.gmra.mxu0 %v3838
        %v4115 = vpop.f32.mrf.mxu0
        %v4116 = vadd.f32 0.0, %v4115
        %v4117 = vpop.f32.mrf.mxu0
        %v4118 = vpop.f32.mrf.mxu0
        %v4119 = vadd.f32 0.0, %v4118
        %v4120 = vpop.f32.mrf.mxu0
        %4121 = vmatprep.mubr.bf16.mxu0 0
        %4122 = vmatmul.mubr.bf16.gmra.mxu0 %v3846
        %v4123 = vpop.f32.mrf.mxu0
        %v4124 = vadd.f32 0.0, %v4123
        %v4125 = vpop.f32.mrf.mxu0
        %v4126 = vpop.f32.mrf.mxu0
        %v4127 = vadd.f32 0.0, %v4126
        %v4128 = vpop.f32.mrf.mxu0
        %4129 = vmatprep.mubr.bf16.mxu0 0
        %4130 = vmatmul.mubr.bf16.gmra.mxu0 %v3854
        %v4131 = vpop.f32.mrf.mxu0
        %v4132 = vadd.f32 0.0, %v4131
        %v4133 = vpop.f32.mrf.mxu0
        %v4134 = vpop.f32.mrf.mxu0
        %v4135 = vadd.f32 0.0, %v4134
        %v4136 = vpop.f32.mrf.mxu0
        %4137 = vmatprep.mubr.bf16.mxu0 0
        %4138 = vmatmul.mubr.bf16.gmra.mxu0 %v3862
        %v4139 = vpop.f32.mrf.mxu0
        %v4140 = vadd.f32 0.0, %v4139
        %v4141 = vpop.f32.mrf.mxu0
        %v4142 = vpop.f32.mrf.mxu0
        %v4143 = vadd.f32 0.0, %v4142
        %v4144 = vpop.f32.mrf.mxu0
        %4145 = vmatprep.mubr.bf16.mxu0 0
        %4146 = vmatmul.mubr.bf16.gmra.mxu0 %v3870
        %v4147 = vpop.f32.mrf.mxu0
        %v4148 = vadd.f32 0.0, %v4147
        %v4149 = vpop.f32.mrf.mxu0
        %v4150 = vpop.f32.mrf.mxu0
        %v4151 = vadd.f32 0.0, %v4150
        %v4152 = vpop.f32.mrf.mxu0
        %4153 = vmatprep.mubr.bf16.mxu0 0
        %4154 = vmatmul.mubr.bf16.gmra.mxu0 %v3878
        %v4155 = vpop.f32.mrf.mxu0
        %v4156 = vadd.f32 0.0, %v4155
        %v4157 = vpop.f32.mrf.mxu0
        %v4158 = vpop.f32.mrf.mxu0
        %v4159 = vadd.f32 0.0, %v4158
        %v4160 = vpop.f32.mrf.mxu0
        %4161 = vmatprep.mubr.bf16.mxu0 0
        %4162 = vmatmul.mubr.bf16.gmra.mxu0 %v3886
        %v4163 = vpop.f32.mrf.mxu0
        %v4164 = vadd.f32 0.0, %v4163
        %v4165 = vpop.f32.mrf.mxu0
        %v4166 = vpop.f32.mrf.mxu0
        %v4167 = vadd.f32 0.0, %v4166
        %v4168 = vpop.f32.mrf.mxu0
        %4169 = vmatprep.mubr.bf16.mxu0 0
        %4170 = vmatmul.mubr.bf16.gmra.mxu0 %v3894
        %v4171 = vpop.f32.mrf.mxu0
        %v4172 = vadd.f32 0.0, %v4171
        %v4173 = vpop.f32.mrf.mxu0
        %v4174 = vpop.f32.mrf.mxu0
        %v4175 = vadd.f32 0.0, %v4174
        %v4176 = vpop.f32.mrf.mxu0
        %4177 = vmatprep.mubr.bf16.mxu0 0
        %4178 = vmatmul.mubr.bf16.gmra.mxu0 %v3902
        %v4179 = vpop.f32.mrf.mxu0
        %v4180 = vadd.f32 0.0, %v4179
        %v4181 = vpop.f32.mrf.mxu0
        %v4182 = vpop.f32.mrf.mxu0
        %v4183 = vadd.f32 0.0, %v4182
        %v4184 = vpop.f32.mrf.mxu0
        %4185 = vmatprep.mubr.bf16.mxu0 0
        %4186 = vmatmul.mubr.bf16.gmra.mxu0 %v3910
        %v4187 = vpop.f32.mrf.mxu0
        %v4188 = vadd.f32 0.0, %v4187
        %v4189 = vpop.f32.mrf.mxu0
        %v4190 = vpop.f32.mrf.mxu0
        %v4191 = vadd.f32 0.0, %v4190
        %v4192 = vpop.f32.mrf.mxu0
        %4193 = vmatprep.mubr.bf16.mxu0 0
        %4194 = vmatmul.mubr.bf16.gmra.mxu0 %v3918
        %v4195 = vpop.f32.mrf.mxu0
        %v4196 = vadd.f32 0.0, %v4195
        %v4197 = vpop.f32.mrf.mxu0
        %v4198 = vpop.f32.mrf.mxu0
        %v4199 = vadd.f32 0.0, %v4198
        %v4200 = vpop.f32.mrf.mxu0
        %4201 = vmatprep.mubr.bf16.mxu0 0
        %4202 = vmatmul.mubr.bf16.gmra.mxu0 %v3926
        %v4203 = vpop.f32.mrf.mxu0
        %v4204 = vadd.f32 0.0, %v4203
        %v4205 = vpop.f32.mrf.mxu0
        %v4206 = vpop.f32.mrf.mxu0
        %v4207 = vadd.f32 0.0, %v4206
        %v4208 = vpop.f32.mrf.mxu0
        %4209 = vmatprep.mubr.bf16.mxu0 0
        %4210 = vmatmul.mubr.bf16.gmra.mxu0 %v3934
        %v4211 = vpop.f32.mrf.mxu0
        %v4212 = vadd.f32 0.0, %v4211
        %v4213 = vpop.f32.mrf.mxu0
        %v4214 = vpop.f32.mrf.mxu0
        %v4215 = vadd.f32 0.0, %v4214
        %v4216 = vpop.f32.mrf.mxu0
        %4217 = vmatprep.mubr.bf16.mxu0 0
        %4218 = vmatmul.mubr.bf16.gmra.mxu0 %v3942
        %v4219 = vpop.f32.mrf.mxu0
        %v4220 = vadd.f32 0.0, %v4219
        %v4221 = vpop.f32.mrf.mxu0
        %v4222 = vpop.f32.mrf.mxu0
        %v4223 = vadd.f32 0.0, %v4222
        %v4224 = vpop.f32.mrf.mxu0
        %4225 = vmatprep.mubr.bf16.mxu0 0
        %4226 = vmatmul.mubr.bf16.gmra.mxu0 %v3950
        %v4227 = vpop.f32.mrf.mxu0
        %v4228 = vadd.f32 0.0, %v4227
        %v4229 = vpop.f32.mrf.mxu0
        %v4230 = vpop.f32.mrf.mxu0
        %v4231 = vadd.f32 0.0, %v4230
        %v4232 = vpop.f32.mrf.mxu0
        %4233 = vmatprep.mubr.bf16.mxu0 0
        %4234 = vmatmul.mubr.bf16.gmra.mxu0 %v3958
        %v4235 = vpop.f32.mrf.mxu0
        %v4236 = vadd.f32 0.0, %v4235
        %v4237 = vpop.f32.mrf.mxu0
        %v4238 = vpop.f32.mrf.mxu0
        %v4239 = vadd.f32 0.0, %v4238
        %v4240 = vpop.f32.mrf.mxu0
        %4241 = vmatprep.mubr.bf16.mxu0 0
        %4242 = vmatmul.mubr.bf16.gmra.mxu0 %v3966
        %v4243 = vpop.f32.mrf.mxu0
        %v4244 = vadd.f32 0.0, %v4243
        %v4245 = vpop.f32.mrf.mxu0
        %v4246 = vpop.f32.mrf.mxu0
        %v4247 = vadd.f32 0.0, %v4246
        %v4248 = vpop.f32.mrf.mxu0
        %4249 = vmatprep.mubr.bf16.mxu0 0
        %4250 = vmatmul.mubr.bf16.gmra.mxu0 %v3974
        %v4251 = vpop.f32.mrf.mxu0
        %v4252 = vadd.f32 0.0, %v4251
        %v4253 = vpop.f32.mrf.mxu0
        %v4254 = vpop.f32.mrf.mxu0
        %v4255 = vadd.f32 0.0, %v4254
        %v4256 = vpop.f32.mrf.mxu0
        %4257 = vmatprep.mubr.bf16.mxu0 0
        %4258 = vmatmul.mubr.bf16.gmra.mxu0 %v3982
        %v4259 = vpop.f32.mrf.mxu0
        %v4260 = vadd.f32 0.0, %v4259
        %v4261 = vpop.f32.mrf.mxu0
        %v4262 = vpop.f32.mrf.mxu0
        %v4263 = vadd.f32 0.0, %v4262
        %v4264 = vpop.f32.mrf.mxu0
        %4265 = vmatprep.mubr.bf16.mxu0 0
        %4266 = vmatmul.mubr.bf16.gmra.mxu0 %v3985
        %v4267 = vpop.f32.mrf.mxu0
        %v4268 = vadd.f32 0.0, %v4267
        %v4269 = vpop.f32.mrf.mxu0
        %v4270 = vpop.f32.mrf.mxu0
        %v4271 = vpop.f32.mrf.mxu0
        %4272 = vdwg.mxu0
        %v4273 = vadd.f32 %v3580, %v4092
        %v4274 = vadd.f32 %v3581, %v4095
        %v4275 = vadd.f32 %v3582, %v4100
        %v4276 = vadd.f32 %v3583, %v4103
        %v4277 = vadd.f32 %v3584, %v4108
        %v4278 = vadd.f32 %v3585, %v4111
        %v4279 = vadd.f32 %v3586, %v4116
        %v4280 = vadd.f32 %v3587, %v4119
        %v4281 = vadd.f32 %v3588, %v4124
        %v4282 = vadd.f32 %v3589, %v4127
        %v4283 = vadd.f32 %v3590, %v4132
        %v4284 = vadd.f32 %v3591, %v4135
        %v4285 = vadd.f32 %v3592, %v4140
        %v4286 = vadd.f32 %v3593, %v4143
        %v4287 = vadd.f32 %v3594, %v4148
        %v4288 = vadd.f32 %v3595, %v4151
        %v4289 = vadd.f32 %v3596, %v4156
        %v4290 = vadd.f32 %v3597, %v4159
        %v4291 = vadd.f32 %v3598, %v4164
        %v4292 = vadd.f32 %v3599, %v4167
        %v4293 = vadd.f32 %v3600, %v4172
        %v4294 = vadd.f32 %v3601, %v4175
        %v4295 = vadd.f32 %v3602, %v4180
        %v4296 = vadd.f32 %v3603, %v4183
        %v4297 = vadd.f32 %v3604, %v4188
        %v4298 = vadd.f32 %v3605, %v4191
        %v4299 = vadd.f32 %v3606, %v4196
        %v4300 = vadd.f32 %v3607, %v4199
        %v4301 = vadd.f32 %v3608, %v4204
        %v4302 = vadd.f32 %v3609, %v4207
        %v4303 = vadd.f32 %v3610, %v4212
        %v4304 = vadd.f32 %v3611, %v4215
        %v4305 = vadd.f32 %v3612, %v4220
        %v4306 = vadd.f32 %v3613, %v4223
        %v4307 = vadd.f32 %v3614, %v4228
        %v4308 = vadd.f32 %v3615, %v4231
        %v4309 = vadd.f32 %v3616, %v4236
        %v4310 = vadd.f32 %v3617, %v4239
        %v4311 = vadd.f32 %v3618, %v4244
        %v4312 = vadd.f32 %v3619, %v4247
        %v4313 = vadd.f32 %v3620, %v4252
        %v4314 = vadd.f32 %v3621, %v4255
        %v4315 = vadd.f32 %v3622, %v4260
        %v4316 = vadd.f32 %v3623, %v4263
        %v4317 = vadd.f32 %v3624, %v4268
        %v4318 = vld [vmem:[%s249 + $0x14] sm:$0xe]
        %s4319 = scalar_lea.vmem %s1, 512
        %v4320 = vld [vmem:[%s4319] sm:$0xf]
        %v4321 = vld [vmem:[%s4319 + $0x4] sm:$0xf]
        %v4322 = vld [vmem:[%s4319 + $0x8] sm:$0xf]
        %v4323 = vld [vmem:[%s4319 + $0xc] sm:$0xf]
        %v4324 = vld [vmem:[%s4319 + $0x10] sm:$0xf]
        %v4325 = vld [vmem:[%s4319 + $0x14] sm:$0xf]
        %v4326 = vld [vmem:[%s4319 + $0x18] sm:$0xf]
        %v4327 = vld [vmem:[%s4319 + $0x1c] sm:$0xf]
        %v4328 = vld [vmem:[%s4319 + $0x20] sm:$0xf]
        %v4329 = vld [vmem:[%s4319 + $0x24] sm:$0xf]
        %v4330 = vld [vmem:[%s4319 + $0x28] sm:$0xf]
        %v4331 = vld [vmem:[%s4319 + $0x2c] sm:$0xf]
        %v4332 = vld [vmem:[%s4319 + $0x30] sm:$0xf]
        %v4333 = vld [vmem:[%s4319 + $0x34] sm:$0xf]
        %v4334 = vld [vmem:[%s4319 + $0x38] sm:$0xf]
        %v4335 = vld [vmem:[%s4319 + $0x3c] sm:$0xf]
        %v4337 = vunpack.c.l.b16 %v4318
        %v4338 = vpack.c.b16 %v3735, %v4337
        %v4339 = vrot.slane %v4338, 1
        %v4340 = vrot.slane %v3781, 1
        %v4341 = vsel %vm1225, %v4339, %v4340
        %v4342 = vrot.slane %v3782, 1
        %v4343 = vsel %vm1225, %v4340, %v4342
        %v4344 = vrot.slane %v3783, 1
        %v4345 = vsel %vm1225, %v4342, %v4344
        %v4346 = vrot.slane %v3784, 1
        %v4347 = vsel %vm1225, %v4344, %v4346
        %v4348 = vrot.slane %v3785, 1
        %v4349 = vsel %vm1225, %v4346, %v4348
        %v4350 = vrot.slane %v3786, 1
        %v4351 = vsel %vm1225, %v4348, %v4350
        %v4352 = vrot.slane %v3787, 1
        %v4353 = vsel %vm1225, %v4350, %v4352
        %v4354 = vrot.slane %v3788, 1
        %v4355 = vsel %vm1225, %v4352, %v4354
        %v4356 = vrot.slane %v3789, 1
        %v4357 = vsel %vm1225, %v4354, %v4356
        %v4358 = vrot.slane %v3790, 1
        %v4359 = vsel %vm1225, %v4356, %v4358
        %v4360 = vrot.slane %v3791, 1
        %v4361 = vsel %vm1225, %v4358, %v4360
        %v4362 = vrot.slane %v3792, 1
        %v4363 = vsel %vm1225, %v4360, %v4362
        %v4364 = vrot.slane %v3793, 1
        %v4365 = vsel %vm1225, %v4362, %v4364
        %v4366 = vrot.slane %v3794, 1
        %v4367 = vsel %vm1225, %v4364, %v4366
        %v4368 = vrot.slane %v3795, 1
        %v4369 = vsel %vm1225, %v4366, %v4368
        %v4370 = vrot.slane %v3796, 1
        %v4371 = vsel %vm1225, %v4368, %v4370
        %v4372 = vrot.slane %v3797, 1
        %v4373 = vsel %vm1225, %v4370, %v4372
        %v4374 = vrot.slane %v3798, 1
        %v4375 = vsel %vm1225, %v4372, %v4374
        %v4376 = vrot.slane %v3799, 1
        %v4377 = vsel %vm1225, %v4374, %v4376
        %v4378 = vrot.slane %v3800, 1
        %v4379 = vsel %vm1225, %v4376, %v4378
        %v4380 = vrot.slane %v3801, 1
        %v4381 = vsel %vm1225, %v4378, %v4380
        %v4382 = vrot.slane %v3802, 1
        %v4383 = vsel %vm1225, %v4380, %v4382
        %v4423 = vunpack.c.l.b16 %v4320
        %v4424 = vunpack.c.l.b16 %v4321
        %v4425 = vunpack.c.l.b16 %v4322
        %v4426 = vunpack.c.l.b16 %v4323
        %v4427 = vunpack.c.l.b16 %v4324
        %v4428 = vunpack.c.l.b16 %v4325
        %v4429 = vunpack.c.l.b16 %v4326
        %v4430 = vunpack.c.l.b16 %v4327
        %v4431 = vunpack.c.l.b16 %v4328
        %v4432 = vunpack.c.l.b16 %v4329
        %v4433 = vunpack.c.l.b16 %v4330
        %v4434 = vunpack.c.l.b16 %v4331
        %v4435 = vunpack.c.l.b16 %v4332
        %v4436 = vunpack.c.l.b16 %v4333
        %v4437 = vunpack.c.l.b16 %v4334
        %v4438 = vunpack.c.l.b16 %v4335
        %v4439 = vpack.c.b16 %v4424, %v4423
        %v4440 = vpack.c.b16 %v4426, %v4425
        %v4441 = vpack.c.b16 %v4428, %v4427
        %v4442 = vpack.c.b16 %v4430, %v4429
        %v4443 = vpack.c.b16 %v4432, %v4431
        %v4444 = vpack.c.b16 %v4434, %v4433
        %v4445 = vpack.c.b16 %v4436, %v4435
        %v4446 = vpack.c.b16 %v4438, %v4437
        %4455 = vmatprep.subr.bf16.mxu0 0
        %4456 = vmatpush1.bf16.msra.mxu0 %v4446
        %4457 = vmatprep.subr.bf16.mxu0 0
        %4458 = vmatpush1.bf16.msra.mxu0 %v4445
        %4459 = vmatprep.subr.bf16.mxu0 0
        %4460 = vmatpush1.bf16.msra.mxu0 %v4444
        %4461 = vmatprep.subr.bf16.mxu0 0
        %4462 = vmatpush1.bf16.msra.mxu0 %v4443
        %4463 = vmatprep.subr.bf16.mxu0 0
        %4464 = vmatpush1.bf16.msra.mxu0 %v4442
        %4465 = vmatprep.subr.bf16.mxu0 0
        %4466 = vmatpush1.bf16.msra.mxu0 %v4441
        %4467 = vmatprep.subr.bf16.mxu0 0
        %4468 = vmatpush1.bf16.msra.mxu0 %v4440
        %4469 = vmatprep.subr.bf16.mxu0 0
        %4470 = vmatpush1.bf16.msra.mxu0 %v4439
        %4471 = vmatprep.subr.bf16.mxu0 0
        %4472 = vmatpush2.bf16.msra.mxu0 0
        %4473 = vmatprep.subr.bf16.mxu0 0
        %4474 = vmatpush2.bf16.msra.mxu0 0
        %4475 = vmatprep.subr.bf16.mxu0 0
        %4476 = vmatpush2.bf16.msra.mxu0 0
        %4477 = vmatprep.subr.bf16.mxu0 0
        %4478 = vmatpush2.bf16.msra.mxu0 0
        %4479 = vmatprep.subr.bf16.mxu0 0
        %4480 = vmatpush2.bf16.msra.mxu0 0
        %4481 = vmatprep.subr.bf16.mxu0 0
        %4482 = vmatpush2.bf16.msra.mxu0 0
        %4483 = vmatprep.subr.bf16.mxu0 0
        %4484 = vmatpush2.bf16.msra.mxu0 0
        %4485 = vmatprep.subr.bf16.mxu0 0
        %4486 = vmatpush2.bf16.msra.mxu0 0
        %4487 = vmatprep.mubr.bf16.mxu0 0
        %4488 = vmatmul.mubr.bf16.gmra.mxu0 %v4341
        %v4489 = vpop.f32.mrf.mxu0
        %v4490 = vadd.f32 0.0, %v4489
        %v4491 = vpop.f32.mrf.mxu0
        %v4492 = vpop.f32.mrf.mxu0
        %v4493 = vadd.f32 0.0, %v4492
        %v4494 = vpop.f32.mrf.mxu0
        %4495 = vmatprep.mubr.bf16.mxu0 0
        %4496 = vmatmul.mubr.bf16.gmra.mxu0 %v4343
        %v4497 = vpop.f32.mrf.mxu0
        %v4498 = vadd.f32 0.0, %v4497
        %v4499 = vpop.f32.mrf.mxu0
        %v4500 = vpop.f32.mrf.mxu0
        %v4501 = vadd.f32 0.0, %v4500
        %v4502 = vpop.f32.mrf.mxu0
        %4503 = vmatprep.mubr.bf16.mxu0 0
        %4504 = vmatmul.mubr.bf16.gmra.mxu0 %v4345
        %v4505 = vpop.f32.mrf.mxu0
        %v4506 = vadd.f32 0.0, %v4505
        %v4507 = vpop.f32.mrf.mxu0
        %v4508 = vpop.f32.mrf.mxu0
        %v4509 = vadd.f32 0.0, %v4508
        %v4510 = vpop.f32.mrf.mxu0
        %4511 = vmatprep.mubr.bf16.mxu0 0
        %4512 = vmatmul.mubr.bf16.gmra.mxu0 %v4347
        %v4513 = vpop.f32.mrf.mxu0
        %v4514 = vadd.f32 0.0, %v4513
        %v4515 = vpop.f32.mrf.mxu0
        %v4516 = vpop.f32.mrf.mxu0
        %v4517 = vadd.f32 0.0, %v4516
        %v4518 = vpop.f32.mrf.mxu0
        %4519 = vmatprep.mubr.bf16.mxu0 0
        %4520 = vmatmul.mubr.bf16.gmra.mxu0 %v4349
        %v4521 = vpop.f32.mrf.mxu0
        %v4522 = vadd.f32 0.0, %v4521
        %v4523 = vpop.f32.mrf.mxu0
        %v4524 = vpop.f32.mrf.mxu0
        %v4525 = vadd.f32 0.0, %v4524
        %v4526 = vpop.f32.mrf.mxu0
        %4527 = vmatprep.mubr.bf16.mxu0 0
        %4528 = vmatmul.mubr.bf16.gmra.mxu0 %v4351
        %v4529 = vpop.f32.mrf.mxu0
        %v4530 = vadd.f32 0.0, %v4529
        %v4531 = vpop.f32.mrf.mxu0
        %v4532 = vpop.f32.mrf.mxu0
        %v4533 = vadd.f32 0.0, %v4532
        %v4534 = vpop.f32.mrf.mxu0
        %4535 = vmatprep.mubr.bf16.mxu0 0
        %4536 = vmatmul.mubr.bf16.gmra.mxu0 %v4353
        %v4537 = vpop.f32.mrf.mxu0
        %v4538 = vadd.f32 0.0, %v4537
        %v4539 = vpop.f32.mrf.mxu0
        %v4540 = vpop.f32.mrf.mxu0
        %v4541 = vadd.f32 0.0, %v4540
        %v4542 = vpop.f32.mrf.mxu0
        %4543 = vmatprep.mubr.bf16.mxu0 0
        %4544 = vmatmul.mubr.bf16.gmra.mxu0 %v4355
        %v4545 = vpop.f32.mrf.mxu0
        %v4546 = vadd.f32 0.0, %v4545
        %v4547 = vpop.f32.mrf.mxu0
        %v4548 = vpop.f32.mrf.mxu0
        %v4549 = vadd.f32 0.0, %v4548
        %v4550 = vpop.f32.mrf.mxu0
        %4551 = vmatprep.mubr.bf16.mxu0 0
        %4552 = vmatmul.mubr.bf16.gmra.mxu0 %v4357
        %v4553 = vpop.f32.mrf.mxu0
        %v4554 = vadd.f32 0.0, %v4553
        %v4555 = vpop.f32.mrf.mxu0
        %v4556 = vpop.f32.mrf.mxu0
        %v4557 = vadd.f32 0.0, %v4556
        %v4558 = vpop.f32.mrf.mxu0
        %4559 = vmatprep.mubr.bf16.mxu0 0
        %4560 = vmatmul.mubr.bf16.gmra.mxu0 %v4359
        %v4561 = vpop.f32.mrf.mxu0
        %v4562 = vadd.f32 0.0, %v4561
        %v4563 = vpop.f32.mrf.mxu0
        %v4564 = vpop.f32.mrf.mxu0
        %v4565 = vadd.f32 0.0, %v4564
        %v4566 = vpop.f32.mrf.mxu0
        %4567 = vmatprep.mubr.bf16.mxu0 0
        %4568 = vmatmul.mubr.bf16.gmra.mxu0 %v4361
        %v4569 = vpop.f32.mrf.mxu0
        %v4570 = vadd.f32 0.0, %v4569
        %v4571 = vpop.f32.mrf.mxu0
        %v4572 = vpop.f32.mrf.mxu0
        %v4573 = vadd.f32 0.0, %v4572
        %v4574 = vpop.f32.mrf.mxu0
        %4575 = vmatprep.mubr.bf16.mxu0 0
        %4576 = vmatmul.mubr.bf16.gmra.mxu0 %v4363
        %v4577 = vpop.f32.mrf.mxu0
        %v4578 = vadd.f32 0.0, %v4577
        %v4579 = vpop.f32.mrf.mxu0
        %v4580 = vpop.f32.mrf.mxu0
        %v4581 = vadd.f32 0.0, %v4580
        %v4582 = vpop.f32.mrf.mxu0
        %4583 = vmatprep.mubr.bf16.mxu0 0
        %4584 = vmatmul.mubr.bf16.gmra.mxu0 %v4365
        %v4585 = vpop.f32.mrf.mxu0
        %v4586 = vadd.f32 0.0, %v4585
        %v4587 = vpop.f32.mrf.mxu0
        %v4588 = vpop.f32.mrf.mxu0
        %v4589 = vadd.f32 0.0, %v4588
        %v4590 = vpop.f32.mrf.mxu0
        %4591 = vmatprep.mubr.bf16.mxu0 0
        %4592 = vmatmul.mubr.bf16.gmra.mxu0 %v4367
        %v4593 = vpop.f32.mrf.mxu0
        %v4594 = vadd.f32 0.0, %v4593
        %v4595 = vpop.f32.mrf.mxu0
        %v4596 = vpop.f32.mrf.mxu0
        %v4597 = vadd.f32 0.0, %v4596
        %v4598 = vpop.f32.mrf.mxu0
        %4599 = vmatprep.mubr.bf16.mxu0 0
        %4600 = vmatmul.mubr.bf16.gmra.mxu0 %v4369
        %v4601 = vpop.f32.mrf.mxu0
        %v4602 = vadd.f32 0.0, %v4601
        %v4603 = vpop.f32.mrf.mxu0
        %v4604 = vpop.f32.mrf.mxu0
        %v4605 = vadd.f32 0.0, %v4604
        %v4606 = vpop.f32.mrf.mxu0
        %4607 = vmatprep.mubr.bf16.mxu0 0
        %4608 = vmatmul.mubr.bf16.gmra.mxu0 %v4371
        %v4609 = vpop.f32.mrf.mxu0
        %v4610 = vadd.f32 0.0, %v4609
        %v4611 = vpop.f32.mrf.mxu0
        %v4612 = vpop.f32.mrf.mxu0
        %v4613 = vadd.f32 0.0, %v4612
        %v4614 = vpop.f32.mrf.mxu0
        %4615 = vmatprep.mubr.bf16.mxu0 0
        %4616 = vmatmul.mubr.bf16.gmra.mxu0 %v4373
        %v4617 = vpop.f32.mrf.mxu0
        %v4618 = vadd.f32 0.0, %v4617
        %v4619 = vpop.f32.mrf.mxu0
        %v4620 = vpop.f32.mrf.mxu0
        %v4621 = vadd.f32 0.0, %v4620
        %v4622 = vpop.f32.mrf.mxu0
        %4623 = vmatprep.mubr.bf16.mxu0 0
        %4624 = vmatmul.mubr.bf16.gmra.mxu0 %v4375
        %v4625 = vpop.f32.mrf.mxu0
        %v4626 = vadd.f32 0.0, %v4625
        %v4627 = vpop.f32.mrf.mxu0
        %v4628 = vpop.f32.mrf.mxu0
        %v4629 = vadd.f32 0.0, %v4628
        %v4630 = vpop.f32.mrf.mxu0
        %4631 = vmatprep.mubr.bf16.mxu0 0
        %4632 = vmatmul.mubr.bf16.gmra.mxu0 %v4377
        %v4633 = vpop.f32.mrf.mxu0
        %v4634 = vadd.f32 0.0, %v4633
        %v4635 = vpop.f32.mrf.mxu0
        %v4636 = vpop.f32.mrf.mxu0
        %v4637 = vadd.f32 0.0, %v4636
        %v4638 = vpop.f32.mrf.mxu0
        %4639 = vmatprep.mubr.bf16.mxu0 0
        %4640 = vmatmul.mubr.bf16.gmra.mxu0 %v4379
        %v4641 = vpop.f32.mrf.mxu0
        %v4642 = vadd.f32 0.0, %v4641
        %v4643 = vpop.f32.mrf.mxu0
        %v4644 = vpop.f32.mrf.mxu0
        %v4645 = vadd.f32 0.0, %v4644
        %v4646 = vpop.f32.mrf.mxu0
        %4647 = vmatprep.mubr.bf16.mxu0 0
        %4648 = vmatmul.mubr.bf16.gmra.mxu0 %v4381
        %v4649 = vpop.f32.mrf.mxu0
        %v4650 = vadd.f32 0.0, %v4649
        %v4651 = vpop.f32.mrf.mxu0
        %v4652 = vpop.f32.mrf.mxu0
        %v4653 = vadd.f32 0.0, %v4652
        %v4654 = vpop.f32.mrf.mxu0
        %4655 = vmatprep.mubr.bf16.mxu0 0
        %4656 = vmatmul.mubr.bf16.gmra.mxu0 %v4383
        %v4657 = vpop.f32.mrf.mxu0
        %v4658 = vadd.f32 0.0, %v4657
        %v4659 = vpop.f32.mrf.mxu0
        %v4660 = vpop.f32.mrf.mxu0
        %v4661 = vadd.f32 0.0, %v4660
        %v4662 = vpop.f32.mrf.mxu0
        %4663 = vmatprep.mubr.bf16.mxu0 0
        %4664 = vmatmul.mubr.bf16.gmra.mxu0 %v4382
        %v4665 = vpop.f32.mrf.mxu0
        %v4666 = vadd.f32 0.0, %v4665
        %v4667 = vpop.f32.mrf.mxu0
        %v4668 = vpop.f32.mrf.mxu0
        %v4669 = vpop.f32.mrf.mxu0
        %4670 = vdwg.mxu0
        %v4671 = vadd.f32 %v4273, %v4490
        %v4672 = vadd.f32 %v4274, %v4493
        %v4673 = vadd.f32 %v4275, %v4498
        %v4674 = vadd.f32 %v4276, %v4501
        %v4675 = vadd.f32 %v4277, %v4506
        %v4676 = vadd.f32 %v4278, %v4509
        %v4677 = vadd.f32 %v4279, %v4514
        %v4678 = vadd.f32 %v4280, %v4517
        %v4679 = vadd.f32 %v4281, %v4522
        %v4680 = vadd.f32 %v4282, %v4525
        %v4681 = vadd.f32 %v4283, %v4530
        %v4682 = vadd.f32 %v4284, %v4533
        %v4683 = vadd.f32 %v4285, %v4538
        %v4684 = vadd.f32 %v4286, %v4541
        %v4685 = vadd.f32 %v4287, %v4546
        %v4686 = vadd.f32 %v4288, %v4549
        %v4687 = vadd.f32 %v4289, %v4554
        %v4688 = vadd.f32 %v4290, %v4557
        %v4689 = vadd.f32 %v4291, %v4562
        %v4690 = vadd.f32 %v4292, %v4565
        %v4691 = vadd.f32 %v4293, %v4570
        %v4692 = vadd.f32 %v4294, %v4573
        %v4693 = vadd.f32 %v4295, %v4578
        %v4694 = vadd.f32 %v4296, %v4581
        %v4695 = vadd.f32 %v4297, %v4586
        %v4696 = vadd.f32 %v4298, %v4589
        %v4697 = vadd.f32 %v4299, %v4594
        %v4698 = vadd.f32 %v4300, %v4597
        %v4699 = vadd.f32 %v4301, %v4602
        %v4700 = vadd.f32 %v4302, %v4605
        %v4701 = vadd.f32 %v4303, %v4610
        %v4702 = vadd.f32 %v4304, %v4613
        %v4703 = vadd.f32 %v4305, %v4618
        %v4704 = vadd.f32 %v4306, %v4621
        %v4705 = vadd.f32 %v4307, %v4626
        %v4706 = vadd.f32 %v4308, %v4629
        %v4707 = vadd.f32 %v4309, %v4634
        %v4708 = vadd.f32 %v4310, %v4637
        %v4709 = vadd.f32 %v4311, %v4642
        %v4710 = vadd.f32 %v4312, %v4645
        %v4711 = vadd.f32 %v4313, %v4650
        %v4712 = vadd.f32 %v4314, %v4653
        %v4713 = vadd.f32 %v4315, %v4658
        %v4714 = vadd.f32 %v4316, %v4661
        %v4715 = vadd.f32 %v4317, %v4666
        %v4716 = vld [vmem:[%s2] sm:$0x1]
        %v4718 = vlaneseq
        %v4719 = vshrl.u32 %v4718, 7
        %v4720 = vsub.s32 0, %v4719
        %v4721 = vrot.slane %v4716, %v4720
        %v4723 = vadd.f32 %v4671, %v4721
        %v4724 = vadd.f32 %v4672, %v4721
        %v4725 = vadd.f32 %v4673, %v4721
        %v4726 = vadd.f32 %v4674, %v4721
        %v4727 = vadd.f32 %v4675, %v4721
        %v4728 = vadd.f32 %v4676, %v4721
        %v4729 = vadd.f32 %v4677, %v4721
        %v4730 = vadd.f32 %v4678, %v4721
        %v4731 = vadd.f32 %v4679, %v4721
        %v4732 = vadd.f32 %v4680, %v4721
        %v4733 = vadd.f32 %v4681, %v4721
        %v4734 = vadd.f32 %v4682, %v4721
        %v4735 = vadd.f32 %v4683, %v4721
        %v4736 = vadd.f32 %v4684, %v4721
        %v4737 = vadd.f32 %v4685, %v4721
        %v4738 = vadd.f32 %v4686, %v4721
        %v4739 = vadd.f32 %v4687, %v4721
        %v4740 = vadd.f32 %v4688, %v4721
        %v4741 = vadd.f32 %v4689, %v4721
        %v4742 = vadd.f32 %v4690, %v4721
        %v4743 = vadd.f32 %v4691, %v4721
        %v4744 = vadd.f32 %v4692, %v4721
        %v4745 = vadd.f32 %v4693, %v4721
        %v4746 = vadd.f32 %v4694, %v4721
        %v4747 = vadd.f32 %v4695, %v4721
        %v4748 = vadd.f32 %v4696, %v4721
        %v4749 = vadd.f32 %v4697, %v4721
        %v4750 = vadd.f32 %v4698, %v4721
        %v4751 = vadd.f32 %v4699, %v4721
        %v4752 = vadd.f32 %v4700, %v4721
        %v4753 = vadd.f32 %v4701, %v4721
        %v4754 = vadd.f32 %v4702, %v4721
        %v4755 = vadd.f32 %v4703, %v4721
        %v4756 = vadd.f32 %v4704, %v4721
        %v4757 = vadd.f32 %v4705, %v4721
        %v4758 = vadd.f32 %v4706, %v4721
        %v4759 = vadd.f32 %v4707, %v4721
        %v4760 = vadd.f32 %v4708, %v4721
        %v4761 = vadd.f32 %v4709, %v4721
        %v4762 = vadd.f32 %v4710, %v4721
        %v4763 = vadd.f32 %v4711, %v4721
        %v4764 = vadd.f32 %v4712, %v4721
        %v4765 = vadd.f32 %v4713, %v4721
        %v4766 = vadd.f32 %v4714, %v4721
        %v4767 = vadd.f32 %v4715, %v4721
        %v4768 = vmax.f32 %v4723, 0.0
        %v4769 = vmax.f32 %v4724, 0.0
        %v4770 = vmax.f32 %v4725, 0.0
        %v4771 = vmax.f32 %v4726, 0.0
        %v4772 = vmax.f32 %v4727, 0.0
        %v4773 = vmax.f32 %v4728, 0.0
        %v4774 = vmax.f32 %v4729, 0.0
        %v4775 = vmax.f32 %v4730, 0.0
        %v4776 = vmax.f32 %v4731, 0.0
        %v4777 = vmax.f32 %v4732, 0.0
        %v4778 = vmax.f32 %v4733, 0.0
        %v4779 = vmax.f32 %v4734, 0.0
        %v4780 = vmax.f32 %v4735, 0.0
        %v4781 = vmax.f32 %v4736, 0.0
        %v4782 = vmax.f32 %v4737, 0.0
        %v4783 = vmax.f32 %v4738, 0.0
        %v4784 = vmax.f32 %v4739, 0.0
        %v4785 = vmax.f32 %v4740, 0.0
        %v4786 = vmax.f32 %v4741, 0.0
        %v4787 = vmax.f32 %v4742, 0.0
        %v4788 = vmax.f32 %v4743, 0.0
        %v4789 = vmax.f32 %v4744, 0.0
        %v4790 = vmax.f32 %v4745, 0.0
        %v4791 = vmax.f32 %v4746, 0.0
        %v4792 = vmax.f32 %v4747, 0.0
        %v4793 = vmax.f32 %v4748, 0.0
        %v4794 = vmax.f32 %v4749, 0.0
        %v4795 = vmax.f32 %v4750, 0.0
        %v4796 = vmax.f32 %v4751, 0.0
        %v4797 = vmax.f32 %v4752, 0.0
        %v4798 = vmax.f32 %v4753, 0.0
        %v4799 = vmax.f32 %v4754, 0.0
        %v4800 = vmax.f32 %v4755, 0.0
        %v4801 = vmax.f32 %v4756, 0.0
        %v4802 = vmax.f32 %v4757, 0.0
        %v4803 = vmax.f32 %v4758, 0.0
        %v4804 = vmax.f32 %v4759, 0.0
        %v4805 = vmax.f32 %v4760, 0.0
        %v4806 = vmax.f32 %v4761, 0.0
        %v4807 = vmax.f32 %v4762, 0.0
        %v4808 = vmax.f32 %v4763, 0.0
        %v4809 = vmax.f32 %v4764, 0.0
        %v4810 = vmax.f32 %v4765, 0.0
        %v4811 = vmax.f32 %v4766, 0.0
        %v4812 = vmax.f32 %v4767, 0.0
        %v4813 = vld [vmem:[%s5] sm:$0xff]
        %v4814 = vld [vmem:[%s5 + $0x8] sm:$0xff]
        %v4815 = vld [vmem:[%s5 + $0x10] sm:$0xff]
        %v4816 = vld [vmem:[%s5 + $0x18] sm:$0xff]
        %v4817 = vld [vmem:[%s5 + $0x20] sm:$0xff]
        %v4818 = vld [vmem:[%s5 + $0x28] sm:$0xff]
        %v4819 = vld [vmem:[%s5 + $0x30] sm:$0xff]
        %v4820 = vld [vmem:[%s5 + $0x38] sm:$0xff]
        %v4821 = vld [vmem:[%s5 + $0x40] sm:$0xff]
        %v4822 = vld [vmem:[%s5 + $0x48] sm:$0xff]
        %v4823 = vld [vmem:[%s5 + $0x50] sm:$0xff]
        %v4824 = vld [vmem:[%s5 + $0x58] sm:$0xff]
        %v4825 = vld [vmem:[%s5 + $0x60] sm:$0xff]
        %v4826 = vld [vmem:[%s5 + $0x68] sm:$0xff]
        %v4827 = vld [vmem:[%s5 + $0x70] sm:$0xff]
        %v4828 = vld [vmem:[%s5 + $0x78] sm:$0xff]
        %v4829 = vld [vmem:[%s5 + $0x80] sm:$0xff]
        %v4830 = vld [vmem:[%s5 + $0x88] sm:$0xff]
        %v4831 = vld [vmem:[%s5 + $0x90] sm:$0xff]
        %v4832 = vld [vmem:[%s5 + $0x98] sm:$0xff]
        %v4833 = vld [vmem:[%s5 + $0xa0] sm:$0xff]
        %v4834 = vld [vmem:[%s5 + $0xa8] sm:$0xff]
        %v4835 = vld [vmem:[%s5 + $0xb0] sm:$0xff]
        %v4836 = vld [vmem:[%s5 + $0xb8] sm:$0xff]
        %v4837 = vld [vmem:[%s5 + $0xc0] sm:$0xff]
        %v4838 = vld [vmem:[%s5 + $0xc8] sm:$0xff]
        %v4839 = vld [vmem:[%s5 + $0xd0] sm:$0xff]
        %v4840 = vld [vmem:[%s5 + $0xd8] sm:$0xff]
        %v4841 = vld [vmem:[%s5 + $0xe0] sm:$0xff]
        %v4842 = vld [vmem:[%s5 + $0xe8] sm:$0xff]
        %v4843 = vld [vmem:[%s5 + $0xf0] sm:$0xff]
        %v4844 = vld [vmem:[%s5 + $0xf8] sm:$0xff]
        %v4845 = vld [vmem:[%s5 + $0x100] sm:$0xff]
        %v4846 = vld [vmem:[%s5 + $0x108] sm:$0xff]
        %v4847 = vld [vmem:[%s5 + $0x110] sm:$0xff]
        %v4848 = vld [vmem:[%s5 + $0x118] sm:$0xff]
        %v4849 = vld [vmem:[%s5 + $0x120] sm:$0xff]
        %v4850 = vld [vmem:[%s5 + $0x128] sm:$0xff]
        %v4851 = vld [vmem:[%s5 + $0x130] sm:$0xff]
        %v4852 = vld [vmem:[%s5 + $0x138] sm:$0xff]
        %v4853 = vld [vmem:[%s5 + $0x140] sm:$0xff]
        %v4854 = vld [vmem:[%s5 + $0x148] sm:$0xff]
        %v4855 = vld [vmem:[%s5 + $0x150] sm:$0xff]
        %v4856 = vld [vmem:[%s5 + $0x158] sm:$0xff]
        %v4857 = vld [vmem:[%s5 + $0x160] sm:$0xff]
        %4859 = vset.pattern.permute.xlu0 0
        %4860 = vperm.xlu0 %4859, %v4813
        %v4861 = vpop.permute.xlu0 %4860
        %4864 = vset.pattern.permute.xlu0 0
        %4865 = vperm.xlu0 %4864, %v4814
        %v4866 = vpop.permute.xlu0 %4865
        %4869 = vset.pattern.permute.xlu0 0
        %4870 = vperm.xlu0 %4869, %v4815
        %v4871 = vpop.permute.xlu0 %4870
        %4874 = vset.pattern.permute.xlu0 0
        %4875 = vperm.xlu0 %4874, %v4816
        %v4876 = vpop.permute.xlu0 %4875
        %4879 = vset.pattern.permute.xlu0 0
        %4880 = vperm.xlu0 %4879, %v4817
        %v4881 = vpop.permute.xlu0 %4880
        %4884 = vset.pattern.permute.xlu0 0
        %4885 = vperm.xlu0 %4884, %v4818
        %v4886 = vpop.permute.xlu0 %4885
        %4889 = vset.pattern.permute.xlu0 0
        %4890 = vperm.xlu0 %4889, %v4819
        %v4891 = vpop.permute.xlu0 %4890
        %4894 = vset.pattern.permute.xlu0 0
        %4895 = vperm.xlu0 %4894, %v4820
        %v4896 = vpop.permute.xlu0 %4895
        %4899 = vset.pattern.permute.xlu0 0
        %4900 = vperm.xlu0 %4899, %v4821
        %v4901 = vpop.permute.xlu0 %4900
        %4904 = vset.pattern.permute.xlu0 0
        %4905 = vperm.xlu0 %4904, %v4822
        %v4906 = vpop.permute.xlu0 %4905
        %4909 = vset.pattern.permute.xlu0 0
        %4910 = vperm.xlu0 %4909, %v4823
        %v4911 = vpop.permute.xlu0 %4910
        %4914 = vset.pattern.permute.xlu0 0
        %4915 = vperm.xlu0 %4914, %v4824
        %v4916 = vpop.permute.xlu0 %4915
        %4919 = vset.pattern.permute.xlu0 0
        %4920 = vperm.xlu0 %4919, %v4825
        %v4921 = vpop.permute.xlu0 %4920
        %4924 = vset.pattern.permute.xlu0 0
        %4925 = vperm.xlu0 %4924, %v4826
        %v4926 = vpop.permute.xlu0 %4925
        %4929 = vset.pattern.permute.xlu0 0
        %4930 = vperm.xlu0 %4929, %v4827
        %v4931 = vpop.permute.xlu0 %4930
        %4934 = vset.pattern.permute.xlu0 0
        %4935 = vperm.xlu0 %4934, %v4828
        %v4936 = vpop.permute.xlu0 %4935
        %4939 = vset.pattern.permute.xlu0 0
        %4940 = vperm.xlu0 %4939, %v4829
        %v4941 = vpop.permute.xlu0 %4940
        %4944 = vset.pattern.permute.xlu0 0
        %4945 = vperm.xlu0 %4944, %v4830
        %v4946 = vpop.permute.xlu0 %4945
        %4949 = vset.pattern.permute.xlu0 0
        %4950 = vperm.xlu0 %4949, %v4831
        %v4951 = vpop.permute.xlu0 %4950
        %4954 = vset.pattern.permute.xlu0 0
        %4955 = vperm.xlu0 %4954, %v4832
        %v4956 = vpop.permute.xlu0 %4955
        %4959 = vset.pattern.permute.xlu0 0
        %4960 = vperm.xlu0 %4959, %v4833
        %v4961 = vpop.permute.xlu0 %4960
        %4964 = vset.pattern.permute.xlu0 0
        %4965 = vperm.xlu0 %4964, %v4834
        %v4966 = vpop.permute.xlu0 %4965
        %4969 = vset.pattern.permute.xlu0 0
        %4970 = vperm.xlu0 %4969, %v4835
        %v4971 = vpop.permute.xlu0 %4970
        %4974 = vset.pattern.permute.xlu0 0
        %4975 = vperm.xlu0 %4974, %v4836
        %v4976 = vpop.permute.xlu0 %4975
        %4979 = vset.pattern.permute.xlu0 0
        %4980 = vperm.xlu0 %4979, %v4837
        %v4981 = vpop.permute.xlu0 %4980
        %4984 = vset.pattern.permute.xlu0 0
        %4985 = vperm.xlu0 %4984, %v4838
        %v4986 = vpop.permute.xlu0 %4985
        %4989 = vset.pattern.permute.xlu0 0
        %4990 = vperm.xlu0 %4989, %v4839
        %v4991 = vpop.permute.xlu0 %4990
        %4994 = vset.pattern.permute.xlu0 0
        %4995 = vperm.xlu0 %4994, %v4840
        %v4996 = vpop.permute.xlu0 %4995
        %4999 = vset.pattern.permute.xlu0 0
        %5000 = vperm.xlu0 %4999, %v4841
        %v5001 = vpop.permute.xlu0 %5000
        %5004 = vset.pattern.permute.xlu0 0
        %5005 = vperm.xlu0 %5004, %v4842
        %v5006 = vpop.permute.xlu0 %5005
        %5009 = vset.pattern.permute.xlu0 0
        %5010 = vperm.xlu0 %5009, %v4843
        %v5011 = vpop.permute.xlu0 %5010
        %5014 = vset.pattern.permute.xlu0 0
        %5015 = vperm.xlu0 %5014, %v4844
        %v5016 = vpop.permute.xlu0 %5015
        %5019 = vset.pattern.permute.xlu0 0
        %5020 = vperm.xlu0 %5019, %v4845
        %v5021 = vpop.permute.xlu0 %5020
        %5024 = vset.pattern.permute.xlu0 0
        %5025 = vperm.xlu0 %5024, %v4846
        %v5026 = vpop.permute.xlu0 %5025
        %5029 = vset.pattern.permute.xlu0 0
        %5030 = vperm.xlu0 %5029, %v4847
        %v5031 = vpop.permute.xlu0 %5030
        %5034 = vset.pattern.permute.xlu0 0
        %5035 = vperm.xlu0 %5034, %v4848
        %v5036 = vpop.permute.xlu0 %5035
        %5039 = vset.pattern.permute.xlu0 0
        %5040 = vperm.xlu0 %5039, %v4849
        %v5041 = vpop.permute.xlu0 %5040
        %5044 = vset.pattern.permute.xlu0 0
        %5045 = vperm.xlu0 %5044, %v4850
        %v5046 = vpop.permute.xlu0 %5045
        %5049 = vset.pattern.permute.xlu0 0
        %5050 = vperm.xlu0 %5049, %v4851
        %v5051 = vpop.permute.xlu0 %5050
        %5054 = vset.pattern.permute.xlu0 0
        %5055 = vperm.xlu0 %5054, %v4852
        %v5056 = vpop.permute.xlu0 %5055
        %5059 = vset.pattern.permute.xlu0 0
        %5060 = vperm.xlu0 %5059, %v4853
        %v5061 = vpop.permute.xlu0 %5060
        %5064 = vset.pattern.permute.xlu0 0
        %5065 = vperm.xlu0 %5064, %v4854
        %v5066 = vpop.permute.xlu0 %5065
        %5069 = vset.pattern.permute.xlu0 0
        %5070 = vperm.xlu0 %5069, %v4855
        %v5071 = vpop.permute.xlu0 %5070
        %5074 = vset.pattern.permute.xlu0 0
        %5075 = vperm.xlu0 %5074, %v4856
        %v5076 = vpop.permute.xlu0 %5075
        %5079 = vset.pattern.permute.xlu0 0
        %5080 = vperm.xlu0 %5079, %v4857
        %v5081 = vpop.permute.xlu0 %5080
        %v5083 = vmul.f32 %v4768, %v4861
        %v5084 = vmul.f32 %v4769, %v4866
        %v5085 = vmul.f32 %v4770, %v4871
        %v5086 = vmul.f32 %v4771, %v4876
        %v5087 = vmul.f32 %v4772, %v4881
        %v5088 = vmul.f32 %v4773, %v4886
        %v5089 = vmul.f32 %v4774, %v4891
        %v5090 = vmul.f32 %v4775, %v4896
        %v5091 = vmul.f32 %v4776, %v4901
        %v5092 = vmul.f32 %v4777, %v4906
        %v5093 = vmul.f32 %v4778, %v4911
        %v5094 = vmul.f32 %v4779, %v4916
        %v5095 = vmul.f32 %v4780, %v4921
        %v5096 = vmul.f32 %v4781, %v4926
        %v5097 = vmul.f32 %v4782, %v4931
        %v5098 = vmul.f32 %v4783, %v4936
        %v5099 = vmul.f32 %v4784, %v4941
        %v5100 = vmul.f32 %v4785, %v4946
        %v5101 = vmul.f32 %v4786, %v4951
        %v5102 = vmul.f32 %v4787, %v4956
        %v5103 = vmul.f32 %v4788, %v4961
        %v5104 = vmul.f32 %v4789, %v4966
        %v5105 = vmul.f32 %v4790, %v4971
        %v5106 = vmul.f32 %v4791, %v4976
        %v5107 = vmul.f32 %v4792, %v4981
        %v5108 = vmul.f32 %v4793, %v4986
        %v5109 = vmul.f32 %v4794, %v4991
        %v5110 = vmul.f32 %v4795, %v4996
        %v5111 = vmul.f32 %v4796, %v5001
        %v5112 = vmul.f32 %v4797, %v5006
        %v5113 = vmul.f32 %v4798, %v5011
        %v5114 = vmul.f32 %v4799, %v5016
        %v5115 = vmul.f32 %v4800, %v5021
        %v5116 = vmul.f32 %v4801, %v5026
        %v5117 = vmul.f32 %v4802, %v5031
        %v5118 = vmul.f32 %v4803, %v5036
        %v5119 = vmul.f32 %v4804, %v5041
        %v5120 = vmul.f32 %v4805, %v5046
        %v5121 = vmul.f32 %v4806, %v5051
        %v5122 = vmul.f32 %v4807, %v5056
        %v5123 = vmul.f32 %v4808, %v5061
        %v5124 = vmul.f32 %v4809, %v5066
        %v5125 = vmul.f32 %v4810, %v5071
        %v5126 = vmul.f32 %v4811, %v5076
        %v5127 = vmul.f32 %v4812, %v5081
        %v5128 = vpack.c.bf16 %v5084, %v5083
        %v5129 = vpack.c.bf16 %v5086, %v5085
        %v5130 = vpack.c.bf16 %v5088, %v5087
        %v5131 = vpack.c.bf16 %v5090, %v5089
        %v5132 = vpack.c.bf16 %v5092, %v5091
        %v5133 = vpack.c.bf16 %v5094, %v5093
        %v5134 = vpack.c.bf16 %v5096, %v5095
        %v5135 = vpack.c.bf16 %v5098, %v5097
        %v5136 = vpack.c.bf16 %v5100, %v5099
        %v5137 = vpack.c.bf16 %v5102, %v5101
        %v5138 = vpack.c.bf16 %v5104, %v5103
        %v5139 = vpack.c.bf16 %v5106, %v5105
        %v5140 = vpack.c.bf16 %v5108, %v5107
        %v5141 = vpack.c.bf16 %v5110, %v5109
        %v5142 = vpack.c.bf16 %v5112, %v5111
        %v5143 = vpack.c.bf16 %v5114, %v5113
        %v5144 = vpack.c.bf16 %v5116, %v5115
        %v5145 = vpack.c.bf16 %v5118, %v5117
        %v5146 = vpack.c.bf16 %v5120, %v5119
        %v5147 = vpack.c.bf16 %v5122, %v5121
        %v5148 = vpack.c.bf16 %v5124, %v5123
        %v5149 = vpack.c.bf16 %v5126, %v5125
        %v5150 = vpack.c.bf16 %v5127, %v5127
        %v5174 = vunpack.c.l.b16 %v5128
        %v5175 = vunpack.c.h.b16 %v5128
        %v5176 = vunpack.c.l.b16 %v5129
        %v5177 = vunpack.c.h.b16 %v5129
        %v5178 = vunpack.c.l.b16 %v5130
        %v5179 = vunpack.c.h.b16 %v5130
        %v5180 = vunpack.c.l.b16 %v5131
        %v5181 = vunpack.c.h.b16 %v5131
        %v5182 = vunpack.c.l.b16 %v5132
        %v5183 = vunpack.c.h.b16 %v5132
        %v5184 = vunpack.c.l.b16 %v5133
        %v5185 = vunpack.c.h.b16 %v5133
        %v5186 = vunpack.c.l.b16 %v5134
        %v5187 = vunpack.c.h.b16 %v5134
        %v5188 = vunpack.c.l.b16 %v5135
        %v5189 = vunpack.c.h.b16 %v5135
        %v5190 = vunpack.c.l.b16 %v5136
        %v5191 = vunpack.c.h.b16 %v5136
        %v5192 = vunpack.c.l.b16 %v5137
        %v5193 = vunpack.c.h.b16 %v5137
        %v5194 = vunpack.c.l.b16 %v5138
        %v5195 = vunpack.c.h.b16 %v5138
        %v5196 = vunpack.c.l.b16 %v5139
        %v5197 = vunpack.c.h.b16 %v5139
        %v5198 = vunpack.c.l.b16 %v5140
        %v5199 = vunpack.c.h.b16 %v5140
        %v5200 = vunpack.c.l.b16 %v5141
        %v5201 = vunpack.c.h.b16 %v5141
        %v5202 = vunpack.c.l.b16 %v5142
        %v5203 = vunpack.c.h.b16 %v5142
        %v5204 = vunpack.c.l.b16 %v5143
        %v5205 = vunpack.c.h.b16 %v5143
        %v5206 = vunpack.c.l.b16 %v5144
        %v5207 = vunpack.c.h.b16 %v5144
        %v5208 = vunpack.c.l.b16 %v5145
        %v5209 = vunpack.c.h.b16 %v5145
        %v5210 = vunpack.c.l.b16 %v5146
        %v5211 = vunpack.c.h.b16 %v5146
        %v5212 = vunpack.c.l.b16 %v5147
        %v5213 = vunpack.c.h.b16 %v5147
        %v5214 = vunpack.c.l.b16 %v5148
        %v5215 = vunpack.c.h.b16 %v5148
        %v5216 = vunpack.c.l.b16 %v5149
        %v5217 = vunpack.c.h.b16 %v5149
        %v5218 = vunpack.c.l.b16 %v5150
        %v5219 = vpack.c.b16 %v5174, %v5174
        %v5220 = vpack.c.b16 %v5175, %v5175
        %v5221 = vpack.c.b16 %v5176, %v5176
        %v5222 = vpack.c.b16 %v5177, %v5177
        %v5223 = vpack.c.b16 %v5178, %v5178
        %v5224 = vpack.c.b16 %v5179, %v5179
        %v5225 = vpack.c.b16 %v5180, %v5180
        %v5226 = vpack.c.b16 %v5181, %v5181
        %v5227 = vpack.c.b16 %v5182, %v5182
        %v5228 = vpack.c.b16 %v5183, %v5183
        %v5229 = vpack.c.b16 %v5184, %v5184
        %v5230 = vpack.c.b16 %v5185, %v5185
        %v5231 = vpack.c.b16 %v5186, %v5186
        %v5232 = vpack.c.b16 %v5187, %v5187
        %v5233 = vpack.c.b16 %v5188, %v5188
        %v5234 = vpack.c.b16 %v5189, %v5189
        %v5235 = vpack.c.b16 %v5190, %v5190
        %v5236 = vpack.c.b16 %v5191, %v5191
        %v5237 = vpack.c.b16 %v5192, %v5192
        %v5238 = vpack.c.b16 %v5193, %v5193
        %v5239 = vpack.c.b16 %v5194, %v5194
        %v5240 = vpack.c.b16 %v5195, %v5195
        %v5241 = vpack.c.b16 %v5196, %v5196
        %v5242 = vpack.c.b16 %v5197, %v5197
        %v5243 = vpack.c.b16 %v5198, %v5198
        %v5244 = vpack.c.b16 %v5199, %v5199
        %v5245 = vpack.c.b16 %v5200, %v5200
        %v5246 = vpack.c.b16 %v5201, %v5201
        %v5247 = vpack.c.b16 %v5202, %v5202
        %v5248 = vpack.c.b16 %v5203, %v5203
        %v5249 = vpack.c.b16 %v5204, %v5204
        %v5250 = vpack.c.b16 %v5205, %v5205
        %v5251 = vpack.c.b16 %v5206, %v5206
        %v5252 = vpack.c.b16 %v5207, %v5207
        %v5253 = vpack.c.b16 %v5208, %v5208
        %v5254 = vpack.c.b16 %v5209, %v5209
        %v5255 = vpack.c.b16 %v5210, %v5210
        %v5256 = vpack.c.b16 %v5211, %v5211
        %v5257 = vpack.c.b16 %v5212, %v5212
        %v5258 = vpack.c.b16 %v5213, %v5213
        %v5259 = vpack.c.b16 %v5214, %v5214
        %v5260 = vpack.c.b16 %v5215, %v5215
        %v5261 = vpack.c.b16 %v5216, %v5216
        %v5262 = vpack.c.b16 %v5217, %v5217
        %v5263 = vpack.c.b16 %v5218, %v5218
        %5309 = vst [vmem:[#allocation2] sm:$0xf] %v5219
        %5310 = vst [vmem:[#allocation2 + $0x4] sm:$0xf] %v5220
        %5311 = vst [vmem:[#allocation2 + $0x8] sm:$0xf] %v5221
        %5312 = vst [vmem:[#allocation2 + $0xc] sm:$0xf] %v5222
        %5313 = vst [vmem:[#allocation2 + $0x10] sm:$0xf] %v5223
        %5314 = vst [vmem:[#allocation2 + $0x14] sm:$0xf] %v5224
        %5315 = vst [vmem:[#allocation2 + $0x18] sm:$0xf] %v5225
        %5316 = vst [vmem:[#allocation2 + $0x1c] sm:$0xf] %v5226
        %5317 = vst [vmem:[#allocation2 + $0x20] sm:$0xf] %v5227
        %5318 = vst [vmem:[#allocation2 + $0x24] sm:$0xf] %v5228
        %5319 = vst [vmem:[#allocation2 + $0x28] sm:$0xf] %v5229
        %5320 = vst [vmem:[#allocation2 + $0x2c] sm:$0xf] %v5230
        %5321 = vst [vmem:[#allocation2 + $0x30] sm:$0xf] %v5231
        %5322 = vst [vmem:[#allocation2 + $0x34] sm:$0xf] %v5232
        %5323 = vst [vmem:[#allocation2 + $0x38] sm:$0xf] %v5233
        %5324 = vst [vmem:[#allocation2 + $0x3c] sm:$0xf] %v5234
        %5325 = vst [vmem:[#allocation2 + $0x40] sm:$0xf] %v5235
        %5326 = vst [vmem:[#allocation2 + $0x44] sm:$0xf] %v5236
        %5327 = vst [vmem:[#allocation2 + $0x48] sm:$0xf] %v5237
        %5328 = vst [vmem:[#allocation2 + $0x4c] sm:$0xf] %v5238
        %5329 = vst [vmem:[#allocation2 + $0x50] sm:$0xf] %v5239
        %5330 = vst [vmem:[#allocation2 + $0x54] sm:$0xf] %v5240
        %5331 = vst [vmem:[#allocation2 + $0x58] sm:$0xf] %v5241
        %5332 = vst [vmem:[#allocation2 + $0x5c] sm:$0xf] %v5242
        %5333 = vst [vmem:[#allocation2 + $0x60] sm:$0xf] %v5243
        %5334 = vst [vmem:[#allocation2 + $0x64] sm:$0xf] %v5244
        %5335 = vst [vmem:[#allocation2 + $0x68] sm:$0xf] %v5245
        %5336 = vst [vmem:[#allocation2 + $0x6c] sm:$0xf] %v5246
        %5337 = vst [vmem:[#allocation2 + $0x70] sm:$0xf] %v5247
        %5338 = vst [vmem:[#allocation2 + $0x74] sm:$0xf] %v5248
        %5339 = vst [vmem:[#allocation2 + $0x78] sm:$0xf] %v5249
        %5340 = vst [vmem:[#allocation2 + $0x7c] sm:$0xf] %v5250
        %5341 = vst [vmem:[#allocation2 + $0x80] sm:$0xf] %v5251
        %5342 = vst [vmem:[#allocation2 + $0x84] sm:$0xf] %v5252
        %5343 = vst [vmem:[#allocation2 + $0x88] sm:$0xf] %v5253
        %5344 = vst [vmem:[#allocation2 + $0x8c] sm:$0xf] %v5254
        %5345 = vst [vmem:[#allocation2 + $0x90] sm:$0xf] %v5255
        %5346 = vst [vmem:[#allocation2 + $0x94] sm:$0xf] %v5256
        %5347 = vst [vmem:[#allocation2 + $0x98] sm:$0xf] %v5257
        %5348 = vst [vmem:[#allocation2 + $0x9c] sm:$0xf] %v5258
        %5349 = vst [vmem:[#allocation2 + $0xa0] sm:$0xf] %v5259
        %5350 = vst [vmem:[#allocation2 + $0xa4] sm:$0xf] %v5260
        %5351 = vst [vmem:[#allocation2 + $0xa8] sm:$0xf] %v5261
        %5352 = vst [vmem:[#allocation2 + $0xac] sm:$0xf] %v5262
        %5353 = vst [vmem:[#allocation2 + $0xb0] sm:$0xf] %v5263
        %5354 = vst [vmem:[#allocation2 + $0xb4] sm:$0xf] 0
        %5355 = vst [vmem:[#allocation2 + $0xb8] sm:$0xf] 0
        %5356 = vst [vmem:[#allocation2 + $0xbc] sm:$0x3] 0
        %v5357 = vld [vmem:[#allocation2] sm:$0xf]
        %v5358 = vld [vmem:[#allocation2 + $0x4] sm:$0xf]
        %v5359 = vld [vmem:[#allocation2 + $0x8] sm:$0xf]
        %v5360 = vld [vmem:[#allocation2 + $0xc] sm:$0xf]
        %v5361 = vld [vmem:[#allocation2 + $0x10] sm:$0xf]
        %v5362 = vld [vmem:[#allocation2 + $0x14] sm:$0xf]
        %v5363 = vld [vmem:[#allocation2 + $0x18] sm:$0xf]
        %v5364 = vld [vmem:[#allocation2 + $0x1c] sm:$0xf]
        %v5365 = vld [vmem:[#allocation2 + $0x20] sm:$0xf]
        %v5366 = vld [vmem:[#allocation2 + $0x24] sm:$0xf]
        %v5367 = vld [vmem:[#allocation2 + $0x28] sm:$0xf]
        %v5368 = vld [vmem:[#allocation2 + $0x2c] sm:$0xf]
        %v5369 = vld [vmem:[#allocation2 + $0x30] sm:$0xf]
        %v5370 = vld [vmem:[#allocation2 + $0x34] sm:$0xf]
        %v5371 = vld [vmem:[#allocation2 + $0x38] sm:$0xf]
        %v5372 = vld [vmem:[#allocation2 + $0x3c] sm:$0xf]
        %v5373 = vld [vmem:[#allocation2 + $0x40] sm:$0xf]
        %v5374 = vld [vmem:[#allocation2 + $0x44] sm:$0xf]
        %v5375 = vld [vmem:[#allocation2 + $0x48] sm:$0xf]
        %v5376 = vld [vmem:[#allocation2 + $0x4c] sm:$0xf]
        %v5377 = vld [vmem:[#allocation2 + $0x50] sm:$0xf]
        %v5378 = vld [vmem:[#allocation2 + $0x54] sm:$0xf]
        %v5379 = vld [vmem:[#allocation2 + $0x58] sm:$0xf]
        %v5380 = vld [vmem:[#allocation2 + $0x5c] sm:$0xf]
        %v5381 = vld [vmem:[#allocation2 + $0x60] sm:$0xf]
        %v5382 = vld [vmem:[#allocation2 + $0x64] sm:$0xf]
        %v5383 = vld [vmem:[#allocation2 + $0x68] sm:$0xf]
        %v5384 = vld [vmem:[#allocation2 + $0x6c] sm:$0xf]
        %v5385 = vld [vmem:[#allocation2 + $0x70] sm:$0xf]
        %v5386 = vld [vmem:[#allocation2 + $0x74] sm:$0xf]
        %v5387 = vld [vmem:[#allocation2 + $0x78] sm:$0xf]
        %v5388 = vld [vmem:[#allocation2 + $0x7c] sm:$0xf]
        %v5389 = vld [vmem:[#allocation2 + $0x80] sm:$0xf]
        %v5390 = vld [vmem:[#allocation2 + $0x84] sm:$0xf]
        %v5391 = vld [vmem:[#allocation2 + $0x88] sm:$0xf]
        %v5392 = vld [vmem:[#allocation2 + $0x8c] sm:$0xf]
        %v5393 = vld [vmem:[#allocation2 + $0x90] sm:$0xf]
        %v5394 = vld [vmem:[#allocation2 + $0x94] sm:$0xf]
        %v5395 = vld [vmem:[#allocation2 + $0x98] sm:$0xf]
        %v5396 = vld [vmem:[#allocation2 + $0x9c] sm:$0xf]
        %v5397 = vld [vmem:[%s3] sm:$0xf]
        %v5398 = vld [vmem:[%s3 + $0x4] sm:$0xf]
        %v5399 = vld [vmem:[%s3 + $0x8] sm:$0xf]
        %v5400 = vld [vmem:[%s3 + $0xc] sm:$0xf]
        %v5401 = vld [vmem:[%s3 + $0x10] sm:$0xf]
        %v5402 = vld [vmem:[%s3 + $0x14] sm:$0xf]
        %v5403 = vld [vmem:[%s3 + $0x18] sm:$0xf]
        %v5404 = vld [vmem:[%s3 + $0x1c] sm:$0xf]
        %v5405 = vld [vmem:[%s3 + $0x20] sm:$0xf]
        %v5406 = vld [vmem:[%s3 + $0x24] sm:$0xf]
        %v5407 = vld [vmem:[%s3 + $0x28] sm:$0xf]
        %v5408 = vld [vmem:[%s3 + $0x2c] sm:$0xf]
        %v5409 = vld [vmem:[%s3 + $0x30] sm:$0xf]
        %v5410 = vld [vmem:[%s3 + $0x34] sm:$0xf]
        %v5411 = vld [vmem:[%s3 + $0x38] sm:$0xf]
        %v5412 = vld [vmem:[%s3 + $0x3c] sm:$0xf]
        %v5413 = vld [vmem:[#allocation2 + $0xa0] sm:$0x1]
        %s5414 = scalar_lea.vmem %s3, 64
        %v5415 = vld [vmem:[%s5414] sm:$0xf]
        %v5416 = vld [vmem:[%s5414 + $0x4] sm:$0xf]
        %v5417 = vld [vmem:[%s5414 + $0x8] sm:$0xf]
        %v5418 = vld [vmem:[%s5414 + $0xc] sm:$0xf]
        %v5419 = vld [vmem:[%s5414 + $0x10] sm:$0xf]
        %v5420 = vld [vmem:[%s5414 + $0x14] sm:$0xf]
        %v5421 = vld [vmem:[%s5414 + $0x18] sm:$0xf]
        %v5422 = vld [vmem:[%s5414 + $0x1c] sm:$0xf]
        %v5423 = vld [vmem:[%s5414 + $0x20] sm:$0xf]
        %v5424 = vld [vmem:[%s5414 + $0x24] sm:$0xf]
        %v5425 = vld [vmem:[%s5414 + $0x28] sm:$0xf]
        %v5426 = vld [vmem:[%s5414 + $0x2c] sm:$0xf]
        %v5427 = vld [vmem:[%s5414 + $0x30] sm:$0xf]
        %v5428 = vld [vmem:[%s5414 + $0x34] sm:$0xf]
        %v5429 = vld [vmem:[%s5414 + $0x38] sm:$0xf]
        %v5430 = vld [vmem:[%s5414 + $0x3c] sm:$0xf]
        %v5472 = vunpack.c.l.b16 %v5357
        %v5473 = vunpack.c.l.b16 %v5358
        %v5474 = vunpack.c.l.b16 %v5359
        %v5475 = vunpack.c.l.b16 %v5360
        %v5476 = vunpack.c.l.b16 %v5361
        %v5477 = vunpack.c.l.b16 %v5362
        %v5478 = vunpack.c.l.b16 %v5363
        %v5479 = vunpack.c.l.b16 %v5364
        %v5480 = vunpack.c.l.b16 %v5365
        %v5481 = vunpack.c.l.b16 %v5366
        %v5482 = vunpack.c.l.b16 %v5367
        %v5483 = vunpack.c.l.b16 %v5368
        %v5484 = vunpack.c.l.b16 %v5369
        %v5485 = vunpack.c.l.b16 %v5370
        %v5486 = vunpack.c.l.b16 %v5371
        %v5487 = vunpack.c.l.b16 %v5372
        %v5488 = vunpack.c.l.b16 %v5373
        %v5489 = vunpack.c.l.b16 %v5374
        %v5490 = vunpack.c.l.b16 %v5375
        %v5491 = vunpack.c.l.b16 %v5376
        %v5492 = vunpack.c.l.b16 %v5377
        %v5493 = vunpack.c.l.b16 %v5378
        %v5494 = vunpack.c.l.b16 %v5379
        %v5495 = vunpack.c.l.b16 %v5380
        %v5496 = vunpack.c.l.b16 %v5381
        %v5497 = vunpack.c.l.b16 %v5382
        %v5498 = vunpack.c.l.b16 %v5383
        %v5499 = vunpack.c.l.b16 %v5384
        %v5500 = vunpack.c.l.b16 %v5385
        %v5501 = vunpack.c.l.b16 %v5386
        %v5502 = vunpack.c.l.b16 %v5387
        %v5503 = vunpack.c.l.b16 %v5388
        %v5504 = vunpack.c.l.b16 %v5389
        %v5505 = vunpack.c.l.b16 %v5390
        %v5506 = vunpack.c.l.b16 %v5391
        %v5507 = vunpack.c.l.b16 %v5392
        %v5508 = vunpack.c.l.b16 %v5393
        %v5509 = vunpack.c.l.b16 %v5394
        %v5510 = vunpack.c.l.b16 %v5395
        %v5511 = vunpack.c.l.b16 %v5396
        %v5512 = vunpack.c.l.b16 %v5413
        %v5513 = vpack.c.b16 %v5473, %v5472
        %v5514 = vpack.c.b16 %v5475, %v5474
        %v5515 = vpack.c.b16 %v5477, %v5476
        %v5516 = vpack.c.b16 %v5479, %v5478
        %v5517 = vpack.c.b16 %v5481, %v5480
        %v5518 = vpack.c.b16 %v5483, %v5482
        %v5519 = vpack.c.b16 %v5485, %v5484
        %v5520 = vpack.c.b16 %v5487, %v5486
        %v5521 = vpack.c.b16 %v5489, %v5488
        %v5522 = vpack.c.b16 %v5491, %v5490
        %v5523 = vpack.c.b16 %v5493, %v5492
        %v5524 = vpack.c.b16 %v5495, %v5494
        %v5525 = vpack.c.b16 %v5497, %v5496
        %v5526 = vpack.c.b16 %v5499, %v5498
        %v5527 = vpack.c.b16 %v5501, %v5500
        %v5528 = vpack.c.b16 %v5503, %v5502
        %v5529 = vpack.c.b16 %v5505, %v5504
        %v5530 = vpack.c.b16 %v5507, %v5506
        %v5531 = vpack.c.b16 %v5509, %v5508
        %v5532 = vpack.c.b16 %v5511, %v5510
        %v5533 = vpack.c.b16 %v5512, %v5512
        %v5535 = vshrl.u32 %v5513, 16
        %v5537 = vshll.u32 %v5513, 16
        %v5539 = vrot.slane %v5537, 1
        %v5540 = vor.u32 %v5535, %v5539
        %v5542 = vshll.u32 %v5514, 16
        %v5544 = vrot.slane %v5542, 1
        %v5545 = vsel %vm445, %v5540, %v5544
        %v5546 = vshrl.u32 %v5514, 16
        %v5548 = vor.u32 %v5546, %v5544
        %v5550 = vshll.u32 %v5515, 16
        %v5552 = vrot.slane %v5550, 1
        %v5553 = vsel %vm445, %v5548, %v5552
        %v5554 = vshrl.u32 %v5515, 16
        %v5556 = vor.u32 %v5554, %v5552
        %v5558 = vshll.u32 %v5516, 16
        %v5560 = vrot.slane %v5558, 1
        %v5561 = vsel %vm445, %v5556, %v5560
        %v5562 = vshrl.u32 %v5516, 16
        %v5564 = vor.u32 %v5562, %v5560
        %v5566 = vshll.u32 %v5517, 16
        %v5568 = vrot.slane %v5566, 1
        %v5569 = vsel %vm445, %v5564, %v5568
        %v5570 = vshrl.u32 %v5517, 16
        %v5572 = vor.u32 %v5570, %v5568
        %v5574 = vshll.u32 %v5518, 16
        %v5576 = vrot.slane %v5574, 1
        %v5577 = vsel %vm445, %v5572, %v5576
        %v5578 = vshrl.u32 %v5518, 16
        %v5580 = vor.u32 %v5578, %v5576
        %v5582 = vshll.u32 %v5519, 16
        %v5584 = vrot.slane %v5582, 1
        %v5585 = vsel %vm445, %v5580, %v5584
        %v5586 = vshrl.u32 %v5519, 16
        %v5588 = vor.u32 %v5586, %v5584
        %v5590 = vshll.u32 %v5520, 16
        %v5592 = vrot.slane %v5590, 1
        %v5593 = vsel %vm445, %v5588, %v5592
        %v5594 = vshrl.u32 %v5520, 16
        %v5596 = vor.u32 %v5594, %v5592
        %v5598 = vshll.u32 %v5521, 16
        %v5600 = vrot.slane %v5598, 1
        %v5601 = vsel %vm445, %v5596, %v5600
        %v5602 = vshrl.u32 %v5521, 16
        %v5604 = vor.u32 %v5602, %v5600
        %v5606 = vshll.u32 %v5522, 16
        %v5608 = vrot.slane %v5606, 1
        %v5609 = vsel %vm445, %v5604, %v5608
        %v5610 = vshrl.u32 %v5522, 16
        %v5612 = vor.u32 %v5610, %v5608
        %v5614 = vshll.u32 %v5523, 16
        %v5616 = vrot.slane %v5614, 1
        %v5617 = vsel %vm445, %v5612, %v5616
        %v5618 = vshrl.u32 %v5523, 16
        %v5620 = vor.u32 %v5618, %v5616
        %v5622 = vshll.u32 %v5524, 16
        %v5624 = vrot.slane %v5622, 1
        %v5625 = vsel %vm445, %v5620, %v5624
        %v5626 = vshrl.u32 %v5524, 16
        %v5628 = vor.u32 %v5626, %v5624
        %v5630 = vshll.u32 %v5525, 16
        %v5632 = vrot.slane %v5630, 1
        %v5633 = vsel %vm445, %v5628, %v5632
        %v5634 = vshrl.u32 %v5525, 16
        %v5636 = vor.u32 %v5634, %v5632
        %v5638 = vshll.u32 %v5526, 16
        %v5640 = vrot.slane %v5638, 1
        %v5641 = vsel %vm445, %v5636, %v5640
        %v5642 = vshrl.u32 %v5526, 16
        %v5644 = vor.u32 %v5642, %v5640
        %v5646 = vshll.u32 %v5527, 16
        %v5648 = vrot.slane %v5646, 1
        %v5649 = vsel %vm445, %v5644, %v5648
        %v5650 = vshrl.u32 %v5527, 16
        %v5652 = vor.u32 %v5650, %v5648
        %v5654 = vshll.u32 %v5528, 16
        %v5656 = vrot.slane %v5654, 1
        %v5657 = vsel %vm445, %v5652, %v5656
        %v5658 = vshrl.u32 %v5528, 16
        %v5660 = vor.u32 %v5658, %v5656
        %v5662 = vshll.u32 %v5529, 16
        %v5664 = vrot.slane %v5662, 1
        %v5665 = vsel %vm445, %v5660, %v5664
        %v5666 = vshrl.u32 %v5529, 16
        %v5668 = vor.u32 %v5666, %v5664
        %v5670 = vshll.u32 %v5530, 16
        %v5672 = vrot.slane %v5670, 1
        %v5673 = vsel %vm445, %v5668, %v5672
        %v5674 = vshrl.u32 %v5530, 16
        %v5676 = vor.u32 %v5674, %v5672
        %v5678 = vshll.u32 %v5531, 16
        %v5680 = vrot.slane %v5678, 1
        %v5681 = vsel %vm445, %v5676, %v5680
        %v5682 = vshrl.u32 %v5531, 16
        %v5684 = vor.u32 %v5682, %v5680
        %v5686 = vshll.u32 %v5532, 16
        %v5688 = vrot.slane %v5686, 1
        %v5689 = vsel %vm445, %v5684, %v5688
        %v5690 = vshrl.u32 %v5532, 16
        %v5692 = vor.u32 %v5690, %v5688
        %v5694 = vshll.u32 %v5533, 16
        %v5696 = vrot.slane %v5694, 1
        %v5697 = vsel %vm445, %v5692, %v5696
        %v5734 = vunpack.c.l.b16 %v5415
        %v5735 = vunpack.c.l.b16 %v5416
        %v5736 = vunpack.c.l.b16 %v5417
        %v5737 = vunpack.c.l.b16 %v5418
        %v5738 = vunpack.c.l.b16 %v5419
        %v5739 = vunpack.c.l.b16 %v5420
        %v5740 = vunpack.c.l.b16 %v5421
        %v5741 = vunpack.c.l.b16 %v5422
        %v5742 = vunpack.c.l.b16 %v5423
        %v5743 = vunpack.c.l.b16 %v5424
        %v5744 = vunpack.c.l.b16 %v5425
        %v5745 = vunpack.c.l.b16 %v5426
        %v5746 = vunpack.c.l.b16 %v5427
        %v5747 = vunpack.c.l.b16 %v5428
        %v5748 = vunpack.c.l.b16 %v5429
        %v5749 = vunpack.c.l.b16 %v5430
        %v5750 = vpack.c.b16 %v5735, %v5734
        %v5751 = vpack.c.b16 %v5737, %v5736
        %v5752 = vpack.c.b16 %v5739, %v5738
        %v5753 = vpack.c.b16 %v5741, %v5740
        %v5754 = vpack.c.b16 %v5743, %v5742
        %v5755 = vpack.c.b16 %v5745, %v5744
        %v5756 = vpack.c.b16 %v5747, %v5746
        %v5757 = vpack.c.b16 %v5749, %v5748
        %5766 = vmatprep.subr.bf16.mxu0 0
        %5767 = vmatpush1.bf16.msra.mxu0 %v5757
        %5768 = vmatprep.subr.bf16.mxu0 0
        %5769 = vmatpush1.bf16.msra.mxu0 %v5756
        %5770 = vmatprep.subr.bf16.mxu0 0
        %5771 = vmatpush1.bf16.msra.mxu0 %v5755
        %5772 = vmatprep.subr.bf16.mxu0 0
        %5773 = vmatpush1.bf16.msra.mxu0 %v5754
        %5774 = vmatprep.subr.bf16.mxu0 0
        %5775 = vmatpush1.bf16.msra.mxu0 %v5753
        %5776 = vmatprep.subr.bf16.mxu0 0
        %5777 = vmatpush1.bf16.msra.mxu0 %v5752
        %5778 = vmatprep.subr.bf16.mxu0 0
        %5779 = vmatpush1.bf16.msra.mxu0 %v5751
        %5780 = vmatprep.subr.bf16.mxu0 0
        %5781 = vmatpush1.bf16.msra.mxu0 %v5750
        %5782 = vmatprep.subr.bf16.mxu0 0
        %5783 = vmatpush2.bf16.msra.mxu0 0
        %5784 = vmatprep.subr.bf16.mxu0 0
        %5785 = vmatpush2.bf16.msra.mxu0 0
        %5786 = vmatprep.subr.bf16.mxu0 0
        %5787 = vmatpush2.bf16.msra.mxu0 0
        %5788 = vmatprep.subr.bf16.mxu0 0
        %5789 = vmatpush2.bf16.msra.mxu0 0
        %5790 = vmatprep.subr.bf16.mxu0 0
        %5791 = vmatpush2.bf16.msra.mxu0 0
        %5792 = vmatprep.subr.bf16.mxu0 0
        %5793 = vmatpush2.bf16.msra.mxu0 0
        %5794 = vmatprep.subr.bf16.mxu0 0
        %5795 = vmatpush2.bf16.msra.mxu0 0
        %5796 = vmatprep.subr.bf16.mxu0 0
        %5797 = vmatpush2.bf16.msra.mxu0 0
        %5798 = vmatprep.mubr.bf16.mxu0 0
        %5799 = vmatmul.mubr.bf16.gmra.mxu0 %v5545
        %v5800 = vpop.f32.mrf.mxu0
        %v5801 = vadd.f32 0.0, %v5800
        %v5802 = vpop.f32.mrf.mxu0
        %v5803 = vpop.f32.mrf.mxu0
        %v5804 = vadd.f32 0.0, %v5803
        %v5805 = vpop.f32.mrf.mxu0
        %5806 = vmatprep.mubr.bf16.mxu0 0
        %5807 = vmatmul.mubr.bf16.gmra.mxu0 %v5553
        %v5808 = vpop.f32.mrf.mxu0
        %v5809 = vadd.f32 0.0, %v5808
        %v5810 = vpop.f32.mrf.mxu0
        %v5811 = vpop.f32.mrf.mxu0
        %v5812 = vadd.f32 0.0, %v5811
        %v5813 = vpop.f32.mrf.mxu0
        %5814 = vmatprep.mubr.bf16.mxu0 0
        %5815 = vmatmul.mubr.bf16.gmra.mxu0 %v5561
        %v5816 = vpop.f32.mrf.mxu0
        %v5817 = vadd.f32 0.0, %v5816
        %v5818 = vpop.f32.mrf.mxu0
        %v5819 = vpop.f32.mrf.mxu0
        %v5820 = vadd.f32 0.0, %v5819
        %v5821 = vpop.f32.mrf.mxu0
        %5822 = vmatprep.mubr.bf16.mxu0 0
        %5823 = vmatmul.mubr.bf16.gmra.mxu0 %v5569
        %v5824 = vpop.f32.mrf.mxu0
        %v5825 = vadd.f32 0.0, %v5824
        %v5826 = vpop.f32.mrf.mxu0
        %v5827 = vpop.f32.mrf.mxu0
        %v5828 = vadd.f32 0.0, %v5827
        %v5829 = vpop.f32.mrf.mxu0
        %5830 = vmatprep.mubr.bf16.mxu0 0
        %5831 = vmatmul.mubr.bf16.gmra.mxu0 %v5577
        %v5832 = vpop.f32.mrf.mxu0
        %v5833 = vadd.f32 0.0, %v5832
        %v5834 = vpop.f32.mrf.mxu0
        %v5835 = vpop.f32.mrf.mxu0
        %v5836 = vadd.f32 0.0, %v5835
        %v5837 = vpop.f32.mrf.mxu0
        %5838 = vmatprep.mubr.bf16.mxu0 0
        %5839 = vmatmul.mubr.bf16.gmra.mxu0 %v5585
        %v5840 = vpop.f32.mrf.mxu0
        %v5841 = vadd.f32 0.0, %v5840
        %v5842 = vpop.f32.mrf.mxu0
        %v5843 = vpop.f32.mrf.mxu0
        %v5844 = vadd.f32 0.0, %v5843
        %v5845 = vpop.f32.mrf.mxu0
        %5846 = vmatprep.mubr.bf16.mxu0 0
        %5847 = vmatmul.mubr.bf16.gmra.mxu0 %v5593
        %v5848 = vpop.f32.mrf.mxu0
        %v5849 = vadd.f32 0.0, %v5848
        %v5850 = vpop.f32.mrf.mxu0
        %v5851 = vpop.f32.mrf.mxu0
        %v5852 = vadd.f32 0.0, %v5851
        %v5853 = vpop.f32.mrf.mxu0
        %5854 = vmatprep.mubr.bf16.mxu0 0
        %5855 = vmatmul.mubr.bf16.gmra.mxu0 %v5601
        %v5856 = vpop.f32.mrf.mxu0
        %v5857 = vadd.f32 0.0, %v5856
        %v5858 = vpop.f32.mrf.mxu0
        %v5859 = vpop.f32.mrf.mxu0
        %v5860 = vadd.f32 0.0, %v5859
        %v5861 = vpop.f32.mrf.mxu0
        %5862 = vmatprep.mubr.bf16.mxu0 0
        %5863 = vmatmul.mubr.bf16.gmra.mxu0 %v5609
        %v5864 = vpop.f32.mrf.mxu0
        %v5865 = vadd.f32 0.0, %v5864
        %v5866 = vpop.f32.mrf.mxu0
        %v5867 = vpop.f32.mrf.mxu0
        %v5868 = vadd.f32 0.0, %v5867
        %v5869 = vpop.f32.mrf.mxu0
        %5870 = vmatprep.mubr.bf16.mxu0 0
        %5871 = vmatmul.mubr.bf16.gmra.mxu0 %v5617
        %v5872 = vpop.f32.mrf.mxu0
        %v5873 = vadd.f32 0.0, %v5872
        %v5874 = vpop.f32.mrf.mxu0
        %v5875 = vpop.f32.mrf.mxu0
        %v5876 = vadd.f32 0.0, %v5875
        %v5877 = vpop.f32.mrf.mxu0
        %5878 = vmatprep.mubr.bf16.mxu0 0
        %5879 = vmatmul.mubr.bf16.gmra.mxu0 %v5625
        %v5880 = vpop.f32.mrf.mxu0
        %v5881 = vadd.f32 0.0, %v5880
        %v5882 = vpop.f32.mrf.mxu0
        %v5883 = vpop.f32.mrf.mxu0
        %v5884 = vadd.f32 0.0, %v5883
        %v5885 = vpop.f32.mrf.mxu0
        %5886 = vmatprep.mubr.bf16.mxu0 0
        %5887 = vmatmul.mubr.bf16.gmra.mxu0 %v5633
        %v5888 = vpop.f32.mrf.mxu0
        %v5889 = vadd.f32 0.0, %v5888
        %v5890 = vpop.f32.mrf.mxu0
        %v5891 = vpop.f32.mrf.mxu0
        %v5892 = vadd.f32 0.0, %v5891
        %v5893 = vpop.f32.mrf.mxu0
        %5894 = vmatprep.mubr.bf16.mxu0 0
        %5895 = vmatmul.mubr.bf16.gmra.mxu0 %v5641
        %v5896 = vpop.f32.mrf.mxu0
        %v5897 = vadd.f32 0.0, %v5896
        %v5898 = vpop.f32.mrf.mxu0
        %v5899 = vpop.f32.mrf.mxu0
        %v5900 = vadd.f32 0.0, %v5899
        %v5901 = vpop.f32.mrf.mxu0
        %5902 = vmatprep.mubr.bf16.mxu0 0
        %5903 = vmatmul.mubr.bf16.gmra.mxu0 %v5649
        %v5904 = vpop.f32.mrf.mxu0
        %v5905 = vadd.f32 0.0, %v5904
        %v5906 = vpop.f32.mrf.mxu0
        %v5907 = vpop.f32.mrf.mxu0
        %v5908 = vadd.f32 0.0, %v5907
        %v5909 = vpop.f32.mrf.mxu0
        %5910 = vmatprep.mubr.bf16.mxu0 0
        %5911 = vmatmul.mubr.bf16.gmra.mxu0 %v5657
        %v5912 = vpop.f32.mrf.mxu0
        %v5913 = vadd.f32 0.0, %v5912
        %v5914 = vpop.f32.mrf.mxu0
        %v5915 = vpop.f32.mrf.mxu0
        %v5916 = vadd.f32 0.0, %v5915
        %v5917 = vpop.f32.mrf.mxu0
        %5918 = vmatprep.mubr.bf16.mxu0 0
        %5919 = vmatmul.mubr.bf16.gmra.mxu0 %v5665
        %v5920 = vpop.f32.mrf.mxu0
        %v5921 = vadd.f32 0.0, %v5920
        %v5922 = vpop.f32.mrf.mxu0
        %v5923 = vpop.f32.mrf.mxu0
        %v5924 = vadd.f32 0.0, %v5923
        %v5925 = vpop.f32.mrf.mxu0
        %5926 = vmatprep.mubr.bf16.mxu0 0
        %5927 = vmatmul.mubr.bf16.gmra.mxu0 %v5673
        %v5928 = vpop.f32.mrf.mxu0
        %v5929 = vadd.f32 0.0, %v5928
        %v5930 = vpop.f32.mrf.mxu0
        %v5931 = vpop.f32.mrf.mxu0
        %v5932 = vadd.f32 0.0, %v5931
        %v5933 = vpop.f32.mrf.mxu0
        %5934 = vmatprep.mubr.bf16.mxu0 0
        %5935 = vmatmul.mubr.bf16.gmra.mxu0 %v5681
        %v5936 = vpop.f32.mrf.mxu0
        %v5937 = vadd.f32 0.0, %v5936
        %v5938 = vpop.f32.mrf.mxu0
        %v5939 = vpop.f32.mrf.mxu0
        %v5940 = vadd.f32 0.0, %v5939
        %v5941 = vpop.f32.mrf.mxu0
        %5942 = vmatprep.mubr.bf16.mxu0 0
        %5943 = vmatmul.mubr.bf16.gmra.mxu0 %v5689
        %v5944 = vpop.f32.mrf.mxu0
        %v5945 = vadd.f32 0.0, %v5944
        %v5946 = vpop.f32.mrf.mxu0
        %v5947 = vpop.f32.mrf.mxu0
        %v5948 = vadd.f32 0.0, %v5947
        %v5949 = vpop.f32.mrf.mxu0
        %5950 = vmatprep.mubr.bf16.mxu0 0
        %5951 = vmatmul.mubr.bf16.gmra.mxu0 %v5697
        %v5952 = vpop.f32.mrf.mxu0
        %v5953 = vadd.f32 0.0, %v5952
        %v5954 = vpop.f32.mrf.mxu0
        %v5955 = vpop.f32.mrf.mxu0
        %v5956 = vadd.f32 0.0, %v5955
        %v5957 = vpop.f32.mrf.mxu0
        %5958 = vdwg.mxu0
        %v5995 = vunpack.c.l.b16 %v5397
        %v5996 = vunpack.c.l.b16 %v5398
        %v5997 = vunpack.c.l.b16 %v5399
        %v5998 = vunpack.c.l.b16 %v5400
        %v5999 = vunpack.c.l.b16 %v5401
        %v6000 = vunpack.c.l.b16 %v5402
        %v6001 = vunpack.c.l.b16 %v5403
        %v6002 = vunpack.c.l.b16 %v5404
        %v6003 = vunpack.c.l.b16 %v5405
        %v6004 = vunpack.c.l.b16 %v5406
        %v6005 = vunpack.c.l.b16 %v5407
        %v6006 = vunpack.c.l.b16 %v5408
        %v6007 = vunpack.c.l.b16 %v5409
        %v6008 = vunpack.c.l.b16 %v5410
        %v6009 = vunpack.c.l.b16 %v5411
        %v6010 = vunpack.c.l.b16 %v5412
        %v6011 = vpack.c.b16 %v5996, %v5995
        %v6012 = vpack.c.b16 %v5998, %v5997
        %v6013 = vpack.c.b16 %v6000, %v5999
        %v6014 = vpack.c.b16 %v6002, %v6001
        %v6015 = vpack.c.b16 %v6004, %v6003
        %v6016 = vpack.c.b16 %v6006, %v6005
        %v6017 = vpack.c.b16 %v6008, %v6007
        %v6018 = vpack.c.b16 %v6010, %v6009
        %6027 = vmatprep.subr.bf16.mxu0 0
        %6028 = vmatpush1.bf16.msra.mxu0 %v6018
        %6029 = vmatprep.subr.bf16.mxu0 0
        %6030 = vmatpush1.bf16.msra.mxu0 %v6017
        %6031 = vmatprep.subr.bf16.mxu0 0
        %6032 = vmatpush1.bf16.msra.mxu0 %v6016
        %6033 = vmatprep.subr.bf16.mxu0 0
        %6034 = vmatpush1.bf16.msra.mxu0 %v6015
        %6035 = vmatprep.subr.bf16.mxu0 0
        %6036 = vmatpush1.bf16.msra.mxu0 %v6014
        %6037 = vmatprep.subr.bf16.mxu0 0
        %6038 = vmatpush1.bf16.msra.mxu0 %v6013
        %6039 = vmatprep.subr.bf16.mxu0 0
        %6040 = vmatpush1.bf16.msra.mxu0 %v6012
        %6041 = vmatprep.subr.bf16.mxu0 0
        %6042 = vmatpush1.bf16.msra.mxu0 %v6011
        %6043 = vmatprep.subr.bf16.mxu0 0
        %6044 = vmatpush2.bf16.msra.mxu0 0
        %6045 = vmatprep.subr.bf16.mxu0 0
        %6046 = vmatpush2.bf16.msra.mxu0 0
        %6047 = vmatprep.subr.bf16.mxu0 0
        %6048 = vmatpush2.bf16.msra.mxu0 0
        %6049 = vmatprep.subr.bf16.mxu0 0
        %6050 = vmatpush2.bf16.msra.mxu0 0
        %6051 = vmatprep.subr.bf16.mxu0 0
        %6052 = vmatpush2.bf16.msra.mxu0 0
        %6053 = vmatprep.subr.bf16.mxu0 0
        %6054 = vmatpush2.bf16.msra.mxu0 0
        %6055 = vmatprep.subr.bf16.mxu0 0
        %6056 = vmatpush2.bf16.msra.mxu0 0
        %6057 = vmatprep.subr.bf16.mxu0 0
        %6058 = vmatpush2.bf16.msra.mxu0 0
        %6059 = vmatprep.mubr.bf16.mxu0 0
        %6060 = vmatmul.mubr.bf16.gmra.mxu0 %v5513
        %v6061 = vpop.f32.mrf.mxu0
        %v6062 = vadd.f32 %v5801, %v6061
        %v6063 = vpop.f32.mrf.mxu0
        %v6064 = vpop.f32.mrf.mxu0
        %v6065 = vadd.f32 %v5804, %v6064
        %v6066 = vpop.f32.mrf.mxu0
        %6067 = vmatprep.mubr.bf16.mxu0 0
        %6068 = vmatmul.mubr.bf16.gmra.mxu0 %v5514
        %v6069 = vpop.f32.mrf.mxu0
        %v6070 = vadd.f32 %v5809, %v6069
        %v6071 = vpop.f32.mrf.mxu0
        %v6072 = vpop.f32.mrf.mxu0
        %v6073 = vadd.f32 %v5812, %v6072
        %v6074 = vpop.f32.mrf.mxu0
        %6075 = vmatprep.mubr.bf16.mxu0 0
        %6076 = vmatmul.mubr.bf16.gmra.mxu0 %v5515
        %v6077 = vpop.f32.mrf.mxu0
        %v6078 = vadd.f32 %v5817, %v6077
        %v6079 = vpop.f32.mrf.mxu0
        %v6080 = vpop.f32.mrf.mxu0
        %v6081 = vadd.f32 %v5820, %v6080
        %v6082 = vpop.f32.mrf.mxu0
        %6083 = vmatprep.mubr.bf16.mxu0 0
        %6084 = vmatmul.mubr.bf16.gmra.mxu0 %v5516
        %v6085 = vpop.f32.mrf.mxu0
        %v6086 = vadd.f32 %v5825, %v6085
        %v6087 = vpop.f32.mrf.mxu0
        %v6088 = vpop.f32.mrf.mxu0
        %v6089 = vadd.f32 %v5828, %v6088
        %v6090 = vpop.f32.mrf.mxu0
        %6091 = vmatprep.mubr.bf16.mxu0 0
        %6092 = vmatmul.mubr.bf16.gmra.mxu0 %v5517
        %v6093 = vpop.f32.mrf.mxu0
        %v6094 = vadd.f32 %v5833, %v6093
        %v6095 = vpop.f32.mrf.mxu0
        %v6096 = vpop.f32.mrf.mxu0
        %v6097 = vadd.f32 %v5836, %v6096
        %v6098 = vpop.f32.mrf.mxu0
        %6099 = vmatprep.mubr.bf16.mxu0 0
        %6100 = vmatmul.mubr.bf16.gmra.mxu0 %v5518
        %v6101 = vpop.f32.mrf.mxu0
        %v6102 = vadd.f32 %v5841, %v6101
        %v6103 = vpop.f32.mrf.mxu0
        %v6104 = vpop.f32.mrf.mxu0
        %v6105 = vadd.f32 %v5844, %v6104
        %v6106 = vpop.f32.mrf.mxu0
        %6107 = vmatprep.mubr.bf16.mxu0 0
        %6108 = vmatmul.mubr.bf16.gmra.mxu0 %v5519
        %v6109 = vpop.f32.mrf.mxu0
        %v6110 = vadd.f32 %v5849, %v6109
        %v6111 = vpop.f32.mrf.mxu0
        %v6112 = vpop.f32.mrf.mxu0
        %v6113 = vadd.f32 %v5852, %v6112
        %v6114 = vpop.f32.mrf.mxu0
        %6115 = vmatprep.mubr.bf16.mxu0 0
        %6116 = vmatmul.mubr.bf16.gmra.mxu0 %v5520
        %v6117 = vpop.f32.mrf.mxu0
        %v6118 = vadd.f32 %v5857, %v6117
        %v6119 = vpop.f32.mrf.mxu0
        %v6120 = vpop.f32.mrf.mxu0
        %v6121 = vadd.f32 %v5860, %v6120
        %v6122 = vpop.f32.mrf.mxu0
        %6123 = vmatprep.mubr.bf16.mxu0 0
        %6124 = vmatmul.mubr.bf16.gmra.mxu0 %v5521
        %v6125 = vpop.f32.mrf.mxu0
        %v6126 = vadd.f32 %v5865, %v6125
        %v6127 = vpop.f32.mrf.mxu0
        %v6128 = vpop.f32.mrf.mxu0
        %v6129 = vadd.f32 %v5868, %v6128
        %v6130 = vpop.f32.mrf.mxu0
        %6131 = vmatprep.mubr.bf16.mxu0 0
        %6132 = vmatmul.mubr.bf16.gmra.mxu0 %v5522
        %v6133 = vpop.f32.mrf.mxu0
        %v6134 = vadd.f32 %v5873, %v6133
        %v6135 = vpop.f32.mrf.mxu0
        %v6136 = vpop.f32.mrf.mxu0
        %v6137 = vadd.f32 %v5876, %v6136
        %v6138 = vpop.f32.mrf.mxu0
        %6139 = vmatprep.mubr.bf16.mxu0 0
        %6140 = vmatmul.mubr.bf16.gmra.mxu0 %v5523
        %v6141 = vpop.f32.mrf.mxu0
        %v6142 = vadd.f32 %v5881, %v6141
        %v6143 = vpop.f32.mrf.mxu0
        %v6144 = vpop.f32.mrf.mxu0
        %v6145 = vadd.f32 %v5884, %v6144
        %v6146 = vpop.f32.mrf.mxu0
        %6147 = vmatprep.mubr.bf16.mxu0 0
        %6148 = vmatmul.mubr.bf16.gmra.mxu0 %v5524
        %v6149 = vpop.f32.mrf.mxu0
        %v6150 = vadd.f32 %v5889, %v6149
        %v6151 = vpop.f32.mrf.mxu0
        %v6152 = vpop.f32.mrf.mxu0
        %v6153 = vadd.f32 %v5892, %v6152
        %v6154 = vpop.f32.mrf.mxu0
        %6155 = vmatprep.mubr.bf16.mxu0 0
        %6156 = vmatmul.mubr.bf16.gmra.mxu0 %v5525
        %v6157 = vpop.f32.mrf.mxu0
        %v6158 = vadd.f32 %v5897, %v6157
        %v6159 = vpop.f32.mrf.mxu0
        %v6160 = vpop.f32.mrf.mxu0
        %v6161 = vadd.f32 %v5900, %v6160
        %v6162 = vpop.f32.mrf.mxu0
        %6163 = vmatprep.mubr.bf16.mxu0 0
        %6164 = vmatmul.mubr.bf16.gmra.mxu0 %v5526
        %v6165 = vpop.f32.mrf.mxu0
        %v6166 = vadd.f32 %v5905, %v6165
        %v6167 = vpop.f32.mrf.mxu0
        %v6168 = vpop.f32.mrf.mxu0
        %v6169 = vadd.f32 %v5908, %v6168
        %v6170 = vpop.f32.mrf.mxu0
        %6171 = vmatprep.mubr.bf16.mxu0 0
        %6172 = vmatmul.mubr.bf16.gmra.mxu0 %v5527
        %v6173 = vpop.f32.mrf.mxu0
        %v6174 = vadd.f32 %v5913, %v6173
        %v6175 = vpop.f32.mrf.mxu0
        %v6176 = vpop.f32.mrf.mxu0
        %v6177 = vadd.f32 %v5916, %v6176
        %v6178 = vpop.f32.mrf.mxu0
        %6179 = vmatprep.mubr.bf16.mxu0 0
        %6180 = vmatmul.mubr.bf16.gmra.mxu0 %v5528
        %v6181 = vpop.f32.mrf.mxu0
        %v6182 = vadd.f32 %v5921, %v6181
        %v6183 = vpop.f32.mrf.mxu0
        %v6184 = vpop.f32.mrf.mxu0
        %v6185 = vadd.f32 %v5924, %v6184
        %v6186 = vpop.f32.mrf.mxu0
        %6187 = vmatprep.mubr.bf16.mxu0 0
        %6188 = vmatmul.mubr.bf16.gmra.mxu0 %v5529
        %v6189 = vpop.f32.mrf.mxu0
        %v6190 = vadd.f32 %v5929, %v6189
        %v6191 = vpop.f32.mrf.mxu0
        %v6192 = vpop.f32.mrf.mxu0
        %v6193 = vadd.f32 %v5932, %v6192
        %v6194 = vpop.f32.mrf.mxu0
        %6195 = vmatprep.mubr.bf16.mxu0 0
        %6196 = vmatmul.mubr.bf16.gmra.mxu0 %v5530
        %v6197 = vpop.f32.mrf.mxu0
        %v6198 = vadd.f32 %v5937, %v6197
        %v6199 = vpop.f32.mrf.mxu0
        %v6200 = vpop.f32.mrf.mxu0
        %v6201 = vadd.f32 %v5940, %v6200
        %v6202 = vpop.f32.mrf.mxu0
        %6203 = vmatprep.mubr.bf16.mxu0 0
        %6204 = vmatmul.mubr.bf16.gmra.mxu0 %v5531
        %v6205 = vpop.f32.mrf.mxu0
        %v6206 = vadd.f32 %v5945, %v6205
        %v6207 = vpop.f32.mrf.mxu0
        %v6208 = vpop.f32.mrf.mxu0
        %v6209 = vadd.f32 %v5948, %v6208
        %v6210 = vpop.f32.mrf.mxu0
        %6211 = vmatprep.mubr.bf16.mxu0 0
        %6212 = vmatmul.mubr.bf16.gmra.mxu0 %v5532
        %v6213 = vpop.f32.mrf.mxu0
        %v6214 = vadd.f32 %v5953, %v6213
        %v6215 = vpop.f32.mrf.mxu0
        %v6216 = vpop.f32.mrf.mxu0
        %v6217 = vadd.f32 %v5956, %v6216
        %v6218 = vpop.f32.mrf.mxu0
        %6219 = vdwg.mxu0
        %v6220 = vld [vmem:[#allocation2] sm:$0xe]
        %s6221 = scalar_lea.vmem %s3, 128
        %v6222 = vld [vmem:[%s6221] sm:$0xf]
        %v6223 = vld [vmem:[%s6221 + $0x4] sm:$0xf]
        %v6224 = vld [vmem:[%s6221 + $0x8] sm:$0xf]
        %v6225 = vld [vmem:[%s6221 + $0xc] sm:$0xf]
        %v6226 = vld [vmem:[%s6221 + $0x10] sm:$0xf]
        %v6227 = vld [vmem:[%s6221 + $0x14] sm:$0xf]
        %v6228 = vld [vmem:[%s6221 + $0x18] sm:$0xf]
        %v6229 = vld [vmem:[%s6221 + $0x1c] sm:$0xf]
        %v6230 = vld [vmem:[%s6221 + $0x20] sm:$0xf]
        %v6231 = vld [vmem:[%s6221 + $0x24] sm:$0xf]
        %v6232 = vld [vmem:[%s6221 + $0x28] sm:$0xf]
        %v6233 = vld [vmem:[%s6221 + $0x2c] sm:$0xf]
        %v6234 = vld [vmem:[%s6221 + $0x30] sm:$0xf]
        %v6235 = vld [vmem:[%s6221 + $0x34] sm:$0xf]
        %v6236 = vld [vmem:[%s6221 + $0x38] sm:$0xf]
        %v6237 = vld [vmem:[%s6221 + $0x3c] sm:$0xf]
        %v6239 = vunpack.c.l.b16 %v6220
        %v6240 = vpack.c.b16 %v5473, %v6239
        %v6241 = vrot.slane %v6240, 1
        %v6242 = vrot.slane %v5514, 1
        %v6243 = vsel %vm1225, %v6241, %v6242
        %v6244 = vrot.slane %v5515, 1
        %v6245 = vsel %vm1225, %v6242, %v6244
        %v6246 = vrot.slane %v5516, 1
        %v6247 = vsel %vm1225, %v6244, %v6246
        %v6248 = vrot.slane %v5517, 1
        %v6249 = vsel %vm1225, %v6246, %v6248
        %v6250 = vrot.slane %v5518, 1
        %v6251 = vsel %vm1225, %v6248, %v6250
        %v6252 = vrot.slane %v5519, 1
        %v6253 = vsel %vm1225, %v6250, %v6252
        %v6254 = vrot.slane %v5520, 1
        %v6255 = vsel %vm1225, %v6252, %v6254
        %v6256 = vrot.slane %v5521, 1
        %v6257 = vsel %vm1225, %v6254, %v6256
        %v6258 = vrot.slane %v5522, 1
        %v6259 = vsel %vm1225, %v6256, %v6258
        %v6260 = vrot.slane %v5523, 1
        %v6261 = vsel %vm1225, %v6258, %v6260
        %v6262 = vrot.slane %v5524, 1
        %v6263 = vsel %vm1225, %v6260, %v6262
        %v6264 = vrot.slane %v5525, 1
        %v6265 = vsel %vm1225, %v6262, %v6264
        %v6266 = vrot.slane %v5526, 1
        %v6267 = vsel %vm1225, %v6264, %v6266
        %v6268 = vrot.slane %v5527, 1
        %v6269 = vsel %vm1225, %v6266, %v6268
        %v6270 = vrot.slane %v5528, 1
        %v6271 = vsel %vm1225, %v6268, %v6270
        %v6272 = vrot.slane %v5529, 1
        %v6273 = vsel %vm1225, %v6270, %v6272
        %v6274 = vrot.slane %v5530, 1
        %v6275 = vsel %vm1225, %v6272, %v6274
        %v6276 = vrot.slane %v5531, 1
        %v6277 = vsel %vm1225, %v6274, %v6276
        %v6278 = vrot.slane %v5532, 1
        %v6279 = vsel %vm1225, %v6276, %v6278
        %v6280 = vrot.slane %v5533, 1
        %v6281 = vsel %vm1225, %v6278, %v6280
        %v6318 = vunpack.c.l.b16 %v6222
        %v6319 = vunpack.c.l.b16 %v6223
        %v6320 = vunpack.c.l.b16 %v6224
        %v6321 = vunpack.c.l.b16 %v6225
        %v6322 = vunpack.c.l.b16 %v6226
        %v6323 = vunpack.c.l.b16 %v6227
        %v6324 = vunpack.c.l.b16 %v6228
        %v6325 = vunpack.c.l.b16 %v6229
        %v6326 = vunpack.c.l.b16 %v6230
        %v6327 = vunpack.c.l.b16 %v6231
        %v6328 = vunpack.c.l.b16 %v6232
        %v6329 = vunpack.c.l.b16 %v6233
        %v6330 = vunpack.c.l.b16 %v6234
        %v6331 = vunpack.c.l.b16 %v6235
        %v6332 = vunpack.c.l.b16 %v6236
        %v6333 = vunpack.c.l.b16 %v6237
        %v6334 = vpack.c.b16 %v6319, %v6318
        %v6335 = vpack.c.b16 %v6321, %v6320
        %v6336 = vpack.c.b16 %v6323, %v6322
        %v6337 = vpack.c.b16 %v6325, %v6324
        %v6338 = vpack.c.b16 %v6327, %v6326
        %v6339 = vpack.c.b16 %v6329, %v6328
        %v6340 = vpack.c.b16 %v6331, %v6330
        %v6341 = vpack.c.b16 %v6333, %v6332
        %6350 = vmatprep.subr.bf16.mxu0 0
        %6351 = vmatpush1.bf16.msra.mxu0 %v6341
        %6352 = vmatprep.subr.bf16.mxu0 0
        %6353 = vmatpush1.bf16.msra.mxu0 %v6340
        %6354 = vmatprep.subr.bf16.mxu0 0
        %6355 = vmatpush1.bf16.msra.mxu0 %v6339
        %6356 = vmatprep.subr.bf16.mxu0 0
        %6357 = vmatpush1.bf16.msra.mxu0 %v6338
        %6358 = vmatprep.subr.bf16.mxu0 0
        %6359 = vmatpush1.bf16.msra.mxu0 %v6337
        %6360 = vmatprep.subr.bf16.mxu0 0
        %6361 = vmatpush1.bf16.msra.mxu0 %v6336
        %6362 = vmatprep.subr.bf16.mxu0 0
        %6363 = vmatpush1.bf16.msra.mxu0 %v6335
        %6364 = vmatprep.subr.bf16.mxu0 0
        %6365 = vmatpush1.bf16.msra.mxu0 %v6334
        %6366 = vmatprep.subr.bf16.mxu0 0
        %6367 = vmatpush2.bf16.msra.mxu0 0
        %6368 = vmatprep.subr.bf16.mxu0 0
        %6369 = vmatpush2.bf16.msra.mxu0 0
        %6370 = vmatprep.subr.bf16.mxu0 0
        %6371 = vmatpush2.bf16.msra.mxu0 0
        %6372 = vmatprep.subr.bf16.mxu0 0
        %6373 = vmatpush2.bf16.msra.mxu0 0
        %6374 = vmatprep.subr.bf16.mxu0 0
        %6375 = vmatpush2.bf16.msra.mxu0 0
        %6376 = vmatprep.subr.bf16.mxu0 0
        %6377 = vmatpush2.bf16.msra.mxu0 0
        %6378 = vmatprep.subr.bf16.mxu0 0
        %6379 = vmatpush2.bf16.msra.mxu0 0
        %6380 = vmatprep.subr.bf16.mxu0 0
        %6381 = vmatpush2.bf16.msra.mxu0 0
        %6382 = vmatprep.mubr.bf16.mxu0 0
        %6383 = vmatmul.mubr.bf16.gmra.mxu0 %v6243
        %v6384 = vpop.f32.mrf.mxu0
        %v6385 = vadd.f32 0.0, %v6384
        %v6386 = vpop.f32.mrf.mxu0
        %v6387 = vpop.f32.mrf.mxu0
        %v6388 = vadd.f32 0.0, %v6387
        %v6389 = vpop.f32.mrf.mxu0
        %6390 = vmatprep.mubr.bf16.mxu0 0
        %6391 = vmatmul.mubr.bf16.gmra.mxu0 %v6245
        %v6392 = vpop.f32.mrf.mxu0
        %v6393 = vadd.f32 0.0, %v6392
        %v6394 = vpop.f32.mrf.mxu0
        %v6395 = vpop.f32.mrf.mxu0
        %v6396 = vadd.f32 0.0, %v6395
        %v6397 = vpop.f32.mrf.mxu0
        %6398 = vmatprep.mubr.bf16.mxu0 0
        %6399 = vmatmul.mubr.bf16.gmra.mxu0 %v6247
        %v6400 = vpop.f32.mrf.mxu0
        %v6401 = vadd.f32 0.0, %v6400
        %v6402 = vpop.f32.mrf.mxu0
        %v6403 = vpop.f32.mrf.mxu0
        %v6404 = vadd.f32 0.0, %v6403
        %v6405 = vpop.f32.mrf.mxu0
        %6406 = vmatprep.mubr.bf16.mxu0 0
        %6407 = vmatmul.mubr.bf16.gmra.mxu0 %v6249
        %v6408 = vpop.f32.mrf.mxu0
        %v6409 = vadd.f32 0.0, %v6408
        %v6410 = vpop.f32.mrf.mxu0
        %v6411 = vpop.f32.mrf.mxu0
        %v6412 = vadd.f32 0.0, %v6411
        %v6413 = vpop.f32.mrf.mxu0
        %6414 = vmatprep.mubr.bf16.mxu0 0
        %6415 = vmatmul.mubr.bf16.gmra.mxu0 %v6251
        %v6416 = vpop.f32.mrf.mxu0
        %v6417 = vadd.f32 0.0, %v6416
        %v6418 = vpop.f32.mrf.mxu0
        %v6419 = vpop.f32.mrf.mxu0
        %v6420 = vadd.f32 0.0, %v6419
        %v6421 = vpop.f32.mrf.mxu0
        %6422 = vmatprep.mubr.bf16.mxu0 0
        %6423 = vmatmul.mubr.bf16.gmra.mxu0 %v6253
        %v6424 = vpop.f32.mrf.mxu0
        %v6425 = vadd.f32 0.0, %v6424
        %v6426 = vpop.f32.mrf.mxu0
        %v6427 = vpop.f32.mrf.mxu0
        %v6428 = vadd.f32 0.0, %v6427
        %v6429 = vpop.f32.mrf.mxu0
        %6430 = vmatprep.mubr.bf16.mxu0 0
        %6431 = vmatmul.mubr.bf16.gmra.mxu0 %v6255
        %v6432 = vpop.f32.mrf.mxu0
        %v6433 = vadd.f32 0.0, %v6432
        %v6434 = vpop.f32.mrf.mxu0
        %v6435 = vpop.f32.mrf.mxu0
        %v6436 = vadd.f32 0.0, %v6435
        %v6437 = vpop.f32.mrf.mxu0
        %6438 = vmatprep.mubr.bf16.mxu0 0
        %6439 = vmatmul.mubr.bf16.gmra.mxu0 %v6257
        %v6440 = vpop.f32.mrf.mxu0
        %v6441 = vadd.f32 0.0, %v6440
        %v6442 = vpop.f32.mrf.mxu0
        %v6443 = vpop.f32.mrf.mxu0
        %v6444 = vadd.f32 0.0, %v6443
        %v6445 = vpop.f32.mrf.mxu0
        %6446 = vmatprep.mubr.bf16.mxu0 0
        %6447 = vmatmul.mubr.bf16.gmra.mxu0 %v6259
        %v6448 = vpop.f32.mrf.mxu0
        %v6449 = vadd.f32 0.0, %v6448
        %v6450 = vpop.f32.mrf.mxu0
        %v6451 = vpop.f32.mrf.mxu0
        %v6452 = vadd.f32 0.0, %v6451
        %v6453 = vpop.f32.mrf.mxu0
        %6454 = vmatprep.mubr.bf16.mxu0 0
        %6455 = vmatmul.mubr.bf16.gmra.mxu0 %v6261
        %v6456 = vpop.f32.mrf.mxu0
        %v6457 = vadd.f32 0.0, %v6456
        %v6458 = vpop.f32.mrf.mxu0
        %v6459 = vpop.f32.mrf.mxu0
        %v6460 = vadd.f32 0.0, %v6459
        %v6461 = vpop.f32.mrf.mxu0
        %6462 = vmatprep.mubr.bf16.mxu0 0
        %6463 = vmatmul.mubr.bf16.gmra.mxu0 %v6263
        %v6464 = vpop.f32.mrf.mxu0
        %v6465 = vadd.f32 0.0, %v6464
        %v6466 = vpop.f32.mrf.mxu0
        %v6467 = vpop.f32.mrf.mxu0
        %v6468 = vadd.f32 0.0, %v6467
        %v6469 = vpop.f32.mrf.mxu0
        %6470 = vmatprep.mubr.bf16.mxu0 0
        %6471 = vmatmul.mubr.bf16.gmra.mxu0 %v6265
        %v6472 = vpop.f32.mrf.mxu0
        %v6473 = vadd.f32 0.0, %v6472
        %v6474 = vpop.f32.mrf.mxu0
        %v6475 = vpop.f32.mrf.mxu0
        %v6476 = vadd.f32 0.0, %v6475
        %v6477 = vpop.f32.mrf.mxu0
        %6478 = vmatprep.mubr.bf16.mxu0 0
        %6479 = vmatmul.mubr.bf16.gmra.mxu0 %v6267
        %v6480 = vpop.f32.mrf.mxu0
        %v6481 = vadd.f32 0.0, %v6480
        %v6482 = vpop.f32.mrf.mxu0
        %v6483 = vpop.f32.mrf.mxu0
        %v6484 = vadd.f32 0.0, %v6483
        %v6485 = vpop.f32.mrf.mxu0
        %6486 = vmatprep.mubr.bf16.mxu0 0
        %6487 = vmatmul.mubr.bf16.gmra.mxu0 %v6269
        %v6488 = vpop.f32.mrf.mxu0
        %v6489 = vadd.f32 0.0, %v6488
        %v6490 = vpop.f32.mrf.mxu0
        %v6491 = vpop.f32.mrf.mxu0
        %v6492 = vadd.f32 0.0, %v6491
        %v6493 = vpop.f32.mrf.mxu0
        %6494 = vmatprep.mubr.bf16.mxu0 0
        %6495 = vmatmul.mubr.bf16.gmra.mxu0 %v6271
        %v6496 = vpop.f32.mrf.mxu0
        %v6497 = vadd.f32 0.0, %v6496
        %v6498 = vpop.f32.mrf.mxu0
        %v6499 = vpop.f32.mrf.mxu0
        %v6500 = vadd.f32 0.0, %v6499
        %v6501 = vpop.f32.mrf.mxu0
        %6502 = vmatprep.mubr.bf16.mxu0 0
        %6503 = vmatmul.mubr.bf16.gmra.mxu0 %v6273
        %v6504 = vpop.f32.mrf.mxu0
        %v6505 = vadd.f32 0.0, %v6504
        %v6506 = vpop.f32.mrf.mxu0
        %v6507 = vpop.f32.mrf.mxu0
        %v6508 = vadd.f32 0.0, %v6507
        %v6509 = vpop.f32.mrf.mxu0
        %6510 = vmatprep.mubr.bf16.mxu0 0
        %6511 = vmatmul.mubr.bf16.gmra.mxu0 %v6275
        %v6512 = vpop.f32.mrf.mxu0
        %v6513 = vadd.f32 0.0, %v6512
        %v6514 = vpop.f32.mrf.mxu0
        %v6515 = vpop.f32.mrf.mxu0
        %v6516 = vadd.f32 0.0, %v6515
        %v6517 = vpop.f32.mrf.mxu0
        %6518 = vmatprep.mubr.bf16.mxu0 0
        %6519 = vmatmul.mubr.bf16.gmra.mxu0 %v6277
        %v6520 = vpop.f32.mrf.mxu0
        %v6521 = vadd.f32 0.0, %v6520
        %v6522 = vpop.f32.mrf.mxu0
        %v6523 = vpop.f32.mrf.mxu0
        %v6524 = vadd.f32 0.0, %v6523
        %v6525 = vpop.f32.mrf.mxu0
        %6526 = vmatprep.mubr.bf16.mxu0 0
        %6527 = vmatmul.mubr.bf16.gmra.mxu0 %v6279
        %v6528 = vpop.f32.mrf.mxu0
        %v6529 = vadd.f32 0.0, %v6528
        %v6530 = vpop.f32.mrf.mxu0
        %v6531 = vpop.f32.mrf.mxu0
        %v6532 = vadd.f32 0.0, %v6531
        %v6533 = vpop.f32.mrf.mxu0
        %6534 = vmatprep.mubr.bf16.mxu0 0
        %6535 = vmatmul.mubr.bf16.gmra.mxu0 %v6281
        %v6536 = vpop.f32.mrf.mxu0
        %v6537 = vadd.f32 0.0, %v6536
        %v6538 = vpop.f32.mrf.mxu0
        %v6539 = vpop.f32.mrf.mxu0
        %v6540 = vadd.f32 0.0, %v6539
        %v6541 = vpop.f32.mrf.mxu0
        %6542 = vdwg.mxu0
        %v6543 = vadd.f32 %v6062, %v6385
        %v6544 = vadd.f32 %v6065, %v6388
        %v6545 = vadd.f32 %v6070, %v6393
        %v6546 = vadd.f32 %v6073, %v6396
        %v6547 = vadd.f32 %v6078, %v6401
        %v6548 = vadd.f32 %v6081, %v6404
        %v6549 = vadd.f32 %v6086, %v6409
        %v6550 = vadd.f32 %v6089, %v6412
        %v6551 = vadd.f32 %v6094, %v6417
        %v6552 = vadd.f32 %v6097, %v6420
        %v6553 = vadd.f32 %v6102, %v6425
        %v6554 = vadd.f32 %v6105, %v6428
        %v6555 = vadd.f32 %v6110, %v6433
        %v6556 = vadd.f32 %v6113, %v6436
        %v6557 = vadd.f32 %v6118, %v6441
        %v6558 = vadd.f32 %v6121, %v6444
        %v6559 = vadd.f32 %v6126, %v6449
        %v6560 = vadd.f32 %v6129, %v6452
        %v6561 = vadd.f32 %v6134, %v6457
        %v6562 = vadd.f32 %v6137, %v6460
        %v6563 = vadd.f32 %v6142, %v6465
        %v6564 = vadd.f32 %v6145, %v6468
        %v6565 = vadd.f32 %v6150, %v6473
        %v6566 = vadd.f32 %v6153, %v6476
        %v6567 = vadd.f32 %v6158, %v6481
        %v6568 = vadd.f32 %v6161, %v6484
        %v6569 = vadd.f32 %v6166, %v6489
        %v6570 = vadd.f32 %v6169, %v6492
        %v6571 = vadd.f32 %v6174, %v6497
        %v6572 = vadd.f32 %v6177, %v6500
        %v6573 = vadd.f32 %v6182, %v6505
        %v6574 = vadd.f32 %v6185, %v6508
        %v6575 = vadd.f32 %v6190, %v6513
        %v6576 = vadd.f32 %v6193, %v6516
        %v6577 = vadd.f32 %v6198, %v6521
        %v6578 = vadd.f32 %v6201, %v6524
        %v6579 = vadd.f32 %v6206, %v6529
        %v6580 = vadd.f32 %v6209, %v6532
        %v6581 = vadd.f32 %v6214, %v6537
        %v6582 = vadd.f32 %v6217, %v6540
        %v6583 = vld [vmem:[#allocation2 + $0x8] sm:$0xc]
        %v6584 = vld [vmem:[#allocation2 + $0xc] sm:$0xf]
        %v6585 = vld [vmem:[#allocation2 + $0x10] sm:$0xf]
        %v6586 = vld [vmem:[#allocation2 + $0x14] sm:$0xf]
        %v6587 = vld [vmem:[#allocation2 + $0x18] sm:$0xf]
        %v6588 = vld [vmem:[#allocation2 + $0x1c] sm:$0xf]
        %v6589 = vld [vmem:[#allocation2 + $0x20] sm:$0xf]
        %v6590 = vld [vmem:[#allocation2 + $0x24] sm:$0xf]
        %v6591 = vld [vmem:[#allocation2 + $0x28] sm:$0xf]
        %v6592 = vld [vmem:[#allocation2 + $0x2c] sm:$0xf]
        %v6593 = vld [vmem:[#allocation2 + $0x30] sm:$0xf]
        %v6594 = vld [vmem:[#allocation2 + $0x34] sm:$0xf]
        %v6595 = vld [vmem:[#allocation2 + $0x38] sm:$0xf]
        %v6596 = vld [vmem:[#allocation2 + $0x3c] sm:$0xf]
        %v6597 = vld [vmem:[#allocation2 + $0x40] sm:$0xf]
        %v6598 = vld [vmem:[#allocation2 + $0x44] sm:$0xf]
        %v6599 = vld [vmem:[#allocation2 + $0x48] sm:$0xf]
        %v6600 = vld [vmem:[#allocation2 + $0x4c] sm:$0xf]
        %v6601 = vld [vmem:[#allocation2 + $0x50] sm:$0xf]
        %v6602 = vld [vmem:[#allocation2 + $0x54] sm:$0xf]
        %v6603 = vld [vmem:[#allocation2 + $0x58] sm:$0xf]
        %v6604 = vld [vmem:[#allocation2 + $0x5c] sm:$0xf]
        %v6605 = vld [vmem:[#allocation2 + $0x60] sm:$0xf]
        %v6606 = vld [vmem:[#allocation2 + $0x64] sm:$0xf]
        %v6607 = vld [vmem:[#allocation2 + $0x68] sm:$0xf]
        %v6608 = vld [vmem:[#allocation2 + $0x6c] sm:$0xf]
        %v6609 = vld [vmem:[#allocation2 + $0x70] sm:$0xf]
        %v6610 = vld [vmem:[#allocation2 + $0x74] sm:$0xf]
        %v6611 = vld [vmem:[#allocation2 + $0x78] sm:$0xf]
        %v6612 = vld [vmem:[#allocation2 + $0x7c] sm:$0xf]
        %v6613 = vld [vmem:[#allocation2 + $0x80] sm:$0xf]
        %v6614 = vld [vmem:[#allocation2 + $0x84] sm:$0xf]
        %v6615 = vld [vmem:[#allocation2 + $0x88] sm:$0xf]
        %v6616 = vld [vmem:[#allocation2 + $0x8c] sm:$0xf]
        %v6617 = vld [vmem:[#allocation2 + $0x90] sm:$0xf]
        %v6618 = vld [vmem:[#allocation2 + $0x94] sm:$0xf]
        %v6619 = vld [vmem:[#allocation2 + $0x98] sm:$0xf]
        %v6620 = vld [vmem:[#allocation2 + $0x9c] sm:$0xf]
        %v6621 = vld [vmem:[#allocation2 + $0xa0] sm:$0xf]
        %v6622 = vld [vmem:[#allocation2 + $0xa4] sm:$0xf]
        %v6623 = vld [vmem:[#allocation2 + $0xa8] sm:$0x3]
        %s6624 = scalar_lea.vmem %s3, 192
        %v6625 = vld [vmem:[%s6624] sm:$0xf]
        %v6626 = vld [vmem:[%s6624 + $0x4] sm:$0xf]
        %v6627 = vld [vmem:[%s6624 + $0x8] sm:$0xf]
        %v6628 = vld [vmem:[%s6624 + $0xc] sm:$0xf]
        %v6629 = vld [vmem:[%s6624 + $0x10] sm:$0xf]
        %v6630 = vld [vmem:[%s6624 + $0x14] sm:$0xf]
        %v6631 = vld [vmem:[%s6624 + $0x18] sm:$0xf]
        %v6632 = vld [vmem:[%s6624 + $0x1c] sm:$0xf]
        %v6633 = vld [vmem:[%s6624 + $0x20] sm:$0xf]
        %v6634 = vld [vmem:[%s6624 + $0x24] sm:$0xf]
        %v6635 = vld [vmem:[%s6624 + $0x28] sm:$0xf]
        %v6636 = vld [vmem:[%s6624 + $0x2c] sm:$0xf]
        %v6637 = vld [vmem:[%s6624 + $0x30] sm:$0xf]
        %v6638 = vld [vmem:[%s6624 + $0x34] sm:$0xf]
        %v6639 = vld [vmem:[%s6624 + $0x38] sm:$0xf]
        %v6640 = vld [vmem:[%s6624 + $0x3c] sm:$0xf]
        %v6682 = vunpack.c.l.b16 %v6583
        %v6683 = vunpack.c.l.b16 %v6584
        %v6684 = vunpack.c.l.b16 %v6585
        %v6685 = vunpack.c.l.b16 %v6586
        %v6686 = vunpack.c.l.b16 %v6587
        %v6687 = vunpack.c.l.b16 %v6588
        %v6688 = vunpack.c.l.b16 %v6589
        %v6689 = vunpack.c.l.b16 %v6590
        %v6690 = vunpack.c.l.b16 %v6591
        %v6691 = vunpack.c.l.b16 %v6592
        %v6692 = vunpack.c.l.b16 %v6593
        %v6693 = vunpack.c.l.b16 %v6594
        %v6694 = vunpack.c.l.b16 %v6595
        %v6695 = vunpack.c.l.b16 %v6596
        %v6696 = vunpack.c.l.b16 %v6597
        %v6697 = vunpack.c.l.b16 %v6598
        %v6698 = vunpack.c.l.b16 %v6599
        %v6699 = vunpack.c.l.b16 %v6600
        %v6700 = vunpack.c.l.b16 %v6601
        %v6701 = vunpack.c.l.b16 %v6602
        %v6702 = vunpack.c.l.b16 %v6603
        %v6703 = vunpack.c.l.b16 %v6604
        %v6704 = vunpack.c.l.b16 %v6605
        %v6705 = vunpack.c.l.b16 %v6606
        %v6706 = vunpack.c.l.b16 %v6607
        %v6707 = vunpack.c.l.b16 %v6608
        %v6708 = vunpack.c.l.b16 %v6609
        %v6709 = vunpack.c.l.b16 %v6610
        %v6710 = vunpack.c.l.b16 %v6611
        %v6711 = vunpack.c.l.b16 %v6612
        %v6712 = vunpack.c.l.b16 %v6613
        %v6713 = vunpack.c.l.b16 %v6614
        %v6714 = vunpack.c.l.b16 %v6615
        %v6715 = vunpack.c.l.b16 %v6616
        %v6716 = vunpack.c.l.b16 %v6617
        %v6717 = vunpack.c.l.b16 %v6618
        %v6718 = vunpack.c.l.b16 %v6619
        %v6719 = vunpack.c.l.b16 %v6620
        %v6720 = vunpack.c.l.b16 %v6621
        %v6721 = vunpack.c.l.b16 %v6622
        %v6722 = vunpack.c.l.b16 %v6623
        %v6723 = vpack.c.b16 %v6683, %v6682
        %v6724 = vpack.c.b16 %v6685, %v6684
        %v6725 = vpack.c.b16 %v6687, %v6686
        %v6726 = vpack.c.b16 %v6689, %v6688
        %v6727 = vpack.c.b16 %v6691, %v6690
        %v6728 = vpack.c.b16 %v6693, %v6692
        %v6729 = vpack.c.b16 %v6695, %v6694
        %v6730 = vpack.c.b16 %v6697, %v6696
        %v6731 = vpack.c.b16 %v6699, %v6698
        %v6732 = vpack.c.b16 %v6701, %v6700
        %v6733 = vpack.c.b16 %v6703, %v6702
        %v6734 = vpack.c.b16 %v6705, %v6704
        %v6735 = vpack.c.b16 %v6707, %v6706
        %v6736 = vpack.c.b16 %v6709, %v6708
        %v6737 = vpack.c.b16 %v6711, %v6710
        %v6738 = vpack.c.b16 %v6713, %v6712
        %v6739 = vpack.c.b16 %v6715, %v6714
        %v6740 = vpack.c.b16 %v6717, %v6716
        %v6741 = vpack.c.b16 %v6719, %v6718
        %v6742 = vpack.c.b16 %v6721, %v6720
        %v6743 = vpack.c.b16 %v6722, %v6722
        %v6744 = vrot.slane %v6723, 2
        %v6745 = vrot.slane %v6724, 2
        %v6746 = vsel %vm1781, %v6744, %v6745
        %v6747 = vrot.slane %v6725, 2
        %v6748 = vsel %vm1781, %v6745, %v6747
        %v6749 = vrot.slane %v6726, 2
        %v6750 = vsel %vm1781, %v6747, %v6749
        %v6751 = vrot.slane %v6727, 2
        %v6752 = vsel %vm1781, %v6749, %v6751
        %v6753 = vrot.slane %v6728, 2
        %v6754 = vsel %vm1781, %v6751, %v6753
        %v6755 = vrot.slane %v6729, 2
        %v6756 = vsel %vm1781, %v6753, %v6755
        %v6757 = vrot.slane %v6730, 2
        %v6758 = vsel %vm1781, %v6755, %v6757
        %v6759 = vrot.slane %v6731, 2
        %v6760 = vsel %vm1781, %v6757, %v6759
        %v6761 = vrot.slane %v6732, 2
        %v6762 = vsel %vm1781, %v6759, %v6761
        %v6763 = vrot.slane %v6733, 2
        %v6764 = vsel %vm1781, %v6761, %v6763
        %v6765 = vrot.slane %v6734, 2
        %v6766 = vsel %vm1781, %v6763, %v6765
        %v6767 = vrot.slane %v6735, 2
        %v6768 = vsel %vm1781, %v6765, %v6767
        %v6769 = vrot.slane %v6736, 2
        %v6770 = vsel %vm1781, %v6767, %v6769
        %v6771 = vrot.slane %v6737, 2
        %v6772 = vsel %vm1781, %v6769, %v6771
        %v6773 = vrot.slane %v6738, 2
        %v6774 = vsel %vm1781, %v6771, %v6773
        %v6775 = vrot.slane %v6739, 2
        %v6776 = vsel %vm1781, %v6773, %v6775
        %v6777 = vrot.slane %v6740, 2
        %v6778 = vsel %vm1781, %v6775, %v6777
        %v6779 = vrot.slane %v6741, 2
        %v6780 = vsel %vm1781, %v6777, %v6779
        %v6781 = vrot.slane %v6742, 2
        %v6782 = vsel %vm1781, %v6779, %v6781
        %v6783 = vrot.slane %v6743, 2
        %v6784 = vsel %vm1781, %v6781, %v6783
        %v6821 = vunpack.c.l.b16 %v6625
        %v6822 = vunpack.c.l.b16 %v6626
        %v6823 = vunpack.c.l.b16 %v6627
        %v6824 = vunpack.c.l.b16 %v6628
        %v6825 = vunpack.c.l.b16 %v6629
        %v6826 = vunpack.c.l.b16 %v6630
        %v6827 = vunpack.c.l.b16 %v6631
        %v6828 = vunpack.c.l.b16 %v6632
        %v6829 = vunpack.c.l.b16 %v6633
        %v6830 = vunpack.c.l.b16 %v6634
        %v6831 = vunpack.c.l.b16 %v6635
        %v6832 = vunpack.c.l.b16 %v6636
        %v6833 = vunpack.c.l.b16 %v6637
        %v6834 = vunpack.c.l.b16 %v6638
        %v6835 = vunpack.c.l.b16 %v6639
        %v6836 = vunpack.c.l.b16 %v6640
        %v6837 = vpack.c.b16 %v6822, %v6821
        %v6838 = vpack.c.b16 %v6824, %v6823
        %v6839 = vpack.c.b16 %v6826, %v6825
        %v6840 = vpack.c.b16 %v6828, %v6827
        %v6841 = vpack.c.b16 %v6830, %v6829
        %v6842 = vpack.c.b16 %v6832, %v6831
        %v6843 = vpack.c.b16 %v6834, %v6833
        %v6844 = vpack.c.b16 %v6836, %v6835
        %6853 = vmatprep.subr.bf16.mxu0 0
        %6854 = vmatpush1.bf16.msra.mxu0 %v6844
        %6855 = vmatprep.subr.bf16.mxu0 0
        %6856 = vmatpush1.bf16.msra.mxu0 %v6843
        %6857 = vmatprep.subr.bf16.mxu0 0
        %6858 = vmatpush1.bf16.msra.mxu0 %v6842
        %6859 = vmatprep.subr.bf16.mxu0 0
        %6860 = vmatpush1.bf16.msra.mxu0 %v6841
        %6861 = vmatprep.subr.bf16.mxu0 0
        %6862 = vmatpush1.bf16.msra.mxu0 %v6840
        %6863 = vmatprep.subr.bf16.mxu0 0
        %6864 = vmatpush1.bf16.msra.mxu0 %v6839
        %6865 = vmatprep.subr.bf16.mxu0 0
        %6866 = vmatpush1.bf16.msra.mxu0 %v6838
        %6867 = vmatprep.subr.bf16.mxu0 0
        %6868 = vmatpush1.bf16.msra.mxu0 %v6837
        %6869 = vmatprep.subr.bf16.mxu0 0
        %6870 = vmatpush2.bf16.msra.mxu0 0
        %6871 = vmatprep.subr.bf16.mxu0 0
        %6872 = vmatpush2.bf16.msra.mxu0 0
        %6873 = vmatprep.subr.bf16.mxu0 0
        %6874 = vmatpush2.bf16.msra.mxu0 0
        %6875 = vmatprep.subr.bf16.mxu0 0
        %6876 = vmatpush2.bf16.msra.mxu0 0
        %6877 = vmatprep.subr.bf16.mxu0 0
        %6878 = vmatpush2.bf16.msra.mxu0 0
        %6879 = vmatprep.subr.bf16.mxu0 0
        %6880 = vmatpush2.bf16.msra.mxu0 0
        %6881 = vmatprep.subr.bf16.mxu0 0
        %6882 = vmatpush2.bf16.msra.mxu0 0
        %6883 = vmatprep.subr.bf16.mxu0 0
        %6884 = vmatpush2.bf16.msra.mxu0 0
        %6885 = vmatprep.mubr.bf16.mxu0 0
        %6886 = vmatmul.mubr.bf16.gmra.mxu0 %v6746
        %v6887 = vpop.f32.mrf.mxu0
        %v6888 = vadd.f32 0.0, %v6887
        %v6889 = vpop.f32.mrf.mxu0
        %v6890 = vpop.f32.mrf.mxu0
        %v6891 = vadd.f32 0.0, %v6890
        %v6892 = vpop.f32.mrf.mxu0
        %6893 = vmatprep.mubr.bf16.mxu0 0
        %6894 = vmatmul.mubr.bf16.gmra.mxu0 %v6748
        %v6895 = vpop.f32.mrf.mxu0
        %v6896 = vadd.f32 0.0, %v6895
        %v6897 = vpop.f32.mrf.mxu0
        %v6898 = vpop.f32.mrf.mxu0
        %v6899 = vadd.f32 0.0, %v6898
        %v6900 = vpop.f32.mrf.mxu0
        %6901 = vmatprep.mubr.bf16.mxu0 0
        %6902 = vmatmul.mubr.bf16.gmra.mxu0 %v6750
        %v6903 = vpop.f32.mrf.mxu0
        %v6904 = vadd.f32 0.0, %v6903
        %v6905 = vpop.f32.mrf.mxu0
        %v6906 = vpop.f32.mrf.mxu0
        %v6907 = vadd.f32 0.0, %v6906
        %v6908 = vpop.f32.mrf.mxu0
        %6909 = vmatprep.mubr.bf16.mxu0 0
        %6910 = vmatmul.mubr.bf16.gmra.mxu0 %v6752
        %v6911 = vpop.f32.mrf.mxu0
        %v6912 = vadd.f32 0.0, %v6911
        %v6913 = vpop.f32.mrf.mxu0
        %v6914 = vpop.f32.mrf.mxu0
        %v6915 = vadd.f32 0.0, %v6914
        %v6916 = vpop.f32.mrf.mxu0
        %6917 = vmatprep.mubr.bf16.mxu0 0
        %6918 = vmatmul.mubr.bf16.gmra.mxu0 %v6754
        %v6919 = vpop.f32.mrf.mxu0
        %v6920 = vadd.f32 0.0, %v6919
        %v6921 = vpop.f32.mrf.mxu0
        %v6922 = vpop.f32.mrf.mxu0
        %v6923 = vadd.f32 0.0, %v6922
        %v6924 = vpop.f32.mrf.mxu0
        %6925 = vmatprep.mubr.bf16.mxu0 0
        %6926 = vmatmul.mubr.bf16.gmra.mxu0 %v6756
        %v6927 = vpop.f32.mrf.mxu0
        %v6928 = vadd.f32 0.0, %v6927
        %v6929 = vpop.f32.mrf.mxu0
        %v6930 = vpop.f32.mrf.mxu0
        %v6931 = vadd.f32 0.0, %v6930
        %v6932 = vpop.f32.mrf.mxu0
        %6933 = vmatprep.mubr.bf16.mxu0 0
        %6934 = vmatmul.mubr.bf16.gmra.mxu0 %v6758
        %v6935 = vpop.f32.mrf.mxu0
        %v6936 = vadd.f32 0.0, %v6935
        %v6937 = vpop.f32.mrf.mxu0
        %v6938 = vpop.f32.mrf.mxu0
        %v6939 = vadd.f32 0.0, %v6938
        %v6940 = vpop.f32.mrf.mxu0
        %6941 = vmatprep.mubr.bf16.mxu0 0
        %6942 = vmatmul.mubr.bf16.gmra.mxu0 %v6760
        %v6943 = vpop.f32.mrf.mxu0
        %v6944 = vadd.f32 0.0, %v6943
        %v6945 = vpop.f32.mrf.mxu0
        %v6946 = vpop.f32.mrf.mxu0
        %v6947 = vadd.f32 0.0, %v6946
        %v6948 = vpop.f32.mrf.mxu0
        %6949 = vmatprep.mubr.bf16.mxu0 0
        %6950 = vmatmul.mubr.bf16.gmra.mxu0 %v6762
        %v6951 = vpop.f32.mrf.mxu0
        %v6952 = vadd.f32 0.0, %v6951
        %v6953 = vpop.f32.mrf.mxu0
        %v6954 = vpop.f32.mrf.mxu0
        %v6955 = vadd.f32 0.0, %v6954
        %v6956 = vpop.f32.mrf.mxu0
        %6957 = vmatprep.mubr.bf16.mxu0 0
        %6958 = vmatmul.mubr.bf16.gmra.mxu0 %v6764
        %v6959 = vpop.f32.mrf.mxu0
        %v6960 = vadd.f32 0.0, %v6959
        %v6961 = vpop.f32.mrf.mxu0
        %v6962 = vpop.f32.mrf.mxu0
        %v6963 = vadd.f32 0.0, %v6962
        %v6964 = vpop.f32.mrf.mxu0
        %6965 = vmatprep.mubr.bf16.mxu0 0
        %6966 = vmatmul.mubr.bf16.gmra.mxu0 %v6766
        %v6967 = vpop.f32.mrf.mxu0
        %v6968 = vadd.f32 0.0, %v6967
        %v6969 = vpop.f32.mrf.mxu0
        %v6970 = vpop.f32.mrf.mxu0
        %v6971 = vadd.f32 0.0, %v6970
        %v6972 = vpop.f32.mrf.mxu0
        %6973 = vmatprep.mubr.bf16.mxu0 0
        %6974 = vmatmul.mubr.bf16.gmra.mxu0 %v6768
        %v6975 = vpop.f32.mrf.mxu0
        %v6976 = vadd.f32 0.0, %v6975
        %v6977 = vpop.f32.mrf.mxu0
        %v6978 = vpop.f32.mrf.mxu0
        %v6979 = vadd.f32 0.0, %v6978
        %v6980 = vpop.f32.mrf.mxu0
        %6981 = vmatprep.mubr.bf16.mxu0 0
        %6982 = vmatmul.mubr.bf16.gmra.mxu0 %v6770
        %v6983 = vpop.f32.mrf.mxu0
        %v6984 = vadd.f32 0.0, %v6983
        %v6985 = vpop.f32.mrf.mxu0
        %v6986 = vpop.f32.mrf.mxu0
        %v6987 = vadd.f32 0.0, %v6986
        %v6988 = vpop.f32.mrf.mxu0
        %6989 = vmatprep.mubr.bf16.mxu0 0
        %6990 = vmatmul.mubr.bf16.gmra.mxu0 %v6772
        %v6991 = vpop.f32.mrf.mxu0
        %v6992 = vadd.f32 0.0, %v6991
        %v6993 = vpop.f32.mrf.mxu0
        %v6994 = vpop.f32.mrf.mxu0
        %v6995 = vadd.f32 0.0, %v6994
        %v6996 = vpop.f32.mrf.mxu0
        %6997 = vmatprep.mubr.bf16.mxu0 0
        %6998 = vmatmul.mubr.bf16.gmra.mxu0 %v6774
        %v6999 = vpop.f32.mrf.mxu0
        %v7000 = vadd.f32 0.0, %v6999
        %v7001 = vpop.f32.mrf.mxu0
        %v7002 = vpop.f32.mrf.mxu0
        %v7003 = vadd.f32 0.0, %v7002
        %v7004 = vpop.f32.mrf.mxu0
        %7005 = vmatprep.mubr.bf16.mxu0 0
        %7006 = vmatmul.mubr.bf16.gmra.mxu0 %v6776
        %v7007 = vpop.f32.mrf.mxu0
        %v7008 = vadd.f32 0.0, %v7007
        %v7009 = vpop.f32.mrf.mxu0
        %v7010 = vpop.f32.mrf.mxu0
        %v7011 = vadd.f32 0.0, %v7010
        %v7012 = vpop.f32.mrf.mxu0
        %7013 = vmatprep.mubr.bf16.mxu0 0
        %7014 = vmatmul.mubr.bf16.gmra.mxu0 %v6778
        %v7015 = vpop.f32.mrf.mxu0
        %v7016 = vadd.f32 0.0, %v7015
        %v7017 = vpop.f32.mrf.mxu0
        %v7018 = vpop.f32.mrf.mxu0
        %v7019 = vadd.f32 0.0, %v7018
        %v7020 = vpop.f32.mrf.mxu0
        %7021 = vmatprep.mubr.bf16.mxu0 0
        %7022 = vmatmul.mubr.bf16.gmra.mxu0 %v6780
        %v7023 = vpop.f32.mrf.mxu0
        %v7024 = vadd.f32 0.0, %v7023
        %v7025 = vpop.f32.mrf.mxu0
        %v7026 = vpop.f32.mrf.mxu0
        %v7027 = vadd.f32 0.0, %v7026
        %v7028 = vpop.f32.mrf.mxu0
        %7029 = vmatprep.mubr.bf16.mxu0 0
        %7030 = vmatmul.mubr.bf16.gmra.mxu0 %v6782
        %v7031 = vpop.f32.mrf.mxu0
        %v7032 = vadd.f32 0.0, %v7031
        %v7033 = vpop.f32.mrf.mxu0
        %v7034 = vpop.f32.mrf.mxu0
        %v7035 = vadd.f32 0.0, %v7034
        %v7036 = vpop.f32.mrf.mxu0
        %7037 = vmatprep.mubr.bf16.mxu0 0
        %7038 = vmatmul.mubr.bf16.gmra.mxu0 %v6784
        %v7039 = vpop.f32.mrf.mxu0
        %v7040 = vadd.f32 0.0, %v7039
        %v7041 = vpop.f32.mrf.mxu0
        %v7042 = vpop.f32.mrf.mxu0
        %v7043 = vadd.f32 0.0, %v7042
        %v7044 = vpop.f32.mrf.mxu0
        %7045 = vdwg.mxu0
        %v7046 = vadd.f32 %v6543, %v6888
        %v7047 = vadd.f32 %v6544, %v6891
        %v7048 = vadd.f32 %v6545, %v6896
        %v7049 = vadd.f32 %v6546, %v6899
        %v7050 = vadd.f32 %v6547, %v6904
        %v7051 = vadd.f32 %v6548, %v6907
        %v7052 = vadd.f32 %v6549, %v6912
        %v7053 = vadd.f32 %v6550, %v6915
        %v7054 = vadd.f32 %v6551, %v6920
        %v7055 = vadd.f32 %v6552, %v6923
        %v7056 = vadd.f32 %v6553, %v6928
        %v7057 = vadd.f32 %v6554, %v6931
        %v7058 = vadd.f32 %v6555, %v6936
        %v7059 = vadd.f32 %v6556, %v6939
        %v7060 = vadd.f32 %v6557, %v6944
        %v7061 = vadd.f32 %v6558, %v6947
        %v7062 = vadd.f32 %v6559, %v6952
        %v7063 = vadd.f32 %v6560, %v6955
        %v7064 = vadd.f32 %v6561, %v6960
        %v7065 = vadd.f32 %v6562, %v6963
        %v7066 = vadd.f32 %v6563, %v6968
        %v7067 = vadd.f32 %v6564, %v6971
        %v7068 = vadd.f32 %v6565, %v6976
        %v7069 = vadd.f32 %v6566, %v6979
        %v7070 = vadd.f32 %v6567, %v6984
        %v7071 = vadd.f32 %v6568, %v6987
        %v7072 = vadd.f32 %v6569, %v6992
        %v7073 = vadd.f32 %v6570, %v6995
        %v7074 = vadd.f32 %v6571, %v7000
        %v7075 = vadd.f32 %v6572, %v7003
        %v7076 = vadd.f32 %v6573, %v7008
        %v7077 = vadd.f32 %v6574, %v7011
        %v7078 = vadd.f32 %v6575, %v7016
        %v7079 = vadd.f32 %v6576, %v7019
        %v7080 = vadd.f32 %v6577, %v7024
        %v7081 = vadd.f32 %v6578, %v7027
        %v7082 = vadd.f32 %v6579, %v7032
        %v7083 = vadd.f32 %v6580, %v7035
        %v7084 = vadd.f32 %v6581, %v7040
        %v7085 = vadd.f32 %v6582, %v7043
        %v7086 = vld [vmem:[#allocation2 + $0xa8] sm:$0x7]
        %s7087 = scalar_lea.vmem %s3, 256
        %v7088 = vld [vmem:[%s7087] sm:$0xf]
        %v7089 = vld [vmem:[%s7087 + $0x4] sm:$0xf]
        %v7090 = vld [vmem:[%s7087 + $0x8] sm:$0xf]
        %v7091 = vld [vmem:[%s7087 + $0xc] sm:$0xf]
        %v7092 = vld [vmem:[%s7087 + $0x10] sm:$0xf]
        %v7093 = vld [vmem:[%s7087 + $0x14] sm:$0xf]
        %v7094 = vld [vmem:[%s7087 + $0x18] sm:$0xf]
        %v7095 = vld [vmem:[%s7087 + $0x1c] sm:$0xf]
        %v7096 = vld [vmem:[%s7087 + $0x20] sm:$0xf]
        %v7097 = vld [vmem:[%s7087 + $0x24] sm:$0xf]
        %v7098 = vld [vmem:[%s7087 + $0x28] sm:$0xf]
        %v7099 = vld [vmem:[%s7087 + $0x2c] sm:$0xf]
        %v7100 = vld [vmem:[%s7087 + $0x30] sm:$0xf]
        %v7101 = vld [vmem:[%s7087 + $0x34] sm:$0xf]
        %v7102 = vld [vmem:[%s7087 + $0x38] sm:$0xf]
        %v7103 = vld [vmem:[%s7087 + $0x3c] sm:$0xf]
        %v7105 = vunpack.c.l.b16 %v7086
        %v7106 = vpack.c.b16 %v7105, %v7105
        %v7108 = vshrl.u32 %v6723, 16
        %v7110 = vrot.slane %v7108, 2
        %v7111 = vshll.u32 %v6723, 16
        %v7113 = vrot.slane %v7111, 3
        %v7114 = vor.u32 %v7110, %v7113
        %v7116 = vshrl.u32 %v6724, 16
        %v7118 = vrot.slane %v7116, 2
        %v7119 = vshll.u32 %v6724, 16
        %v7121 = vrot.slane %v7119, 3
        %v7122 = vor.u32 %v7118, %v7121
        %v7123 = vsel %vm2180, %v7114, %v7122
        %v7125 = vshrl.u32 %v6725, 16
        %v7127 = vrot.slane %v7125, 2
        %v7128 = vshll.u32 %v6725, 16
        %v7130 = vrot.slane %v7128, 3
        %v7131 = vor.u32 %v7127, %v7130
        %v7132 = vsel %vm2180, %v7122, %v7131
        %v7134 = vshrl.u32 %v6726, 16
        %v7136 = vrot.slane %v7134, 2
        %v7137 = vshll.u32 %v6726, 16
        %v7139 = vrot.slane %v7137, 3
        %v7140 = vor.u32 %v7136, %v7139
        %v7141 = vsel %vm2180, %v7131, %v7140
        %v7143 = vshrl.u32 %v6727, 16
        %v7145 = vrot.slane %v7143, 2
        %v7146 = vshll.u32 %v6727, 16
        %v7148 = vrot.slane %v7146, 3
        %v7149 = vor.u32 %v7145, %v7148
        %v7150 = vsel %vm2180, %v7140, %v7149
        %v7152 = vshrl.u32 %v6728, 16
        %v7154 = vrot.slane %v7152, 2
        %v7155 = vshll.u32 %v6728, 16
        %v7157 = vrot.slane %v7155, 3
        %v7158 = vor.u32 %v7154, %v7157
        %v7159 = vsel %vm2180, %v7149, %v7158
        %v7161 = vshrl.u32 %v6729, 16
        %v7163 = vrot.slane %v7161, 2
        %v7164 = vshll.u32 %v6729, 16
        %v7166 = vrot.slane %v7164, 3
        %v7167 = vor.u32 %v7163, %v7166
        %v7168 = vsel %vm2180, %v7158, %v7167
        %v7170 = vshrl.u32 %v6730, 16
        %v7172 = vrot.slane %v7170, 2
        %v7173 = vshll.u32 %v6730, 16
        %v7175 = vrot.slane %v7173, 3
        %v7176 = vor.u32 %v7172, %v7175
        %v7177 = vsel %vm2180, %v7167, %v7176
        %v7179 = vshrl.u32 %v6731, 16
        %v7181 = vrot.slane %v7179, 2
        %v7182 = vshll.u32 %v6731, 16
        %v7184 = vrot.slane %v7182, 3
        %v7185 = vor.u32 %v7181, %v7184
        %v7186 = vsel %vm2180, %v7176, %v7185
        %v7188 = vshrl.u32 %v6732, 16
        %v7190 = vrot.slane %v7188, 2
        %v7191 = vshll.u32 %v6732, 16
        %v7193 = vrot.slane %v7191, 3
        %v7194 = vor.u32 %v7190, %v7193
        %v7195 = vsel %vm2180, %v7185, %v7194
        %v7197 = vshrl.u32 %v6733, 16
        %v7199 = vrot.slane %v7197, 2
        %v7200 = vshll.u32 %v6733, 16
        %v7202 = vrot.slane %v7200, 3
        %v7203 = vor.u32 %v7199, %v7202
        %v7204 = vsel %vm2180, %v7194, %v7203
        %v7206 = vshrl.u32 %v6734, 16
        %v7208 = vrot.slane %v7206, 2
        %v7209 = vshll.u32 %v6734, 16
        %v7211 = vrot.slane %v7209, 3
        %v7212 = vor.u32 %v7208, %v7211
        %v7213 = vsel %vm2180, %v7203, %v7212
        %v7215 = vshrl.u32 %v6735, 16
        %v7217 = vrot.slane %v7215, 2
        %v7218 = vshll.u32 %v6735, 16
        %v7220 = vrot.slane %v7218, 3
        %v7221 = vor.u32 %v7217, %v7220
        %v7222 = vsel %vm2180, %v7212, %v7221
        %v7224 = vshrl.u32 %v6736, 16
        %v7226 = vrot.slane %v7224, 2
        %v7227 = vshll.u32 %v6736, 16
        %v7229 = vrot.slane %v7227, 3
        %v7230 = vor.u32 %v7226, %v7229
        %v7231 = vsel %vm2180, %v7221, %v7230
        %v7233 = vshrl.u32 %v6737, 16
        %v7235 = vrot.slane %v7233, 2
        %v7236 = vshll.u32 %v6737, 16
        %v7238 = vrot.slane %v7236, 3
        %v7239 = vor.u32 %v7235, %v7238
        %v7240 = vsel %vm2180, %v7230, %v7239
        %v7242 = vshrl.u32 %v6738, 16
        %v7244 = vrot.slane %v7242, 2
        %v7245 = vshll.u32 %v6738, 16
        %v7247 = vrot.slane %v7245, 3
        %v7248 = vor.u32 %v7244, %v7247
        %v7249 = vsel %vm2180, %v7239, %v7248
        %v7251 = vshrl.u32 %v6739, 16
        %v7253 = vrot.slane %v7251, 2
        %v7254 = vshll.u32 %v6739, 16
        %v7256 = vrot.slane %v7254, 3
        %v7257 = vor.u32 %v7253, %v7256
        %v7258 = vsel %vm2180, %v7248, %v7257
        %v7260 = vshrl.u32 %v6740, 16
        %v7262 = vrot.slane %v7260, 2
        %v7263 = vshll.u32 %v6740, 16
        %v7265 = vrot.slane %v7263, 3
        %v7266 = vor.u32 %v7262, %v7265
        %v7267 = vsel %vm2180, %v7257, %v7266
        %v7269 = vshrl.u32 %v6741, 16
        %v7271 = vrot.slane %v7269, 2
        %v7272 = vshll.u32 %v6741, 16
        %v7274 = vrot.slane %v7272, 3
        %v7275 = vor.u32 %v7271, %v7274
        %v7276 = vsel %vm2180, %v7266, %v7275
        %v7278 = vshrl.u32 %v6742, 16
        %v7280 = vrot.slane %v7278, 2
        %v7281 = vshll.u32 %v6742, 16
        %v7283 = vrot.slane %v7281, 3
        %v7284 = vor.u32 %v7280, %v7283
        %v7285 = vsel %vm2180, %v7275, %v7284
        %v7287 = vshrl.u32 %v7106, 16
        %v7289 = vrot.slane %v7287, 2
        %v7290 = vshll.u32 %v7106, 16
        %v7292 = vrot.slane %v7290, 3
        %v7293 = vor.u32 %v7289, %v7292
        %v7294 = vsel %vm2180, %v7284, %v7293
        %v7331 = vunpack.c.l.b16 %v7088
        %v7332 = vunpack.c.l.b16 %v7089
        %v7333 = vunpack.c.l.b16 %v7090
        %v7334 = vunpack.c.l.b16 %v7091
        %v7335 = vunpack.c.l.b16 %v7092
        %v7336 = vunpack.c.l.b16 %v7093
        %v7337 = vunpack.c.l.b16 %v7094
        %v7338 = vunpack.c.l.b16 %v7095
        %v7339 = vunpack.c.l.b16 %v7096
        %v7340 = vunpack.c.l.b16 %v7097
        %v7341 = vunpack.c.l.b16 %v7098
        %v7342 = vunpack.c.l.b16 %v7099
        %v7343 = vunpack.c.l.b16 %v7100
        %v7344 = vunpack.c.l.b16 %v7101
        %v7345 = vunpack.c.l.b16 %v7102
        %v7346 = vunpack.c.l.b16 %v7103
        %v7347 = vpack.c.b16 %v7332, %v7331
        %v7348 = vpack.c.b16 %v7334, %v7333
        %v7349 = vpack.c.b16 %v7336, %v7335
        %v7350 = vpack.c.b16 %v7338, %v7337
        %v7351 = vpack.c.b16 %v7340, %v7339
        %v7352 = vpack.c.b16 %v7342, %v7341
        %v7353 = vpack.c.b16 %v7344, %v7343
        %v7354 = vpack.c.b16 %v7346, %v7345
        %7363 = vmatprep.subr.bf16.mxu0 0
        %7364 = vmatpush1.bf16.msra.mxu0 %v7354
        %7365 = vmatprep.subr.bf16.mxu0 0
        %7366 = vmatpush1.bf16.msra.mxu0 %v7353
        %7367 = vmatprep.subr.bf16.mxu0 0
        %7368 = vmatpush1.bf16.msra.mxu0 %v7352
        %7369 = vmatprep.subr.bf16.mxu0 0
        %7370 = vmatpush1.bf16.msra.mxu0 %v7351
        %7371 = vmatprep.subr.bf16.mxu0 0
        %7372 = vmatpush1.bf16.msra.mxu0 %v7350
        %7373 = vmatprep.subr.bf16.mxu0 0
        %7374 = vmatpush1.bf16.msra.mxu0 %v7349
        %7375 = vmatprep.subr.bf16.mxu0 0
        %7376 = vmatpush1.bf16.msra.mxu0 %v7348
        %7377 = vmatprep.subr.bf16.mxu0 0
        %7378 = vmatpush1.bf16.msra.mxu0 %v7347
        %7379 = vmatprep.subr.bf16.mxu0 0
        %7380 = vmatpush2.bf16.msra.mxu0 0
        %7381 = vmatprep.subr.bf16.mxu0 0
        %7382 = vmatpush2.bf16.msra.mxu0 0
        %7383 = vmatprep.subr.bf16.mxu0 0
        %7384 = vmatpush2.bf16.msra.mxu0 0
        %7385 = vmatprep.subr.bf16.mxu0 0
        %7386 = vmatpush2.bf16.msra.mxu0 0
        %7387 = vmatprep.subr.bf16.mxu0 0
        %7388 = vmatpush2.bf16.msra.mxu0 0
        %7389 = vmatprep.subr.bf16.mxu0 0
        %7390 = vmatpush2.bf16.msra.mxu0 0
        %7391 = vmatprep.subr.bf16.mxu0 0
        %7392 = vmatpush2.bf16.msra.mxu0 0
        %7393 = vmatprep.subr.bf16.mxu0 0
        %7394 = vmatpush2.bf16.msra.mxu0 0
        %7395 = vmatprep.mubr.bf16.mxu0 0
        %7396 = vmatmul.mubr.bf16.gmra.mxu0 %v7123
        %v7397 = vpop.f32.mrf.mxu0
        %v7398 = vadd.f32 0.0, %v7397
        %v7399 = vpop.f32.mrf.mxu0
        %v7400 = vpop.f32.mrf.mxu0
        %v7401 = vadd.f32 0.0, %v7400
        %v7402 = vpop.f32.mrf.mxu0
        %7403 = vmatprep.mubr.bf16.mxu0 0
        %7404 = vmatmul.mubr.bf16.gmra.mxu0 %v7132
        %v7405 = vpop.f32.mrf.mxu0
        %v7406 = vadd.f32 0.0, %v7405
        %v7407 = vpop.f32.mrf.mxu0
        %v7408 = vpop.f32.mrf.mxu0
        %v7409 = vadd.f32 0.0, %v7408
        %v7410 = vpop.f32.mrf.mxu0
        %7411 = vmatprep.mubr.bf16.mxu0 0
        %7412 = vmatmul.mubr.bf16.gmra.mxu0 %v7141
        %v7413 = vpop.f32.mrf.mxu0
        %v7414 = vadd.f32 0.0, %v7413
        %v7415 = vpop.f32.mrf.mxu0
        %v7416 = vpop.f32.mrf.mxu0
        %v7417 = vadd.f32 0.0, %v7416
        %v7418 = vpop.f32.mrf.mxu0
        %7419 = vmatprep.mubr.bf16.mxu0 0
        %7420 = vmatmul.mubr.bf16.gmra.mxu0 %v7150
        %v7421 = vpop.f32.mrf.mxu0
        %v7422 = vadd.f32 0.0, %v7421
        %v7423 = vpop.f32.mrf.mxu0
        %v7424 = vpop.f32.mrf.mxu0
        %v7425 = vadd.f32 0.0, %v7424
        %v7426 = vpop.f32.mrf.mxu0
        %7427 = vmatprep.mubr.bf16.mxu0 0
        %7428 = vmatmul.mubr.bf16.gmra.mxu0 %v7159
        %v7429 = vpop.f32.mrf.mxu0
        %v7430 = vadd.f32 0.0, %v7429
        %v7431 = vpop.f32.mrf.mxu0
        %v7432 = vpop.f32.mrf.mxu0
        %v7433 = vadd.f32 0.0, %v7432
        %v7434 = vpop.f32.mrf.mxu0
        %7435 = vmatprep.mubr.bf16.mxu0 0
        %7436 = vmatmul.mubr.bf16.gmra.mxu0 %v7168
        %v7437 = vpop.f32.mrf.mxu0
        %v7438 = vadd.f32 0.0, %v7437
        %v7439 = vpop.f32.mrf.mxu0
        %v7440 = vpop.f32.mrf.mxu0
        %v7441 = vadd.f32 0.0, %v7440
        %v7442 = vpop.f32.mrf.mxu0
        %7443 = vmatprep.mubr.bf16.mxu0 0
        %7444 = vmatmul.mubr.bf16.gmra.mxu0 %v7177
        %v7445 = vpop.f32.mrf.mxu0
        %v7446 = vadd.f32 0.0, %v7445
        %v7447 = vpop.f32.mrf.mxu0
        %v7448 = vpop.f32.mrf.mxu0
        %v7449 = vadd.f32 0.0, %v7448
        %v7450 = vpop.f32.mrf.mxu0
        %7451 = vmatprep.mubr.bf16.mxu0 0
        %7452 = vmatmul.mubr.bf16.gmra.mxu0 %v7186
        %v7453 = vpop.f32.mrf.mxu0
        %v7454 = vadd.f32 0.0, %v7453
        %v7455 = vpop.f32.mrf.mxu0
        %v7456 = vpop.f32.mrf.mxu0
        %v7457 = vadd.f32 0.0, %v7456
        %v7458 = vpop.f32.mrf.mxu0
        %7459 = vmatprep.mubr.bf16.mxu0 0
        %7460 = vmatmul.mubr.bf16.gmra.mxu0 %v7195
        %v7461 = vpop.f32.mrf.mxu0
        %v7462 = vadd.f32 0.0, %v7461
        %v7463 = vpop.f32.mrf.mxu0
        %v7464 = vpop.f32.mrf.mxu0
        %v7465 = vadd.f32 0.0, %v7464
        %v7466 = vpop.f32.mrf.mxu0
        %7467 = vmatprep.mubr.bf16.mxu0 0
        %7468 = vmatmul.mubr.bf16.gmra.mxu0 %v7204
        %v7469 = vpop.f32.mrf.mxu0
        %v7470 = vadd.f32 0.0, %v7469
        %v7471 = vpop.f32.mrf.mxu0
        %v7472 = vpop.f32.mrf.mxu0
        %v7473 = vadd.f32 0.0, %v7472
        %v7474 = vpop.f32.mrf.mxu0
        %7475 = vmatprep.mubr.bf16.mxu0 0
        %7476 = vmatmul.mubr.bf16.gmra.mxu0 %v7213
        %v7477 = vpop.f32.mrf.mxu0
        %v7478 = vadd.f32 0.0, %v7477
        %v7479 = vpop.f32.mrf.mxu0
        %v7480 = vpop.f32.mrf.mxu0
        %v7481 = vadd.f32 0.0, %v7480
        %v7482 = vpop.f32.mrf.mxu0
        %7483 = vmatprep.mubr.bf16.mxu0 0
        %7484 = vmatmul.mubr.bf16.gmra.mxu0 %v7222
        %v7485 = vpop.f32.mrf.mxu0
        %v7486 = vadd.f32 0.0, %v7485
        %v7487 = vpop.f32.mrf.mxu0
        %v7488 = vpop.f32.mrf.mxu0
        %v7489 = vadd.f32 0.0, %v7488
        %v7490 = vpop.f32.mrf.mxu0
        %7491 = vmatprep.mubr.bf16.mxu0 0
        %7492 = vmatmul.mubr.bf16.gmra.mxu0 %v7231
        %v7493 = vpop.f32.mrf.mxu0
        %v7494 = vadd.f32 0.0, %v7493
        %v7495 = vpop.f32.mrf.mxu0
        %v7496 = vpop.f32.mrf.mxu0
        %v7497 = vadd.f32 0.0, %v7496
        %v7498 = vpop.f32.mrf.mxu0
        %7499 = vmatprep.mubr.bf16.mxu0 0
        %7500 = vmatmul.mubr.bf16.gmra.mxu0 %v7240
        %v7501 = vpop.f32.mrf.mxu0
        %v7502 = vadd.f32 0.0, %v7501
        %v7503 = vpop.f32.mrf.mxu0
        %v7504 = vpop.f32.mrf.mxu0
        %v7505 = vadd.f32 0.0, %v7504
        %v7506 = vpop.f32.mrf.mxu0
        %7507 = vmatprep.mubr.bf16.mxu0 0
        %7508 = vmatmul.mubr.bf16.gmra.mxu0 %v7249
        %v7509 = vpop.f32.mrf.mxu0
        %v7510 = vadd.f32 0.0, %v7509
        %v7511 = vpop.f32.mrf.mxu0
        %v7512 = vpop.f32.mrf.mxu0
        %v7513 = vadd.f32 0.0, %v7512
        %v7514 = vpop.f32.mrf.mxu0
        %7515 = vmatprep.mubr.bf16.mxu0 0
        %7516 = vmatmul.mubr.bf16.gmra.mxu0 %v7258
        %v7517 = vpop.f32.mrf.mxu0
        %v7518 = vadd.f32 0.0, %v7517
        %v7519 = vpop.f32.mrf.mxu0
        %v7520 = vpop.f32.mrf.mxu0
        %v7521 = vadd.f32 0.0, %v7520
        %v7522 = vpop.f32.mrf.mxu0
        %7523 = vmatprep.mubr.bf16.mxu0 0
        %7524 = vmatmul.mubr.bf16.gmra.mxu0 %v7267
        %v7525 = vpop.f32.mrf.mxu0
        %v7526 = vadd.f32 0.0, %v7525
        %v7527 = vpop.f32.mrf.mxu0
        %v7528 = vpop.f32.mrf.mxu0
        %v7529 = vadd.f32 0.0, %v7528
        %v7530 = vpop.f32.mrf.mxu0
        %7531 = vmatprep.mubr.bf16.mxu0 0
        %7532 = vmatmul.mubr.bf16.gmra.mxu0 %v7276
        %v7533 = vpop.f32.mrf.mxu0
        %v7534 = vadd.f32 0.0, %v7533
        %v7535 = vpop.f32.mrf.mxu0
        %v7536 = vpop.f32.mrf.mxu0
        %v7537 = vadd.f32 0.0, %v7536
        %v7538 = vpop.f32.mrf.mxu0
        %7539 = vmatprep.mubr.bf16.mxu0 0
        %7540 = vmatmul.mubr.bf16.gmra.mxu0 %v7285
        %v7541 = vpop.f32.mrf.mxu0
        %v7542 = vadd.f32 0.0, %v7541
        %v7543 = vpop.f32.mrf.mxu0
        %v7544 = vpop.f32.mrf.mxu0
        %v7545 = vadd.f32 0.0, %v7544
        %v7546 = vpop.f32.mrf.mxu0
        %7547 = vmatprep.mubr.bf16.mxu0 0
        %7548 = vmatmul.mubr.bf16.gmra.mxu0 %v7294
        %v7549 = vpop.f32.mrf.mxu0
        %v7550 = vadd.f32 0.0, %v7549
        %v7551 = vpop.f32.mrf.mxu0
        %v7552 = vpop.f32.mrf.mxu0
        %v7553 = vadd.f32 0.0, %v7552
        %v7554 = vpop.f32.mrf.mxu0
        %7555 = vdwg.mxu0
        %v7556 = vadd.f32 %v7046, %v7398
        %v7557 = vadd.f32 %v7047, %v7401
        %v7558 = vadd.f32 %v7048, %v7406
        %v7559 = vadd.f32 %v7049, %v7409
        %v7560 = vadd.f32 %v7050, %v7414
        %v7561 = vadd.f32 %v7051, %v7417
        %v7562 = vadd.f32 %v7052, %v7422
        %v7563 = vadd.f32 %v7053, %v7425
        %v7564 = vadd.f32 %v7054, %v7430
        %v7565 = vadd.f32 %v7055, %v7433
        %v7566 = vadd.f32 %v7056, %v7438
        %v7567 = vadd.f32 %v7057, %v7441
        %v7568 = vadd.f32 %v7058, %v7446
        %v7569 = vadd.f32 %v7059, %v7449
        %v7570 = vadd.f32 %v7060, %v7454
        %v7571 = vadd.f32 %v7061, %v7457
        %v7572 = vadd.f32 %v7062, %v7462
        %v7573 = vadd.f32 %v7063, %v7465
        %v7574 = vadd.f32 %v7064, %v7470
        %v7575 = vadd.f32 %v7065, %v7473
        %v7576 = vadd.f32 %v7066, %v7478
        %v7577 = vadd.f32 %v7067, %v7481
        %v7578 = vadd.f32 %v7068, %v7486
        %v7579 = vadd.f32 %v7069, %v7489
        %v7580 = vadd.f32 %v7070, %v7494
        %v7581 = vadd.f32 %v7071, %v7497
        %v7582 = vadd.f32 %v7072, %v7502
        %v7583 = vadd.f32 %v7073, %v7505
        %v7584 = vadd.f32 %v7074, %v7510
        %v7585 = vadd.f32 %v7075, %v7513
        %v7586 = vadd.f32 %v7076, %v7518
        %v7587 = vadd.f32 %v7077, %v7521
        %v7588 = vadd.f32 %v7078, %v7526
        %v7589 = vadd.f32 %v7079, %v7529
        %v7590 = vadd.f32 %v7080, %v7534
        %v7591 = vadd.f32 %v7081, %v7537
        %v7592 = vadd.f32 %v7082, %v7542
        %v7593 = vadd.f32 %v7083, %v7545
        %v7594 = vadd.f32 %v7084, %v7550
        %v7595 = vadd.f32 %v7085, %v7553
        %v7596 = vld [vmem:[#allocation2 + $0x8] sm:$0x8]
        %s7597 = scalar_lea.vmem %s3, 320
        %v7598 = vld [vmem:[%s7597] sm:$0xf]
        %v7599 = vld [vmem:[%s7597 + $0x4] sm:$0xf]
        %v7600 = vld [vmem:[%s7597 + $0x8] sm:$0xf]
        %v7601 = vld [vmem:[%s7597 + $0xc] sm:$0xf]
        %v7602 = vld [vmem:[%s7597 + $0x10] sm:$0xf]
        %v7603 = vld [vmem:[%s7597 + $0x14] sm:$0xf]
        %v7604 = vld [vmem:[%s7597 + $0x18] sm:$0xf]
        %v7605 = vld [vmem:[%s7597 + $0x1c] sm:$0xf]
        %v7606 = vld [vmem:[%s7597 + $0x20] sm:$0xf]
        %v7607 = vld [vmem:[%s7597 + $0x24] sm:$0xf]
        %v7608 = vld [vmem:[%s7597 + $0x28] sm:$0xf]
        %v7609 = vld [vmem:[%s7597 + $0x2c] sm:$0xf]
        %v7610 = vld [vmem:[%s7597 + $0x30] sm:$0xf]
        %v7611 = vld [vmem:[%s7597 + $0x34] sm:$0xf]
        %v7612 = vld [vmem:[%s7597 + $0x38] sm:$0xf]
        %v7613 = vld [vmem:[%s7597 + $0x3c] sm:$0xf]
        %v7615 = vunpack.c.l.b16 %v7596
        %v7616 = vpack.c.b16 %v6683, %v7615
        %v7617 = vrot.slane %v7616, 3
        %v7618 = vrot.slane %v6724, 3
        %v7619 = vsel %vm2740, %v7617, %v7618
        %v7620 = vrot.slane %v6725, 3
        %v7621 = vsel %vm2740, %v7618, %v7620
        %v7622 = vrot.slane %v6726, 3
        %v7623 = vsel %vm2740, %v7620, %v7622
        %v7624 = vrot.slane %v6727, 3
        %v7625 = vsel %vm2740, %v7622, %v7624
        %v7626 = vrot.slane %v6728, 3
        %v7627 = vsel %vm2740, %v7624, %v7626
        %v7628 = vrot.slane %v6729, 3
        %v7629 = vsel %vm2740, %v7626, %v7628
        %v7630 = vrot.slane %v6730, 3
        %v7631 = vsel %vm2740, %v7628, %v7630
        %v7632 = vrot.slane %v6731, 3
        %v7633 = vsel %vm2740, %v7630, %v7632
        %v7634 = vrot.slane %v6732, 3
        %v7635 = vsel %vm2740, %v7632, %v7634
        %v7636 = vrot.slane %v6733, 3
        %v7637 = vsel %vm2740, %v7634, %v7636
        %v7638 = vrot.slane %v6734, 3
        %v7639 = vsel %vm2740, %v7636, %v7638
        %v7640 = vrot.slane %v6735, 3
        %v7641 = vsel %vm2740, %v7638, %v7640
        %v7642 = vrot.slane %v6736, 3
        %v7643 = vsel %vm2740, %v7640, %v7642
        %v7644 = vrot.slane %v6737, 3
        %v7645 = vsel %vm2740, %v7642, %v7644
        %v7646 = vrot.slane %v6738, 3
        %v7647 = vsel %vm2740, %v7644, %v7646
        %v7648 = vrot.slane %v6739, 3
        %v7649 = vsel %vm2740, %v7646, %v7648
        %v7650 = vrot.slane %v6740, 3
        %v7651 = vsel %vm2740, %v7648, %v7650
        %v7652 = vrot.slane %v6741, 3
        %v7653 = vsel %vm2740, %v7650, %v7652
        %v7654 = vrot.slane %v6742, 3
        %v7655 = vsel %vm2740, %v7652, %v7654
        %v7656 = vrot.slane %v7106, 3
        %v7657 = vsel %vm2740, %v7654, %v7656
        %v7694 = vunpack.c.l.b16 %v7598
        %v7695 = vunpack.c.l.b16 %v7599
        %v7696 = vunpack.c.l.b16 %v7600
        %v7697 = vunpack.c.l.b16 %v7601
        %v7698 = vunpack.c.l.b16 %v7602
        %v7699 = vunpack.c.l.b16 %v7603
        %v7700 = vunpack.c.l.b16 %v7604
        %v7701 = vunpack.c.l.b16 %v7605
        %v7702 = vunpack.c.l.b16 %v7606
        %v7703 = vunpack.c.l.b16 %v7607
        %v7704 = vunpack.c.l.b16 %v7608
        %v7705 = vunpack.c.l.b16 %v7609
        %v7706 = vunpack.c.l.b16 %v7610
        %v7707 = vunpack.c.l.b16 %v7611
        %v7708 = vunpack.c.l.b16 %v7612
        %v7709 = vunpack.c.l.b16 %v7613
        %v7710 = vpack.c.b16 %v7695, %v7694
        %v7711 = vpack.c.b16 %v7697, %v7696
        %v7712 = vpack.c.b16 %v7699, %v7698
        %v7713 = vpack.c.b16 %v7701, %v7700
        %v7714 = vpack.c.b16 %v7703, %v7702
        %v7715 = vpack.c.b16 %v7705, %v7704
        %v7716 = vpack.c.b16 %v7707, %v7706
        %v7717 = vpack.c.b16 %v7709, %v7708
        %7726 = vmatprep.subr.bf16.mxu0 0
        %7727 = vmatpush1.bf16.msra.mxu0 %v7717
        %7728 = vmatprep.subr.bf16.mxu0 0
        %7729 = vmatpush1.bf16.msra.mxu0 %v7716
        %7730 = vmatprep.subr.bf16.mxu0 0
        %7731 = vmatpush1.bf16.msra.mxu0 %v7715
        %7732 = vmatprep.subr.bf16.mxu0 0
        %7733 = vmatpush1.bf16.msra.mxu0 %v7714
        %7734 = vmatprep.subr.bf16.mxu0 0
        %7735 = vmatpush1.bf16.msra.mxu0 %v7713
        %7736 = vmatprep.subr.bf16.mxu0 0
        %7737 = vmatpush1.bf16.msra.mxu0 %v7712
        %7738 = vmatprep.subr.bf16.mxu0 0
        %7739 = vmatpush1.bf16.msra.mxu0 %v7711
        %7740 = vmatprep.subr.bf16.mxu0 0
        %7741 = vmatpush1.bf16.msra.mxu0 %v7710
        %7742 = vmatprep.subr.bf16.mxu0 0
        %7743 = vmatpush2.bf16.msra.mxu0 0
        %7744 = vmatprep.subr.bf16.mxu0 0
        %7745 = vmatpush2.bf16.msra.mxu0 0
        %7746 = vmatprep.subr.bf16.mxu0 0
        %7747 = vmatpush2.bf16.msra.mxu0 0
        %7748 = vmatprep.subr.bf16.mxu0 0
        %7749 = vmatpush2.bf16.msra.mxu0 0
        %7750 = vmatprep.subr.bf16.mxu0 0
        %7751 = vmatpush2.bf16.msra.mxu0 0
        %7752 = vmatprep.subr.bf16.mxu0 0
        %7753 = vmatpush2.bf16.msra.mxu0 0
        %7754 = vmatprep.subr.bf16.mxu0 0
        %7755 = vmatpush2.bf16.msra.mxu0 0
        %7756 = vmatprep.subr.bf16.mxu0 0
        %7757 = vmatpush2.bf16.msra.mxu0 0
        %7758 = vmatprep.mubr.bf16.mxu0 0
        %7759 = vmatmul.mubr.bf16.gmra.mxu0 %v7619
        %v7760 = vpop.f32.mrf.mxu0
        %v7761 = vadd.f32 0.0, %v7760
        %v7762 = vpop.f32.mrf.mxu0
        %v7763 = vpop.f32.mrf.mxu0
        %v7764 = vadd.f32 0.0, %v7763
        %v7765 = vpop.f32.mrf.mxu0
        %7766 = vmatprep.mubr.bf16.mxu0 0
        %7767 = vmatmul.mubr.bf16.gmra.mxu0 %v7621
        %v7768 = vpop.f32.mrf.mxu0
        %v7769 = vadd.f32 0.0, %v7768
        %v7770 = vpop.f32.mrf.mxu0
        %v7771 = vpop.f32.mrf.mxu0
        %v7772 = vadd.f32 0.0, %v7771
        %v7773 = vpop.f32.mrf.mxu0
        %7774 = vmatprep.mubr.bf16.mxu0 0
        %7775 = vmatmul.mubr.bf16.gmra.mxu0 %v7623
        %v7776 = vpop.f32.mrf.mxu0
        %v7777 = vadd.f32 0.0, %v7776
        %v7778 = vpop.f32.mrf.mxu0
        %v7779 = vpop.f32.mrf.mxu0
        %v7780 = vadd.f32 0.0, %v7779
        %v7781 = vpop.f32.mrf.mxu0
        %7782 = vmatprep.mubr.bf16.mxu0 0
        %7783 = vmatmul.mubr.bf16.gmra.mxu0 %v7625
        %v7784 = vpop.f32.mrf.mxu0
        %v7785 = vadd.f32 0.0, %v7784
        %v7786 = vpop.f32.mrf.mxu0
        %v7787 = vpop.f32.mrf.mxu0
        %v7788 = vadd.f32 0.0, %v7787
        %v7789 = vpop.f32.mrf.mxu0
        %7790 = vmatprep.mubr.bf16.mxu0 0
        %7791 = vmatmul.mubr.bf16.gmra.mxu0 %v7627
        %v7792 = vpop.f32.mrf.mxu0
        %v7793 = vadd.f32 0.0, %v7792
        %v7794 = vpop.f32.mrf.mxu0
        %v7795 = vpop.f32.mrf.mxu0
        %v7796 = vadd.f32 0.0, %v7795
        %v7797 = vpop.f32.mrf.mxu0
        %7798 = vmatprep.mubr.bf16.mxu0 0
        %7799 = vmatmul.mubr.bf16.gmra.mxu0 %v7629
        %v7800 = vpop.f32.mrf.mxu0
        %v7801 = vadd.f32 0.0, %v7800
        %v7802 = vpop.f32.mrf.mxu0
        %v7803 = vpop.f32.mrf.mxu0
        %v7804 = vadd.f32 0.0, %v7803
        %v7805 = vpop.f32.mrf.mxu0
        %7806 = vmatprep.mubr.bf16.mxu0 0
        %7807 = vmatmul.mubr.bf16.gmra.mxu0 %v7631
        %v7808 = vpop.f32.mrf.mxu0
        %v7809 = vadd.f32 0.0, %v7808
        %v7810 = vpop.f32.mrf.mxu0
        %v7811 = vpop.f32.mrf.mxu0
        %v7812 = vadd.f32 0.0, %v7811
        %v7813 = vpop.f32.mrf.mxu0
        %7814 = vmatprep.mubr.bf16.mxu0 0
        %7815 = vmatmul.mubr.bf16.gmra.mxu0 %v7633
        %v7816 = vpop.f32.mrf.mxu0
        %v7817 = vadd.f32 0.0, %v7816
        %v7818 = vpop.f32.mrf.mxu0
        %v7819 = vpop.f32.mrf.mxu0
        %v7820 = vadd.f32 0.0, %v7819
        %v7821 = vpop.f32.mrf.mxu0
        %7822 = vmatprep.mubr.bf16.mxu0 0
        %7823 = vmatmul.mubr.bf16.gmra.mxu0 %v7635
        %v7824 = vpop.f32.mrf.mxu0
        %v7825 = vadd.f32 0.0, %v7824
        %v7826 = vpop.f32.mrf.mxu0
        %v7827 = vpop.f32.mrf.mxu0
        %v7828 = vadd.f32 0.0, %v7827
        %v7829 = vpop.f32.mrf.mxu0
        %7830 = vmatprep.mubr.bf16.mxu0 0
        %7831 = vmatmul.mubr.bf16.gmra.mxu0 %v7637
        %v7832 = vpop.f32.mrf.mxu0
        %v7833 = vadd.f32 0.0, %v7832
        %v7834 = vpop.f32.mrf.mxu0
        %v7835 = vpop.f32.mrf.mxu0
        %v7836 = vadd.f32 0.0, %v7835
        %v7837 = vpop.f32.mrf.mxu0
        %7838 = vmatprep.mubr.bf16.mxu0 0
        %7839 = vmatmul.mubr.bf16.gmra.mxu0 %v7639
        %v7840 = vpop.f32.mrf.mxu0
        %v7841 = vadd.f32 0.0, %v7840
        %v7842 = vpop.f32.mrf.mxu0
        %v7843 = vpop.f32.mrf.mxu0
        %v7844 = vadd.f32 0.0, %v7843
        %v7845 = vpop.f32.mrf.mxu0
        %7846 = vmatprep.mubr.bf16.mxu0 0
        %7847 = vmatmul.mubr.bf16.gmra.mxu0 %v7641
        %v7848 = vpop.f32.mrf.mxu0
        %v7849 = vadd.f32 0.0, %v7848
        %v7850 = vpop.f32.mrf.mxu0
        %v7851 = vpop.f32.mrf.mxu0
        %v7852 = vadd.f32 0.0, %v7851
        %v7853 = vpop.f32.mrf.mxu0
        %7854 = vmatprep.mubr.bf16.mxu0 0
        %7855 = vmatmul.mubr.bf16.gmra.mxu0 %v7643
        %v7856 = vpop.f32.mrf.mxu0
        %v7857 = vadd.f32 0.0, %v7856
        %v7858 = vpop.f32.mrf.mxu0
        %v7859 = vpop.f32.mrf.mxu0
        %v7860 = vadd.f32 0.0, %v7859
        %v7861 = vpop.f32.mrf.mxu0
        %7862 = vmatprep.mubr.bf16.mxu0 0
        %7863 = vmatmul.mubr.bf16.gmra.mxu0 %v7645
        %v7864 = vpop.f32.mrf.mxu0
        %v7865 = vadd.f32 0.0, %v7864
        %v7866 = vpop.f32.mrf.mxu0
        %v7867 = vpop.f32.mrf.mxu0
        %v7868 = vadd.f32 0.0, %v7867
        %v7869 = vpop.f32.mrf.mxu0
        %7870 = vmatprep.mubr.bf16.mxu0 0
        %7871 = vmatmul.mubr.bf16.gmra.mxu0 %v7647
        %v7872 = vpop.f32.mrf.mxu0
        %v7873 = vadd.f32 0.0, %v7872
        %v7874 = vpop.f32.mrf.mxu0
        %v7875 = vpop.f32.mrf.mxu0
        %v7876 = vadd.f32 0.0, %v7875
        %v7877 = vpop.f32.mrf.mxu0
        %7878 = vmatprep.mubr.bf16.mxu0 0
        %7879 = vmatmul.mubr.bf16.gmra.mxu0 %v7649
        %v7880 = vpop.f32.mrf.mxu0
        %v7881 = vadd.f32 0.0, %v7880
        %v7882 = vpop.f32.mrf.mxu0
        %v7883 = vpop.f32.mrf.mxu0
        %v7884 = vadd.f32 0.0, %v7883
        %v7885 = vpop.f32.mrf.mxu0
        %7886 = vmatprep.mubr.bf16.mxu0 0
        %7887 = vmatmul.mubr.bf16.gmra.mxu0 %v7651
        %v7888 = vpop.f32.mrf.mxu0
        %v7889 = vadd.f32 0.0, %v7888
        %v7890 = vpop.f32.mrf.mxu0
        %v7891 = vpop.f32.mrf.mxu0
        %v7892 = vadd.f32 0.0, %v7891
        %v7893 = vpop.f32.mrf.mxu0
        %7894 = vmatprep.mubr.bf16.mxu0 0
        %7895 = vmatmul.mubr.bf16.gmra.mxu0 %v7653
        %v7896 = vpop.f32.mrf.mxu0
        %v7897 = vadd.f32 0.0, %v7896
        %v7898 = vpop.f32.mrf.mxu0
        %v7899 = vpop.f32.mrf.mxu0
        %v7900 = vadd.f32 0.0, %v7899
        %v7901 = vpop.f32.mrf.mxu0
        %7902 = vmatprep.mubr.bf16.mxu0 0
        %7903 = vmatmul.mubr.bf16.gmra.mxu0 %v7655
        %v7904 = vpop.f32.mrf.mxu0
        %v7905 = vadd.f32 0.0, %v7904
        %v7906 = vpop.f32.mrf.mxu0
        %v7907 = vpop.f32.mrf.mxu0
        %v7908 = vadd.f32 0.0, %v7907
        %v7909 = vpop.f32.mrf.mxu0
        %7910 = vmatprep.mubr.bf16.mxu0 0
        %7911 = vmatmul.mubr.bf16.gmra.mxu0 %v7657
        %v7912 = vpop.f32.mrf.mxu0
        %v7913 = vadd.f32 0.0, %v7912
        %v7914 = vpop.f32.mrf.mxu0
        %v7915 = vpop.f32.mrf.mxu0
        %v7916 = vadd.f32 0.0, %v7915
        %v7917 = vpop.f32.mrf.mxu0
        %7918 = vdwg.mxu0
        %v7919 = vadd.f32 %v7556, %v7761
        %v7920 = vadd.f32 %v7557, %v7764
        %v7921 = vadd.f32 %v7558, %v7769
        %v7922 = vadd.f32 %v7559, %v7772
        %v7923 = vadd.f32 %v7560, %v7777
        %v7924 = vadd.f32 %v7561, %v7780
        %v7925 = vadd.f32 %v7562, %v7785
        %v7926 = vadd.f32 %v7563, %v7788
        %v7927 = vadd.f32 %v7564, %v7793
        %v7928 = vadd.f32 %v7565, %v7796
        %v7929 = vadd.f32 %v7566, %v7801
        %v7930 = vadd.f32 %v7567, %v7804
        %v7931 = vadd.f32 %v7568, %v7809
        %v7932 = vadd.f32 %v7569, %v7812
        %v7933 = vadd.f32 %v7570, %v7817
        %v7934 = vadd.f32 %v7571, %v7820
        %v7935 = vadd.f32 %v7572, %v7825
        %v7936 = vadd.f32 %v7573, %v7828
        %v7937 = vadd.f32 %v7574, %v7833
        %v7938 = vadd.f32 %v7575, %v7836
        %v7939 = vadd.f32 %v7576, %v7841
        %v7940 = vadd.f32 %v7577, %v7844
        %v7941 = vadd.f32 %v7578, %v7849
        %v7942 = vadd.f32 %v7579, %v7852
        %v7943 = vadd.f32 %v7580, %v7857
        %v7944 = vadd.f32 %v7581, %v7860
        %v7945 = vadd.f32 %v7582, %v7865
        %v7946 = vadd.f32 %v7583, %v7868
        %v7947 = vadd.f32 %v7584, %v7873
        %v7948 = vadd.f32 %v7585, %v7876
        %v7949 = vadd.f32 %v7586, %v7881
        %v7950 = vadd.f32 %v7587, %v7884
        %v7951 = vadd.f32 %v7588, %v7889
        %v7952 = vadd.f32 %v7589, %v7892
        %v7953 = vadd.f32 %v7590, %v7897
        %v7954 = vadd.f32 %v7591, %v7900
        %v7955 = vadd.f32 %v7592, %v7905
        %v7956 = vadd.f32 %v7593, %v7908
        %v7957 = vadd.f32 %v7594, %v7913
        %v7958 = vadd.f32 %v7595, %v7916
        %v7959 = vld [vmem:[#allocation2 + $0x14] sm:$0xf]
        %v7960 = vld [vmem:[#allocation2 + $0x18] sm:$0xf]
        %v7961 = vld [vmem:[#allocation2 + $0x1c] sm:$0xf]
        %v7962 = vld [vmem:[#allocation2 + $0x20] sm:$0xf]
        %v7963 = vld [vmem:[#allocation2 + $0x24] sm:$0xf]
        %v7964 = vld [vmem:[#allocation2 + $0x28] sm:$0xf]
        %v7965 = vld [vmem:[#allocation2 + $0x2c] sm:$0xf]
        %v7966 = vld [vmem:[#allocation2 + $0x30] sm:$0xf]
        %v7967 = vld [vmem:[#allocation2 + $0x34] sm:$0xf]
        %v7968 = vld [vmem:[#allocation2 + $0x38] sm:$0xf]
        %v7969 = vld [vmem:[#allocation2 + $0x3c] sm:$0xf]
        %v7970 = vld [vmem:[#allocation2 + $0x40] sm:$0xf]
        %v7971 = vld [vmem:[#allocation2 + $0x44] sm:$0xf]
        %v7972 = vld [vmem:[#allocation2 + $0x48] sm:$0xf]
        %v7973 = vld [vmem:[#allocation2 + $0x4c] sm:$0xf]
        %v7974 = vld [vmem:[#allocation2 + $0x50] sm:$0xf]
        %v7975 = vld [vmem:[#allocation2 + $0x54] sm:$0xf]
        %v7976 = vld [vmem:[#allocation2 + $0x58] sm:$0xf]
        %v7977 = vld [vmem:[#allocation2 + $0x5c] sm:$0xf]
        %v7978 = vld [vmem:[#allocation2 + $0x60] sm:$0xf]
        %v7979 = vld [vmem:[#allocation2 + $0x64] sm:$0xf]
        %v7980 = vld [vmem:[#allocation2 + $0x68] sm:$0xf]
        %v7981 = vld [vmem:[#allocation2 + $0x6c] sm:$0xf]
        %v7982 = vld [vmem:[#allocation2 + $0x70] sm:$0xf]
        %v7983 = vld [vmem:[#allocation2 + $0x74] sm:$0xf]
        %v7984 = vld [vmem:[#allocation2 + $0x78] sm:$0xf]
        %v7985 = vld [vmem:[#allocation2 + $0x7c] sm:$0xf]
        %v7986 = vld [vmem:[#allocation2 + $0x80] sm:$0xf]
        %v7987 = vld [vmem:[#allocation2 + $0x84] sm:$0xf]
        %v7988 = vld [vmem:[#allocation2 + $0x88] sm:$0xf]
        %v7989 = vld [vmem:[#allocation2 + $0x8c] sm:$0xf]
        %v7990 = vld [vmem:[#allocation2 + $0x90] sm:$0xf]
        %v7991 = vld [vmem:[#allocation2 + $0x94] sm:$0xf]
        %v7992 = vld [vmem:[#allocation2 + $0x98] sm:$0xf]
        %v7993 = vld [vmem:[#allocation2 + $0x9c] sm:$0xf]
        %v7994 = vld [vmem:[#allocation2 + $0xa0] sm:$0xf]
        %v7995 = vld [vmem:[#allocation2 + $0xa4] sm:$0xf]
        %v7996 = vld [vmem:[#allocation2 + $0xa8] sm:$0xf]
        %v7997 = vld [vmem:[#allocation2 + $0xac] sm:$0xf]
        %v7998 = vld [vmem:[#allocation2 + $0xb0] sm:$0xf]
        %s7999 = scalar_lea.vmem %s3, 384
        %v8000 = vld [vmem:[%s7999] sm:$0xf]
        %v8001 = vld [vmem:[%s7999 + $0x4] sm:$0xf]
        %v8002 = vld [vmem:[%s7999 + $0x8] sm:$0xf]
        %v8003 = vld [vmem:[%s7999 + $0xc] sm:$0xf]
        %v8004 = vld [vmem:[%s7999 + $0x10] sm:$0xf]
        %v8005 = vld [vmem:[%s7999 + $0x14] sm:$0xf]
        %v8006 = vld [vmem:[%s7999 + $0x18] sm:$0xf]
        %v8007 = vld [vmem:[%s7999 + $0x1c] sm:$0xf]
        %v8008 = vld [vmem:[%s7999 + $0x20] sm:$0xf]
        %v8009 = vld [vmem:[%s7999 + $0x24] sm:$0xf]
        %v8010 = vld [vmem:[%s7999 + $0x28] sm:$0xf]
        %v8011 = vld [vmem:[%s7999 + $0x2c] sm:$0xf]
        %v8012 = vld [vmem:[%s7999 + $0x30] sm:$0xf]
        %v8013 = vld [vmem:[%s7999 + $0x34] sm:$0xf]
        %v8014 = vld [vmem:[%s7999 + $0x38] sm:$0xf]
        %v8015 = vld [vmem:[%s7999 + $0x3c] sm:$0xf]
        %v8056 = vunpack.c.l.b16 %v7959
        %v8057 = vunpack.c.l.b16 %v7960
        %v8058 = vunpack.c.l.b16 %v7961
        %v8059 = vunpack.c.l.b16 %v7962
        %v8060 = vunpack.c.l.b16 %v7963
        %v8061 = vunpack.c.l.b16 %v7964
        %v8062 = vunpack.c.l.b16 %v7965
        %v8063 = vunpack.c.l.b16 %v7966
        %v8064 = vunpack.c.l.b16 %v7967
        %v8065 = vunpack.c.l.b16 %v7968
        %v8066 = vunpack.c.l.b16 %v7969
        %v8067 = vunpack.c.l.b16 %v7970
        %v8068 = vunpack.c.l.b16 %v7971
        %v8069 = vunpack.c.l.b16 %v7972
        %v8070 = vunpack.c.l.b16 %v7973
        %v8071 = vunpack.c.l.b16 %v7974
        %v8072 = vunpack.c.l.b16 %v7975
        %v8073 = vunpack.c.l.b16 %v7976
        %v8074 = vunpack.c.l.b16 %v7977
        %v8075 = vunpack.c.l.b16 %v7978
        %v8076 = vunpack.c.l.b16 %v7979
        %v8077 = vunpack.c.l.b16 %v7980
        %v8078 = vunpack.c.l.b16 %v7981
        %v8079 = vunpack.c.l.b16 %v7982
        %v8080 = vunpack.c.l.b16 %v7983
        %v8081 = vunpack.c.l.b16 %v7984
        %v8082 = vunpack.c.l.b16 %v7985
        %v8083 = vunpack.c.l.b16 %v7986
        %v8084 = vunpack.c.l.b16 %v7987
        %v8085 = vunpack.c.l.b16 %v7988
        %v8086 = vunpack.c.l.b16 %v7989
        %v8087 = vunpack.c.l.b16 %v7990
        %v8088 = vunpack.c.l.b16 %v7991
        %v8089 = vunpack.c.l.b16 %v7992
        %v8090 = vunpack.c.l.b16 %v7993
        %v8091 = vunpack.c.l.b16 %v7994
        %v8092 = vunpack.c.l.b16 %v7995
        %v8093 = vunpack.c.l.b16 %v7996
        %v8094 = vunpack.c.l.b16 %v7997
        %v8095 = vunpack.c.l.b16 %v7998
        %v8096 = vpack.c.b16 %v8057, %v8056
        %v8097 = vpack.c.b16 %v8059, %v8058
        %v8098 = vpack.c.b16 %v8061, %v8060
        %v8099 = vpack.c.b16 %v8063, %v8062
        %v8100 = vpack.c.b16 %v8065, %v8064
        %v8101 = vpack.c.b16 %v8067, %v8066
        %v8102 = vpack.c.b16 %v8069, %v8068
        %v8103 = vpack.c.b16 %v8071, %v8070
        %v8104 = vpack.c.b16 %v8073, %v8072
        %v8105 = vpack.c.b16 %v8075, %v8074
        %v8106 = vpack.c.b16 %v8077, %v8076
        %v8107 = vpack.c.b16 %v8079, %v8078
        %v8108 = vpack.c.b16 %v8081, %v8080
        %v8109 = vpack.c.b16 %v8083, %v8082
        %v8110 = vpack.c.b16 %v8085, %v8084
        %v8111 = vpack.c.b16 %v8087, %v8086
        %v8112 = vpack.c.b16 %v8089, %v8088
        %v8113 = vpack.c.b16 %v8091, %v8090
        %v8114 = vpack.c.b16 %v8093, %v8092
        %v8115 = vpack.c.b16 %v8095, %v8094
        %v8152 = vunpack.c.l.b16 %v8000
        %v8153 = vunpack.c.l.b16 %v8001
        %v8154 = vunpack.c.l.b16 %v8002
        %v8155 = vunpack.c.l.b16 %v8003
        %v8156 = vunpack.c.l.b16 %v8004
        %v8157 = vunpack.c.l.b16 %v8005
        %v8158 = vunpack.c.l.b16 %v8006
        %v8159 = vunpack.c.l.b16 %v8007
        %v8160 = vunpack.c.l.b16 %v8008
        %v8161 = vunpack.c.l.b16 %v8009
        %v8162 = vunpack.c.l.b16 %v8010
        %v8163 = vunpack.c.l.b16 %v8011
        %v8164 = vunpack.c.l.b16 %v8012
        %v8165 = vunpack.c.l.b16 %v8013
        %v8166 = vunpack.c.l.b16 %v8014
        %v8167 = vunpack.c.l.b16 %v8015
        %v8168 = vpack.c.b16 %v8153, %v8152
        %v8169 = vpack.c.b16 %v8155, %v8154
        %v8170 = vpack.c.b16 %v8157, %v8156
        %v8171 = vpack.c.b16 %v8159, %v8158
        %v8172 = vpack.c.b16 %v8161, %v8160
        %v8173 = vpack.c.b16 %v8163, %v8162
        %v8174 = vpack.c.b16 %v8165, %v8164
        %v8175 = vpack.c.b16 %v8167, %v8166
        %8184 = vmatprep.subr.bf16.mxu0 0
        %8185 = vmatpush1.bf16.msra.mxu0 %v8175
        %8186 = vmatprep.subr.bf16.mxu0 0
        %8187 = vmatpush1.bf16.msra.mxu0 %v8174
        %8188 = vmatprep.subr.bf16.mxu0 0
        %8189 = vmatpush1.bf16.msra.mxu0 %v8173
        %8190 = vmatprep.subr.bf16.mxu0 0
        %8191 = vmatpush1.bf16.msra.mxu0 %v8172
        %8192 = vmatprep.subr.bf16.mxu0 0
        %8193 = vmatpush1.bf16.msra.mxu0 %v8171
        %8194 = vmatprep.subr.bf16.mxu0 0
        %8195 = vmatpush1.bf16.msra.mxu0 %v8170
        %8196 = vmatprep.subr.bf16.mxu0 0
        %8197 = vmatpush1.bf16.msra.mxu0 %v8169
        %8198 = vmatprep.subr.bf16.mxu0 0
        %8199 = vmatpush1.bf16.msra.mxu0 %v8168
        %8200 = vmatprep.subr.bf16.mxu0 0
        %8201 = vmatpush2.bf16.msra.mxu0 0
        %8202 = vmatprep.subr.bf16.mxu0 0
        %8203 = vmatpush2.bf16.msra.mxu0 0
        %8204 = vmatprep.subr.bf16.mxu0 0
        %8205 = vmatpush2.bf16.msra.mxu0 0
        %8206 = vmatprep.subr.bf16.mxu0 0
        %8207 = vmatpush2.bf16.msra.mxu0 0
        %8208 = vmatprep.subr.bf16.mxu0 0
        %8209 = vmatpush2.bf16.msra.mxu0 0
        %8210 = vmatprep.subr.bf16.mxu0 0
        %8211 = vmatpush2.bf16.msra.mxu0 0
        %8212 = vmatprep.subr.bf16.mxu0 0
        %8213 = vmatpush2.bf16.msra.mxu0 0
        %8214 = vmatprep.subr.bf16.mxu0 0
        %8215 = vmatpush2.bf16.msra.mxu0 0
        %8216 = vmatprep.mubr.bf16.mxu0 0
        %8217 = vmatmul.mubr.bf16.gmra.mxu0 %v8096
        %v8218 = vpop.f32.mrf.mxu0
        %v8219 = vadd.f32 0.0, %v8218
        %v8220 = vpop.f32.mrf.mxu0
        %v8221 = vpop.f32.mrf.mxu0
        %v8222 = vadd.f32 0.0, %v8221
        %v8223 = vpop.f32.mrf.mxu0
        %8224 = vmatprep.mubr.bf16.mxu0 0
        %8225 = vmatmul.mubr.bf16.gmra.mxu0 %v8097
        %v8226 = vpop.f32.mrf.mxu0
        %v8227 = vadd.f32 0.0, %v8226
        %v8228 = vpop.f32.mrf.mxu0
        %v8229 = vpop.f32.mrf.mxu0
        %v8230 = vadd.f32 0.0, %v8229
        %v8231 = vpop.f32.mrf.mxu0
        %8232 = vmatprep.mubr.bf16.mxu0 0
        %8233 = vmatmul.mubr.bf16.gmra.mxu0 %v8098
        %v8234 = vpop.f32.mrf.mxu0
        %v8235 = vadd.f32 0.0, %v8234
        %v8236 = vpop.f32.mrf.mxu0
        %v8237 = vpop.f32.mrf.mxu0
        %v8238 = vadd.f32 0.0, %v8237
        %v8239 = vpop.f32.mrf.mxu0
        %8240 = vmatprep.mubr.bf16.mxu0 0
        %8241 = vmatmul.mubr.bf16.gmra.mxu0 %v8099
        %v8242 = vpop.f32.mrf.mxu0
        %v8243 = vadd.f32 0.0, %v8242
        %v8244 = vpop.f32.mrf.mxu0
        %v8245 = vpop.f32.mrf.mxu0
        %v8246 = vadd.f32 0.0, %v8245
        %v8247 = vpop.f32.mrf.mxu0
        %8248 = vmatprep.mubr.bf16.mxu0 0
        %8249 = vmatmul.mubr.bf16.gmra.mxu0 %v8100
        %v8250 = vpop.f32.mrf.mxu0
        %v8251 = vadd.f32 0.0, %v8250
        %v8252 = vpop.f32.mrf.mxu0
        %v8253 = vpop.f32.mrf.mxu0
        %v8254 = vadd.f32 0.0, %v8253
        %v8255 = vpop.f32.mrf.mxu0
        %8256 = vmatprep.mubr.bf16.mxu0 0
        %8257 = vmatmul.mubr.bf16.gmra.mxu0 %v8101
        %v8258 = vpop.f32.mrf.mxu0
        %v8259 = vadd.f32 0.0, %v8258
        %v8260 = vpop.f32.mrf.mxu0
        %v8261 = vpop.f32.mrf.mxu0
        %v8262 = vadd.f32 0.0, %v8261
        %v8263 = vpop.f32.mrf.mxu0
        %8264 = vmatprep.mubr.bf16.mxu0 0
        %8265 = vmatmul.mubr.bf16.gmra.mxu0 %v8102
        %v8266 = vpop.f32.mrf.mxu0
        %v8267 = vadd.f32 0.0, %v8266
        %v8268 = vpop.f32.mrf.mxu0
        %v8269 = vpop.f32.mrf.mxu0
        %v8270 = vadd.f32 0.0, %v8269
        %v8271 = vpop.f32.mrf.mxu0
        %8272 = vmatprep.mubr.bf16.mxu0 0
        %8273 = vmatmul.mubr.bf16.gmra.mxu0 %v8103
        %v8274 = vpop.f32.mrf.mxu0
        %v8275 = vadd.f32 0.0, %v8274
        %v8276 = vpop.f32.mrf.mxu0
        %v8277 = vpop.f32.mrf.mxu0
        %v8278 = vadd.f32 0.0, %v8277
        %v8279 = vpop.f32.mrf.mxu0
        %8280 = vmatprep.mubr.bf16.mxu0 0
        %8281 = vmatmul.mubr.bf16.gmra.mxu0 %v8104
        %v8282 = vpop.f32.mrf.mxu0
        %v8283 = vadd.f32 0.0, %v8282
        %v8284 = vpop.f32.mrf.mxu0
        %v8285 = vpop.f32.mrf.mxu0
        %v8286 = vadd.f32 0.0, %v8285
        %v8287 = vpop.f32.mrf.mxu0
        %8288 = vmatprep.mubr.bf16.mxu0 0
        %8289 = vmatmul.mubr.bf16.gmra.mxu0 %v8105
        %v8290 = vpop.f32.mrf.mxu0
        %v8291 = vadd.f32 0.0, %v8290
        %v8292 = vpop.f32.mrf.mxu0
        %v8293 = vpop.f32.mrf.mxu0
        %v8294 = vadd.f32 0.0, %v8293
        %v8295 = vpop.f32.mrf.mxu0
        %8296 = vmatprep.mubr.bf16.mxu0 0
        %8297 = vmatmul.mubr.bf16.gmra.mxu0 %v8106
        %v8298 = vpop.f32.mrf.mxu0
        %v8299 = vadd.f32 0.0, %v8298
        %v8300 = vpop.f32.mrf.mxu0
        %v8301 = vpop.f32.mrf.mxu0
        %v8302 = vadd.f32 0.0, %v8301
        %v8303 = vpop.f32.mrf.mxu0
        %8304 = vmatprep.mubr.bf16.mxu0 0
        %8305 = vmatmul.mubr.bf16.gmra.mxu0 %v8107
        %v8306 = vpop.f32.mrf.mxu0
        %v8307 = vadd.f32 0.0, %v8306
        %v8308 = vpop.f32.mrf.mxu0
        %v8309 = vpop.f32.mrf.mxu0
        %v8310 = vadd.f32 0.0, %v8309
        %v8311 = vpop.f32.mrf.mxu0
        %8312 = vmatprep.mubr.bf16.mxu0 0
        %8313 = vmatmul.mubr.bf16.gmra.mxu0 %v8108
        %v8314 = vpop.f32.mrf.mxu0
        %v8315 = vadd.f32 0.0, %v8314
        %v8316 = vpop.f32.mrf.mxu0
        %v8317 = vpop.f32.mrf.mxu0
        %v8318 = vadd.f32 0.0, %v8317
        %v8319 = vpop.f32.mrf.mxu0
        %8320 = vmatprep.mubr.bf16.mxu0 0
        %8321 = vmatmul.mubr.bf16.gmra.mxu0 %v8109
        %v8322 = vpop.f32.mrf.mxu0
        %v8323 = vadd.f32 0.0, %v8322
        %v8324 = vpop.f32.mrf.mxu0
        %v8325 = vpop.f32.mrf.mxu0
        %v8326 = vadd.f32 0.0, %v8325
        %v8327 = vpop.f32.mrf.mxu0
        %8328 = vmatprep.mubr.bf16.mxu0 0
        %8329 = vmatmul.mubr.bf16.gmra.mxu0 %v8110
        %v8330 = vpop.f32.mrf.mxu0
        %v8331 = vadd.f32 0.0, %v8330
        %v8332 = vpop.f32.mrf.mxu0
        %v8333 = vpop.f32.mrf.mxu0
        %v8334 = vadd.f32 0.0, %v8333
        %v8335 = vpop.f32.mrf.mxu0
        %8336 = vmatprep.mubr.bf16.mxu0 0
        %8337 = vmatmul.mubr.bf16.gmra.mxu0 %v8111
        %v8338 = vpop.f32.mrf.mxu0
        %v8339 = vadd.f32 0.0, %v8338
        %v8340 = vpop.f32.mrf.mxu0
        %v8341 = vpop.f32.mrf.mxu0
        %v8342 = vadd.f32 0.0, %v8341
        %v8343 = vpop.f32.mrf.mxu0
        %8344 = vmatprep.mubr.bf16.mxu0 0
        %8345 = vmatmul.mubr.bf16.gmra.mxu0 %v8112
        %v8346 = vpop.f32.mrf.mxu0
        %v8347 = vadd.f32 0.0, %v8346
        %v8348 = vpop.f32.mrf.mxu0
        %v8349 = vpop.f32.mrf.mxu0
        %v8350 = vadd.f32 0.0, %v8349
        %v8351 = vpop.f32.mrf.mxu0
        %8352 = vmatprep.mubr.bf16.mxu0 0
        %8353 = vmatmul.mubr.bf16.gmra.mxu0 %v8113
        %v8354 = vpop.f32.mrf.mxu0
        %v8355 = vadd.f32 0.0, %v8354
        %v8356 = vpop.f32.mrf.mxu0
        %v8357 = vpop.f32.mrf.mxu0
        %v8358 = vadd.f32 0.0, %v8357
        %v8359 = vpop.f32.mrf.mxu0
        %8360 = vmatprep.mubr.bf16.mxu0 0
        %8361 = vmatmul.mubr.bf16.gmra.mxu0 %v8114
        %v8362 = vpop.f32.mrf.mxu0
        %v8363 = vadd.f32 0.0, %v8362
        %v8364 = vpop.f32.mrf.mxu0
        %v8365 = vpop.f32.mrf.mxu0
        %v8366 = vadd.f32 0.0, %v8365
        %v8367 = vpop.f32.mrf.mxu0
        %8368 = vmatprep.mubr.bf16.mxu0 0
        %8369 = vmatmul.mubr.bf16.gmra.mxu0 %v8115
        %v8370 = vpop.f32.mrf.mxu0
        %v8371 = vadd.f32 0.0, %v8370
        %v8372 = vpop.f32.mrf.mxu0
        %v8373 = vpop.f32.mrf.mxu0
        %v8374 = vadd.f32 0.0, %v8373
        %v8375 = vpop.f32.mrf.mxu0
        %8376 = vdwg.mxu0
        %v8377 = vadd.f32 %v7919, %v8219
        %v8378 = vadd.f32 %v7920, %v8222
        %v8379 = vadd.f32 %v7921, %v8227
        %v8380 = vadd.f32 %v7922, %v8230
        %v8381 = vadd.f32 %v7923, %v8235
        %v8382 = vadd.f32 %v7924, %v8238
        %v8383 = vadd.f32 %v7925, %v8243
        %v8384 = vadd.f32 %v7926, %v8246
        %v8385 = vadd.f32 %v7927, %v8251
        %v8386 = vadd.f32 %v7928, %v8254
        %v8387 = vadd.f32 %v7929, %v8259
        %v8388 = vadd.f32 %v7930, %v8262
        %v8389 = vadd.f32 %v7931, %v8267
        %v8390 = vadd.f32 %v7932, %v8270
        %v8391 = vadd.f32 %v7933, %v8275
        %v8392 = vadd.f32 %v7934, %v8278
        %v8393 = vadd.f32 %v7935, %v8283
        %v8394 = vadd.f32 %v7936, %v8286
        %v8395 = vadd.f32 %v7937, %v8291
        %v8396 = vadd.f32 %v7938, %v8294
        %v8397 = vadd.f32 %v7939, %v8299
        %v8398 = vadd.f32 %v7940, %v8302
        %v8399 = vadd.f32 %v7941, %v8307
        %v8400 = vadd.f32 %v7942, %v8310
        %v8401 = vadd.f32 %v7943, %v8315
        %v8402 = vadd.f32 %v7944, %v8318
        %v8403 = vadd.f32 %v7945, %v8323
        %v8404 = vadd.f32 %v7946, %v8326
        %v8405 = vadd.f32 %v7947, %v8331
        %v8406 = vadd.f32 %v7948, %v8334
        %v8407 = vadd.f32 %v7949, %v8339
        %v8408 = vadd.f32 %v7950, %v8342
        %v8409 = vadd.f32 %v7951, %v8347
        %v8410 = vadd.f32 %v7952, %v8350
        %v8411 = vadd.f32 %v7953, %v8355
        %v8412 = vadd.f32 %v7954, %v8358
        %v8413 = vadd.f32 %v7955, %v8363
        %v8414 = vadd.f32 %v7956, %v8366
        %v8415 = vadd.f32 %v7957, %v8371
        %v8416 = vadd.f32 %v7958, %v8374
        %v8417 = vld [vmem:[#allocation2 + $0x14] sm:$0xf]
        %v8418 = vld [vmem:[#allocation2 + $0x18] sm:$0xf]
        %v8419 = vld [vmem:[#allocation2 + $0x1c] sm:$0xf]
        %v8420 = vld [vmem:[#allocation2 + $0x20] sm:$0xf]
        %v8421 = vld [vmem:[#allocation2 + $0x24] sm:$0xf]
        %v8422 = vld [vmem:[#allocation2 + $0x28] sm:$0xf]
        %v8423 = vld [vmem:[#allocation2 + $0x2c] sm:$0xf]
        %v8424 = vld [vmem:[#allocation2 + $0x30] sm:$0xf]
        %v8425 = vld [vmem:[#allocation2 + $0x34] sm:$0xf]
        %v8426 = vld [vmem:[#allocation2 + $0x38] sm:$0xf]
        %v8427 = vld [vmem:[#allocation2 + $0x3c] sm:$0xf]
        %v8428 = vld [vmem:[#allocation2 + $0x40] sm:$0xf]
        %v8429 = vld [vmem:[#allocation2 + $0x44] sm:$0xf]
        %v8430 = vld [vmem:[#allocation2 + $0x48] sm:$0xf]
        %v8431 = vld [vmem:[#allocation2 + $0x4c] sm:$0xf]
        %v8432 = vld [vmem:[#allocation2 + $0x50] sm:$0xf]
        %v8433 = vld [vmem:[#allocation2 + $0x54] sm:$0xf]
        %v8434 = vld [vmem:[#allocation2 + $0x58] sm:$0xf]
        %v8435 = vld [vmem:[#allocation2 + $0x5c] sm:$0xf]
        %v8436 = vld [vmem:[#allocation2 + $0x60] sm:$0xf]
        %v8437 = vld [vmem:[#allocation2 + $0x64] sm:$0xf]
        %v8438 = vld [vmem:[#allocation2 + $0x68] sm:$0xf]
        %v8439 = vld [vmem:[#allocation2 + $0x6c] sm:$0xf]
        %v8440 = vld [vmem:[#allocation2 + $0x70] sm:$0xf]
        %v8441 = vld [vmem:[#allocation2 + $0x74] sm:$0xf]
        %v8442 = vld [vmem:[#allocation2 + $0x78] sm:$0xf]
        %v8443 = vld [vmem:[#allocation2 + $0x7c] sm:$0xf]
        %v8444 = vld [vmem:[#allocation2 + $0x80] sm:$0xf]
        %v8445 = vld [vmem:[#allocation2 + $0x84] sm:$0xf]
        %v8446 = vld [vmem:[#allocation2 + $0x88] sm:$0xf]
        %v8447 = vld [vmem:[#allocation2 + $0x8c] sm:$0xf]
        %v8448 = vld [vmem:[#allocation2 + $0x90] sm:$0xf]
        %v8449 = vld [vmem:[#allocation2 + $0x94] sm:$0xf]
        %v8450 = vld [vmem:[#allocation2 + $0x98] sm:$0xf]
        %v8451 = vld [vmem:[#allocation2 + $0x9c] sm:$0xf]
        %v8452 = vld [vmem:[#allocation2 + $0xa0] sm:$0xf]
        %v8453 = vld [vmem:[#allocation2 + $0xa4] sm:$0xf]
        %v8454 = vld [vmem:[#allocation2 + $0xa8] sm:$0xf]
        %v8455 = vld [vmem:[#allocation2 + $0xac] sm:$0xf]
        %v8456 = vld [vmem:[#allocation2 + $0xb0] sm:$0xf]
        %v8457 = vld [vmem:[#allocation2 + $0xb4] sm:$0x1]
        %s8458 = scalar_lea.vmem %s3, 448
        %v8459 = vld [vmem:[%s8458] sm:$0xf]
        %v8460 = vld [vmem:[%s8458 + $0x4] sm:$0xf]
        %v8461 = vld [vmem:[%s8458 + $0x8] sm:$0xf]
        %v8462 = vld [vmem:[%s8458 + $0xc] sm:$0xf]
        %v8463 = vld [vmem:[%s8458 + $0x10] sm:$0xf]
        %v8464 = vld [vmem:[%s8458 + $0x14] sm:$0xf]
        %v8465 = vld [vmem:[%s8458 + $0x18] sm:$0xf]
        %v8466 = vld [vmem:[%s8458 + $0x1c] sm:$0xf]
        %v8467 = vld [vmem:[%s8458 + $0x20] sm:$0xf]
        %v8468 = vld [vmem:[%s8458 + $0x24] sm:$0xf]
        %v8469 = vld [vmem:[%s8458 + $0x28] sm:$0xf]
        %v8470 = vld [vmem:[%s8458 + $0x2c] sm:$0xf]
        %v8471 = vld [vmem:[%s8458 + $0x30] sm:$0xf]
        %v8472 = vld [vmem:[%s8458 + $0x34] sm:$0xf]
        %v8473 = vld [vmem:[%s8458 + $0x38] sm:$0xf]
        %v8474 = vld [vmem:[%s8458 + $0x3c] sm:$0xf]
        %v8516 = vunpack.c.l.b16 %v8417
        %v8517 = vunpack.c.l.b16 %v8418
        %v8518 = vunpack.c.l.b16 %v8419
        %v8519 = vunpack.c.l.b16 %v8420
        %v8520 = vunpack.c.l.b16 %v8421
        %v8521 = vunpack.c.l.b16 %v8422
        %v8522 = vunpack.c.l.b16 %v8423
        %v8523 = vunpack.c.l.b16 %v8424
        %v8524 = vunpack.c.l.b16 %v8425
        %v8525 = vunpack.c.l.b16 %v8426
        %v8526 = vunpack.c.l.b16 %v8427
        %v8527 = vunpack.c.l.b16 %v8428
        %v8528 = vunpack.c.l.b16 %v8429
        %v8529 = vunpack.c.l.b16 %v8430
        %v8530 = vunpack.c.l.b16 %v8431
        %v8531 = vunpack.c.l.b16 %v8432
        %v8532 = vunpack.c.l.b16 %v8433
        %v8533 = vunpack.c.l.b16 %v8434
        %v8534 = vunpack.c.l.b16 %v8435
        %v8535 = vunpack.c.l.b16 %v8436
        %v8536 = vunpack.c.l.b16 %v8437
        %v8537 = vunpack.c.l.b16 %v8438
        %v8538 = vunpack.c.l.b16 %v8439
        %v8539 = vunpack.c.l.b16 %v8440
        %v8540 = vunpack.c.l.b16 %v8441
        %v8541 = vunpack.c.l.b16 %v8442
        %v8542 = vunpack.c.l.b16 %v8443
        %v8543 = vunpack.c.l.b16 %v8444
        %v8544 = vunpack.c.l.b16 %v8445
        %v8545 = vunpack.c.l.b16 %v8446
        %v8546 = vunpack.c.l.b16 %v8447
        %v8547 = vunpack.c.l.b16 %v8448
        %v8548 = vunpack.c.l.b16 %v8449
        %v8549 = vunpack.c.l.b16 %v8450
        %v8550 = vunpack.c.l.b16 %v8451
        %v8551 = vunpack.c.l.b16 %v8452
        %v8552 = vunpack.c.l.b16 %v8453
        %v8553 = vunpack.c.l.b16 %v8454
        %v8554 = vunpack.c.l.b16 %v8455
        %v8555 = vunpack.c.l.b16 %v8456
        %v8556 = vunpack.c.l.b16 %v8457
        %v8557 = vpack.c.b16 %v8517, %v8516
        %v8558 = vpack.c.b16 %v8519, %v8518
        %v8559 = vpack.c.b16 %v8521, %v8520
        %v8560 = vpack.c.b16 %v8523, %v8522
        %v8561 = vpack.c.b16 %v8525, %v8524
        %v8562 = vpack.c.b16 %v8527, %v8526
        %v8563 = vpack.c.b16 %v8529, %v8528
        %v8564 = vpack.c.b16 %v8531, %v8530
        %v8565 = vpack.c.b16 %v8533, %v8532
        %v8566 = vpack.c.b16 %v8535, %v8534
        %v8567 = vpack.c.b16 %v8537, %v8536
        %v8568 = vpack.c.b16 %v8539, %v8538
        %v8569 = vpack.c.b16 %v8541, %v8540
        %v8570 = vpack.c.b16 %v8543, %v8542
        %v8571 = vpack.c.b16 %v8545, %v8544
        %v8572 = vpack.c.b16 %v8547, %v8546
        %v8573 = vpack.c.b16 %v8549, %v8548
        %v8574 = vpack.c.b16 %v8551, %v8550
        %v8575 = vpack.c.b16 %v8553, %v8552
        %v8576 = vpack.c.b16 %v8555, %v8554
        %v8577 = vpack.c.b16 %v8556, %v8556
        %v8579 = vshrl.u32 %v8557, 16
        %v8581 = vshll.u32 %v8557, 16
        %v8583 = vrot.slane %v8581, 1
        %v8584 = vor.u32 %v8579, %v8583
        %v8586 = vshll.u32 %v8558, 16
        %v8588 = vrot.slane %v8586, 1
        %v8589 = vsel %vm445, %v8584, %v8588
        %v8590 = vshrl.u32 %v8558, 16
        %v8592 = vor.u32 %v8590, %v8588
        %v8594 = vshll.u32 %v8559, 16
        %v8596 = vrot.slane %v8594, 1
        %v8597 = vsel %vm445, %v8592, %v8596
        %v8598 = vshrl.u32 %v8559, 16
        %v8600 = vor.u32 %v8598, %v8596
        %v8602 = vshll.u32 %v8560, 16
        %v8604 = vrot.slane %v8602, 1
        %v8605 = vsel %vm445, %v8600, %v8604
        %v8606 = vshrl.u32 %v8560, 16
        %v8608 = vor.u32 %v8606, %v8604
        %v8610 = vshll.u32 %v8561, 16
        %v8612 = vrot.slane %v8610, 1
        %v8613 = vsel %vm445, %v8608, %v8612
        %v8614 = vshrl.u32 %v8561, 16
        %v8616 = vor.u32 %v8614, %v8612
        %v8618 = vshll.u32 %v8562, 16
        %v8620 = vrot.slane %v8618, 1
        %v8621 = vsel %vm445, %v8616, %v8620
        %v8622 = vshrl.u32 %v8562, 16
        %v8624 = vor.u32 %v8622, %v8620
        %v8626 = vshll.u32 %v8563, 16
        %v8628 = vrot.slane %v8626, 1
        %v8629 = vsel %vm445, %v8624, %v8628
        %v8630 = vshrl.u32 %v8563, 16
        %v8632 = vor.u32 %v8630, %v8628
        %v8634 = vshll.u32 %v8564, 16
        %v8636 = vrot.slane %v8634, 1
        %v8637 = vsel %vm445, %v8632, %v8636
        %v8638 = vshrl.u32 %v8564, 16
        %v8640 = vor.u32 %v8638, %v8636
        %v8642 = vshll.u32 %v8565, 16
        %v8644 = vrot.slane %v8642, 1
        %v8645 = vsel %vm445, %v8640, %v8644
        %v8646 = vshrl.u32 %v8565, 16
        %v8648 = vor.u32 %v8646, %v8644
        %v8650 = vshll.u32 %v8566, 16
        %v8652 = vrot.slane %v8650, 1
        %v8653 = vsel %vm445, %v8648, %v8652
        %v8654 = vshrl.u32 %v8566, 16
        %v8656 = vor.u32 %v8654, %v8652
        %v8658 = vshll.u32 %v8567, 16
        %v8660 = vrot.slane %v8658, 1
        %v8661 = vsel %vm445, %v8656, %v8660
        %v8662 = vshrl.u32 %v8567, 16
        %v8664 = vor.u32 %v8662, %v8660
        %v8666 = vshll.u32 %v8568, 16
        %v8668 = vrot.slane %v8666, 1
        %v8669 = vsel %vm445, %v8664, %v8668
        %v8670 = vshrl.u32 %v8568, 16
        %v8672 = vor.u32 %v8670, %v8668
        %v8674 = vshll.u32 %v8569, 16
        %v8676 = vrot.slane %v8674, 1
        %v8677 = vsel %vm445, %v8672, %v8676
        %v8678 = vshrl.u32 %v8569, 16
        %v8680 = vor.u32 %v8678, %v8676
        %v8682 = vshll.u32 %v8570, 16
        %v8684 = vrot.slane %v8682, 1
        %v8685 = vsel %vm445, %v8680, %v8684
        %v8686 = vshrl.u32 %v8570, 16
        %v8688 = vor.u32 %v8686, %v8684
        %v8690 = vshll.u32 %v8571, 16
        %v8692 = vrot.slane %v8690, 1
        %v8693 = vsel %vm445, %v8688, %v8692
        %v8694 = vshrl.u32 %v8571, 16
        %v8696 = vor.u32 %v8694, %v8692
        %v8698 = vshll.u32 %v8572, 16
        %v8700 = vrot.slane %v8698, 1
        %v8701 = vsel %vm445, %v8696, %v8700
        %v8702 = vshrl.u32 %v8572, 16
        %v8704 = vor.u32 %v8702, %v8700
        %v8706 = vshll.u32 %v8573, 16
        %v8708 = vrot.slane %v8706, 1
        %v8709 = vsel %vm445, %v8704, %v8708
        %v8710 = vshrl.u32 %v8573, 16
        %v8712 = vor.u32 %v8710, %v8708
        %v8714 = vshll.u32 %v8574, 16
        %v8716 = vrot.slane %v8714, 1
        %v8717 = vsel %vm445, %v8712, %v8716
        %v8718 = vshrl.u32 %v8574, 16
        %v8720 = vor.u32 %v8718, %v8716
        %v8722 = vshll.u32 %v8575, 16
        %v8724 = vrot.slane %v8722, 1
        %v8725 = vsel %vm445, %v8720, %v8724
        %v8726 = vshrl.u32 %v8575, 16
        %v8728 = vor.u32 %v8726, %v8724
        %v8730 = vshll.u32 %v8576, 16
        %v8732 = vrot.slane %v8730, 1
        %v8733 = vsel %vm445, %v8728, %v8732
        %v8734 = vshrl.u32 %v8576, 16
        %v8736 = vor.u32 %v8734, %v8732
        %v8738 = vshll.u32 %v8577, 16
        %v8740 = vrot.slane %v8738, 1
        %v8741 = vsel %vm445, %v8736, %v8740
        %v8778 = vunpack.c.l.b16 %v8459
        %v8779 = vunpack.c.l.b16 %v8460
        %v8780 = vunpack.c.l.b16 %v8461
        %v8781 = vunpack.c.l.b16 %v8462
        %v8782 = vunpack.c.l.b16 %v8463
        %v8783 = vunpack.c.l.b16 %v8464
        %v8784 = vunpack.c.l.b16 %v8465
        %v8785 = vunpack.c.l.b16 %v8466
        %v8786 = vunpack.c.l.b16 %v8467
        %v8787 = vunpack.c.l.b16 %v8468
        %v8788 = vunpack.c.l.b16 %v8469
        %v8789 = vunpack.c.l.b16 %v8470
        %v8790 = vunpack.c.l.b16 %v8471
        %v8791 = vunpack.c.l.b16 %v8472
        %v8792 = vunpack.c.l.b16 %v8473
        %v8793 = vunpack.c.l.b16 %v8474
        %v8794 = vpack.c.b16 %v8779, %v8778
        %v8795 = vpack.c.b16 %v8781, %v8780
        %v8796 = vpack.c.b16 %v8783, %v8782
        %v8797 = vpack.c.b16 %v8785, %v8784
        %v8798 = vpack.c.b16 %v8787, %v8786
        %v8799 = vpack.c.b16 %v8789, %v8788
        %v8800 = vpack.c.b16 %v8791, %v8790
        %v8801 = vpack.c.b16 %v8793, %v8792
        %8810 = vmatprep.subr.bf16.mxu0 0
        %8811 = vmatpush1.bf16.msra.mxu0 %v8801
        %8812 = vmatprep.subr.bf16.mxu0 0
        %8813 = vmatpush1.bf16.msra.mxu0 %v8800
        %8814 = vmatprep.subr.bf16.mxu0 0
        %8815 = vmatpush1.bf16.msra.mxu0 %v8799
        %8816 = vmatprep.subr.bf16.mxu0 0
        %8817 = vmatpush1.bf16.msra.mxu0 %v8798
        %8818 = vmatprep.subr.bf16.mxu0 0
        %8819 = vmatpush1.bf16.msra.mxu0 %v8797
        %8820 = vmatprep.subr.bf16.mxu0 0
        %8821 = vmatpush1.bf16.msra.mxu0 %v8796
        %8822 = vmatprep.subr.bf16.mxu0 0
        %8823 = vmatpush1.bf16.msra.mxu0 %v8795
        %8824 = vmatprep.subr.bf16.mxu0 0
        %8825 = vmatpush1.bf16.msra.mxu0 %v8794
        %8826 = vmatprep.subr.bf16.mxu0 0
        %8827 = vmatpush2.bf16.msra.mxu0 0
        %8828 = vmatprep.subr.bf16.mxu0 0
        %8829 = vmatpush2.bf16.msra.mxu0 0
        %8830 = vmatprep.subr.bf16.mxu0 0
        %8831 = vmatpush2.bf16.msra.mxu0 0
        %8832 = vmatprep.subr.bf16.mxu0 0
        %8833 = vmatpush2.bf16.msra.mxu0 0
        %8834 = vmatprep.subr.bf16.mxu0 0
        %8835 = vmatpush2.bf16.msra.mxu0 0
        %8836 = vmatprep.subr.bf16.mxu0 0
        %8837 = vmatpush2.bf16.msra.mxu0 0
        %8838 = vmatprep.subr.bf16.mxu0 0
        %8839 = vmatpush2.bf16.msra.mxu0 0
        %8840 = vmatprep.subr.bf16.mxu0 0
        %8841 = vmatpush2.bf16.msra.mxu0 0
        %8842 = vmatprep.mubr.bf16.mxu0 0
        %8843 = vmatmul.mubr.bf16.gmra.mxu0 %v8589
        %v8844 = vpop.f32.mrf.mxu0
        %v8845 = vadd.f32 0.0, %v8844
        %v8846 = vpop.f32.mrf.mxu0
        %v8847 = vpop.f32.mrf.mxu0
        %v8848 = vadd.f32 0.0, %v8847
        %v8849 = vpop.f32.mrf.mxu0
        %8850 = vmatprep.mubr.bf16.mxu0 0
        %8851 = vmatmul.mubr.bf16.gmra.mxu0 %v8597
        %v8852 = vpop.f32.mrf.mxu0
        %v8853 = vadd.f32 0.0, %v8852
        %v8854 = vpop.f32.mrf.mxu0
        %v8855 = vpop.f32.mrf.mxu0
        %v8856 = vadd.f32 0.0, %v8855
        %v8857 = vpop.f32.mrf.mxu0
        %8858 = vmatprep.mubr.bf16.mxu0 0
        %8859 = vmatmul.mubr.bf16.gmra.mxu0 %v8605
        %v8860 = vpop.f32.mrf.mxu0
        %v8861 = vadd.f32 0.0, %v8860
        %v8862 = vpop.f32.mrf.mxu0
        %v8863 = vpop.f32.mrf.mxu0
        %v8864 = vadd.f32 0.0, %v8863
        %v8865 = vpop.f32.mrf.mxu0
        %8866 = vmatprep.mubr.bf16.mxu0 0
        %8867 = vmatmul.mubr.bf16.gmra.mxu0 %v8613
        %v8868 = vpop.f32.mrf.mxu0
        %v8869 = vadd.f32 0.0, %v8868
        %v8870 = vpop.f32.mrf.mxu0
        %v8871 = vpop.f32.mrf.mxu0
        %v8872 = vadd.f32 0.0, %v8871
        %v8873 = vpop.f32.mrf.mxu0
        %8874 = vmatprep.mubr.bf16.mxu0 0
        %8875 = vmatmul.mubr.bf16.gmra.mxu0 %v8621
        %v8876 = vpop.f32.mrf.mxu0
        %v8877 = vadd.f32 0.0, %v8876
        %v8878 = vpop.f32.mrf.mxu0
        %v8879 = vpop.f32.mrf.mxu0
        %v8880 = vadd.f32 0.0, %v8879
        %v8881 = vpop.f32.mrf.mxu0
        %8882 = vmatprep.mubr.bf16.mxu0 0
        %8883 = vmatmul.mubr.bf16.gmra.mxu0 %v8629
        %v8884 = vpop.f32.mrf.mxu0
        %v8885 = vadd.f32 0.0, %v8884
        %v8886 = vpop.f32.mrf.mxu0
        %v8887 = vpop.f32.mrf.mxu0
        %v8888 = vadd.f32 0.0, %v8887
        %v8889 = vpop.f32.mrf.mxu0
        %8890 = vmatprep.mubr.bf16.mxu0 0
        %8891 = vmatmul.mubr.bf16.gmra.mxu0 %v8637
        %v8892 = vpop.f32.mrf.mxu0
        %v8893 = vadd.f32 0.0, %v8892
        %v8894 = vpop.f32.mrf.mxu0
        %v8895 = vpop.f32.mrf.mxu0
        %v8896 = vadd.f32 0.0, %v8895
        %v8897 = vpop.f32.mrf.mxu0
        %8898 = vmatprep.mubr.bf16.mxu0 0
        %8899 = vmatmul.mubr.bf16.gmra.mxu0 %v8645
        %v8900 = vpop.f32.mrf.mxu0
        %v8901 = vadd.f32 0.0, %v8900
        %v8902 = vpop.f32.mrf.mxu0
        %v8903 = vpop.f32.mrf.mxu0
        %v8904 = vadd.f32 0.0, %v8903
        %v8905 = vpop.f32.mrf.mxu0
        %8906 = vmatprep.mubr.bf16.mxu0 0
        %8907 = vmatmul.mubr.bf16.gmra.mxu0 %v8653
        %v8908 = vpop.f32.mrf.mxu0
        %v8909 = vadd.f32 0.0, %v8908
        %v8910 = vpop.f32.mrf.mxu0
        %v8911 = vpop.f32.mrf.mxu0
        %v8912 = vadd.f32 0.0, %v8911
        %v8913 = vpop.f32.mrf.mxu0
        %8914 = vmatprep.mubr.bf16.mxu0 0
        %8915 = vmatmul.mubr.bf16.gmra.mxu0 %v8661
        %v8916 = vpop.f32.mrf.mxu0
        %v8917 = vadd.f32 0.0, %v8916
        %v8918 = vpop.f32.mrf.mxu0
        %v8919 = vpop.f32.mrf.mxu0
        %v8920 = vadd.f32 0.0, %v8919
        %v8921 = vpop.f32.mrf.mxu0
        %8922 = vmatprep.mubr.bf16.mxu0 0
        %8923 = vmatmul.mubr.bf16.gmra.mxu0 %v8669
        %v8924 = vpop.f32.mrf.mxu0
        %v8925 = vadd.f32 0.0, %v8924
        %v8926 = vpop.f32.mrf.mxu0
        %v8927 = vpop.f32.mrf.mxu0
        %v8928 = vadd.f32 0.0, %v8927
        %v8929 = vpop.f32.mrf.mxu0
        %8930 = vmatprep.mubr.bf16.mxu0 0
        %8931 = vmatmul.mubr.bf16.gmra.mxu0 %v8677
        %v8932 = vpop.f32.mrf.mxu0
        %v8933 = vadd.f32 0.0, %v8932
        %v8934 = vpop.f32.mrf.mxu0
        %v8935 = vpop.f32.mrf.mxu0
        %v8936 = vadd.f32 0.0, %v8935
        %v8937 = vpop.f32.mrf.mxu0
        %8938 = vmatprep.mubr.bf16.mxu0 0
        %8939 = vmatmul.mubr.bf16.gmra.mxu0 %v8685
        %v8940 = vpop.f32.mrf.mxu0
        %v8941 = vadd.f32 0.0, %v8940
        %v8942 = vpop.f32.mrf.mxu0
        %v8943 = vpop.f32.mrf.mxu0
        %v8944 = vadd.f32 0.0, %v8943
        %v8945 = vpop.f32.mrf.mxu0
        %8946 = vmatprep.mubr.bf16.mxu0 0
        %8947 = vmatmul.mubr.bf16.gmra.mxu0 %v8693
        %v8948 = vpop.f32.mrf.mxu0
        %v8949 = vadd.f32 0.0, %v8948
        %v8950 = vpop.f32.mrf.mxu0
        %v8951 = vpop.f32.mrf.mxu0
        %v8952 = vadd.f32 0.0, %v8951
        %v8953 = vpop.f32.mrf.mxu0
        %8954 = vmatprep.mubr.bf16.mxu0 0
        %8955 = vmatmul.mubr.bf16.gmra.mxu0 %v8701
        %v8956 = vpop.f32.mrf.mxu0
        %v8957 = vadd.f32 0.0, %v8956
        %v8958 = vpop.f32.mrf.mxu0
        %v8959 = vpop.f32.mrf.mxu0
        %v8960 = vadd.f32 0.0, %v8959
        %v8961 = vpop.f32.mrf.mxu0
        %8962 = vmatprep.mubr.bf16.mxu0 0
        %8963 = vmatmul.mubr.bf16.gmra.mxu0 %v8709
        %v8964 = vpop.f32.mrf.mxu0
        %v8965 = vadd.f32 0.0, %v8964
        %v8966 = vpop.f32.mrf.mxu0
        %v8967 = vpop.f32.mrf.mxu0
        %v8968 = vadd.f32 0.0, %v8967
        %v8969 = vpop.f32.mrf.mxu0
        %8970 = vmatprep.mubr.bf16.mxu0 0
        %8971 = vmatmul.mubr.bf16.gmra.mxu0 %v8717
        %v8972 = vpop.f32.mrf.mxu0
        %v8973 = vadd.f32 0.0, %v8972
        %v8974 = vpop.f32.mrf.mxu0
        %v8975 = vpop.f32.mrf.mxu0
        %v8976 = vadd.f32 0.0, %v8975
        %v8977 = vpop.f32.mrf.mxu0
        %8978 = vmatprep.mubr.bf16.mxu0 0
        %8979 = vmatmul.mubr.bf16.gmra.mxu0 %v8725
        %v8980 = vpop.f32.mrf.mxu0
        %v8981 = vadd.f32 0.0, %v8980
        %v8982 = vpop.f32.mrf.mxu0
        %v8983 = vpop.f32.mrf.mxu0
        %v8984 = vadd.f32 0.0, %v8983
        %v8985 = vpop.f32.mrf.mxu0
        %8986 = vmatprep.mubr.bf16.mxu0 0
        %8987 = vmatmul.mubr.bf16.gmra.mxu0 %v8733
        %v8988 = vpop.f32.mrf.mxu0
        %v8989 = vadd.f32 0.0, %v8988
        %v8990 = vpop.f32.mrf.mxu0
        %v8991 = vpop.f32.mrf.mxu0
        %v8992 = vadd.f32 0.0, %v8991
        %v8993 = vpop.f32.mrf.mxu0
        %8994 = vmatprep.mubr.bf16.mxu0 0
        %8995 = vmatmul.mubr.bf16.gmra.mxu0 %v8741
        %v8996 = vpop.f32.mrf.mxu0
        %v8997 = vadd.f32 0.0, %v8996
        %v8998 = vpop.f32.mrf.mxu0
        %v8999 = vpop.f32.mrf.mxu0
        %v9000 = vadd.f32 0.0, %v8999
        %v9001 = vpop.f32.mrf.mxu0
        %9002 = vdwg.mxu0
        %v9003 = vadd.f32 %v8377, %v8845
        %v9004 = vadd.f32 %v8378, %v8848
        %v9005 = vadd.f32 %v8379, %v8853
        %v9006 = vadd.f32 %v8380, %v8856
        %v9007 = vadd.f32 %v8381, %v8861
        %v9008 = vadd.f32 %v8382, %v8864
        %v9009 = vadd.f32 %v8383, %v8869
        %v9010 = vadd.f32 %v8384, %v8872
        %v9011 = vadd.f32 %v8385, %v8877
        %v9012 = vadd.f32 %v8386, %v8880
        %v9013 = vadd.f32 %v8387, %v8885
        %v9014 = vadd.f32 %v8388, %v8888
        %v9015 = vadd.f32 %v8389, %v8893
        %v9016 = vadd.f32 %v8390, %v8896
        %v9017 = vadd.f32 %v8391, %v8901
        %v9018 = vadd.f32 %v8392, %v8904
        %v9019 = vadd.f32 %v8393, %v8909
        %v9020 = vadd.f32 %v8394, %v8912
        %v9021 = vadd.f32 %v8395, %v8917
        %v9022 = vadd.f32 %v8396, %v8920
        %v9023 = vadd.f32 %v8397, %v8925
        %v9024 = vadd.f32 %v8398, %v8928
        %v9025 = vadd.f32 %v8399, %v8933
        %v9026 = vadd.f32 %v8400, %v8936
        %v9027 = vadd.f32 %v8401, %v8941
        %v9028 = vadd.f32 %v8402, %v8944
        %v9029 = vadd.f32 %v8403, %v8949
        %v9030 = vadd.f32 %v8404, %v8952
        %v9031 = vadd.f32 %v8405, %v8957
        %v9032 = vadd.f32 %v8406, %v8960
        %v9033 = vadd.f32 %v8407, %v8965
        %v9034 = vadd.f32 %v8408, %v8968
        %v9035 = vadd.f32 %v8409, %v8973
        %v9036 = vadd.f32 %v8410, %v8976
        %v9037 = vadd.f32 %v8411, %v8981
        %v9038 = vadd.f32 %v8412, %v8984
        %v9039 = vadd.f32 %v8413, %v8989
        %v9040 = vadd.f32 %v8414, %v8992
        %v9041 = vadd.f32 %v8415, %v8997
        %v9042 = vadd.f32 %v8416, %v9000
        %v9043 = vld [vmem:[#allocation2 + $0x14] sm:$0xe]
        %s9044 = scalar_lea.vmem %s3, 512
        %v9045 = vld [vmem:[%s9044] sm:$0xf]
        %v9046 = vld [vmem:[%s9044 + $0x4] sm:$0xf]
        %v9047 = vld [vmem:[%s9044 + $0x8] sm:$0xf]
        %v9048 = vld [vmem:[%s9044 + $0xc] sm:$0xf]
        %v9049 = vld [vmem:[%s9044 + $0x10] sm:$0xf]
        %v9050 = vld [vmem:[%s9044 + $0x14] sm:$0xf]
        %v9051 = vld [vmem:[%s9044 + $0x18] sm:$0xf]
        %v9052 = vld [vmem:[%s9044 + $0x1c] sm:$0xf]
        %v9053 = vld [vmem:[%s9044 + $0x20] sm:$0xf]
        %v9054 = vld [vmem:[%s9044 + $0x24] sm:$0xf]
        %v9055 = vld [vmem:[%s9044 + $0x28] sm:$0xf]
        %v9056 = vld [vmem:[%s9044 + $0x2c] sm:$0xf]
        %v9057 = vld [vmem:[%s9044 + $0x30] sm:$0xf]
        %v9058 = vld [vmem:[%s9044 + $0x34] sm:$0xf]
        %v9059 = vld [vmem:[%s9044 + $0x38] sm:$0xf]
        %v9060 = vld [vmem:[%s9044 + $0x3c] sm:$0xf]
        %v9062 = vunpack.c.l.b16 %v9043
        %v9063 = vpack.c.b16 %v8517, %v9062
        %v9064 = vrot.slane %v9063, 1
        %v9065 = vrot.slane %v8558, 1
        %v9066 = vsel %vm1225, %v9064, %v9065
        %v9067 = vrot.slane %v8559, 1
        %v9068 = vsel %vm1225, %v9065, %v9067
        %v9069 = vrot.slane %v8560, 1
        %v9070 = vsel %vm1225, %v9067, %v9069
        %v9071 = vrot.slane %v8561, 1
        %v9072 = vsel %vm1225, %v9069, %v9071
        %v9073 = vrot.slane %v8562, 1
        %v9074 = vsel %vm1225, %v9071, %v9073
        %v9075 = vrot.slane %v8563, 1
        %v9076 = vsel %vm1225, %v9073, %v9075
        %v9077 = vrot.slane %v8564, 1
        %v9078 = vsel %vm1225, %v9075, %v9077
        %v9079 = vrot.slane %v8565, 1
        %v9080 = vsel %vm1225, %v9077, %v9079
        %v9081 = vrot.slane %v8566, 1
        %v9082 = vsel %vm1225, %v9079, %v9081
        %v9083 = vrot.slane %v8567, 1
        %v9084 = vsel %vm1225, %v9081, %v9083
        %v9085 = vrot.slane %v8568, 1
        %v9086 = vsel %vm1225, %v9083, %v9085
        %v9087 = vrot.slane %v8569, 1
        %v9088 = vsel %vm1225, %v9085, %v9087
        %v9089 = vrot.slane %v8570, 1
        %v9090 = vsel %vm1225, %v9087, %v9089
        %v9091 = vrot.slane %v8571, 1
        %v9092 = vsel %vm1225, %v9089, %v9091
        %v9093 = vrot.slane %v8572, 1
        %v9094 = vsel %vm1225, %v9091, %v9093
        %v9095 = vrot.slane %v8573, 1
        %v9096 = vsel %vm1225, %v9093, %v9095
        %v9097 = vrot.slane %v8574, 1
        %v9098 = vsel %vm1225, %v9095, %v9097
        %v9099 = vrot.slane %v8575, 1
        %v9100 = vsel %vm1225, %v9097, %v9099
        %v9101 = vrot.slane %v8576, 1
        %v9102 = vsel %vm1225, %v9099, %v9101
        %v9103 = vrot.slane %v8577, 1
        %v9104 = vsel %vm1225, %v9101, %v9103
        %v9141 = vunpack.c.l.b16 %v9045
        %v9142 = vunpack.c.l.b16 %v9046
        %v9143 = vunpack.c.l.b16 %v9047
        %v9144 = vunpack.c.l.b16 %v9048
        %v9145 = vunpack.c.l.b16 %v9049
        %v9146 = vunpack.c.l.b16 %v9050
        %v9147 = vunpack.c.l.b16 %v9051
        %v9148 = vunpack.c.l.b16 %v9052
        %v9149 = vunpack.c.l.b16 %v9053
        %v9150 = vunpack.c.l.b16 %v9054
        %v9151 = vunpack.c.l.b16 %v9055
        %v9152 = vunpack.c.l.b16 %v9056
        %v9153 = vunpack.c.l.b16 %v9057
        %v9154 = vunpack.c.l.b16 %v9058
        %v9155 = vunpack.c.l.b16 %v9059
        %v9156 = vunpack.c.l.b16 %v9060
        %v9157 = vpack.c.b16 %v9142, %v9141
        %v9158 = vpack.c.b16 %v9144, %v9143
        %v9159 = vpack.c.b16 %v9146, %v9145
        %v9160 = vpack.c.b16 %v9148, %v9147
        %v9161 = vpack.c.b16 %v9150, %v9149
        %v9162 = vpack.c.b16 %v9152, %v9151
        %v9163 = vpack.c.b16 %v9154, %v9153
        %v9164 = vpack.c.b16 %v9156, %v9155
        %9173 = vmatprep.subr.bf16.mxu0 0
        %9174 = vmatpush1.bf16.msra.mxu0 %v9164
        %9175 = vmatprep.subr.bf16.mxu0 0
        %9176 = vmatpush1.bf16.msra.mxu0 %v9163
        %9177 = vmatprep.subr.bf16.mxu0 0
        %9178 = vmatpush1.bf16.msra.mxu0 %v9162
        %9179 = vmatprep.subr.bf16.mxu0 0
        %9180 = vmatpush1.bf16.msra.mxu0 %v9161
        %9181 = vmatprep.subr.bf16.mxu0 0
        %9182 = vmatpush1.bf16.msra.mxu0 %v9160
        %9183 = vmatprep.subr.bf16.mxu0 0
        %9184 = vmatpush1.bf16.msra.mxu0 %v9159
        %9185 = vmatprep.subr.bf16.mxu0 0
        %9186 = vmatpush1.bf16.msra.mxu0 %v9158
        %9187 = vmatprep.subr.bf16.mxu0 0
        %9188 = vmatpush1.bf16.msra.mxu0 %v9157
        %9189 = vmatprep.subr.bf16.mxu0 0
        %9190 = vmatpush2.bf16.msra.mxu0 0
        %9191 = vmatprep.subr.bf16.mxu0 0
        %9192 = vmatpush2.bf16.msra.mxu0 0
        %9193 = vmatprep.subr.bf16.mxu0 0
        %9194 = vmatpush2.bf16.msra.mxu0 0
        %9195 = vmatprep.subr.bf16.mxu0 0
        %9196 = vmatpush2.bf16.msra.mxu0 0
        %9197 = vmatprep.subr.bf16.mxu0 0
        %9198 = vmatpush2.bf16.msra.mxu0 0
        %9199 = vmatprep.subr.bf16.mxu0 0
        %9200 = vmatpush2.bf16.msra.mxu0 0
        %9201 = vmatprep.subr.bf16.mxu0 0
        %9202 = vmatpush2.bf16.msra.mxu0 0
        %9203 = vmatprep.subr.bf16.mxu0 0
        %9204 = vmatpush2.bf16.msra.mxu0 0
        %9205 = vmatprep.mubr.bf16.mxu0 0
        %9206 = vmatmul.mubr.bf16.gmra.mxu0 %v9066
        %v9207 = vpop.f32.mrf.mxu0
        %v9208 = vadd.f32 0.0, %v9207
        %v9209 = vpop.f32.mrf.mxu0
        %v9210 = vpop.f32.mrf.mxu0
        %v9211 = vadd.f32 0.0, %v9210
        %v9212 = vpop.f32.mrf.mxu0
        %9213 = vmatprep.mubr.bf16.mxu0 0
        %9214 = vmatmul.mubr.bf16.gmra.mxu0 %v9068
        %v9215 = vpop.f32.mrf.mxu0
        %v9216 = vadd.f32 0.0, %v9215
        %v9217 = vpop.f32.mrf.mxu0
        %v9218 = vpop.f32.mrf.mxu0
        %v9219 = vadd.f32 0.0, %v9218
        %v9220 = vpop.f32.mrf.mxu0
        %9221 = vmatprep.mubr.bf16.mxu0 0
        %9222 = vmatmul.mubr.bf16.gmra.mxu0 %v9070
        %v9223 = vpop.f32.mrf.mxu0
        %v9224 = vadd.f32 0.0, %v9223
        %v9225 = vpop.f32.mrf.mxu0
        %v9226 = vpop.f32.mrf.mxu0
        %v9227 = vadd.f32 0.0, %v9226
        %v9228 = vpop.f32.mrf.mxu0
        %9229 = vmatprep.mubr.bf16.mxu0 0
        %9230 = vmatmul.mubr.bf16.gmra.mxu0 %v9072
        %v9231 = vpop.f32.mrf.mxu0
        %v9232 = vadd.f32 0.0, %v9231
        %v9233 = vpop.f32.mrf.mxu0
        %v9234 = vpop.f32.mrf.mxu0
        %v9235 = vadd.f32 0.0, %v9234
        %v9236 = vpop.f32.mrf.mxu0
        %9237 = vmatprep.mubr.bf16.mxu0 0
        %9238 = vmatmul.mubr.bf16.gmra.mxu0 %v9074
        %v9239 = vpop.f32.mrf.mxu0
        %v9240 = vadd.f32 0.0, %v9239
        %v9241 = vpop.f32.mrf.mxu0
        %v9242 = vpop.f32.mrf.mxu0
        %v9243 = vadd.f32 0.0, %v9242
        %v9244 = vpop.f32.mrf.mxu0
        %9245 = vmatprep.mubr.bf16.mxu0 0
        %9246 = vmatmul.mubr.bf16.gmra.mxu0 %v9076
        %v9247 = vpop.f32.mrf.mxu0
        %v9248 = vadd.f32 0.0, %v9247
        %v9249 = vpop.f32.mrf.mxu0
        %v9250 = vpop.f32.mrf.mxu0
        %v9251 = vadd.f32 0.0, %v9250
        %v9252 = vpop.f32.mrf.mxu0
        %9253 = vmatprep.mubr.bf16.mxu0 0
        %9254 = vmatmul.mubr.bf16.gmra.mxu0 %v9078
        %v9255 = vpop.f32.mrf.mxu0
        %v9256 = vadd.f32 0.0, %v9255
        %v9257 = vpop.f32.mrf.mxu0
        %v9258 = vpop.f32.mrf.mxu0
        %v9259 = vadd.f32 0.0, %v9258
        %v9260 = vpop.f32.mrf.mxu0
        %9261 = vmatprep.mubr.bf16.mxu0 0
        %9262 = vmatmul.mubr.bf16.gmra.mxu0 %v9080
        %v9263 = vpop.f32.mrf.mxu0
        %v9264 = vadd.f32 0.0, %v9263
        %v9265 = vpop.f32.mrf.mxu0
        %v9266 = vpop.f32.mrf.mxu0
        %v9267 = vadd.f32 0.0, %v9266
        %v9268 = vpop.f32.mrf.mxu0
        %9269 = vmatprep.mubr.bf16.mxu0 0
        %9270 = vmatmul.mubr.bf16.gmra.mxu0 %v9082
        %v9271 = vpop.f32.mrf.mxu0
        %v9272 = vadd.f32 0.0, %v9271
        %v9273 = vpop.f32.mrf.mxu0
        %v9274 = vpop.f32.mrf.mxu0
        %v9275 = vadd.f32 0.0, %v9274
        %v9276 = vpop.f32.mrf.mxu0
        %9277 = vmatprep.mubr.bf16.mxu0 0
        %9278 = vmatmul.mubr.bf16.gmra.mxu0 %v9084
        %v9279 = vpop.f32.mrf.mxu0
        %v9280 = vadd.f32 0.0, %v9279
        %v9281 = vpop.f32.mrf.mxu0
        %v9282 = vpop.f32.mrf.mxu0
        %v9283 = vadd.f32 0.0, %v9282
        %v9284 = vpop.f32.mrf.mxu0
        %9285 = vmatprep.mubr.bf16.mxu0 0
        %9286 = vmatmul.mubr.bf16.gmra.mxu0 %v9086
        %v9287 = vpop.f32.mrf.mxu0
        %v9288 = vadd.f32 0.0, %v9287
        %v9289 = vpop.f32.mrf.mxu0
        %v9290 = vpop.f32.mrf.mxu0
        %v9291 = vadd.f32 0.0, %v9290
        %v9292 = vpop.f32.mrf.mxu0
        %9293 = vmatprep.mubr.bf16.mxu0 0
        %9294 = vmatmul.mubr.bf16.gmra.mxu0 %v9088
        %v9295 = vpop.f32.mrf.mxu0
        %v9296 = vadd.f32 0.0, %v9295
        %v9297 = vpop.f32.mrf.mxu0
        %v9298 = vpop.f32.mrf.mxu0
        %v9299 = vadd.f32 0.0, %v9298
        %v9300 = vpop.f32.mrf.mxu0
        %9301 = vmatprep.mubr.bf16.mxu0 0
        %9302 = vmatmul.mubr.bf16.gmra.mxu0 %v9090
        %v9303 = vpop.f32.mrf.mxu0
        %v9304 = vadd.f32 0.0, %v9303
        %v9305 = vpop.f32.mrf.mxu0
        %v9306 = vpop.f32.mrf.mxu0
        %v9307 = vadd.f32 0.0, %v9306
        %v9308 = vpop.f32.mrf.mxu0
        %9309 = vmatprep.mubr.bf16.mxu0 0
        %9310 = vmatmul.mubr.bf16.gmra.mxu0 %v9092
        %v9311 = vpop.f32.mrf.mxu0
        %v9312 = vadd.f32 0.0, %v9311
        %v9313 = vpop.f32.mrf.mxu0
        %v9314 = vpop.f32.mrf.mxu0
        %v9315 = vadd.f32 0.0, %v9314
        %v9316 = vpop.f32.mrf.mxu0
        %9317 = vmatprep.mubr.bf16.mxu0 0
        %9318 = vmatmul.mubr.bf16.gmra.mxu0 %v9094
        %v9319 = vpop.f32.mrf.mxu0
        %v9320 = vadd.f32 0.0, %v9319
        %v9321 = vpop.f32.mrf.mxu0
        %v9322 = vpop.f32.mrf.mxu0
        %v9323 = vadd.f32 0.0, %v9322
        %v9324 = vpop.f32.mrf.mxu0
        %9325 = vmatprep.mubr.bf16.mxu0 0
        %9326 = vmatmul.mubr.bf16.gmra.mxu0 %v9096
        %v9327 = vpop.f32.mrf.mxu0
        %v9328 = vadd.f32 0.0, %v9327
        %v9329 = vpop.f32.mrf.mxu0
        %v9330 = vpop.f32.mrf.mxu0
        %v9331 = vadd.f32 0.0, %v9330
        %v9332 = vpop.f32.mrf.mxu0
        %9333 = vmatprep.mubr.bf16.mxu0 0
        %9334 = vmatmul.mubr.bf16.gmra.mxu0 %v9098
        %v9335 = vpop.f32.mrf.mxu0
        %v9336 = vadd.f32 0.0, %v9335
        %v9337 = vpop.f32.mrf.mxu0
        %v9338 = vpop.f32.mrf.mxu0
        %v9339 = vadd.f32 0.0, %v9338
        %v9340 = vpop.f32.mrf.mxu0
        %9341 = vmatprep.mubr.bf16.mxu0 0
        %9342 = vmatmul.mubr.bf16.gmra.mxu0 %v9100
        %v9343 = vpop.f32.mrf.mxu0
        %v9344 = vadd.f32 0.0, %v9343
        %v9345 = vpop.f32.mrf.mxu0
        %v9346 = vpop.f32.mrf.mxu0
        %v9347 = vadd.f32 0.0, %v9346
        %v9348 = vpop.f32.mrf.mxu0
        %9349 = vmatprep.mubr.bf16.mxu0 0
        %9350 = vmatmul.mubr.bf16.gmra.mxu0 %v9102
        %v9351 = vpop.f32.mrf.mxu0
        %v9352 = vadd.f32 0.0, %v9351
        %v9353 = vpop.f32.mrf.mxu0
        %v9354 = vpop.f32.mrf.mxu0
        %v9355 = vadd.f32 0.0, %v9354
        %v9356 = vpop.f32.mrf.mxu0
        %9357 = vmatprep.mubr.bf16.mxu0 0
        %9358 = vmatmul.mubr.bf16.gmra.mxu0 %v9104
        %v9359 = vpop.f32.mrf.mxu0
        %v9360 = vadd.f32 0.0, %v9359
        %v9361 = vpop.f32.mrf.mxu0
        %v9362 = vpop.f32.mrf.mxu0
        %v9363 = vadd.f32 0.0, %v9362
        %v9364 = vpop.f32.mrf.mxu0
        %9365 = vdwg.mxu0
        %v9366 = vadd.f32 %v9003, %v9208
        %v9367 = vadd.f32 %v9004, %v9211
        %v9368 = vadd.f32 %v9005, %v9216
        %v9369 = vadd.f32 %v9006, %v9219
        %v9370 = vadd.f32 %v9007, %v9224
        %v9371 = vadd.f32 %v9008, %v9227
        %v9372 = vadd.f32 %v9009, %v9232
        %v9373 = vadd.f32 %v9010, %v9235
        %v9374 = vadd.f32 %v9011, %v9240
        %v9375 = vadd.f32 %v9012, %v9243
        %v9376 = vadd.f32 %v9013, %v9248
        %v9377 = vadd.f32 %v9014, %v9251
        %v9378 = vadd.f32 %v9015, %v9256
        %v9379 = vadd.f32 %v9016, %v9259
        %v9380 = vadd.f32 %v9017, %v9264
        %v9381 = vadd.f32 %v9018, %v9267
        %v9382 = vadd.f32 %v9019, %v9272
        %v9383 = vadd.f32 %v9020, %v9275
        %v9384 = vadd.f32 %v9021, %v9280
        %v9385 = vadd.f32 %v9022, %v9283
        %v9386 = vadd.f32 %v9023, %v9288
        %v9387 = vadd.f32 %v9024, %v9291
        %v9388 = vadd.f32 %v9025, %v9296
        %v9389 = vadd.f32 %v9026, %v9299
        %v9390 = vadd.f32 %v9027, %v9304
        %v9391 = vadd.f32 %v9028, %v9307
        %v9392 = vadd.f32 %v9029, %v9312
        %v9393 = vadd.f32 %v9030, %v9315
        %v9394 = vadd.f32 %v9031, %v9320
        %v9395 = vadd.f32 %v9032, %v9323
        %v9396 = vadd.f32 %v9033, %v9328
        %v9397 = vadd.f32 %v9034, %v9331
        %v9398 = vadd.f32 %v9035, %v9336
        %v9399 = vadd.f32 %v9036, %v9339
        %v9400 = vadd.f32 %v9037, %v9344
        %v9401 = vadd.f32 %v9038, %v9347
        %v9402 = vadd.f32 %v9039, %v9352
        %v9403 = vadd.f32 %v9040, %v9355
        %v9404 = vadd.f32 %v9041, %v9360
        %v9405 = vadd.f32 %v9042, %v9363
        %v9406 = vld [vmem:[%s249 + $0x14] sm:$0xe]
        %v9407 = vld [vmem:[%s249 + $0x18] sm:$0xf]
        %v9408 = vld [vmem:[%s249 + $0x1c] sm:$0xf]
        %v9409 = vld [vmem:[%s249 + $0x20] sm:$0xf]
        %v9410 = vld [vmem:[%s249 + $0x24] sm:$0xf]
        %v9411 = vld [vmem:[%s249 + $0x28] sm:$0xf]
        %v9412 = vld [vmem:[%s249 + $0x2c] sm:$0xf]
        %v9413 = vld [vmem:[%s249 + $0x30] sm:$0xf]
        %v9414 = vld [vmem:[%s249 + $0x34] sm:$0xf]
        %v9415 = vld [vmem:[%s249 + $0x38] sm:$0xf]
        %v9416 = vld [vmem:[%s249 + $0x3c] sm:$0xf]
        %v9417 = vld [vmem:[%s249 + $0x40] sm:$0xf]
        %v9418 = vld [vmem:[%s249 + $0x44] sm:$0xf]
        %v9419 = vld [vmem:[%s249 + $0x48] sm:$0xf]
        %v9420 = vld [vmem:[%s249 + $0x4c] sm:$0xf]
        %v9421 = vld [vmem:[%s249 + $0x50] sm:$0xf]
        %v9422 = vld [vmem:[%s249 + $0x54] sm:$0xf]
        %v9423 = vld [vmem:[%s249 + $0x58] sm:$0xf]
        %v9424 = vld [vmem:[%s249 + $0x5c] sm:$0xf]
        %v9425 = vld [vmem:[%s249 + $0x60] sm:$0xf]
        %v9426 = vld [vmem:[%s249 + $0x64] sm:$0xf]
        %v9427 = vld [vmem:[%s249 + $0x68] sm:$0xf]
        %v9428 = vld [vmem:[%s249 + $0x6c] sm:$0xf]
        %v9429 = vld [vmem:[%s249 + $0x70] sm:$0xf]
        %v9430 = vld [vmem:[%s249 + $0x74] sm:$0xf]
        %v9431 = vld [vmem:[%s249 + $0x78] sm:$0xf]
        %v9432 = vld [vmem:[%s249 + $0x7c] sm:$0xf]
        %v9433 = vld [vmem:[%s249 + $0x80] sm:$0xf]
        %v9434 = vld [vmem:[%s249 + $0x84] sm:$0xf]
        %v9435 = vld [vmem:[%s249 + $0x88] sm:$0xf]
        %v9436 = vld [vmem:[%s249 + $0x8c] sm:$0xf]
        %v9437 = vld [vmem:[%s249 + $0x90] sm:$0xf]
        %v9438 = vld [vmem:[%s249 + $0x94] sm:$0xf]
        %v9439 = vld [vmem:[%s249 + $0x98] sm:$0xf]
        %v9440 = vld [vmem:[%s249 + $0x9c] sm:$0xf]
        %v9441 = vld [vmem:[%s249 + $0xa0] sm:$0xf]
        %v9442 = vld [vmem:[%s249 + $0xa4] sm:$0xf]
        %v9443 = vld [vmem:[%s249 + $0xa8] sm:$0xf]
        %v9444 = vld [vmem:[%s249 + $0xac] sm:$0xf]
        %v9445 = vld [vmem:[%s249 + $0xb0] sm:$0xf]
        %v9446 = vld [vmem:[%s249 + $0xb4] sm:$0x1]
        %v9447 = vunpack.c.l.bf16 %v9406
        %v9448 = vunpack.c.l.bf16 %v9407
        %v9449 = vunpack.c.l.bf16 %v9408
        %v9450 = vunpack.c.l.bf16 %v9409
        %v9451 = vunpack.c.l.bf16 %v9410
        %v9452 = vunpack.c.l.bf16 %v9411
        %v9453 = vunpack.c.l.bf16 %v9412
        %v9454 = vunpack.c.l.bf16 %v9413
        %v9455 = vunpack.c.l.bf16 %v9414
        %v9456 = vunpack.c.l.bf16 %v9415
        %v9457 = vunpack.c.l.bf16 %v9416
        %v9458 = vunpack.c.l.bf16 %v9417
        %v9459 = vunpack.c.l.bf16 %v9418
        %v9460 = vunpack.c.l.bf16 %v9419
        %v9461 = vunpack.c.l.bf16 %v9420
        %v9462 = vunpack.c.l.bf16 %v9421
        %v9463 = vunpack.c.l.bf16 %v9422
        %v9464 = vunpack.c.l.bf16 %v9423
        %v9465 = vunpack.c.l.bf16 %v9424
        %v9466 = vunpack.c.l.bf16 %v9425
        %v9467 = vunpack.c.l.bf16 %v9426
        %v9468 = vunpack.c.l.bf16 %v9427
        %v9469 = vunpack.c.l.bf16 %v9428
        %v9470 = vunpack.c.l.bf16 %v9429
        %v9471 = vunpack.c.l.bf16 %v9430
        %v9472 = vunpack.c.l.bf16 %v9431
        %v9473 = vunpack.c.l.bf16 %v9432
        %v9474 = vunpack.c.l.bf16 %v9433
        %v9475 = vunpack.c.l.bf16 %v9434
        %v9476 = vunpack.c.l.bf16 %v9435
        %v9477 = vunpack.c.l.bf16 %v9436
        %v9478 = vunpack.c.l.bf16 %v9437
        %v9479 = vunpack.c.l.bf16 %v9438
        %v9480 = vunpack.c.l.bf16 %v9439
        %v9481 = vunpack.c.l.bf16 %v9440
        %v9482 = vunpack.c.l.bf16 %v9441
        %v9483 = vunpack.c.l.bf16 %v9442
        %v9484 = vunpack.c.l.bf16 %v9443
        %v9485 = vunpack.c.l.bf16 %v9444
        %v9486 = vunpack.c.l.bf16 %v9445
        %v9487 = vunpack.c.l.bf16 %v9446
        %v9488 = vld [vmem:[%s4] sm:$0x1]
        %v9490 = vlaneseq
        %v9491 = vshrl.u32 %v9490, 7
        %v9492 = vsub.s32 0, %v9491
        %v9493 = vrot.slane %v9488, %v9492
        %v9495 = vadd.f32 %v9366, %v9493
        %v9496 = vadd.f32 %v9367, %v9493
        %v9497 = vadd.f32 %v9368, %v9493
        %v9498 = vadd.f32 %v9369, %v9493
        %v9499 = vadd.f32 %v9370, %v9493
        %v9500 = vadd.f32 %v9371, %v9493
        %v9501 = vadd.f32 %v9372, %v9493
        %v9502 = vadd.f32 %v9373, %v9493
        %v9503 = vadd.f32 %v9374, %v9493
        %v9504 = vadd.f32 %v9375, %v9493
        %v9505 = vadd.f32 %v9376, %v9493
        %v9506 = vadd.f32 %v9377, %v9493
        %v9507 = vadd.f32 %v9378, %v9493
        %v9508 = vadd.f32 %v9379, %v9493
        %v9509 = vadd.f32 %v9380, %v9493
        %v9510 = vadd.f32 %v9381, %v9493
        %v9511 = vadd.f32 %v9382, %v9493
        %v9512 = vadd.f32 %v9383, %v9493
        %v9513 = vadd.f32 %v9384, %v9493
        %v9514 = vadd.f32 %v9385, %v9493
        %v9515 = vadd.f32 %v9386, %v9493
        %v9516 = vadd.f32 %v9387, %v9493
        %v9517 = vadd.f32 %v9388, %v9493
        %v9518 = vadd.f32 %v9389, %v9493
        %v9519 = vadd.f32 %v9390, %v9493
        %v9520 = vadd.f32 %v9391, %v9493
        %v9521 = vadd.f32 %v9392, %v9493
        %v9522 = vadd.f32 %v9393, %v9493
        %v9523 = vadd.f32 %v9394, %v9493
        %v9524 = vadd.f32 %v9395, %v9493
        %v9525 = vadd.f32 %v9396, %v9493
        %v9526 = vadd.f32 %v9397, %v9493
        %v9527 = vadd.f32 %v9398, %v9493
        %v9528 = vadd.f32 %v9399, %v9493
        %v9529 = vadd.f32 %v9400, %v9493
        %v9530 = vadd.f32 %v9401, %v9493
        %v9531 = vadd.f32 %v9402, %v9493
        %v9532 = vadd.f32 %v9403, %v9493
        %v9533 = vadd.f32 %v9404, %v9493
        %v9534 = vadd.f32 %v9405, %v9493
        %vm9576 = vcmask 1045504
        %v9577 = vrot.slane %v9447, 2
        %v9578 = vrot.slane %v9448, 2
        %v9579 = vsel %vm9576, %v9577, %v9578
        %v9580 = vrot.slane %v9449, 2
        %v9581 = vsel %vm9576, %v9578, %v9580
        %v9582 = vrot.slane %v9450, 2
        %v9583 = vsel %vm9576, %v9580, %v9582
        %v9584 = vrot.slane %v9451, 2
        %v9585 = vsel %vm9576, %v9582, %v9584
        %v9586 = vrot.slane %v9452, 2
        %v9587 = vsel %vm9576, %v9584, %v9586
        %v9588 = vrot.slane %v9453, 2
        %v9589 = vsel %vm9576, %v9586, %v9588
        %v9590 = vrot.slane %v9454, 2
        %v9591 = vsel %vm9576, %v9588, %v9590
        %v9592 = vrot.slane %v9455, 2
        %v9593 = vsel %vm9576, %v9590, %v9592
        %v9594 = vrot.slane %v9456, 2
        %v9595 = vsel %vm9576, %v9592, %v9594
        %v9596 = vrot.slane %v9457, 2
        %v9597 = vsel %vm9576, %v9594, %v9596
        %v9598 = vrot.slane %v9458, 2
        %v9599 = vsel %vm9576, %v9596, %v9598
        %v9600 = vrot.slane %v9459, 2
        %v9601 = vsel %vm9576, %v9598, %v9600
        %v9602 = vrot.slane %v9460, 2
        %v9603 = vsel %vm9576, %v9600, %v9602
        %v9604 = vrot.slane %v9461, 2
        %v9605 = vsel %vm9576, %v9602, %v9604
        %v9606 = vrot.slane %v9462, 2
        %v9607 = vsel %vm9576, %v9604, %v9606
        %v9608 = vrot.slane %v9463, 2
        %v9609 = vsel %vm9576, %v9606, %v9608
        %v9610 = vrot.slane %v9464, 2
        %v9611 = vsel %vm9576, %v9608, %v9610
        %v9612 = vrot.slane %v9465, 2
        %v9613 = vsel %vm9576, %v9610, %v9612
        %v9614 = vrot.slane %v9466, 2
        %v9615 = vsel %vm9576, %v9612, %v9614
        %v9616 = vrot.slane %v9467, 2
        %v9617 = vsel %vm9576, %v9614, %v9616
        %v9618 = vrot.slane %v9468, 2
        %v9619 = vsel %vm9576, %v9616, %v9618
        %v9620 = vrot.slane %v9469, 2
        %v9621 = vsel %vm9576, %v9618, %v9620
        %v9622 = vrot.slane %v9470, 2
        %v9623 = vsel %vm9576, %v9620, %v9622
        %v9624 = vrot.slane %v9471, 2
        %v9625 = vsel %vm9576, %v9622, %v9624
        %v9626 = vrot.slane %v9472, 2
        %v9627 = vsel %vm9576, %v9624, %v9626
        %v9628 = vrot.slane %v9473, 2
        %v9629 = vsel %vm9576, %v9626, %v9628
        %v9630 = vrot.slane %v9474, 2
        %v9631 = vsel %vm9576, %v9628, %v9630
        %v9632 = vrot.slane %v9475, 2
        %v9633 = vsel %vm9576, %v9630, %v9632
        %v9634 = vrot.slane %v9476, 2
        %v9635 = vsel %vm9576, %v9632, %v9634
        %v9636 = vrot.slane %v9477, 2
        %v9637 = vsel %vm9576, %v9634, %v9636
        %v9638 = vrot.slane %v9478, 2
        %v9639 = vsel %vm9576, %v9636, %v9638
        %v9640 = vrot.slane %v9479, 2
        %v9641 = vsel %vm9576, %v9638, %v9640
        %v9642 = vrot.slane %v9480, 2
        %v9643 = vsel %vm9576, %v9640, %v9642
        %v9644 = vrot.slane %v9481, 2
        %v9645 = vsel %vm9576, %v9642, %v9644
        %v9646 = vrot.slane %v9482, 2
        %v9647 = vsel %vm9576, %v9644, %v9646
        %v9648 = vrot.slane %v9483, 2
        %v9649 = vsel %vm9576, %v9646, %v9648
        %v9650 = vrot.slane %v9484, 2
        %v9651 = vsel %vm9576, %v9648, %v9650
        %v9652 = vrot.slane %v9485, 2
        %v9653 = vsel %vm9576, %v9650, %v9652
        %v9654 = vrot.slane %v9486, 2
        %v9655 = vsel %vm9576, %v9652, %v9654
        %v9656 = vrot.slane %v9487, 2
        %v9657 = vsel %vm9576, %v9654, %v9656
        %v9698 = vadd.f32 %v9495, %v9579
        %v9699 = vadd.f32 %v9496, %v9581
        %v9700 = vadd.f32 %v9497, %v9583
        %v9701 = vadd.f32 %v9498, %v9585
        %v9702 = vadd.f32 %v9499, %v9587
        %v9703 = vadd.f32 %v9500, %v9589
        %v9704 = vadd.f32 %v9501, %v9591
        %v9705 = vadd.f32 %v9502, %v9593
        %v9706 = vadd.f32 %v9503, %v9595
        %v9707 = vadd.f32 %v9504, %v9597
        %v9708 = vadd.f32 %v9505, %v9599
        %v9709 = vadd.f32 %v9506, %v9601
        %v9710 = vadd.f32 %v9507, %v9603
        %v9711 = vadd.f32 %v9508, %v9605
        %v9712 = vadd.f32 %v9509, %v9607
        %v9713 = vadd.f32 %v9510, %v9609
        %v9714 = vadd.f32 %v9511, %v9611
        %v9715 = vadd.f32 %v9512, %v9613
        %v9716 = vadd.f32 %v9513, %v9615
        %v9717 = vadd.f32 %v9514, %v9617
        %v9718 = vadd.f32 %v9515, %v9619
        %v9719 = vadd.f32 %v9516, %v9621
        %v9720 = vadd.f32 %v9517, %v9623
        %v9721 = vadd.f32 %v9518, %v9625
        %v9722 = vadd.f32 %v9519, %v9627
        %v9723 = vadd.f32 %v9520, %v9629
        %v9724 = vadd.f32 %v9521, %v9631
        %v9725 = vadd.f32 %v9522, %v9633
        %v9726 = vadd.f32 %v9523, %v9635
        %v9727 = vadd.f32 %v9524, %v9637
        %v9728 = vadd.f32 %v9525, %v9639
        %v9729 = vadd.f32 %v9526, %v9641
        %v9730 = vadd.f32 %v9527, %v9643
        %v9731 = vadd.f32 %v9528, %v9645
        %v9732 = vadd.f32 %v9529, %v9647
        %v9733 = vadd.f32 %v9530, %v9649
        %v9734 = vadd.f32 %v9531, %v9651
        %v9735 = vadd.f32 %v9532, %v9653
        %v9736 = vadd.f32 %v9533, %v9655
        %v9737 = vadd.f32 %v9534, %v9657
        %v9738 = vmax.f32 %v9698, 0.0
        %v9739 = vmax.f32 %v9699, 0.0
        %v9740 = vmax.f32 %v9700, 0.0
        %v9741 = vmax.f32 %v9701, 0.0
        %v9742 = vmax.f32 %v9702, 0.0
        %v9743 = vmax.f32 %v9703, 0.0
        %v9744 = vmax.f32 %v9704, 0.0
        %v9745 = vmax.f32 %v9705, 0.0
        %v9746 = vmax.f32 %v9706, 0.0
        %v9747 = vmax.f32 %v9707, 0.0
        %v9748 = vmax.f32 %v9708, 0.0
        %v9749 = vmax.f32 %v9709, 0.0
        %v9750 = vmax.f32 %v9710, 0.0
        %v9751 = vmax.f32 %v9711, 0.0
        %v9752 = vmax.f32 %v9712, 0.0
        %v9753 = vmax.f32 %v9713, 0.0
        %v9754 = vmax.f32 %v9714, 0.0
        %v9755 = vmax.f32 %v9715, 0.0
        %v9756 = vmax.f32 %v9716, 0.0
        %v9757 = vmax.f32 %v9717, 0.0
        %v9758 = vmax.f32 %v9718, 0.0
        %v9759 = vmax.f32 %v9719, 0.0
        %v9760 = vmax.f32 %v9720, 0.0
        %v9761 = vmax.f32 %v9721, 0.0
        %v9762 = vmax.f32 %v9722, 0.0
        %v9763 = vmax.f32 %v9723, 0.0
        %v9764 = vmax.f32 %v9724, 0.0
        %v9765 = vmax.f32 %v9725, 0.0
        %v9766 = vmax.f32 %v9726, 0.0
        %v9767 = vmax.f32 %v9727, 0.0
        %v9768 = vmax.f32 %v9728, 0.0
        %v9769 = vmax.f32 %v9729, 0.0
        %v9770 = vmax.f32 %v9730, 0.0
        %v9771 = vmax.f32 %v9731, 0.0
        %v9772 = vmax.f32 %v9732, 0.0
        %v9773 = vmax.f32 %v9733, 0.0
        %v9774 = vmax.f32 %v9734, 0.0
        %v9775 = vmax.f32 %v9735, 0.0
        %v9776 = vmax.f32 %v9736, 0.0
        %v9777 = vmax.f32 %v9737, 0.0
        %9778 = vst [vmem:[%s244] sm:$0xff] %v9738
        %9779 = vst [vmem:[%s244 + $0x8] sm:$0xff] %v9739
        %9780 = vst [vmem:[%s244 + $0x10] sm:$0xff] %v9740
        %9781 = vst [vmem:[%s244 + $0x18] sm:$0xff] %v9741
        %9782 = vst [vmem:[%s244 + $0x20] sm:$0xff] %v9742
        %9783 = vst [vmem:[%s244 + $0x28] sm:$0xff] %v9743
        %9784 = vst [vmem:[%s244 + $0x30] sm:$0xff] %v9744
        %9785 = vst [vmem:[%s244 + $0x38] sm:$0xff] %v9745
        %9786 = vst [vmem:[%s244 + $0x40] sm:$0xff] %v9746
        %9787 = vst [vmem:[%s244 + $0x48] sm:$0xff] %v9747
        %9788 = vst [vmem:[%s244 + $0x50] sm:$0xff] %v9748
        %9789 = vst [vmem:[%s244 + $0x58] sm:$0xff] %v9749
        %9790 = vst [vmem:[%s244 + $0x60] sm:$0xff] %v9750
        %9791 = vst [vmem:[%s244 + $0x68] sm:$0xff] %v9751
        %9792 = vst [vmem:[%s244 + $0x70] sm:$0xff] %v9752
        %9793 = vst [vmem:[%s244 + $0x78] sm:$0xff] %v9753
        %9794 = vst [vmem:[%s244 + $0x80] sm:$0xff] %v9754
        %9795 = vst [vmem:[%s244 + $0x88] sm:$0xff] %v9755
        %9796 = vst [vmem:[%s244 + $0x90] sm:$0xff] %v9756
        %9797 = vst [vmem:[%s244 + $0x98] sm:$0xff] %v9757
        %9798 = vst [vmem:[%s244 + $0xa0] sm:$0xff] %v9758
        %9799 = vst [vmem:[%s244 + $0xa8] sm:$0xff] %v9759
        %9800 = vst [vmem:[%s244 + $0xb0] sm:$0xff] %v9760
        %9801 = vst [vmem:[%s244 + $0xb8] sm:$0xff] %v9761
        %9802 = vst [vmem:[%s244 + $0xc0] sm:$0xff] %v9762
        %9803 = vst [vmem:[%s244 + $0xc8] sm:$0xff] %v9763
        %9804 = vst [vmem:[%s244 + $0xd0] sm:$0xff] %v9764
        %9805 = vst [vmem:[%s244 + $0xd8] sm:$0xff] %v9765
        %9806 = vst [vmem:[%s244 + $0xe0] sm:$0xff] %v9766
        %9807 = vst [vmem:[%s244 + $0xe8] sm:$0xff] %v9767
        %9808 = vst [vmem:[%s244 + $0xf0] sm:$0xff] %v9768
        %9809 = vst [vmem:[%s244 + $0xf8] sm:$0xff] %v9769
        %9810 = vst [vmem:[%s244 + $0x100] sm:$0xff] %v9770
        %9811 = vst [vmem:[%s244 + $0x108] sm:$0xff] %v9771
        %9812 = vst [vmem:[%s244 + $0x110] sm:$0xff] %v9772
        %9813 = vst [vmem:[%s244 + $0x118] sm:$0xff] %v9773
        %9814 = vst [vmem:[%s244 + $0x120] sm:$0xff] %v9774
        %9815 = vst [vmem:[%s244 + $0x128] sm:$0xff] %v9775
        %9816 = vst [vmem:[%s244 + $0x130] sm:$0xff] %v9776
        %9817 = vst [vmem:[%s244 + $0x138] sm:$0xff] %v9777
        %s9818 = sand.u32 %s159, 1
        %s9819 = scalar_lea.sflag [#allocation4], %s9818
        %s9820 = sand.u32 %s159, 1
        %s9821 = smul.addr %s9820, 320
        %s9822 = scalar_lea.vmem [#allocation3], %s9821
        // Predicated region
        $region45: #{tpu_custom_call.1} parent=43 // pred_check
          %p9823 = pneg %p169
        $region46: #{tpu_custom_call.1} parent=43 // pred_check_branch
          %9825 = sbr.rel (%p9823) target = $region48
        $region47: #{tpu_custom_call.1} parent=43 // pred_region
          %s9827 = ssub.s32 5120, 5120
          %9828 = vsyncadd %s9819, %s9827
          %s9829 = smul.addr %s20, 40
          %s9830 = smul.addr %s9829, 128
          %s9831 = scalar_lea.hbm %s6, %s9830
          %s9832 = sshll.u32 %s9822, 4
          %s9833 = int_to_ptr.vmem [resolvable:$true] %s9832
          %9838 = dma.vmem_to_hbm [thread:$0]  %s9833, 5120, %s9831, %s9819, 128, 128, 8
        $region48: #{tpu_custom_call.1} parent=43 // pred_fallthru
          _
      $region44: #{tpu_custom_call.1} parent=5 // pred_fallthru
        _
      %p9839 = scmp.le.s32.totalorder 2, %s15
      // Predicated region
      $region49: #{tpu_custom_call.1} parent=5 // pred_check
        %p9840 = pneg %p9839
      $region50: #{tpu_custom_call.1} parent=5 // pred_check_branch
        %9842 = sbr.rel (%p9840) target = $region52
      $region51: #{tpu_custom_call.1} parent=5 // pred_region
        %s9843 = ssub.s32 %s15, 2
        // Predicated region
        $region53: #{tpu_custom_call.1} parent=51 // pred_check
          %p9844 = pneg %p175
        $region54: #{tpu_custom_call.1} parent=51 // pred_check_branch
          %9846 = sbr.rel (%p9844) target = $region56
        $region55: #{tpu_custom_call.1} parent=51 // pred_region
          %s9847 = sand.u32 %s160, 1
          %s9848 = scalar_lea.sflag [#allocation4], %s9847
          %s9849 = sand.u32 %s160, 1
          %s9850 = smul.addr %s9849, 320
          %s9851 = scalar_lea.vmem [#allocation3], %s9850
          %9852 = dma.done %s9848, 5120
        $region56: #{tpu_custom_call.1} parent=51 // pred_fallthru
          _
      $region52: #{tpu_custom_call.1} parent=5 // pred_fallthru
        _
    $region6: #{tpu_custom_call.1} parent=1 // loop_footer
      %s19 = sadd.s32 1, %s15
    $region7: #{tpu_custom_call.1} parent=1 // loop_footer_branch
      %14 = sbr.rel target = $region3
    $region8: #{tpu_custom_call.1} parent=1 // loop_exit
      _
    %9853 = vsyncpa [#allocation4], 1
    %s9854 = scalar_lea.sflag [#allocation4], 1
    %9855 = vsyncpa %s9854, 1

</llo_original>
